<compile_context>
chip_gen: v7x
topology: tpu7x:2x2x1
jax: 0.10.0
libtpu: 0.0.40
codegen_flags: <defaults>
</compile_context>

<pallas_src>
import functools

import jax
import jax.numpy as jnp
import numpy as np
from jax import lax
from jax.experimental import pallas as pl
from jax.experimental.pallas import tpu as pltpu

BN_EPS = 1e-5
K_SIZE = 7
STRIDE = 2
PAD = 3
MIN_C = 8  # pad channel counts below 8 so sublane blocks are tile-aligned

ENC_CH = [(1, 8), (8, 16), (16, 32), (32, 64)]
DEC_CH = [(64, 32, 0), (32, 16, 0), (16, 8, 0), (8, 1, 1)]  # (Cin, Cout, out_pad)
N_LAYERS = len(ENC_CH) + len(DEC_CH)


# ----------------------------------------------------------------------------
# Pallas kernel: whole encoder + decoder for one batch block of TB elements.
#
#   args: x_ref, shift_ref, A_0, S_0, ..., A_7, S_7, o_ref, slab_ref
#     x_ref     (TB, MIN_C, L0)          f32  (input, zero-padded channels)
#     shift_ref (64, N_LAYERS)           f32  column i = layer i bias+BN shift
#     A_i       (K*Cout_pad_i, Cin_pad_i) bf16 tap-stacked, BN scale folded
#     S_i       (K*Lin_i, Lout_i)         bf16 tap-stacked 0/1 gather/scatter
#     o_ref     (TB, 1, L_out)            f32
#     slab_ref  VMEM scratch (max Cout_pad, K*max Lin) f32
# ----------------------------------------------------------------------------
def _fused_net_kernel(x_ref, shift_ref, *refs, layer_meta, tb):
    o_ref, slab_ref = refs[-2], refs[-1]
    prm = refs[:-2]

    for bi in range(tb):                              # static unroll over the block
        x = x_ref[bi]                                 # (Cin_pad_0, L0), length on lanes
        for li, (cout_p, relu) in enumerate(layer_meta):
            a_ref, s_ref = prm[2 * li], prm[2 * li + 1]
            lin = x.shape[1]

            # (1) all 7 taps in ONE matmul: (K*Cout, Cin) @ (Cin, Lin) -> (K*Cout, Lin)
            t = jnp.dot(a_ref[...], x.astype(jnp.bfloat16),
                        preferred_element_type=jnp.float32)

            # (2) re-pack tap blocks from sublanes to lanes in the VMEM slab:
            #     slab[c, k*Lin + l] = t[k*Cout + c, l]
            #     (static slices; the whole [0:cout_p, 0:K*lin] region is
            #      overwritten, so no stale/uninitialized data is ever read)
            for k in range(K_SIZE):
                slab_ref[0:cout_p, k * lin:(k + 1) * lin] = (
                    t[k * cout_p:(k + 1) * cout_p, :])
            slab = slab_ref[0:cout_p, 0:K_SIZE * lin].astype(jnp.bfloat16)

            # (3) ONE deep-contraction matmul over (tap, position):
            #     (Cout, K*Lin) @ (K*Lin, Lout) -> (Cout, Lout), f32 accumulation
            y = jnp.dot(slab, s_ref[...], preferred_element_type=jnp.float32)

            y = y + shift_ref[0:cout_p, li:li + 1]    # conv bias + BN shift (f32)
            if relu:
                y = jnp.maximum(y, 0.0)
            x = y

        o_ref[bi] = x[0:1, :]                         # real channel 0 of last layer


# ----------------------------------------------------------------------------
# Host-side one-time constant preparation
# ----------------------------------------------------------------------------
def _conv_out_len(lin):
    return (lin + 2 * PAD - K_SIZE) // STRIDE + 1


def _convT_out_len(lin, out_pad):
    return (lin - 1) * STRIDE - 2 * PAD + K_SIZE + out_pad


def _conv_s_stack(lin, lout):
    """Stacked selection: row k*lin + l, col o is 1 iff l == STRIDE*o + k - PAD."""
    s = np.zeros((K_SIZE, lin, lout), np.float32)
    for k in range(K_SIZE):
        for o in range(lout):
            l = STRIDE * o + k - PAD
            if 0 <= l < lin:
                s[k, l, o] = 1.0
    return s.reshape(K_SIZE * lin, lout)


def _convT_s_stack(lin, lout):
    """Stacked scatter: row k*lin + l, col o is 1 iff o == STRIDE*l + k - PAD."""
    s = np.zeros((K_SIZE, lin, lout), np.float32)
    for k in range(K_SIZE):
        for l in range(lin):
            o = STRIDE * l + k - PAD
            if 0 <= o < lout:
                s[k, l, o] = 1.0
    return s.reshape(K_SIZE * lin, lout)


def _fold_bn(bias, bn):
    """Conv bias + eval-mode BatchNorm -> per-output-channel (scale, shift)."""
    if bn is None:
        return jnp.ones_like(bias), bias
    gamma, beta, mean, var = bn
    inv = gamma / jnp.sqrt(var + BN_EPS)
    return inv, (bias - mean) * inv + beta


def _prepare_layers(params, length_in):
    """Build per-layer tap-stacked A (bf16), S (bf16), packed shifts, metadata."""
    a_list, s_list, meta, lins = [], [], [], []
    shifts = np.zeros((64, N_LAYERS), np.float32)     # 64 = max padded Cout
    length = length_in
    li = 0

    def add_layer(a_kcoci, shift, s_np, relu):
        nonlocal li
        _, cout_r, cin_r = a_kcoci.shape
        cout_p, cin_p = max(cout_r, MIN_C), max(cin_r, MIN_C)
        a = jnp.pad(a_kcoci, ((0, 0), (0, cout_p - cout_r), (0, cin_p - cin_r)))
        a_list.append(a.reshape(K_SIZE * cout_p, cin_p).astype(jnp.bfloat16))
        s_list.append(jnp.asarray(s_np, dtype=jnp.bfloat16))   # exact 0/1 in bf16
        shifts[:cout_r, li] = np.asarray(shift, dtype=np.float32)
        meta.append((cout_p, relu))
        li += 1

    for (w, b, bn) in params["enc"]:                  # Conv1d weight (Cout, Cin, K)
        lout = _conv_out_len(length)
        scale, shift = _fold_bn(b, bn)
        a = jnp.transpose(w, (2, 0, 1)) * scale[None, :, None]   # (K, Cout, Cin)
        lins.append(length)
        add_layer(a, shift, _conv_s_stack(length, lout), True)
        length = lout

    for (w, b, bn, op) in params["dec"]:              # ConvT weight (Cin, Cout, K)
        lout = _convT_out_len(length, op)
        scale, shift = _fold_bn(b, bn)
        a = jnp.transpose(w, (2, 1, 0)) * scale[None, :, None]   # (K, Cout, Cin)
        lins.append(length)
        add_layer(a, shift, _convT_s_stack(length, lout), bn is not None)
        length = lout

    return a_list, s_list, jnp.asarray(shifts), tuple(meta), tuple(lins), length


# ----------------------------------------------------------------------------
# Forward builder: one fused pallas_call for the whole network.
# ----------------------------------------------------------------------------
def build_forward(params, batch, length, block_b=8):
    a_list, s_list, shifts, meta, lins, length_out = _prepare_layers(params, length)
    if length_out != length:
        raise ValueError(
            f"Decoder output length {length_out} != input length {length}; "
            "this seq_len is incompatible with the module's fixed output_padding.")

    tb = max(1, min(block_b, batch))                  # batch block per grid step
    bp = ((batch + tb - 1) // tb) * tb                # padded batch
    grid = (bp // tb,)

    max_cout_p = max(m[0] for m in meta)
    max_slab_cols = K_SIZE * max(lins)

    const_inputs = [shifts]
    in_specs = [
        pl.BlockSpec((tb, MIN_C, length), lambda b: (b, 0, 0)),
        pl.BlockSpec(shifts.shape, lambda b: (0, 0)),
    ]
    # Grid-invariant full-array constant blocks (A_i, S_i per layer).
    for a, s in zip(a_list, s_list):
        for arr in (a, s):
            const_inputs.append(arr)
            in_specs.append(pl.BlockSpec(arr.shape, lambda b: (0, 0)))
    const_inputs = tuple(const_inputs)

    # Advisory cost estimate so XLA schedules the tiny custom call sensibly.
    flops = 0
    for a, s, (cout_p, _), lin in zip(a_list, s_list, meta, lins):
        kcout, cin_p = a.shape
        klin, lout = s.shape
        flops += 2 * (kcout * cin_p * lin + cout_p * klin * lout)
    flops *= bp
    bytes_accessed = int(bp * MIN_C * length * 4 + bp * length_out * 4
                         + sum(int(c.size) * c.dtype.itemsize for c in const_inputs))

    call = pl.pallas_call(
        functools.partial(_fused_net_kernel, layer_meta=meta, tb=tb),
        out_shape=jax.ShapeDtypeStruct((bp, 1, length_out), jnp.float32),
        grid=grid,
        in_specs=in_specs,
        out_specs=pl.BlockSpec((tb, 1, length_out), lambda b: (b, 0, 0)),
        scratch_shapes=[pltpu.VMEM((max_cout_p, max_slab_cols), jnp.float32)],
        compiler_params=pltpu.CompilerParams(
            dimension_semantics=("parallel",)),
        cost_estimate=pl.CostEstimate(flops=int(flops), transcendentals=0,
                                      bytes_accessed=bytes_accessed),
    )

    @jax.jit
    def forward(x_ncl):
        x = x_ncl.astype(jnp.float32)
        b, cin, _ = x.shape
        x = jnp.pad(x, ((0, bp - b), (0, MIN_C - cin), (0, 0)))
        out = call(x, *const_inputs)
        return out[:batch]

    return forward


# ----------------------------------------------------------------------------
# Parameters (deterministic init, shapes as in the PyTorch module)
# ----------------------------------------------------------------------------
def init_params(key):
    def uniform(k, shape, bound):
        return jax.random.uniform(k, shape, jnp.float32, -bound, bound)

    def bn_init(k, c):
        k1, k2 = jax.random.split(k)
        gamma = 1.0 + 0.1 * jax.random.normal(k1, (c,), jnp.float32)
        beta = 0.1 * jax.random.normal(k2, (c,), jnp.float32)
        return (gamma, beta, jnp.zeros((c,), jnp.float32), jnp.ones((c,), jnp.float32))

    keys = jax.random.split(key, 3 * (len(ENC_CH) + len(DEC_CH)))
    ki = iter(keys)

    enc = []
    for cin, cout in ENC_CH:
        bound = 1.0 / np.sqrt(cin * K_SIZE)
        w = uniform(next(ki), (cout, cin, K_SIZE), bound)        # Conv1d weight
        b = uniform(next(ki), (cout,), bound)
        enc.append((w, b, bn_init(next(ki), cout)))

    dec = []
    for idx, (cin, cout, op) in enumerate(DEC_CH):
        bound = 1.0 / np.sqrt(cout * K_SIZE)
        w = uniform(next(ki), (cin, cout, K_SIZE), bound)        # ConvTranspose1d weight
        b = uniform(next(ki), (cout,), bound)
        bn_key = next(ki)
        bn = bn_init(bn_key, cout) if idx < len(DEC_CH) - 1 else None
        dec.append((w, b, bn, op))
    return {"enc": enc, "dec": dec}


# ----------------------------------------------------------------------------
# Pure-JAX reference (lax convolutions, HIGHEST precision) for a sanity check
# ----------------------------------------------------------------------------
def _bn_apply_ncl(y, bn):
    gamma, beta, mean, var = bn
    inv = gamma / jnp.sqrt(var + BN_EPS)
    return (y - mean[None, :, None]) * inv[None, :, None] + beta[None, :, None]


def ecg_autoencoder_reference(x_ncl, params):
    dn = ("NCH", "OIH", "NCH")
    y = x_ncl.astype(jnp.float32)
    for w, b, bn in params["enc"]:
        y = lax.conv_general_dilated(y, w, (STRIDE,), [(PAD, PAD)],
                                     dimension_numbers=dn,
                                     precision=lax.Precision.HIGHEST)
        y = y + b[None, :, None]
        y = jnp.maximum(_bn_apply_ncl(y, bn), 0.0)
    for w, b, bn, op in params["dec"]:
        w_eq = jnp.flip(jnp.transpose(w, (1, 0, 2)), axis=2)   # (Cout, Cin, K), flipped
        y = lax.conv_general_dilated(y, w_eq, (1,),
                                     [(K_SIZE - 1 - PAD, K_SIZE - 1 - PAD + op)],
                                     lhs_dilation=(STRIDE,),
                                     dimension_numbers=dn,
                                     precision=lax.Precision.HIGHEST)
        y = y + b[None, :, None]
        if bn is not None:
            y = jnp.maximum(_bn_apply_ncl(y, bn), 0.0)
    return y


# ----------------------------------------------------------------------------
if __name__ == "__main__":
    key = jax.random.PRNGKey(0)
    k_param, k_x, k_x2 = jax.random.split(key, 3)
    params = init_params(k_param)

    # Small seq_len whose encode/decode length chain matches the module's fixed
    # output_padding pattern: 130 -> 65 -> 33 -> 17 -> 9 -> 17 -> 33 -> 65 -> 130
    # (same structure as the production seq_len=1250).
    B, C, L = 2, 1, 130
    x = jax.random.normal(k_x, (B, C, L), jnp.float32)

    forward = build_forward(params, batch=B, length=L)
    out = jax.block_until_ready(forward(x))
    ref = jax.block_until_ready(ecg_autoencoder_reference(x, params))

    assert out.shape == (B, 1, L), out.shape
    assert np.all(np.isfinite(np.asarray(out)))
    # bf16 MXU operands (per perf review) with f32 accumulation: atol loosened
    # from 1e-3 to 5e-3 vs the f32 HIGHEST-precision lax reference.
    np.testing.assert_allclose(np.asarray(out), np.asarray(ref), rtol=5e-2, atol=5e-3)

    # Second config: exercises batch padding (5 -> 8) and a multi-step grid
    # (grid=(2,)) with the batch-blocked kernel.
    B2 = 5
    x2 = jax.random.normal(k_x2, (B2, C, L), jnp.float32)
    forward2 = build_forward(params, batch=B2, length=L, block_b=4)
    out2 = jax.block_until_ready(forward2(x2))
    ref2 = jax.block_until_ready(ecg_autoencoder_reference(x2, params))
    assert out2.shape == (B2, 1, L), out2.shape
    np.testing.assert_allclose(np.asarray(out2), np.asarray(ref2), rtol=5e-2, atol=5e-3)

    print("KERNEL_OK")
</pallas_src>

<mosaic_0001>
module attributes {stable_mosaic.version = 11 : i64} {
  func.func @_fused_net_kernel(%arg0: i32, %arg1: memref<2x8x130xf32, #tpu.memory_space<vmem>>, %arg2: memref<64x8xf32, #tpu.memory_space<vmem>>, %arg3: memref<56x8xbf16, #tpu.memory_space<vmem>>, %arg4: memref<910x65xbf16, #tpu.memory_space<vmem>>, %arg5: memref<112x8xbf16, #tpu.memory_space<vmem>>, %arg6: memref<455x33xbf16, #tpu.memory_space<vmem>>, %arg7: memref<224x16xbf16, #tpu.memory_space<vmem>>, %arg8: memref<231x17xbf16, #tpu.memory_space<vmem>>, %arg9: memref<448x32xbf16, #tpu.memory_space<vmem>>, %arg10: memref<119x9xbf16, #tpu.memory_space<vmem>>, %arg11: memref<224x64xbf16, #tpu.memory_space<vmem>>, %arg12: memref<63x17xbf16, #tpu.memory_space<vmem>>, %arg13: memref<112x32xbf16, #tpu.memory_space<vmem>>, %arg14: memref<119x33xbf16, #tpu.memory_space<vmem>>, %arg15: memref<56x16xbf16, #tpu.memory_space<vmem>>, %arg16: memref<231x65xbf16, #tpu.memory_space<vmem>>, %arg17: memref<56x8xbf16, #tpu.memory_space<vmem>>, %arg18: memref<455x130xbf16, #tpu.memory_space<vmem>>, %arg19: memref<2x1x130xf32, #tpu.memory_space<vmem>>, %arg20: memref<64x910xf32, #tpu.memory_space<vmem>>) attributes {dimension_semantics = [#tpu.dimension_semantics<parallel>], iteration_bounds = array<i64: 1>, scalar_prefetch = 0 : i64, scratch_operands = 1 : i64, tpu.core_type = #tpu.core_type<tc>, window_params = [{transform_indices = @transform_0, window_bounds = array<i64: 2, 8, 130>}, {pipeline_mode = #tpu.pipeline_mode<synchronous>, transform_indices = @transform_1, window_bounds = array<i64: 64, 8>}, {pipeline_mode = #tpu.pipeline_mode<synchronous>, transform_indices = @transform_2, window_bounds = array<i64: 56, 8>}, {pipeline_mode = #tpu.pipeline_mode<synchronous>, transform_indices = @transform_3, window_bounds = array<i64: 910, 65>}, {pipeline_mode = #tpu.pipeline_mode<synchronous>, transform_indices = @transform_4, window_bounds = array<i64: 112, 8>}, {pipeline_mode = #tpu.pipeline_mode<synchronous>, transform_indices = @transform_5, window_bounds = array<i64: 455, 33>}, {pipeline_mode = #tpu.pipeline_mode<synchronous>, transform_indices = @transform_6, window_bounds = array<i64: 224, 16>}, {pipeline_mode = #tpu.pipeline_mode<synchronous>, transform_indices = @transform_7, window_bounds = array<i64: 231, 17>}, {pipeline_mode = #tpu.pipeline_mode<synchronous>, transform_indices = @transform_8, window_bounds = array<i64: 448, 32>}, {pipeline_mode = #tpu.pipeline_mode<synchronous>, transform_indices = @transform_9, window_bounds = array<i64: 119, 9>}, {pipeline_mode = #tpu.pipeline_mode<synchronous>, transform_indices = @transform_10, window_bounds = array<i64: 224, 64>}, {pipeline_mode = #tpu.pipeline_mode<synchronous>, transform_indices = @transform_11, window_bounds = array<i64: 63, 17>}, {pipeline_mode = #tpu.pipeline_mode<synchronous>, transform_indices = @transform_12, window_bounds = array<i64: 112, 32>}, {pipeline_mode = #tpu.pipeline_mode<synchronous>, transform_indices = @transform_13, window_bounds = array<i64: 119, 33>}, {pipeline_mode = #tpu.pipeline_mode<synchronous>, transform_indices = @transform_14, window_bounds = array<i64: 56, 16>}, {pipeline_mode = #tpu.pipeline_mode<synchronous>, transform_indices = @transform_15, window_bounds = array<i64: 231, 65>}, {pipeline_mode = #tpu.pipeline_mode<synchronous>, transform_indices = @transform_16, window_bounds = array<i64: 56, 8>}, {pipeline_mode = #tpu.pipeline_mode<synchronous>, transform_indices = @transform_17, window_bounds = array<i64: 455, 130>}, {transform_indices = @transform_18, window_bounds = array<i64: 2, 1, 130>}]} {
    %c0 = arith.constant 0 : index
    %c0_0 = arith.constant 0 : index
    %c0_1 = arith.constant 0 : index
    %0 = vector.load %arg1[%c0, %c0_0, %c0_1] : memref<2x8x130xf32, #tpu.memory_space<vmem>>, vector<1x8x130xf32>
    %1 = vector.shape_cast %0 : vector<1x8x130xf32> to vector<8x130xf32>
    %c0_2 = arith.constant 0 : index
    %c0_3 = arith.constant 0 : index
    %2 = vector.load %arg3[%c0_2, %c0_3] : memref<56x8xbf16, #tpu.memory_space<vmem>>, vector<56x8xbf16>
    %3 = arith.truncf %1 : vector<8x130xf32> to vector<8x130xbf16>
    %cst = arith.constant dense<0.000000e+00> : vector<56x130xf32>
    %4 = tpu.matmul %2, %3, %cst {dimension_numbers = #tpu.dot_dimension_numbers<[1], [0], [0], [1], [0, 0, 1, 1], [], []>} : vector<56x8xbf16>, vector<8x130xbf16>, vector<56x130xf32> -> vector<56x130xf32>
    %5 = vector.extract_strided_slice %4 {offsets = [0, 0], sizes = [8, 130], strides = [1, 1]} : vector<56x130xf32> to vector<8x130xf32>
    %c0_4 = arith.constant 0 : index
    %c0_5 = arith.constant 0 : index
    %6 = vector.load %arg20[%c0_4, %c0_5] : memref<64x910xf32, #tpu.memory_space<vmem>>, vector<8x130xf32>
    tpu.vector_store %arg20[%c0_4, %c0_5], %5 {strides = array<i32>} : memref<64x910xf32, #tpu.memory_space<vmem>>, vector<8x130xf32>,
    %7 = vector.extract_strided_slice %4 {offsets = [8, 0], sizes = [8, 130], strides = [1, 1]} : vector<56x130xf32> to vector<8x130xf32>
    %c0_6 = arith.constant 0 : index
    %c130 = arith.constant 130 : index
    %8 = vector.load %arg20[%c0_6, %c130] : memref<64x910xf32, #tpu.memory_space<vmem>>, vector<8x130xf32>
    tpu.vector_store %arg20[%c0_6, %c130], %7 {strides = array<i32>} : memref<64x910xf32, #tpu.memory_space<vmem>>, vector<8x130xf32>,
    %9 = vector.extract_strided_slice %4 {offsets = [16, 0], sizes = [8, 130], strides = [1, 1]} : vector<56x130xf32> to vector<8x130xf32>
    %c0_7 = arith.constant 0 : index
    %c260 = arith.constant 260 : index
    %10 = vector.load %arg20[%c0_7, %c260] : memref<64x910xf32, #tpu.memory_space<vmem>>, vector<8x130xf32>
    tpu.vector_store %arg20[%c0_7, %c260], %9 {strides = array<i32>} : memref<64x910xf32, #tpu.memory_space<vmem>>, vector<8x130xf32>,
    %11 = vector.extract_strided_slice %4 {offsets = [24, 0], sizes = [8, 130], strides = [1, 1]} : vector<56x130xf32> to vector<8x130xf32>
    %c0_8 = arith.constant 0 : index
    %c390 = arith.constant 390 : index
    %12 = vector.load %arg20[%c0_8, %c390] : memref<64x910xf32, #tpu.memory_space<vmem>>, vector<8x130xf32>
    tpu.vector_store %arg20[%c0_8, %c390], %11 {strides = array<i32>} : memref<64x910xf32, #tpu.memory_space<vmem>>, vector<8x130xf32>,
    %13 = vector.extract_strided_slice %4 {offsets = [32, 0], sizes = [8, 130], strides = [1, 1]} : vector<56x130xf32> to vector<8x130xf32>
    %c0_9 = arith.constant 0 : index
    %c520 = arith.constant 520 : index
    %14 = vector.load %arg20[%c0_9, %c520] : memref<64x910xf32, #tpu.memory_space<vmem>>, vector<8x130xf32>
    tpu.vector_store %arg20[%c0_9, %c520], %13 {strides = array<i32>} : memref<64x910xf32, #tpu.memory_space<vmem>>, vector<8x130xf32>,
    %15 = vector.extract_strided_slice %4 {offsets = [40, 0], sizes = [8, 130], strides = [1, 1]} : vector<56x130xf32> to vector<8x130xf32>
    %c0_10 = arith.constant 0 : index
    %c650 = arith.constant 650 : index
    %16 = vector.load %arg20[%c0_10, %c650] : memref<64x910xf32, #tpu.memory_space<vmem>>, vector<8x130xf32>
    tpu.vector_store %arg20[%c0_10, %c650], %15 {strides = array<i32>} : memref<64x910xf32, #tpu.memory_space<vmem>>, vector<8x130xf32>,
    %17 = vector.extract_strided_slice %4 {offsets = [48, 0], sizes = [8, 130], strides = [1, 1]} : vector<56x130xf32> to vector<8x130xf32>
    %c0_11 = arith.constant 0 : index
    %c780 = arith.constant 780 : index
    %18 = vector.load %arg20[%c0_11, %c780] : memref<64x910xf32, #tpu.memory_space<vmem>>, vector<8x130xf32>
    tpu.vector_store %arg20[%c0_11, %c780], %17 {strides = array<i32>} : memref<64x910xf32, #tpu.memory_space<vmem>>, vector<8x130xf32>,
    %c0_12 = arith.constant 0 : index
    %c0_13 = arith.constant 0 : index
    %19 = vector.load %arg20[%c0_12, %c0_13] : memref<64x910xf32, #tpu.memory_space<vmem>>, vector<8x910xf32>
    %20 = arith.truncf %19 : vector<8x910xf32> to vector<8x910xbf16>
    %c0_14 = arith.constant 0 : index
    %c0_15 = arith.constant 0 : index
    %21 = vector.load %arg4[%c0_14, %c0_15] : memref<910x65xbf16, #tpu.memory_space<vmem>>, vector<910x65xbf16>
    %cst_16 = arith.constant dense<0.000000e+00> : vector<8x65xf32>
    %22 = tpu.matmul %20, %21, %cst_16 {dimension_numbers = #tpu.dot_dimension_numbers<[1], [0], [0], [1], [0, 0, 1, 1], [], []>} : vector<8x910xbf16>, vector<910x65xbf16>, vector<8x65xf32> -> vector<8x65xf32>
    %c0_17 = arith.constant 0 : index
    %c0_18 = arith.constant 0 : index
    %23 = vector.load %arg2[%c0_17, %c0_18] : memref<64x8xf32, #tpu.memory_space<vmem>>, vector<8x1xf32>
    %24 = vector.broadcast %23 : vector<8x1xf32> to vector<8x65xf32>
    %25 = arith.addf %22, %24 : vector<8x65xf32>
    %cst_19 = arith.constant 0.000000e+00 : f32
    %26 = vector.broadcast %cst_19 : f32 to vector<8x65xf32>
    %27 = arith.maximumf %25, %26 : vector<8x65xf32>
    %c0_20 = arith.constant 0 : index
    %c0_21 = arith.constant 0 : index
    %28 = vector.load %arg5[%c0_20, %c0_21] : memref<112x8xbf16, #tpu.memory_space<vmem>>, vector<112x8xbf16>
    %29 = arith.truncf %27 : vector<8x65xf32> to vector<8x65xbf16>
    %cst_22 = arith.constant dense<0.000000e+00> : vector<112x65xf32>
    %30 = tpu.matmul %28, %29, %cst_22 {dimension_numbers = #tpu.dot_dimension_numbers<[1], [0], [0], [1], [0, 0, 1, 1], [], []>} : vector<112x8xbf16>, vector<8x65xbf16>, vector<112x65xf32> -> vector<112x65xf32>
    %31 = vector.extract_strided_slice %30 {offsets = [0, 0], sizes = [16, 65], strides = [1, 1]} : vector<112x65xf32> to vector<16x65xf32>
    %c0_23 = arith.constant 0 : index
    %c0_24 = arith.constant 0 : index
    %32 = vector.load %arg20[%c0_23, %c0_24] : memref<64x910xf32, #tpu.memory_space<vmem>>, vector<16x65xf32>
    tpu.vector_store %arg20[%c0_23, %c0_24], %31 {strides = array<i32>} : memref<64x910xf32, #tpu.memory_space<vmem>>, vector<16x65xf32>,
    %33 = vector.extract_strided_slice %30 {offsets = [16, 0], sizes = [16, 65], strides = [1, 1]} : vector<112x65xf32> to vector<16x65xf32>
    %c0_25 = arith.constant 0 : index
    %c65 = arith.constant 65 : index
    %34 = vector.load %arg20[%c0_25, %c65] : memref<64x910xf32, #tpu.memory_space<vmem>>, vector<16x65xf32>
    tpu.vector_store %arg20[%c0_25, %c65], %33 {strides = array<i32>} : memref<64x910xf32, #tpu.memory_space<vmem>>, vector<16x65xf32>,
    %35 = vector.extract_strided_slice %30 {offsets = [32, 0], sizes = [16, 65], strides = [1, 1]} : vector<112x65xf32> to vector<16x65xf32>
    %c0_26 = arith.constant 0 : index
    %c130_27 = arith.constant 130 : index
    %36 = vector.load %arg20[%c0_26, %c130_27] : memref<64x910xf32, #tpu.memory_space<vmem>>, vector<16x65xf32>
    tpu.vector_store %arg20[%c0_26, %c130_27], %35 {strides = array<i32>} : memref<64x910xf32, #tpu.memory_space<vmem>>, vector<16x65xf32>,
    %37 = vector.extract_strided_slice %30 {offsets = [48, 0], sizes = [16, 65], strides = [1, 1]} : vector<112x65xf32> to vector<16x65xf32>
    %c0_28 = arith.constant 0 : index
    %c195 = arith.constant 195 : index
    %38 = vector.load %arg20[%c0_28, %c195] : memref<64x910xf32, #tpu.memory_space<vmem>>, vector<16x65xf32>
    tpu.vector_store %arg20[%c0_28, %c195], %37 {strides = array<i32>} : memref<64x910xf32, #tpu.memory_space<vmem>>, vector<16x65xf32>,
    %39 = vector.extract_strided_slice %30 {offsets = [64, 0], sizes = [16, 65], strides = [1, 1]} : vector<112x65xf32> to vector<16x65xf32>
    %c0_29 = arith.constant 0 : index
    %c260_30 = arith.constant 260 : index
    %40 = vector.load %arg20[%c0_29, %c260_30] : memref<64x910xf32, #tpu.memory_space<vmem>>, vector<16x65xf32>
    tpu.vector_store %arg20[%c0_29, %c260_30], %39 {strides = array<i32>} : memref<64x910xf32, #tpu.memory_space<vmem>>, vector<16x65xf32>,
    %41 = vector.extract_strided_slice %30 {offsets = [80, 0], sizes = [16, 65], strides = [1, 1]} : vector<112x65xf32> to vector<16x65xf32>
    %c0_31 = arith.constant 0 : index
    %c325 = arith.constant 325 : index
    %42 = vector.load %arg20[%c0_31, %c325] : memref<64x910xf32, #tpu.memory_space<vmem>>, vector<16x65xf32>
    tpu.vector_store %arg20[%c0_31, %c325], %41 {strides = array<i32>} : memref<64x910xf32, #tpu.memory_space<vmem>>, vector<16x65xf32>,
    %43 = vector.extract_strided_slice %30 {offsets = [96, 0], sizes = [16, 65], strides = [1, 1]} : vector<112x65xf32> to vector<16x65xf32>
    %c0_32 = arith.constant 0 : index
    %c390_33 = arith.constant 390 : index
    %44 = vector.load %arg20[%c0_32, %c390_33] : memref<64x910xf32, #tpu.memory_space<vmem>>, vector<16x65xf32>
    tpu.vector_store %arg20[%c0_32, %c390_33], %43 {strides = array<i32>} : memref<64x910xf32, #tpu.memory_space<vmem>>, vector<16x65xf32>,
    %c0_34 = arith.constant 0 : index
    %c0_35 = arith.constant 0 : index
    %45 = vector.load %arg20[%c0_34, %c0_35] : memref<64x910xf32, #tpu.memory_space<vmem>>, vector<16x455xf32>
    %46 = arith.truncf %45 : vector<16x455xf32> to vector<16x455xbf16>
    %c0_36 = arith.constant 0 : index
    %c0_37 = arith.constant 0 : index
    %47 = vector.load %arg6[%c0_36, %c0_37] : memref<455x33xbf16, #tpu.memory_space<vmem>>, vector<455x33xbf16>
    %cst_38 = arith.constant dense<0.000000e+00> : vector<16x33xf32>
    %48 = tpu.matmul %46, %47, %cst_38 {dimension_numbers = #tpu.dot_dimension_numbers<[1], [0], [0], [1], [0, 0, 1, 1], [], []>} : vector<16x455xbf16>, vector<455x33xbf16>, vector<16x33xf32> -> vector<16x33xf32>
    %c0_39 = arith.constant 0 : index
    %c1 = arith.constant 1 : index
    %49 = vector.load %arg2[%c0_39, %c1] : memref<64x8xf32, #tpu.memory_space<vmem>>, vector<16x1xf32>
    %50 = vector.broadcast %49 : vector<16x1xf32> to vector<16x33xf32>
    %51 = arith.addf %48, %50 : vector<16x33xf32>
    %cst_40 = arith.constant 0.000000e+00 : f32
    %52 = vector.broadcast %cst_40 : f32 to vector<16x33xf32>
    %53 = arith.maximumf %51, %52 : vector<16x33xf32>
    %c0_41 = arith.constant 0 : index
    %c0_42 = arith.constant 0 : index
    %54 = vector.load %arg7[%c0_41, %c0_42] : memref<224x16xbf16, #tpu.memory_space<vmem>>, vector<224x16xbf16>
    %55 = arith.truncf %53 : vector<16x33xf32> to vector<16x33xbf16>
    %cst_43 = arith.constant dense<0.000000e+00> : vector<224x33xf32>
    %56 = tpu.matmul %54, %55, %cst_43 {dimension_numbers = #tpu.dot_dimension_numbers<[1], [0], [0], [1], [0, 0, 1, 1], [], []>} : vector<224x16xbf16>, vector<16x33xbf16>, vector<224x33xf32> -> vector<224x33xf32>
    %57 = vector.extract_strided_slice %56 {offsets = [0, 0], sizes = [32, 33], strides = [1, 1]} : vector<224x33xf32> to vector<32x33xf32>
    %c0_44 = arith.constant 0 : index
    %c0_45 = arith.constant 0 : index
    %58 = vector.load %arg20[%c0_44, %c0_45] : memref<64x910xf32, #tpu.memory_space<vmem>>, vector<32x33xf32>
    tpu.vector_store %arg20[%c0_44, %c0_45], %57 {strides = array<i32>} : memref<64x910xf32, #tpu.memory_space<vmem>>, vector<32x33xf32>,
    %59 = vector.extract_strided_slice %56 {offsets = [32, 0], sizes = [32, 33], strides = [1, 1]} : vector<224x33xf32> to vector<32x33xf32>
    %c0_46 = arith.constant 0 : index
    %c33 = arith.constant 33 : index
    %60 = vector.load %arg20[%c0_46, %c33] : memref<64x910xf32, #tpu.memory_space<vmem>>, vector<32x33xf32>
    tpu.vector_store %arg20[%c0_46, %c33], %59 {strides = array<i32>} : memref<64x910xf32, #tpu.memory_space<vmem>>, vector<32x33xf32>,
    %61 = vector.extract_strided_slice %56 {offsets = [64, 0], sizes = [32, 33], strides = [1, 1]} : vector<224x33xf32> to vector<32x33xf32>
    %c0_47 = arith.constant 0 : index
    %c66 = arith.constant 66 : index
    %62 = vector.load %arg20[%c0_47, %c66] : memref<64x910xf32, #tpu.memory_space<vmem>>, vector<32x33xf32>
    tpu.vector_store %arg20[%c0_47, %c66], %61 {strides = array<i32>} : memref<64x910xf32, #tpu.memory_space<vmem>>, vector<32x33xf32>,
    %63 = vector.extract_strided_slice %56 {offsets = [96, 0], sizes = [32, 33], strides = [1, 1]} : vector<224x33xf32> to vector<32x33xf32>
    %c0_48 = arith.constant 0 : index
    %c99 = arith.constant 99 : index
    %64 = vector.load %arg20[%c0_48, %c99] : memref<64x910xf32, #tpu.memory_space<vmem>>, vector<32x33xf32>
    tpu.vector_store %arg20[%c0_48, %c99], %63 {strides = array<i32>} : memref<64x910xf32, #tpu.memory_space<vmem>>, vector<32x33xf32>,
    %65 = vector.extract_strided_slice %56 {offsets = [128, 0], sizes = [32, 33], strides = [1, 1]} : vector<224x33xf32> to vector<32x33xf32>
    %c0_49 = arith.constant 0 : index
    %c132 = arith.constant 132 : index
    %66 = vector.load %arg20[%c0_49, %c132] : memref<64x910xf32, #tpu.memory_space<vmem>>, vector<32x33xf32>
    tpu.vector_store %arg20[%c0_49, %c132], %65 {strides = array<i32>} : memref<64x910xf32, #tpu.memory_space<vmem>>, vector<32x33xf32>,
    %67 = vector.extract_strided_slice %56 {offsets = [160, 0], sizes = [32, 33], strides = [1, 1]} : vector<224x33xf32> to vector<32x33xf32>
    %c0_50 = arith.constant 0 : index
    %c165 = arith.constant 165 : index
    %68 = vector.load %arg20[%c0_50, %c165] : memref<64x910xf32, #tpu.memory_space<vmem>>, vector<32x33xf32>
    tpu.vector_store %arg20[%c0_50, %c165], %67 {strides = array<i32>} : memref<64x910xf32, #tpu.memory_space<vmem>>, vector<32x33xf32>,
    %69 = vector.extract_strided_slice %56 {offsets = [192, 0], sizes = [32, 33], strides = [1, 1]} : vector<224x33xf32> to vector<32x33xf32>
    %c0_51 = arith.constant 0 : index
    %c198 = arith.constant 198 : index
    %70 = vector.load %arg20[%c0_51, %c198] : memref<64x910xf32, #tpu.memory_space<vmem>>, vector<32x33xf32>
    tpu.vector_store %arg20[%c0_51, %c198], %69 {strides = array<i32>} : memref<64x910xf32, #tpu.memory_space<vmem>>, vector<32x33xf32>,
    %c0_52 = arith.constant 0 : index
    %c0_53 = arith.constant 0 : index
    %71 = vector.load %arg20[%c0_52, %c0_53] : memref<64x910xf32, #tpu.memory_space<vmem>>, vector<32x231xf32>
    %72 = arith.truncf %71 : vector<32x231xf32> to vector<32x231xbf16>
    %c0_54 = arith.constant 0 : index
    %c0_55 = arith.constant 0 : index
    %73 = vector.load %arg8[%c0_54, %c0_55] : memref<231x17xbf16, #tpu.memory_space<vmem>>, vector<231x17xbf16>
    %cst_56 = arith.constant dense<0.000000e+00> : vector<32x17xf32>
    %74 = tpu.matmul %72, %73, %cst_56 {dimension_numbers = #tpu.dot_dimension_numbers<[1], [0], [0], [1], [0, 0, 1, 1], [], []>} : vector<32x231xbf16>, vector<231x17xbf16>, vector<32x17xf32> -> vector<32x17xf32>
    %c0_57 = arith.constant 0 : index
    %c2 = arith.constant 2 : index
    %75 = vector.load %arg2[%c0_57, %c2] : memref<64x8xf32, #tpu.memory_space<vmem>>, vector<32x1xf32>
    %76 = vector.broadcast %75 : vector<32x1xf32> to vector<32x17xf32>
    %77 = arith.addf %74, %76 : vector<32x17xf32>
    %cst_58 = arith.constant 0.000000e+00 : f32
    %78 = vector.broadcast %cst_58 : f32 to vector<32x17xf32>
    %79 = arith.maximumf %77, %78 : vector<32x17xf32>
    %c0_59 = arith.constant 0 : index
    %c0_60 = arith.constant 0 : index
    %80 = vector.load %arg9[%c0_59, %c0_60] : memref<448x32xbf16, #tpu.memory_space<vmem>>, vector<448x32xbf16>
    %81 = arith.truncf %79 : vector<32x17xf32> to vector<32x17xbf16>
    %cst_61 = arith.constant dense<0.000000e+00> : vector<448x17xf32>
    %82 = tpu.matmul %80, %81, %cst_61 {dimension_numbers = #tpu.dot_dimension_numbers<[1], [0], [0], [1], [0, 0, 1, 1], [], []>} : vector<448x32xbf16>, vector<32x17xbf16>, vector<448x17xf32> -> vector<448x17xf32>
    %83 = vector.extract_strided_slice %82 {offsets = [0, 0], sizes = [64, 17], strides = [1, 1]} : vector<448x17xf32> to vector<64x17xf32>
    %c0_62 = arith.constant 0 : index
    %c0_63 = arith.constant 0 : index
    %84 = vector.load %arg20[%c0_62, %c0_63] : memref<64x910xf32, #tpu.memory_space<vmem>>, vector<64x17xf32>
    tpu.vector_store %arg20[%c0_62, %c0_63], %83 {strides = array<i32>} : memref<64x910xf32, #tpu.memory_space<vmem>>, vector<64x17xf32>,
    %85 = vector.extract_strided_slice %82 {offsets = [64, 0], sizes = [64, 17], strides = [1, 1]} : vector<448x17xf32> to vector<64x17xf32>
    %c0_64 = arith.constant 0 : index
    %c17 = arith.constant 17 : index
    %86 = vector.load %arg20[%c0_64, %c17] : memref<64x910xf32, #tpu.memory_space<vmem>>, vector<64x17xf32>
    tpu.vector_store %arg20[%c0_64, %c17], %85 {strides = array<i32>} : memref<64x910xf32, #tpu.memory_space<vmem>>, vector<64x17xf32>,
    %87 = vector.extract_strided_slice %82 {offsets = [128, 0], sizes = [64, 17], strides = [1, 1]} : vector<448x17xf32> to vector<64x17xf32>
    %c0_65 = arith.constant 0 : index
    %c34 = arith.constant 34 : index
    %88 = vector.load %arg20[%c0_65, %c34] : memref<64x910xf32, #tpu.memory_space<vmem>>, vector<64x17xf32>
    tpu.vector_store %arg20[%c0_65, %c34], %87 {strides = array<i32>} : memref<64x910xf32, #tpu.memory_space<vmem>>, vector<64x17xf32>,
    %89 = vector.extract_strided_slice %82 {offsets = [192, 0], sizes = [64, 17], strides = [1, 1]} : vector<448x17xf32> to vector<64x17xf32>
    %c0_66 = arith.constant 0 : index
    %c51 = arith.constant 51 : index
    %90 = vector.load %arg20[%c0_66, %c51] : memref<64x910xf32, #tpu.memory_space<vmem>>, vector<64x17xf32>
    tpu.vector_store %arg20[%c0_66, %c51], %89 {strides = array<i32>} : memref<64x910xf32, #tpu.memory_space<vmem>>, vector<64x17xf32>,
    %91 = vector.extract_strided_slice %82 {offsets = [256, 0], sizes = [64, 17], strides = [1, 1]} : vector<448x17xf32> to vector<64x17xf32>
    %c0_67 = arith.constant 0 : index
    %c68 = arith.constant 68 : index
    %92 = vector.load %arg20[%c0_67, %c68] : memref<64x910xf32, #tpu.memory_space<vmem>>, vector<64x17xf32>
    tpu.vector_store %arg20[%c0_67, %c68], %91 {strides = array<i32>} : memref<64x910xf32, #tpu.memory_space<vmem>>, vector<64x17xf32>,
    %93 = vector.extract_strided_slice %82 {offsets = [320, 0], sizes = [64, 17], strides = [1, 1]} : vector<448x17xf32> to vector<64x17xf32>
    %c0_68 = arith.constant 0 : index
    %c85 = arith.constant 85 : index
    %94 = vector.load %arg20[%c0_68, %c85] : memref<64x910xf32, #tpu.memory_space<vmem>>, vector<64x17xf32>
    tpu.vector_store %arg20[%c0_68, %c85], %93 {strides = array<i32>} : memref<64x910xf32, #tpu.memory_space<vmem>>, vector<64x17xf32>,
    %95 = vector.extract_strided_slice %82 {offsets = [384, 0], sizes = [64, 17], strides = [1, 1]} : vector<448x17xf32> to vector<64x17xf32>
    %c0_69 = arith.constant 0 : index
    %c102 = arith.constant 102 : index
    %96 = vector.load %arg20[%c0_69, %c102] : memref<64x910xf32, #tpu.memory_space<vmem>>, vector<64x17xf32>
    tpu.vector_store %arg20[%c0_69, %c102], %95 {strides = array<i32>} : memref<64x910xf32, #tpu.memory_space<vmem>>, vector<64x17xf32>,
    %c0_70 = arith.constant 0 : index
    %c0_71 = arith.constant 0 : index
    %97 = vector.load %arg20[%c0_70, %c0_71] : memref<64x910xf32, #tpu.memory_space<vmem>>, vector<64x119xf32>
    %98 = arith.truncf %97 : vector<64x119xf32> to vector<64x119xbf16>
    %c0_72 = arith.constant 0 : index
    %c0_73 = arith.constant 0 : index
    %99 = vector.load %arg10[%c0_72, %c0_73] : memref<119x9xbf16, #tpu.memory_space<vmem>>, vector<119x9xbf16>
    %cst_74 = arith.constant dense<0.000000e+00> : vector<64x9xf32>
    %100 = tpu.matmul %98, %99, %cst_74 {dimension_numbers = #tpu.dot_dimension_numbers<[1], [0], [0], [1], [0, 0, 1, 1], [], []>} : vector<64x119xbf16>, vector<119x9xbf16>, vector<64x9xf32> -> vector<64x9xf32>
    %c0_75 = arith.constant 0 : index
    %c3 = arith.constant 3 : index
    %101 = vector.load %arg2[%c0_75, %c3] : memref<64x8xf32, #tpu.memory_space<vmem>>, vector<64x1xf32>
    %102 = vector.broadcast %101 : vector<64x1xf32> to vector<64x9xf32>
    %103 = arith.addf %100, %102 : vector<64x9xf32>
    %cst_76 = arith.constant 0.000000e+00 : f32
    %104 = vector.broadcast %cst_76 : f32 to vector<64x9xf32>
    %105 = arith.maximumf %103, %104 : vector<64x9xf32>
    %c0_77 = arith.constant 0 : index
    %c0_78 = arith.constant 0 : index
    %106 = vector.load %arg11[%c0_77, %c0_78] : memref<224x64xbf16, #tpu.memory_space<vmem>>, vector<224x64xbf16>
    %107 = arith.truncf %105 : vector<64x9xf32> to vector<64x9xbf16>
    %cst_79 = arith.constant dense<0.000000e+00> : vector<224x9xf32>
    %108 = tpu.matmul %106, %107, %cst_79 {dimension_numbers = #tpu.dot_dimension_numbers<[1], [0], [0], [1], [0, 0, 1, 1], [], []>} : vector<224x64xbf16>, vector<64x9xbf16>, vector<224x9xf32> -> vector<224x9xf32>
    %109 = vector.extract_strided_slice %108 {offsets = [0, 0], sizes = [32, 9], strides = [1, 1]} : vector<224x9xf32> to vector<32x9xf32>
    %c0_80 = arith.constant 0 : index
    %c0_81 = arith.constant 0 : index
    %110 = vector.load %arg20[%c0_80, %c0_81] : memref<64x910xf32, #tpu.memory_space<vmem>>, vector<32x9xf32>
    tpu.vector_store %arg20[%c0_80, %c0_81], %109 {strides = array<i32>} : memref<64x910xf32, #tpu.memory_space<vmem>>, vector<32x9xf32>,
    %111 = vector.extract_strided_slice %108 {offsets = [32, 0], sizes = [32, 9], strides = [1, 1]} : vector<224x9xf32> to vector<32x9xf32>
    %c0_82 = arith.constant 0 : index
    %c9 = arith.constant 9 : index
    %112 = vector.load %arg20[%c0_82, %c9] : memref<64x910xf32, #tpu.memory_space<vmem>>, vector<32x9xf32>
    tpu.vector_store %arg20[%c0_82, %c9], %111 {strides = array<i32>} : memref<64x910xf32, #tpu.memory_space<vmem>>, vector<32x9xf32>,
    %113 = vector.extract_strided_slice %108 {offsets = [64, 0], sizes = [32, 9], strides = [1, 1]} : vector<224x9xf32> to vector<32x9xf32>
    %c0_83 = arith.constant 0 : index
    %c18 = arith.constant 18 : index
    %114 = vector.load %arg20[%c0_83, %c18] : memref<64x910xf32, #tpu.memory_space<vmem>>, vector<32x9xf32>
    tpu.vector_store %arg20[%c0_83, %c18], %113 {strides = array<i32>} : memref<64x910xf32, #tpu.memory_space<vmem>>, vector<32x9xf32>,
    %115 = vector.extract_strided_slice %108 {offsets = [96, 0], sizes = [32, 9], strides = [1, 1]} : vector<224x9xf32> to vector<32x9xf32>
    %c0_84 = arith.constant 0 : index
    %c27 = arith.constant 27 : index
    %116 = vector.load %arg20[%c0_84, %c27] : memref<64x910xf32, #tpu.memory_space<vmem>>, vector<32x9xf32>
    tpu.vector_store %arg20[%c0_84, %c27], %115 {strides = array<i32>} : memref<64x910xf32, #tpu.memory_space<vmem>>, vector<32x9xf32>,
    %117 = vector.extract_strided_slice %108 {offsets = [128, 0], sizes = [32, 9], strides = [1, 1]} : vector<224x9xf32> to vector<32x9xf32>
    %c0_85 = arith.constant 0 : index
    %c36 = arith.constant 36 : index
    %118 = vector.load %arg20[%c0_85, %c36] : memref<64x910xf32, #tpu.memory_space<vmem>>, vector<32x9xf32>
    tpu.vector_store %arg20[%c0_85, %c36], %117 {strides = array<i32>} : memref<64x910xf32, #tpu.memory_space<vmem>>, vector<32x9xf32>,
    %119 = vector.extract_strided_slice %108 {offsets = [160, 0], sizes = [32, 9], strides = [1, 1]} : vector<224x9xf32> to vector<32x9xf32>
    %c0_86 = arith.constant 0 : index
    %c45 = arith.constant 45 : index
    %120 = vector.load %arg20[%c0_86, %c45] : memref<64x910xf32, #tpu.memory_space<vmem>>, vector<32x9xf32>
    tpu.vector_store %arg20[%c0_86, %c45], %119 {strides = array<i32>} : memref<64x910xf32, #tpu.memory_space<vmem>>, vector<32x9xf32>,
    %121 = vector.extract_strided_slice %108 {offsets = [192, 0], sizes = [32, 9], strides = [1, 1]} : vector<224x9xf32> to vector<32x9xf32>
    %c0_87 = arith.constant 0 : index
    %c54 = arith.constant 54 : index
    %122 = vector.load %arg20[%c0_87, %c54] : memref<64x910xf32, #tpu.memory_space<vmem>>, vector<32x9xf32>
    tpu.vector_store %arg20[%c0_87, %c54], %121 {strides = array<i32>} : memref<64x910xf32, #tpu.memory_space<vmem>>, vector<32x9xf32>,
    %c0_88 = arith.constant 0 : index
    %c0_89 = arith.constant 0 : index
    %123 = vector.load %arg20[%c0_88, %c0_89] : memref<64x910xf32, #tpu.memory_space<vmem>>, vector<32x63xf32>
    %124 = arith.truncf %123 : vector<32x63xf32> to vector<32x63xbf16>
    %c0_90 = arith.constant 0 : index
    %c0_91 = arith.constant 0 : index
    %125 = vector.load %arg12[%c0_90, %c0_91] : memref<63x17xbf16, #tpu.memory_space<vmem>>, vector<63x17xbf16>
    %cst_92 = arith.constant dense<0.000000e+00> : vector<32x17xf32>
    %126 = tpu.matmul %124, %125, %cst_92 {dimension_numbers = #tpu.dot_dimension_numbers<[1], [0], [0], [1], [0, 0, 1, 1], [], []>} : vector<32x63xbf16>, vector<63x17xbf16>, vector<32x17xf32> -> vector<32x17xf32>
    %c0_93 = arith.constant 0 : index
    %c4 = arith.constant 4 : index
    %127 = vector.load %arg2[%c0_93, %c4] : memref<64x8xf32, #tpu.memory_space<vmem>>, vector<32x1xf32>
    %128 = vector.broadcast %127 : vector<32x1xf32> to vector<32x17xf32>
    %129 = arith.addf %126, %128 : vector<32x17xf32>
    %cst_94 = arith.constant 0.000000e+00 : f32
    %130 = vector.broadcast %cst_94 : f32 to vector<32x17xf32>
    %131 = arith.maximumf %129, %130 : vector<32x17xf32>
    %c0_95 = arith.constant 0 : index
    %c0_96 = arith.constant 0 : index
    %132 = vector.load %arg13[%c0_95, %c0_96] : memref<112x32xbf16, #tpu.memory_space<vmem>>, vector<112x32xbf16>
    %133 = arith.truncf %131 : vector<32x17xf32> to vector<32x17xbf16>
    %cst_97 = arith.constant dense<0.000000e+00> : vector<112x17xf32>
    %134 = tpu.matmul %132, %133, %cst_97 {dimension_numbers = #tpu.dot_dimension_numbers<[1], [0], [0], [1], [0, 0, 1, 1], [], []>} : vector<112x32xbf16>, vector<32x17xbf16>, vector<112x17xf32> -> vector<112x17xf32>
    %135 = vector.extract_strided_slice %134 {offsets = [0, 0], sizes = [16, 17], strides = [1, 1]} : vector<112x17xf32> to vector<16x17xf32>
    %c0_98 = arith.constant 0 : index
    %c0_99 = arith.constant 0 : index
    %136 = vector.load %arg20[%c0_98, %c0_99] : memref<64x910xf32, #tpu.memory_space<vmem>>, vector<16x17xf32>
    tpu.vector_store %arg20[%c0_98, %c0_99], %135 {strides = array<i32>} : memref<64x910xf32, #tpu.memory_space<vmem>>, vector<16x17xf32>,
    %137 = vector.extract_strided_slice %134 {offsets = [16, 0], sizes = [16, 17], strides = [1, 1]} : vector<112x17xf32> to vector<16x17xf32>
    %c0_100 = arith.constant 0 : index
    %c17_101 = arith.constant 17 : index
    %138 = vector.load %arg20[%c0_100, %c17_101] : memref<64x910xf32, #tpu.memory_space<vmem>>, vector<16x17xf32>
    tpu.vector_store %arg20[%c0_100, %c17_101], %137 {strides = array<i32>} : memref<64x910xf32, #tpu.memory_space<vmem>>, vector<16x17xf32>,
    %139 = vector.extract_strided_slice %134 {offsets = [32, 0], sizes = [16, 17], strides = [1, 1]} : vector<112x17xf32> to vector<16x17xf32>
    %c0_102 = arith.constant 0 : index
    %c34_103 = arith.constant 34 : index
    %140 = vector.load %arg20[%c0_102, %c34_103] : memref<64x910xf32, #tpu.memory_space<vmem>>, vector<16x17xf32>
    tpu.vector_store %arg20[%c0_102, %c34_103], %139 {strides = array<i32>} : memref<64x910xf32, #tpu.memory_space<vmem>>, vector<16x17xf32>,
    %141 = vector.extract_strided_slice %134 {offsets = [48, 0], sizes = [16, 17], strides = [1, 1]} : vector<112x17xf32> to vector<16x17xf32>
    %c0_104 = arith.constant 0 : index
    %c51_105 = arith.constant 51 : index
    %142 = vector.load %arg20[%c0_104, %c51_105] : memref<64x910xf32, #tpu.memory_space<vmem>>, vector<16x17xf32>
    tpu.vector_store %arg20[%c0_104, %c51_105], %141 {strides = array<i32>} : memref<64x910xf32, #tpu.memory_space<vmem>>, vector<16x17xf32>,
    %143 = vector.extract_strided_slice %134 {offsets = [64, 0], sizes = [16, 17], strides = [1, 1]} : vector<112x17xf32> to vector<16x17xf32>
    %c0_106 = arith.constant 0 : index
    %c68_107 = arith.constant 68 : index
    %144 = vector.load %arg20[%c0_106, %c68_107] : memref<64x910xf32, #tpu.memory_space<vmem>>, vector<16x17xf32>
    tpu.vector_store %arg20[%c0_106, %c68_107], %143 {strides = array<i32>} : memref<64x910xf32, #tpu.memory_space<vmem>>, vector<16x17xf32>,
    %145 = vector.extract_strided_slice %134 {offsets = [80, 0], sizes = [16, 17], strides = [1, 1]} : vector<112x17xf32> to vector<16x17xf32>
    %c0_108 = arith.constant 0 : index
    %c85_109 = arith.constant 85 : index
    %146 = vector.load %arg20[%c0_108, %c85_109] : memref<64x910xf32, #tpu.memory_space<vmem>>, vector<16x17xf32>
    tpu.vector_store %arg20[%c0_108, %c85_109], %145 {strides = array<i32>} : memref<64x910xf32, #tpu.memory_space<vmem>>, vector<16x17xf32>,
    %147 = vector.extract_strided_slice %134 {offsets = [96, 0], sizes = [16, 17], strides = [1, 1]} : vector<112x17xf32> to vector<16x17xf32>
    %c0_110 = arith.constant 0 : index
    %c102_111 = arith.constant 102 : index
    %148 = vector.load %arg20[%c0_110, %c102_111] : memref<64x910xf32, #tpu.memory_space<vmem>>, vector<16x17xf32>
    tpu.vector_store %arg20[%c0_110, %c102_111], %147 {strides = array<i32>} : memref<64x910xf32, #tpu.memory_space<vmem>>, vector<16x17xf32>,
    %c0_112 = arith.constant 0 : index
    %c0_113 = arith.constant 0 : index
    %149 = vector.load %arg20[%c0_112, %c0_113] : memref<64x910xf32, #tpu.memory_space<vmem>>, vector<16x119xf32>
    %150 = arith.truncf %149 : vector<16x119xf32> to vector<16x119xbf16>
    %c0_114 = arith.constant 0 : index
    %c0_115 = arith.constant 0 : index
    %151 = vector.load %arg14[%c0_114, %c0_115] : memref<119x33xbf16, #tpu.memory_space<vmem>>, vector<119x33xbf16>
    %cst_116 = arith.constant dense<0.000000e+00> : vector<16x33xf32>
    %152 = tpu.matmul %150, %151, %cst_116 {dimension_numbers = #tpu.dot_dimension_numbers<[1], [0], [0], [1], [0, 0, 1, 1], [], []>} : vector<16x119xbf16>, vector<119x33xbf16>, vector<16x33xf32> -> vector<16x33xf32>
    %c0_117 = arith.constant 0 : index
    %c5 = arith.constant 5 : index
    %153 = vector.load %arg2[%c0_117, %c5] : memref<64x8xf32, #tpu.memory_space<vmem>>, vector<16x1xf32>
    %154 = vector.broadcast %153 : vector<16x1xf32> to vector<16x33xf32>
    %155 = arith.addf %152, %154 : vector<16x33xf32>
    %cst_118 = arith.constant 0.000000e+00 : f32
    %156 = vector.broadcast %cst_118 : f32 to vector<16x33xf32>
    %157 = arith.maximumf %155, %156 : vector<16x33xf32>
    %c0_119 = arith.constant 0 : index
    %c0_120 = arith.constant 0 : index
    %158 = vector.load %arg15[%c0_119, %c0_120] : memref<56x16xbf16, #tpu.memory_space<vmem>>, vector<56x16xbf16>
    %159 = arith.truncf %157 : vector<16x33xf32> to vector<16x33xbf16>
    %cst_121 = arith.constant dense<0.000000e+00> : vector<56x33xf32>
    %160 = tpu.matmul %158, %159, %cst_121 {dimension_numbers = #tpu.dot_dimension_numbers<[1], [0], [0], [1], [0, 0, 1, 1], [], []>} : vector<56x16xbf16>, vector<16x33xbf16>, vector<56x33xf32> -> vector<56x33xf32>
    %161 = vector.extract_strided_slice %160 {offsets = [0, 0], sizes = [8, 33], strides = [1, 1]} : vector<56x33xf32> to vector<8x33xf32>
    %c0_122 = arith.constant 0 : index
    %c0_123 = arith.constant 0 : index
    %162 = vector.load %arg20[%c0_122, %c0_123] : memref<64x910xf32, #tpu.memory_space<vmem>>, vector<8x33xf32>
    tpu.vector_store %arg20[%c0_122, %c0_123], %161 {strides = array<i32>} : memref<64x910xf32, #tpu.memory_space<vmem>>, vector<8x33xf32>,
    %163 = vector.extract_strided_slice %160 {offsets = [8, 0], sizes = [8, 33], strides = [1, 1]} : vector<56x33xf32> to vector<8x33xf32>
    %c0_124 = arith.constant 0 : index
    %c33_125 = arith.constant 33 : index
    %164 = vector.load %arg20[%c0_124, %c33_125] : memref<64x910xf32, #tpu.memory_space<vmem>>, vector<8x33xf32>
    tpu.vector_store %arg20[%c0_124, %c33_125], %163 {strides = array<i32>} : memref<64x910xf32, #tpu.memory_space<vmem>>, vector<8x33xf32>,
    %165 = vector.extract_strided_slice %160 {offsets = [16, 0], sizes = [8, 33], strides = [1, 1]} : vector<56x33xf32> to vector<8x33xf32>
    %c0_126 = arith.constant 0 : index
    %c66_127 = arith.constant 66 : index
    %166 = vector.load %arg20[%c0_126, %c66_127] : memref<64x910xf32, #tpu.memory_space<vmem>>, vector<8x33xf32>
    tpu.vector_store %arg20[%c0_126, %c66_127], %165 {strides = array<i32>} : memref<64x910xf32, #tpu.memory_space<vmem>>, vector<8x33xf32>,
    %167 = vector.extract_strided_slice %160 {offsets = [24, 0], sizes = [8, 33], strides = [1, 1]} : vector<56x33xf32> to vector<8x33xf32>
    %c0_128 = arith.constant 0 : index
    %c99_129 = arith.constant 99 : index
    %168 = vector.load %arg20[%c0_128, %c99_129] : memref<64x910xf32, #tpu.memory_space<vmem>>, vector<8x33xf32>
    tpu.vector_store %arg20[%c0_128, %c99_129], %167 {strides = array<i32>} : memref<64x910xf32, #tpu.memory_space<vmem>>, vector<8x33xf32>,
    %169 = vector.extract_strided_slice %160 {offsets = [32, 0], sizes = [8, 33], strides = [1, 1]} : vector<56x33xf32> to vector<8x33xf32>
    %c0_130 = arith.constant 0 : index
    %c132_131 = arith.constant 132 : index
    %170 = vector.load %arg20[%c0_130, %c132_131] : memref<64x910xf32, #tpu.memory_space<vmem>>, vector<8x33xf32>
    tpu.vector_store %arg20[%c0_130, %c132_131], %169 {strides = array<i32>} : memref<64x910xf32, #tpu.memory_space<vmem>>, vector<8x33xf32>,
    %171 = vector.extract_strided_slice %160 {offsets = [40, 0], sizes = [8, 33], strides = [1, 1]} : vector<56x33xf32> to vector<8x33xf32>
    %c0_132 = arith.constant 0 : index
    %c165_133 = arith.constant 165 : index
    %172 = vector.load %arg20[%c0_132, %c165_133] : memref<64x910xf32, #tpu.memory_space<vmem>>, vector<8x33xf32>
    tpu.vector_store %arg20[%c0_132, %c165_133], %171 {strides = array<i32>} : memref<64x910xf32, #tpu.memory_space<vmem>>, vector<8x33xf32>,
    %173 = vector.extract_strided_slice %160 {offsets = [48, 0], sizes = [8, 33], strides = [1, 1]} : vector<56x33xf32> to vector<8x33xf32>
    %c0_134 = arith.constant 0 : index
    %c198_135 = arith.constant 198 : index
    %174 = vector.load %arg20[%c0_134, %c198_135] : memref<64x910xf32, #tpu.memory_space<vmem>>, vector<8x33xf32>
    tpu.vector_store %arg20[%c0_134, %c198_135], %173 {strides = array<i32>} : memref<64x910xf32, #tpu.memory_space<vmem>>, vector<8x33xf32>,
    %c0_136 = arith.constant 0 : index
    %c0_137 = arith.constant 0 : index
    %175 = vector.load %arg20[%c0_136, %c0_137] : memref<64x910xf32, #tpu.memory_space<vmem>>, vector<8x231xf32>
    %176 = arith.truncf %175 : vector<8x231xf32> to vector<8x231xbf16>
    %c0_138 = arith.constant 0 : index
    %c0_139 = arith.constant 0 : index
    %177 = vector.load %arg16[%c0_138, %c0_139] : memref<231x65xbf16, #tpu.memory_space<vmem>>, vector<231x65xbf16>
    %cst_140 = arith.constant dense<0.000000e+00> : vector<8x65xf32>
    %178 = tpu.matmul %176, %177, %cst_140 {dimension_numbers = #tpu.dot_dimension_numbers<[1], [0], [0], [1], [0, 0, 1, 1], [], []>} : vector<8x231xbf16>, vector<231x65xbf16>, vector<8x65xf32> -> vector<8x65xf32>
    %c0_141 = arith.constant 0 : index
    %c6 = arith.constant 6 : index
    %179 = vector.load %arg2[%c0_141, %c6] : memref<64x8xf32, #tpu.memory_space<vmem>>, vector<8x1xf32>
    %180 = vector.broadcast %179 : vector<8x1xf32> to vector<8x65xf32>
    %181 = arith.addf %178, %180 : vector<8x65xf32>
    %cst_142 = arith.constant 0.000000e+00 : f32
    %182 = vector.broadcast %cst_142 : f32 to vector<8x65xf32>
    %183 = arith.maximumf %181, %182 : vector<8x65xf32>
    %c0_143 = arith.constant 0 : index
    %c0_144 = arith.constant 0 : index
    %184 = vector.load %arg17[%c0_143, %c0_144] : memref<56x8xbf16, #tpu.memory_space<vmem>>, vector<56x8xbf16>
    %185 = arith.truncf %183 : vector<8x65xf32> to vector<8x65xbf16>
    %cst_145 = arith.constant dense<0.000000e+00> : vector<56x65xf32>
    %186 = tpu.matmul %184, %185, %cst_145 {dimension_numbers = #tpu.dot_dimension_numbers<[1], [0], [0], [1], [0, 0, 1, 1], [], []>} : vector<56x8xbf16>, vector<8x65xbf16>, vector<56x65xf32> -> vector<56x65xf32>
    %187 = vector.extract_strided_slice %186 {offsets = [0, 0], sizes = [8, 65], strides = [1, 1]} : vector<56x65xf32> to vector<8x65xf32>
    %c0_146 = arith.constant 0 : index
    %c0_147 = arith.constant 0 : index
    %188 = vector.load %arg20[%c0_146, %c0_147] : memref<64x910xf32, #tpu.memory_space<vmem>>, vector<8x65xf32>
    tpu.vector_store %arg20[%c0_146, %c0_147], %187 {strides = array<i32>} : memref<64x910xf32, #tpu.memory_space<vmem>>, vector<8x65xf32>,
    %189 = vector.extract_strided_slice %186 {offsets = [8, 0], sizes = [8, 65], strides = [1, 1]} : vector<56x65xf32> to vector<8x65xf32>
    %c0_148 = arith.constant 0 : index
    %c65_149 = arith.constant 65 : index
    %190 = vector.load %arg20[%c0_148, %c65_149] : memref<64x910xf32, #tpu.memory_space<vmem>>, vector<8x65xf32>
    tpu.vector_store %arg20[%c0_148, %c65_149], %189 {strides = array<i32>} : memref<64x910xf32, #tpu.memory_space<vmem>>, vector<8x65xf32>,
    %191 = vector.extract_strided_slice %186 {offsets = [16, 0], sizes = [8, 65], strides = [1, 1]} : vector<56x65xf32> to vector<8x65xf32>
    %c0_150 = arith.constant 0 : index
    %c130_151 = arith.constant 130 : index
    %192 = vector.load %arg20[%c0_150, %c130_151] : memref<64x910xf32, #tpu.memory_space<vmem>>, vector<8x65xf32>
    tpu.vector_store %arg20[%c0_150, %c130_151], %191 {strides = array<i32>} : memref<64x910xf32, #tpu.memory_space<vmem>>, vector<8x65xf32>,
    %193 = vector.extract_strided_slice %186 {offsets = [24, 0], sizes = [8, 65], strides = [1, 1]} : vector<56x65xf32> to vector<8x65xf32>
    %c0_152 = arith.constant 0 : index
    %c195_153 = arith.constant 195 : index
    %194 = vector.load %arg20[%c0_152, %c195_153] : memref<64x910xf32, #tpu.memory_space<vmem>>, vector<8x65xf32>
    tpu.vector_store %arg20[%c0_152, %c195_153], %193 {strides = array<i32>} : memref<64x910xf32, #tpu.memory_space<vmem>>, vector<8x65xf32>,
    %195 = vector.extract_strided_slice %186 {offsets = [32, 0], sizes = [8, 65], strides = [1, 1]} : vector<56x65xf32> to vector<8x65xf32>
    %c0_154 = arith.constant 0 : index
    %c260_155 = arith.constant 260 : index
    %196 = vector.load %arg20[%c0_154, %c260_155] : memref<64x910xf32, #tpu.memory_space<vmem>>, vector<8x65xf32>
    tpu.vector_store %arg20[%c0_154, %c260_155], %195 {strides = array<i32>} : memref<64x910xf32, #tpu.memory_space<vmem>>, vector<8x65xf32>,
    %197 = vector.extract_strided_slice %186 {offsets = [40, 0], sizes = [8, 65], strides = [1, 1]} : vector<56x65xf32> to vector<8x65xf32>
    %c0_156 = arith.constant 0 : index
    %c325_157 = arith.constant 325 : index
    %198 = vector.load %arg20[%c0_156, %c325_157] : memref<64x910xf32, #tpu.memory_space<vmem>>, vector<8x65xf32>
    tpu.vector_store %arg20[%c0_156, %c325_157], %197 {strides = array<i32>} : memref<64x910xf32, #tpu.memory_space<vmem>>, vector<8x65xf32>,
    %199 = vector.extract_strided_slice %186 {offsets = [48, 0], sizes = [8, 65], strides = [1, 1]} : vector<56x65xf32> to vector<8x65xf32>
    %c0_158 = arith.constant 0 : index
    %c390_159 = arith.constant 390 : index
    %200 = vector.load %arg20[%c0_158, %c390_159] : memref<64x910xf32, #tpu.memory_space<vmem>>, vector<8x65xf32>
    tpu.vector_store %arg20[%c0_158, %c390_159], %199 {strides = array<i32>} : memref<64x910xf32, #tpu.memory_space<vmem>>, vector<8x65xf32>,
    %c0_160 = arith.constant 0 : index
    %c0_161 = arith.constant 0 : index
    %201 = vector.load %arg20[%c0_160, %c0_161] : memref<64x910xf32, #tpu.memory_space<vmem>>, vector<8x455xf32>
    %202 = arith.truncf %201 : vector<8x455xf32> to vector<8x455xbf16>
    %c0_162 = arith.constant 0 : index
    %c0_163 = arith.constant 0 : index
    %203 = vector.load %arg18[%c0_162, %c0_163] : memref<455x130xbf16, #tpu.memory_space<vmem>>, vector<455x130xbf16>
    %cst_164 = arith.constant dense<0.000000e+00> : vector<8x130xf32>
    %204 = tpu.matmul %202, %203, %cst_164 {dimension_numbers = #tpu.dot_dimension_numbers<[1], [0], [0], [1], [0, 0, 1, 1], [], []>} : vector<8x455xbf16>, vector<455x130xbf16>, vector<8x130xf32> -> vector<8x130xf32>
    %c0_165 = arith.constant 0 : index
    %c7 = arith.constant 7 : index
    %205 = vector.load %arg2[%c0_165, %c7] : memref<64x8xf32, #tpu.memory_space<vmem>>, vector<8x1xf32>
    %206 = vector.broadcast %205 : vector<8x1xf32> to vector<8x130xf32>
    %207 = arith.addf %204, %206 : vector<8x130xf32>
    %208 = vector.extract_strided_slice %207 {offsets = [0, 0], sizes = [1, 130], strides = [1, 1]} : vector<8x130xf32> to vector<1x130xf32>
    %c0_166 = arith.constant 0 : index
    %c0_167 = arith.constant 0 : index
    %c0_168 = arith.constant 0 : index
    %209 = vector.load %arg19[%c0_166, %c0_167, %c0_168] : memref<2x1x130xf32, #tpu.memory_space<vmem>>, vector<1x1x130xf32>
    %210 = vector.shape_cast %209 : vector<1x1x130xf32> to vector<1x130xf32>
    %211 = vector.shape_cast %208 : vector<1x130xf32> to vector<1x1x130xf32>
    tpu.vector_store %arg19[%c0_166, %c0_167, %c0_168], %211 {strides = array<i32>} : memref<2x1x130xf32, #tpu.memory_space<vmem>>, vector<1x1x130xf32>,
    %c1_169 = arith.constant 1 : index
    %c0_170 = arith.constant 0 : index
    %c0_171 = arith.constant 0 : index
    %212 = vector.load %arg1[%c1_169, %c0_170, %c0_171] : memref<2x8x130xf32, #tpu.memory_space<vmem>>, vector<1x8x130xf32>
    %213 = vector.shape_cast %212 : vector<1x8x130xf32> to vector<8x130xf32>
    %c0_172 = arith.constant 0 : index
    %c0_173 = arith.constant 0 : index
    %214 = vector.load %arg3[%c0_172, %c0_173] : memref<56x8xbf16, #tpu.memory_space<vmem>>, vector<56x8xbf16>
    %215 = arith.truncf %213 : vector<8x130xf32> to vector<8x130xbf16>
    %cst_174 = arith.constant dense<0.000000e+00> : vector<56x130xf32>
    %216 = tpu.matmul %214, %215, %cst_174 {dimension_numbers = #tpu.dot_dimension_numbers<[1], [0], [0], [1], [0, 0, 1, 1], [], []>} : vector<56x8xbf16>, vector<8x130xbf16>, vector<56x130xf32> -> vector<56x130xf32>
    %217 = vector.extract_strided_slice %216 {offsets = [0, 0], sizes = [8, 130], strides = [1, 1]} : vector<56x130xf32> to vector<8x130xf32>
    %c0_175 = arith.constant 0 : index
    %c0_176 = arith.constant 0 : index
    %218 = vector.load %arg20[%c0_175, %c0_176] : memref<64x910xf32, #tpu.memory_space<vmem>>, vector<8x130xf32>
    tpu.vector_store %arg20[%c0_175, %c0_176], %217 {strides = array<i32>} : memref<64x910xf32, #tpu.memory_space<vmem>>, vector<8x130xf32>,
    %219 = vector.extract_strided_slice %216 {offsets = [8, 0], sizes = [8, 130], strides = [1, 1]} : vector<56x130xf32> to vector<8x130xf32>
    %c0_177 = arith.constant 0 : index
    %c130_178 = arith.constant 130 : index
    %220 = vector.load %arg20[%c0_177, %c130_178] : memref<64x910xf32, #tpu.memory_space<vmem>>, vector<8x130xf32>
    tpu.vector_store %arg20[%c0_177, %c130_178], %219 {strides = array<i32>} : memref<64x910xf32, #tpu.memory_space<vmem>>, vector<8x130xf32>,
    %221 = vector.extract_strided_slice %216 {offsets = [16, 0], sizes = [8, 130], strides = [1, 1]} : vector<56x130xf32> to vector<8x130xf32>
    %c0_179 = arith.constant 0 : index
    %c260_180 = arith.constant 260 : index
    %222 = vector.load %arg20[%c0_179, %c260_180] : memref<64x910xf32, #tpu.memory_space<vmem>>, vector<8x130xf32>
    tpu.vector_store %arg20[%c0_179, %c260_180], %221 {strides = array<i32>} : memref<64x910xf32, #tpu.memory_space<vmem>>, vector<8x130xf32>,
    %223 = vector.extract_strided_slice %216 {offsets = [24, 0], sizes = [8, 130], strides = [1, 1]} : vector<56x130xf32> to vector<8x130xf32>
    %c0_181 = arith.constant 0 : index
    %c390_182 = arith.constant 390 : index
    %224 = vector.load %arg20[%c0_181, %c390_182] : memref<64x910xf32, #tpu.memory_space<vmem>>, vector<8x130xf32>
    tpu.vector_store %arg20[%c0_181, %c390_182], %223 {strides = array<i32>} : memref<64x910xf32, #tpu.memory_space<vmem>>, vector<8x130xf32>,
    %225 = vector.extract_strided_slice %216 {offsets = [32, 0], sizes = [8, 130], strides = [1, 1]} : vector<56x130xf32> to vector<8x130xf32>
    %c0_183 = arith.constant 0 : index
    %c520_184 = arith.constant 520 : index
    %226 = vector.load %arg20[%c0_183, %c520_184] : memref<64x910xf32, #tpu.memory_space<vmem>>, vector<8x130xf32>
    tpu.vector_store %arg20[%c0_183, %c520_184], %225 {strides = array<i32>} : memref<64x910xf32, #tpu.memory_space<vmem>>, vector<8x130xf32>,
    %227 = vector.extract_strided_slice %216 {offsets = [40, 0], sizes = [8, 130], strides = [1, 1]} : vector<56x130xf32> to vector<8x130xf32>
    %c0_185 = arith.constant 0 : index
    %c650_186 = arith.constant 650 : index
    %228 = vector.load %arg20[%c0_185, %c650_186] : memref<64x910xf32, #tpu.memory_space<vmem>>, vector<8x130xf32>
    tpu.vector_store %arg20[%c0_185, %c650_186], %227 {strides = array<i32>} : memref<64x910xf32, #tpu.memory_space<vmem>>, vector<8x130xf32>,
    %229 = vector.extract_strided_slice %216 {offsets = [48, 0], sizes = [8, 130], strides = [1, 1]} : vector<56x130xf32> to vector<8x130xf32>
    %c0_187 = arith.constant 0 : index
    %c780_188 = arith.constant 780 : index
    %230 = vector.load %arg20[%c0_187, %c780_188] : memref<64x910xf32, #tpu.memory_space<vmem>>, vector<8x130xf32>
    tpu.vector_store %arg20[%c0_187, %c780_188], %229 {strides = array<i32>} : memref<64x910xf32, #tpu.memory_space<vmem>>, vector<8x130xf32>,
    %c0_189 = arith.constant 0 : index
    %c0_190 = arith.constant 0 : index
    %231 = vector.load %arg20[%c0_189, %c0_190] : memref<64x910xf32, #tpu.memory_space<vmem>>, vector<8x910xf32>
    %232 = arith.truncf %231 : vector<8x910xf32> to vector<8x910xbf16>
    %c0_191 = arith.constant 0 : index
    %c0_192 = arith.constant 0 : index
    %233 = vector.load %arg4[%c0_191, %c0_192] : memref<910x65xbf16, #tpu.memory_space<vmem>>, vector<910x65xbf16>
    %cst_193 = arith.constant dense<0.000000e+00> : vector<8x65xf32>
    %234 = tpu.matmul %232, %233, %cst_193 {dimension_numbers = #tpu.dot_dimension_numbers<[1], [0], [0], [1], [0, 0, 1, 1], [], []>} : vector<8x910xbf16>, vector<910x65xbf16>, vector<8x65xf32> -> vector<8x65xf32>
    %c0_194 = arith.constant 0 : index
    %c0_195 = arith.constant 0 : index
    %235 = vector.load %arg2[%c0_194, %c0_195] : memref<64x8xf32, #tpu.memory_space<vmem>>, vector<8x1xf32>
    %236 = vector.broadcast %235 : vector<8x1xf32> to vector<8x65xf32>
    %237 = arith.addf %234, %236 : vector<8x65xf32>
    %cst_196 = arith.constant 0.000000e+00 : f32
    %238 = vector.broadcast %cst_196 : f32 to vector<8x65xf32>
    %239 = arith.maximumf %237, %238 : vector<8x65xf32>
    %c0_197 = arith.constant 0 : index
    %c0_198 = arith.constant 0 : index
    %240 = vector.load %arg5[%c0_197, %c0_198] : memref<112x8xbf16, #tpu.memory_space<vmem>>, vector<112x8xbf16>
    %241 = arith.truncf %239 : vector<8x65xf32> to vector<8x65xbf16>
    %cst_199 = arith.constant dense<0.000000e+00> : vector<112x65xf32>
    %242 = tpu.matmul %240, %241, %cst_199 {dimension_numbers = #tpu.dot_dimension_numbers<[1], [0], [0], [1], [0, 0, 1, 1], [], []>} : vector<112x8xbf16>, vector<8x65xbf16>, vector<112x65xf32> -> vector<112x65xf32>
    %243 = vector.extract_strided_slice %242 {offsets = [0, 0], sizes = [16, 65], strides = [1, 1]} : vector<112x65xf32> to vector<16x65xf32>
    %c0_200 = arith.constant 0 : index
    %c0_201 = arith.constant 0 : index
    %244 = vector.load %arg20[%c0_200, %c0_201] : memref<64x910xf32, #tpu.memory_space<vmem>>, vector<16x65xf32>
    tpu.vector_store %arg20[%c0_200, %c0_201], %243 {strides = array<i32>} : memref<64x910xf32, #tpu.memory_space<vmem>>, vector<16x65xf32>,
    %245 = vector.extract_strided_slice %242 {offsets = [16, 0], sizes = [16, 65], strides = [1, 1]} : vector<112x65xf32> to vector<16x65xf32>
    %c0_202 = arith.constant 0 : index
    %c65_203 = arith.constant 65 : index
    %246 = vector.load %arg20[%c0_202, %c65_203] : memref<64x910xf32, #tpu.memory_space<vmem>>, vector<16x65xf32>
    tpu.vector_store %arg20[%c0_202, %c65_203], %245 {strides = array<i32>} : memref<64x910xf32, #tpu.memory_space<vmem>>, vector<16x65xf32>,
    %247 = vector.extract_strided_slice %242 {offsets = [32, 0], sizes = [16, 65], strides = [1, 1]} : vector<112x65xf32> to vector<16x65xf32>
    %c0_204 = arith.constant 0 : index
    %c130_205 = arith.constant 130 : index
    %248 = vector.load %arg20[%c0_204, %c130_205] : memref<64x910xf32, #tpu.memory_space<vmem>>, vector<16x65xf32>
    tpu.vector_store %arg20[%c0_204, %c130_205], %247 {strides = array<i32>} : memref<64x910xf32, #tpu.memory_space<vmem>>, vector<16x65xf32>,
    %249 = vector.extract_strided_slice %242 {offsets = [48, 0], sizes = [16, 65], strides = [1, 1]} : vector<112x65xf32> to vector<16x65xf32>
    %c0_206 = arith.constant 0 : index
    %c195_207 = arith.constant 195 : index
    %250 = vector.load %arg20[%c0_206, %c195_207] : memref<64x910xf32, #tpu.memory_space<vmem>>, vector<16x65xf32>
    tpu.vector_store %arg20[%c0_206, %c195_207], %249 {strides = array<i32>} : memref<64x910xf32, #tpu.memory_space<vmem>>, vector<16x65xf32>,
    %251 = vector.extract_strided_slice %242 {offsets = [64, 0], sizes = [16, 65], strides = [1, 1]} : vector<112x65xf32> to vector<16x65xf32>
    %c0_208 = arith.constant 0 : index
    %c260_209 = arith.constant 260 : index
    %252 = vector.load %arg20[%c0_208, %c260_209] : memref<64x910xf32, #tpu.memory_space<vmem>>, vector<16x65xf32>
    tpu.vector_store %arg20[%c0_208, %c260_209], %251 {strides = array<i32>} : memref<64x910xf32, #tpu.memory_space<vmem>>, vector<16x65xf32>,
    %253 = vector.extract_strided_slice %242 {offsets = [80, 0], sizes = [16, 65], strides = [1, 1]} : vector<112x65xf32> to vector<16x65xf32>
    %c0_210 = arith.constant 0 : index
    %c325_211 = arith.constant 325 : index
    %254 = vector.load %arg20[%c0_210, %c325_211] : memref<64x910xf32, #tpu.memory_space<vmem>>, vector<16x65xf32>
    tpu.vector_store %arg20[%c0_210, %c325_211], %253 {strides = array<i32>} : memref<64x910xf32, #tpu.memory_space<vmem>>, vector<16x65xf32>,
    %255 = vector.extract_strided_slice %242 {offsets = [96, 0], sizes = [16, 65], strides = [1, 1]} : vector<112x65xf32> to vector<16x65xf32>
    %c0_212 = arith.constant 0 : index
    %c390_213 = arith.constant 390 : index
    %256 = vector.load %arg20[%c0_212, %c390_213] : memref<64x910xf32, #tpu.memory_space<vmem>>, vector<16x65xf32>
    tpu.vector_store %arg20[%c0_212, %c390_213], %255 {strides = array<i32>} : memref<64x910xf32, #tpu.memory_space<vmem>>, vector<16x65xf32>,
    %c0_214 = arith.constant 0 : index
    %c0_215 = arith.constant 0 : index
    %257 = vector.load %arg20[%c0_214, %c0_215] : memref<64x910xf32, #tpu.memory_space<vmem>>, vector<16x455xf32>
    %258 = arith.truncf %257 : vector<16x455xf32> to vector<16x455xbf16>
    %c0_216 = arith.constant 0 : index
    %c0_217 = arith.constant 0 : index
    %259 = vector.load %arg6[%c0_216, %c0_217] : memref<455x33xbf16, #tpu.memory_space<vmem>>, vector<455x33xbf16>
    %cst_218 = arith.constant dense<0.000000e+00> : vector<16x33xf32>
    %260 = tpu.matmul %258, %259, %cst_218 {dimension_numbers = #tpu.dot_dimension_numbers<[1], [0], [0], [1], [0, 0, 1, 1], [], []>} : vector<16x455xbf16>, vector<455x33xbf16>, vector<16x33xf32> -> vector<16x33xf32>
    %c0_219 = arith.constant 0 : index
    %c1_220 = arith.constant 1 : index
    %261 = vector.load %arg2[%c0_219, %c1_220] : memref<64x8xf32, #tpu.memory_space<vmem>>, vector<16x1xf32>
    %262 = vector.broadcast %261 : vector<16x1xf32> to vector<16x33xf32>
    %263 = arith.addf %260, %262 : vector<16x33xf32>
    %cst_221 = arith.constant 0.000000e+00 : f32
    %264 = vector.broadcast %cst_221 : f32 to vector<16x33xf32>
    %265 = arith.maximumf %263, %264 : vector<16x33xf32>
    %c0_222 = arith.constant 0 : index
    %c0_223 = arith.constant 0 : index
    %266 = vector.load %arg7[%c0_222, %c0_223] : memref<224x16xbf16, #tpu.memory_space<vmem>>, vector<224x16xbf16>
    %267 = arith.truncf %265 : vector<16x33xf32> to vector<16x33xbf16>
    %cst_224 = arith.constant dense<0.000000e+00> : vector<224x33xf32>
    %268 = tpu.matmul %266, %267, %cst_224 {dimension_numbers = #tpu.dot_dimension_numbers<[1], [0], [0], [1], [0, 0, 1, 1], [], []>} : vector<224x16xbf16>, vector<16x33xbf16>, vector<224x33xf32> -> vector<224x33xf32>
    %269 = vector.extract_strided_slice %268 {offsets = [0, 0], sizes = [32, 33], strides = [1, 1]} : vector<224x33xf32> to vector<32x33xf32>
    %c0_225 = arith.constant 0 : index
    %c0_226 = arith.constant 0 : index
    %270 = vector.load %arg20[%c0_225, %c0_226] : memref<64x910xf32, #tpu.memory_space<vmem>>, vector<32x33xf32>
    tpu.vector_store %arg20[%c0_225, %c0_226], %269 {strides = array<i32>} : memref<64x910xf32, #tpu.memory_space<vmem>>, vector<32x33xf32>,
    %271 = vector.extract_strided_slice %268 {offsets = [32, 0], sizes = [32, 33], strides = [1, 1]} : vector<224x33xf32> to vector<32x33xf32>
    %c0_227 = arith.constant 0 : index
    %c33_228 = arith.constant 33 : index
    %272 = vector.load %arg20[%c0_227, %c33_228] : memref<64x910xf32, #tpu.memory_space<vmem>>, vector<32x33xf32>
    tpu.vector_store %arg20[%c0_227, %c33_228], %271 {strides = array<i32>} : memref<64x910xf32, #tpu.memory_space<vmem>>, vector<32x33xf32>,
    %273 = vector.extract_strided_slice %268 {offsets = [64, 0], sizes = [32, 33], strides = [1, 1]} : vector<224x33xf32> to vector<32x33xf32>
    %c0_229 = arith.constant 0 : index
    %c66_230 = arith.constant 66 : index
    %274 = vector.load %arg20[%c0_229, %c66_230] : memref<64x910xf32, #tpu.memory_space<vmem>>, vector<32x33xf32>
    tpu.vector_store %arg20[%c0_229, %c66_230], %273 {strides = array<i32>} : memref<64x910xf32, #tpu.memory_space<vmem>>, vector<32x33xf32>,
    %275 = vector.extract_strided_slice %268 {offsets = [96, 0], sizes = [32, 33], strides = [1, 1]} : vector<224x33xf32> to vector<32x33xf32>
    %c0_231 = arith.constant 0 : index
    %c99_232 = arith.constant 99 : index
    %276 = vector.load %arg20[%c0_231, %c99_232] : memref<64x910xf32, #tpu.memory_space<vmem>>, vector<32x33xf32>
    tpu.vector_store %arg20[%c0_231, %c99_232], %275 {strides = array<i32>} : memref<64x910xf32, #tpu.memory_space<vmem>>, vector<32x33xf32>,
    %277 = vector.extract_strided_slice %268 {offsets = [128, 0], sizes = [32, 33], strides = [1, 1]} : vector<224x33xf32> to vector<32x33xf32>
    %c0_233 = arith.constant 0 : index
    %c132_234 = arith.constant 132 : index
    %278 = vector.load %arg20[%c0_233, %c132_234] : memref<64x910xf32, #tpu.memory_space<vmem>>, vector<32x33xf32>
    tpu.vector_store %arg20[%c0_233, %c132_234], %277 {strides = array<i32>} : memref<64x910xf32, #tpu.memory_space<vmem>>, vector<32x33xf32>,
    %279 = vector.extract_strided_slice %268 {offsets = [160, 0], sizes = [32, 33], strides = [1, 1]} : vector<224x33xf32> to vector<32x33xf32>
    %c0_235 = arith.constant 0 : index
    %c165_236 = arith.constant 165 : index
    %280 = vector.load %arg20[%c0_235, %c165_236] : memref<64x910xf32, #tpu.memory_space<vmem>>, vector<32x33xf32>
    tpu.vector_store %arg20[%c0_235, %c165_236], %279 {strides = array<i32>} : memref<64x910xf32, #tpu.memory_space<vmem>>, vector<32x33xf32>,
    %281 = vector.extract_strided_slice %268 {offsets = [192, 0], sizes = [32, 33], strides = [1, 1]} : vector<224x33xf32> to vector<32x33xf32>
    %c0_237 = arith.constant 0 : index
    %c198_238 = arith.constant 198 : index
    %282 = vector.load %arg20[%c0_237, %c198_238] : memref<64x910xf32, #tpu.memory_space<vmem>>, vector<32x33xf32>
    tpu.vector_store %arg20[%c0_237, %c198_238], %281 {strides = array<i32>} : memref<64x910xf32, #tpu.memory_space<vmem>>, vector<32x33xf32>,
    %c0_239 = arith.constant 0 : index
    %c0_240 = arith.constant 0 : index
    %283 = vector.load %arg20[%c0_239, %c0_240] : memref<64x910xf32, #tpu.memory_space<vmem>>, vector<32x231xf32>
    %284 = arith.truncf %283 : vector<32x231xf32> to vector<32x231xbf16>
    %c0_241 = arith.constant 0 : index
    %c0_242 = arith.constant 0 : index
    %285 = vector.load %arg8[%c0_241, %c0_242] : memref<231x17xbf16, #tpu.memory_space<vmem>>, vector<231x17xbf16>
    %cst_243 = arith.constant dense<0.000000e+00> : vector<32x17xf32>
    %286 = tpu.matmul %284, %285, %cst_243 {dimension_numbers = #tpu.dot_dimension_numbers<[1], [0], [0], [1], [0, 0, 1, 1], [], []>} : vector<32x231xbf16>, vector<231x17xbf16>, vector<32x17xf32> -> vector<32x17xf32>
    %c0_244 = arith.constant 0 : index
    %c2_245 = arith.constant 2 : index
    %287 = vector.load %arg2[%c0_244, %c2_245] : memref<64x8xf32, #tpu.memory_space<vmem>>, vector<32x1xf32>
    %288 = vector.broadcast %287 : vector<32x1xf32> to vector<32x17xf32>
    %289 = arith.addf %286, %288 : vector<32x17xf32>
    %cst_246 = arith.constant 0.000000e+00 : f32
    %290 = vector.broadcast %cst_246 : f32 to vector<32x17xf32>
    %291 = arith.maximumf %289, %290 : vector<32x17xf32>
    %c0_247 = arith.constant 0 : index
    %c0_248 = arith.constant 0 : index
    %292 = vector.load %arg9[%c0_247, %c0_248] : memref<448x32xbf16, #tpu.memory_space<vmem>>, vector<448x32xbf16>
    %293 = arith.truncf %291 : vector<32x17xf32> to vector<32x17xbf16>
    %cst_249 = arith.constant dense<0.000000e+00> : vector<448x17xf32>
    %294 = tpu.matmul %292, %293, %cst_249 {dimension_numbers = #tpu.dot_dimension_numbers<[1], [0], [0], [1], [0, 0, 1, 1], [], []>} : vector<448x32xbf16>, vector<32x17xbf16>, vector<448x17xf32> -> vector<448x17xf32>
    %295 = vector.extract_strided_slice %294 {offsets = [0, 0], sizes = [64, 17], strides = [1, 1]} : vector<448x17xf32> to vector<64x17xf32>
    %c0_250 = arith.constant 0 : index
    %c0_251 = arith.constant 0 : index
    %296 = vector.load %arg20[%c0_250, %c0_251] : memref<64x910xf32, #tpu.memory_space<vmem>>, vector<64x17xf32>
    tpu.vector_store %arg20[%c0_250, %c0_251], %295 {strides = array<i32>} : memref<64x910xf32, #tpu.memory_space<vmem>>, vector<64x17xf32>,
    %297 = vector.extract_strided_slice %294 {offsets = [64, 0], sizes = [64, 17], strides = [1, 1]} : vector<448x17xf32> to vector<64x17xf32>
    %c0_252 = arith.constant 0 : index
    %c17_253 = arith.constant 17 : index
    %298 = vector.load %arg20[%c0_252, %c17_253] : memref<64x910xf32, #tpu.memory_space<vmem>>, vector<64x17xf32>
    tpu.vector_store %arg20[%c0_252, %c17_253], %297 {strides = array<i32>} : memref<64x910xf32, #tpu.memory_space<vmem>>, vector<64x17xf32>,
    %299 = vector.extract_strided_slice %294 {offsets = [128, 0], sizes = [64, 17], strides = [1, 1]} : vector<448x17xf32> to vector<64x17xf32>
    %c0_254 = arith.constant 0 : index
    %c34_255 = arith.constant 34 : index
    %300 = vector.load %arg20[%c0_254, %c34_255] : memref<64x910xf32, #tpu.memory_space<vmem>>, vector<64x17xf32>
    tpu.vector_store %arg20[%c0_254, %c34_255], %299 {strides = array<i32>} : memref<64x910xf32, #tpu.memory_space<vmem>>, vector<64x17xf32>,
    %301 = vector.extract_strided_slice %294 {offsets = [192, 0], sizes = [64, 17], strides = [1, 1]} : vector<448x17xf32> to vector<64x17xf32>
    %c0_256 = arith.constant 0 : index
    %c51_257 = arith.constant 51 : index
    %302 = vector.load %arg20[%c0_256, %c51_257] : memref<64x910xf32, #tpu.memory_space<vmem>>, vector<64x17xf32>
    tpu.vector_store %arg20[%c0_256, %c51_257], %301 {strides = array<i32>} : memref<64x910xf32, #tpu.memory_space<vmem>>, vector<64x17xf32>,
    %303 = vector.extract_strided_slice %294 {offsets = [256, 0], sizes = [64, 17], strides = [1, 1]} : vector<448x17xf32> to vector<64x17xf32>
    %c0_258 = arith.constant 0 : index
    %c68_259 = arith.constant 68 : index
    %304 = vector.load %arg20[%c0_258, %c68_259] : memref<64x910xf32, #tpu.memory_space<vmem>>, vector<64x17xf32>
    tpu.vector_store %arg20[%c0_258, %c68_259], %303 {strides = array<i32>} : memref<64x910xf32, #tpu.memory_space<vmem>>, vector<64x17xf32>,
    %305 = vector.extract_strided_slice %294 {offsets = [320, 0], sizes = [64, 17], strides = [1, 1]} : vector<448x17xf32> to vector<64x17xf32>
    %c0_260 = arith.constant 0 : index
    %c85_261 = arith.constant 85 : index
    %306 = vector.load %arg20[%c0_260, %c85_261] : memref<64x910xf32, #tpu.memory_space<vmem>>, vector<64x17xf32>
    tpu.vector_store %arg20[%c0_260, %c85_261], %305 {strides = array<i32>} : memref<64x910xf32, #tpu.memory_space<vmem>>, vector<64x17xf32>,
    %307 = vector.extract_strided_slice %294 {offsets = [384, 0], sizes = [64, 17], strides = [1, 1]} : vector<448x17xf32> to vector<64x17xf32>
    %c0_262 = arith.constant 0 : index
    %c102_263 = arith.constant 102 : index
    %308 = vector.load %arg20[%c0_262, %c102_263] : memref<64x910xf32, #tpu.memory_space<vmem>>, vector<64x17xf32>
    tpu.vector_store %arg20[%c0_262, %c102_263], %307 {strides = array<i32>} : memref<64x910xf32, #tpu.memory_space<vmem>>, vector<64x17xf32>,
    %c0_264 = arith.constant 0 : index
    %c0_265 = arith.constant 0 : index
    %309 = vector.load %arg20[%c0_264, %c0_265] : memref<64x910xf32, #tpu.memory_space<vmem>>, vector<64x119xf32>
    %310 = arith.truncf %309 : vector<64x119xf32> to vector<64x119xbf16>
    %c0_266 = arith.constant 0 : index
    %c0_267 = arith.constant 0 : index
    %311 = vector.load %arg10[%c0_266, %c0_267] : memref<119x9xbf16, #tpu.memory_space<vmem>>, vector<119x9xbf16>
    %cst_268 = arith.constant dense<0.000000e+00> : vector<64x9xf32>
    %312 = tpu.matmul %310, %311, %cst_268 {dimension_numbers = #tpu.dot_dimension_numbers<[1], [0], [0], [1], [0, 0, 1, 1], [], []>} : vector<64x119xbf16>, vector<119x9xbf16>, vector<64x9xf32> -> vector<64x9xf32>
    %c0_269 = arith.constant 0 : index
    %c3_270 = arith.constant 3 : index
    %313 = vector.load %arg2[%c0_269, %c3_270] : memref<64x8xf32, #tpu.memory_space<vmem>>, vector<64x1xf32>
    %314 = vector.broadcast %313 : vector<64x1xf32> to vector<64x9xf32>
    %315 = arith.addf %312, %314 : vector<64x9xf32>
    %cst_271 = arith.constant 0.000000e+00 : f32
    %316 = vector.broadcast %cst_271 : f32 to vector<64x9xf32>
    %317 = arith.maximumf %315, %316 : vector<64x9xf32>
    %c0_272 = arith.constant 0 : index
    %c0_273 = arith.constant 0 : index
    %318 = vector.load %arg11[%c0_272, %c0_273] : memref<224x64xbf16, #tpu.memory_space<vmem>>, vector<224x64xbf16>
    %319 = arith.truncf %317 : vector<64x9xf32> to vector<64x9xbf16>
    %cst_274 = arith.constant dense<0.000000e+00> : vector<224x9xf32>
    %320 = tpu.matmul %318, %319, %cst_274 {dimension_numbers = #tpu.dot_dimension_numbers<[1], [0], [0], [1], [0, 0, 1, 1], [], []>} : vector<224x64xbf16>, vector<64x9xbf16>, vector<224x9xf32> -> vector<224x9xf32>
    %321 = vector.extract_strided_slice %320 {offsets = [0, 0], sizes = [32, 9], strides = [1, 1]} : vector<224x9xf32> to vector<32x9xf32>
    %c0_275 = arith.constant 0 : index
    %c0_276 = arith.constant 0 : index
    %322 = vector.load %arg20[%c0_275, %c0_276] : memref<64x910xf32, #tpu.memory_space<vmem>>, vector<32x9xf32>
    tpu.vector_store %arg20[%c0_275, %c0_276], %321 {strides = array<i32>} : memref<64x910xf32, #tpu.memory_space<vmem>>, vector<32x9xf32>,
    %323 = vector.extract_strided_slice %320 {offsets = [32, 0], sizes = [32, 9], strides = [1, 1]} : vector<224x9xf32> to vector<32x9xf32>
    %c0_277 = arith.constant 0 : index
    %c9_278 = arith.constant 9 : index
    %324 = vector.load %arg20[%c0_277, %c9_278] : memref<64x910xf32, #tpu.memory_space<vmem>>, vector<32x9xf32>
    tpu.vector_store %arg20[%c0_277, %c9_278], %323 {strides = array<i32>} : memref<64x910xf32, #tpu.memory_space<vmem>>, vector<32x9xf32>,
    %325 = vector.extract_strided_slice %320 {offsets = [64, 0], sizes = [32, 9], strides = [1, 1]} : vector<224x9xf32> to vector<32x9xf32>
    %c0_279 = arith.constant 0 : index
    %c18_280 = arith.constant 18 : index
    %326 = vector.load %arg20[%c0_279, %c18_280] : memref<64x910xf32, #tpu.memory_space<vmem>>, vector<32x9xf32>
    tpu.vector_store %arg20[%c0_279, %c18_280], %325 {strides = array<i32>} : memref<64x910xf32, #tpu.memory_space<vmem>>, vector<32x9xf32>,
    %327 = vector.extract_strided_slice %320 {offsets = [96, 0], sizes = [32, 9], strides = [1, 1]} : vector<224x9xf32> to vector<32x9xf32>
    %c0_281 = arith.constant 0 : index
    %c27_282 = arith.constant 27 : index
    %328 = vector.load %arg20[%c0_281, %c27_282] : memref<64x910xf32, #tpu.memory_space<vmem>>, vector<32x9xf32>
    tpu.vector_store %arg20[%c0_281, %c27_282], %327 {strides = array<i32>} : memref<64x910xf32, #tpu.memory_space<vmem>>, vector<32x9xf32>,
    %329 = vector.extract_strided_slice %320 {offsets = [128, 0], sizes = [32, 9], strides = [1, 1]} : vector<224x9xf32> to vector<32x9xf32>
    %c0_283 = arith.constant 0 : index
    %c36_284 = arith.constant 36 : index
    %330 = vector.load %arg20[%c0_283, %c36_284] : memref<64x910xf32, #tpu.memory_space<vmem>>, vector<32x9xf32>
    tpu.vector_store %arg20[%c0_283, %c36_284], %329 {strides = array<i32>} : memref<64x910xf32, #tpu.memory_space<vmem>>, vector<32x9xf32>,
    %331 = vector.extract_strided_slice %320 {offsets = [160, 0], sizes = [32, 9], strides = [1, 1]} : vector<224x9xf32> to vector<32x9xf32>
    %c0_285 = arith.constant 0 : index
    %c45_286 = arith.constant 45 : index
    %332 = vector.load %arg20[%c0_285, %c45_286] : memref<64x910xf32, #tpu.memory_space<vmem>>, vector<32x9xf32>
    tpu.vector_store %arg20[%c0_285, %c45_286], %331 {strides = array<i32>} : memref<64x910xf32, #tpu.memory_space<vmem>>, vector<32x9xf32>,
    %333 = vector.extract_strided_slice %320 {offsets = [192, 0], sizes = [32, 9], strides = [1, 1]} : vector<224x9xf32> to vector<32x9xf32>
    %c0_287 = arith.constant 0 : index
    %c54_288 = arith.constant 54 : index
    %334 = vector.load %arg20[%c0_287, %c54_288] : memref<64x910xf32, #tpu.memory_space<vmem>>, vector<32x9xf32>
    tpu.vector_store %arg20[%c0_287, %c54_288], %333 {strides = array<i32>} : memref<64x910xf32, #tpu.memory_space<vmem>>, vector<32x9xf32>,
    %c0_289 = arith.constant 0 : index
    %c0_290 = arith.constant 0 : index
    %335 = vector.load %arg20[%c0_289, %c0_290] : memref<64x910xf32, #tpu.memory_space<vmem>>, vector<32x63xf32>
    %336 = arith.truncf %335 : vector<32x63xf32> to vector<32x63xbf16>
    %c0_291 = arith.constant 0 : index
    %c0_292 = arith.constant 0 : index
    %337 = vector.load %arg12[%c0_291, %c0_292] : memref<63x17xbf16, #tpu.memory_space<vmem>>, vector<63x17xbf16>
    %cst_293 = arith.constant dense<0.000000e+00> : vector<32x17xf32>
    %338 = tpu.matmul %336, %337, %cst_293 {dimension_numbers = #tpu.dot_dimension_numbers<[1], [0], [0], [1], [0, 0, 1, 1], [], []>} : vector<32x63xbf16>, vector<63x17xbf16>, vector<32x17xf32> -> vector<32x17xf32>
    %c0_294 = arith.constant 0 : index
    %c4_295 = arith.constant 4 : index
    %339 = vector.load %arg2[%c0_294, %c4_295] : memref<64x8xf32, #tpu.memory_space<vmem>>, vector<32x1xf32>
    %340 = vector.broadcast %339 : vector<32x1xf32> to vector<32x17xf32>
    %341 = arith.addf %338, %340 : vector<32x17xf32>
    %cst_296 = arith.constant 0.000000e+00 : f32
    %342 = vector.broadcast %cst_296 : f32 to vector<32x17xf32>
    %343 = arith.maximumf %341, %342 : vector<32x17xf32>
    %c0_297 = arith.constant 0 : index
    %c0_298 = arith.constant 0 : index
    %344 = vector.load %arg13[%c0_297, %c0_298] : memref<112x32xbf16, #tpu.memory_space<vmem>>, vector<112x32xbf16>
    %345 = arith.truncf %343 : vector<32x17xf32> to vector<32x17xbf16>
    %cst_299 = arith.constant dense<0.000000e+00> : vector<112x17xf32>
    %346 = tpu.matmul %344, %345, %cst_299 {dimension_numbers = #tpu.dot_dimension_numbers<[1], [0], [0], [1], [0, 0, 1, 1], [], []>} : vector<112x32xbf16>, vector<32x17xbf16>, vector<112x17xf32> -> vector<112x17xf32>
    %347 = vector.extract_strided_slice %346 {offsets = [0, 0], sizes = [16, 17], strides = [1, 1]} : vector<112x17xf32> to vector<16x17xf32>
    %c0_300 = arith.constant 0 : index
    %c0_301 = arith.constant 0 : index
    %348 = vector.load %arg20[%c0_300, %c0_301] : memref<64x910xf32, #tpu.memory_space<vmem>>, vector<16x17xf32>
    tpu.vector_store %arg20[%c0_300, %c0_301], %347 {strides = array<i32>} : memref<64x910xf32, #tpu.memory_space<vmem>>, vector<16x17xf32>,
    %349 = vector.extract_strided_slice %346 {offsets = [16, 0], sizes = [16, 17], strides = [1, 1]} : vector<112x17xf32> to vector<16x17xf32>
    %c0_302 = arith.constant 0 : index
    %c17_303 = arith.constant 17 : index
    %350 = vector.load %arg20[%c0_302, %c17_303] : memref<64x910xf32, #tpu.memory_space<vmem>>, vector<16x17xf32>
    tpu.vector_store %arg20[%c0_302, %c17_303], %349 {strides = array<i32>} : memref<64x910xf32, #tpu.memory_space<vmem>>, vector<16x17xf32>,
    %351 = vector.extract_strided_slice %346 {offsets = [32, 0], sizes = [16, 17], strides = [1, 1]} : vector<112x17xf32> to vector<16x17xf32>
    %c0_304 = arith.constant 0 : index
    %c34_305 = arith.constant 34 : index
    %352 = vector.load %arg20[%c0_304, %c34_305] : memref<64x910xf32, #tpu.memory_space<vmem>>, vector<16x17xf32>
    tpu.vector_store %arg20[%c0_304, %c34_305], %351 {strides = array<i32>} : memref<64x910xf32, #tpu.memory_space<vmem>>, vector<16x17xf32>,
    %353 = vector.extract_strided_slice %346 {offsets = [48, 0], sizes = [16, 17], strides = [1, 1]} : vector<112x17xf32> to vector<16x17xf32>
    %c0_306 = arith.constant 0 : index
    %c51_307 = arith.constant 51 : index
    %354 = vector.load %arg20[%c0_306, %c51_307] : memref<64x910xf32, #tpu.memory_space<vmem>>, vector<16x17xf32>
    tpu.vector_store %arg20[%c0_306, %c51_307], %353 {strides = array<i32>} : memref<64x910xf32, #tpu.memory_space<vmem>>, vector<16x17xf32>,
    %355 = vector.extract_strided_slice %346 {offsets = [64, 0], sizes = [16, 17], strides = [1, 1]} : vector<112x17xf32> to vector<16x17xf32>
    %c0_308 = arith.constant 0 : index
    %c68_309 = arith.constant 68 : index
    %356 = vector.load %arg20[%c0_308, %c68_309] : memref<64x910xf32, #tpu.memory_space<vmem>>, vector<16x17xf32>
    tpu.vector_store %arg20[%c0_308, %c68_309], %355 {strides = array<i32>} : memref<64x910xf32, #tpu.memory_space<vmem>>, vector<16x17xf32>,
    %357 = vector.extract_strided_slice %346 {offsets = [80, 0], sizes = [16, 17], strides = [1, 1]} : vector<112x17xf32> to vector<16x17xf32>
    %c0_310 = arith.constant 0 : index
    %c85_311 = arith.constant 85 : index
    %358 = vector.load %arg20[%c0_310, %c85_311] : memref<64x910xf32, #tpu.memory_space<vmem>>, vector<16x17xf32>
    tpu.vector_store %arg20[%c0_310, %c85_311], %357 {strides = array<i32>} : memref<64x910xf32, #tpu.memory_space<vmem>>, vector<16x17xf32>,
    %359 = vector.extract_strided_slice %346 {offsets = [96, 0], sizes = [16, 17], strides = [1, 1]} : vector<112x17xf32> to vector<16x17xf32>
    %c0_312 = arith.constant 0 : index
    %c102_313 = arith.constant 102 : index
    %360 = vector.load %arg20[%c0_312, %c102_313] : memref<64x910xf32, #tpu.memory_space<vmem>>, vector<16x17xf32>
    tpu.vector_store %arg20[%c0_312, %c102_313], %359 {strides = array<i32>} : memref<64x910xf32, #tpu.memory_space<vmem>>, vector<16x17xf32>,
    %c0_314 = arith.constant 0 : index
    %c0_315 = arith.constant 0 : index
    %361 = vector.load %arg20[%c0_314, %c0_315] : memref<64x910xf32, #tpu.memory_space<vmem>>, vector<16x119xf32>
    %362 = arith.truncf %361 : vector<16x119xf32> to vector<16x119xbf16>
    %c0_316 = arith.constant 0 : index
    %c0_317 = arith.constant 0 : index
    %363 = vector.load %arg14[%c0_316, %c0_317] : memref<119x33xbf16, #tpu.memory_space<vmem>>, vector<119x33xbf16>
    %cst_318 = arith.constant dense<0.000000e+00> : vector<16x33xf32>
    %364 = tpu.matmul %362, %363, %cst_318 {dimension_numbers = #tpu.dot_dimension_numbers<[1], [0], [0], [1], [0, 0, 1, 1], [], []>} : vector<16x119xbf16>, vector<119x33xbf16>, vector<16x33xf32> -> vector<16x33xf32>
    %c0_319 = arith.constant 0 : index
    %c5_320 = arith.constant 5 : index
    %365 = vector.load %arg2[%c0_319, %c5_320] : memref<64x8xf32, #tpu.memory_space<vmem>>, vector<16x1xf32>
    %366 = vector.broadcast %365 : vector<16x1xf32> to vector<16x33xf32>
    %367 = arith.addf %364, %366 : vector<16x33xf32>
    %cst_321 = arith.constant 0.000000e+00 : f32
    %368 = vector.broadcast %cst_321 : f32 to vector<16x33xf32>
    %369 = arith.maximumf %367, %368 : vector<16x33xf32>
    %c0_322 = arith.constant 0 : index
    %c0_323 = arith.constant 0 : index
    %370 = vector.load %arg15[%c0_322, %c0_323] : memref<56x16xbf16, #tpu.memory_space<vmem>>, vector<56x16xbf16>
    %371 = arith.truncf %369 : vector<16x33xf32> to vector<16x33xbf16>
    %cst_324 = arith.constant dense<0.000000e+00> : vector<56x33xf32>
    %372 = tpu.matmul %370, %371, %cst_324 {dimension_numbers = #tpu.dot_dimension_numbers<[1], [0], [0], [1], [0, 0, 1, 1], [], []>} : vector<56x16xbf16>, vector<16x33xbf16>, vector<56x33xf32> -> vector<56x33xf32>
    %373 = vector.extract_strided_slice %372 {offsets = [0, 0], sizes = [8, 33], strides = [1, 1]} : vector<56x33xf32> to vector<8x33xf32>
    %c0_325 = arith.constant 0 : index
    %c0_326 = arith.constant 0 : index
    %374 = vector.load %arg20[%c0_325, %c0_326] : memref<64x910xf32, #tpu.memory_space<vmem>>, vector<8x33xf32>
    tpu.vector_store %arg20[%c0_325, %c0_326], %373 {strides = array<i32>} : memref<64x910xf32, #tpu.memory_space<vmem>>, vector<8x33xf32>,
    %375 = vector.extract_strided_slice %372 {offsets = [8, 0], sizes = [8, 33], strides = [1, 1]} : vector<56x33xf32> to vector<8x33xf32>
    %c0_327 = arith.constant 0 : index
    %c33_328 = arith.constant 33 : index
    %376 = vector.load %arg20[%c0_327, %c33_328] : memref<64x910xf32, #tpu.memory_space<vmem>>, vector<8x33xf32>
    tpu.vector_store %arg20[%c0_327, %c33_328], %375 {strides = array<i32>} : memref<64x910xf32, #tpu.memory_space<vmem>>, vector<8x33xf32>,
    %377 = vector.extract_strided_slice %372 {offsets = [16, 0], sizes = [8, 33], strides = [1, 1]} : vector<56x33xf32> to vector<8x33xf32>
    %c0_329 = arith.constant 0 : index
    %c66_330 = arith.constant 66 : index
    %378 = vector.load %arg20[%c0_329, %c66_330] : memref<64x910xf32, #tpu.memory_space<vmem>>, vector<8x33xf32>
    tpu.vector_store %arg20[%c0_329, %c66_330], %377 {strides = array<i32>} : memref<64x910xf32, #tpu.memory_space<vmem>>, vector<8x33xf32>,
    %379 = vector.extract_strided_slice %372 {offsets = [24, 0], sizes = [8, 33], strides = [1, 1]} : vector<56x33xf32> to vector<8x33xf32>
    %c0_331 = arith.constant 0 : index
    %c99_332 = arith.constant 99 : index
    %380 = vector.load %arg20[%c0_331, %c99_332] : memref<64x910xf32, #tpu.memory_space<vmem>>, vector<8x33xf32>
    tpu.vector_store %arg20[%c0_331, %c99_332], %379 {strides = array<i32>} : memref<64x910xf32, #tpu.memory_space<vmem>>, vector<8x33xf32>,
    %381 = vector.extract_strided_slice %372 {offsets = [32, 0], sizes = [8, 33], strides = [1, 1]} : vector<56x33xf32> to vector<8x33xf32>
    %c0_333 = arith.constant 0 : index
    %c132_334 = arith.constant 132 : index
    %382 = vector.load %arg20[%c0_333, %c132_334] : memref<64x910xf32, #tpu.memory_space<vmem>>, vector<8x33xf32>
    tpu.vector_store %arg20[%c0_333, %c132_334], %381 {strides = array<i32>} : memref<64x910xf32, #tpu.memory_space<vmem>>, vector<8x33xf32>,
    %383 = vector.extract_strided_slice %372 {offsets = [40, 0], sizes = [8, 33], strides = [1, 1]} : vector<56x33xf32> to vector<8x33xf32>
    %c0_335 = arith.constant 0 : index
    %c165_336 = arith.constant 165 : index
    %384 = vector.load %arg20[%c0_335, %c165_336] : memref<64x910xf32, #tpu.memory_space<vmem>>, vector<8x33xf32>
    tpu.vector_store %arg20[%c0_335, %c165_336], %383 {strides = array<i32>} : memref<64x910xf32, #tpu.memory_space<vmem>>, vector<8x33xf32>,
    %385 = vector.extract_strided_slice %372 {offsets = [48, 0], sizes = [8, 33], strides = [1, 1]} : vector<56x33xf32> to vector<8x33xf32>
    %c0_337 = arith.constant 0 : index
    %c198_338 = arith.constant 198 : index
    %386 = vector.load %arg20[%c0_337, %c198_338] : memref<64x910xf32, #tpu.memory_space<vmem>>, vector<8x33xf32>
    tpu.vector_store %arg20[%c0_337, %c198_338], %385 {strides = array<i32>} : memref<64x910xf32, #tpu.memory_space<vmem>>, vector<8x33xf32>,
    %c0_339 = arith.constant 0 : index
    %c0_340 = arith.constant 0 : index
    %387 = vector.load %arg20[%c0_339, %c0_340] : memref<64x910xf32, #tpu.memory_space<vmem>>, vector<8x231xf32>
    %388 = arith.truncf %387 : vector<8x231xf32> to vector<8x231xbf16>
    %c0_341 = arith.constant 0 : index
    %c0_342 = arith.constant 0 : index
    %389 = vector.load %arg16[%c0_341, %c0_342] : memref<231x65xbf16, #tpu.memory_space<vmem>>, vector<231x65xbf16>
    %cst_343 = arith.constant dense<0.000000e+00> : vector<8x65xf32>
    %390 = tpu.matmul %388, %389, %cst_343 {dimension_numbers = #tpu.dot_dimension_numbers<[1], [0], [0], [1], [0, 0, 1, 1], [], []>} : vector<8x231xbf16>, vector<231x65xbf16>, vector<8x65xf32> -> vector<8x65xf32>
    %c0_344 = arith.constant 0 : index
    %c6_345 = arith.constant 6 : index
    %391 = vector.load %arg2[%c0_344, %c6_345] : memref<64x8xf32, #tpu.memory_space<vmem>>, vector<8x1xf32>
    %392 = vector.broadcast %391 : vector<8x1xf32> to vector<8x65xf32>
    %393 = arith.addf %390, %392 : vector<8x65xf32>
    %cst_346 = arith.constant 0.000000e+00 : f32
    %394 = vector.broadcast %cst_346 : f32 to vector<8x65xf32>
    %395 = arith.maximumf %393, %394 : vector<8x65xf32>
    %c0_347 = arith.constant 0 : index
    %c0_348 = arith.constant 0 : index
    %396 = vector.load %arg17[%c0_347, %c0_348] : memref<56x8xbf16, #tpu.memory_space<vmem>>, vector<56x8xbf16>
    %397 = arith.truncf %395 : vector<8x65xf32> to vector<8x65xbf16>
    %cst_349 = arith.constant dense<0.000000e+00> : vector<56x65xf32>
    %398 = tpu.matmul %396, %397, %cst_349 {dimension_numbers = #tpu.dot_dimension_numbers<[1], [0], [0], [1], [0, 0, 1, 1], [], []>} : vector<56x8xbf16>, vector<8x65xbf16>, vector<56x65xf32> -> vector<56x65xf32>
    %399 = vector.extract_strided_slice %398 {offsets = [0, 0], sizes = [8, 65], strides = [1, 1]} : vector<56x65xf32> to vector<8x65xf32>
    %c0_350 = arith.constant 0 : index
    %c0_351 = arith.constant 0 : index
    %400 = vector.load %arg20[%c0_350, %c0_351] : memref<64x910xf32, #tpu.memory_space<vmem>>, vector<8x65xf32>
    tpu.vector_store %arg20[%c0_350, %c0_351], %399 {strides = array<i32>} : memref<64x910xf32, #tpu.memory_space<vmem>>, vector<8x65xf32>,
    %401 = vector.extract_strided_slice %398 {offsets = [8, 0], sizes = [8, 65], strides = [1, 1]} : vector<56x65xf32> to vector<8x65xf32>
    %c0_352 = arith.constant 0 : index
    %c65_353 = arith.constant 65 : index
    %402 = vector.load %arg20[%c0_352, %c65_353] : memref<64x910xf32, #tpu.memory_space<vmem>>, vector<8x65xf32>
    tpu.vector_store %arg20[%c0_352, %c65_353], %401 {strides = array<i32>} : memref<64x910xf32, #tpu.memory_space<vmem>>, vector<8x65xf32>,
    %403 = vector.extract_strided_slice %398 {offsets = [16, 0], sizes = [8, 65], strides = [1, 1]} : vector<56x65xf32> to vector<8x65xf32>
    %c0_354 = arith.constant 0 : index
    %c130_355 = arith.constant 130 : index
    %404 = vector.load %arg20[%c0_354, %c130_355] : memref<64x910xf32, #tpu.memory_space<vmem>>, vector<8x65xf32>
    tpu.vector_store %arg20[%c0_354, %c130_355], %403 {strides = array<i32>} : memref<64x910xf32, #tpu.memory_space<vmem>>, vector<8x65xf32>,
    %405 = vector.extract_strided_slice %398 {offsets = [24, 0], sizes = [8, 65], strides = [1, 1]} : vector<56x65xf32> to vector<8x65xf32>
    %c0_356 = arith.constant 0 : index
    %c195_357 = arith.constant 195 : index
    %406 = vector.load %arg20[%c0_356, %c195_357] : memref<64x910xf32, #tpu.memory_space<vmem>>, vector<8x65xf32>
    tpu.vector_store %arg20[%c0_356, %c195_357], %405 {strides = array<i32>} : memref<64x910xf32, #tpu.memory_space<vmem>>, vector<8x65xf32>,
    %407 = vector.extract_strided_slice %398 {offsets = [32, 0], sizes = [8, 65], strides = [1, 1]} : vector<56x65xf32> to vector<8x65xf32>
    %c0_358 = arith.constant 0 : index
    %c260_359 = arith.constant 260 : index
    %408 = vector.load %arg20[%c0_358, %c260_359] : memref<64x910xf32, #tpu.memory_space<vmem>>, vector<8x65xf32>
    tpu.vector_store %arg20[%c0_358, %c260_359], %407 {strides = array<i32>} : memref<64x910xf32, #tpu.memory_space<vmem>>, vector<8x65xf32>,
    %409 = vector.extract_strided_slice %398 {offsets = [40, 0], sizes = [8, 65], strides = [1, 1]} : vector<56x65xf32> to vector<8x65xf32>
    %c0_360 = arith.constant 0 : index
    %c325_361 = arith.constant 325 : index
    %410 = vector.load %arg20[%c0_360, %c325_361] : memref<64x910xf32, #tpu.memory_space<vmem>>, vector<8x65xf32>
    tpu.vector_store %arg20[%c0_360, %c325_361], %409 {strides = array<i32>} : memref<64x910xf32, #tpu.memory_space<vmem>>, vector<8x65xf32>,
    %411 = vector.extract_strided_slice %398 {offsets = [48, 0], sizes = [8, 65], strides = [1, 1]} : vector<56x65xf32> to vector<8x65xf32>
    %c0_362 = arith.constant 0 : index
    %c390_363 = arith.constant 390 : index
    %412 = vector.load %arg20[%c0_362, %c390_363] : memref<64x910xf32, #tpu.memory_space<vmem>>, vector<8x65xf32>
    tpu.vector_store %arg20[%c0_362, %c390_363], %411 {strides = array<i32>} : memref<64x910xf32, #tpu.memory_space<vmem>>, vector<8x65xf32>,
    %c0_364 = arith.constant 0 : index
    %c0_365 = arith.constant 0 : index
    %413 = vector.load %arg20[%c0_364, %c0_365] : memref<64x910xf32, #tpu.memory_space<vmem>>, vector<8x455xf32>
    %414 = arith.truncf %413 : vector<8x455xf32> to vector<8x455xbf16>
    %c0_366 = arith.constant 0 : index
    %c0_367 = arith.constant 0 : index
    %415 = vector.load %arg18[%c0_366, %c0_367] : memref<455x130xbf16, #tpu.memory_space<vmem>>, vector<455x130xbf16>
    %cst_368 = arith.constant dense<0.000000e+00> : vector<8x130xf32>
    %416 = tpu.matmul %414, %415, %cst_368 {dimension_numbers = #tpu.dot_dimension_numbers<[1], [0], [0], [1], [0, 0, 1, 1], [], []>} : vector<8x455xbf16>, vector<455x130xbf16>, vector<8x130xf32> -> vector<8x130xf32>
    %c0_369 = arith.constant 0 : index
    %c7_370 = arith.constant 7 : index
    %417 = vector.load %arg2[%c0_369, %c7_370] : memref<64x8xf32, #tpu.memory_space<vmem>>, vector<8x1xf32>
    %418 = vector.broadcast %417 : vector<8x1xf32> to vector<8x130xf32>
    %419 = arith.addf %416, %418 : vector<8x130xf32>
    %420 = vector.extract_strided_slice %419 {offsets = [0, 0], sizes = [1, 130], strides = [1, 1]} : vector<8x130xf32> to vector<1x130xf32>
    %c1_371 = arith.constant 1 : index
    %c0_372 = arith.constant 0 : index
    %c0_373 = arith.constant 0 : index
    %421 = vector.load %arg19[%c1_371, %c0_372, %c0_373] : memref<2x1x130xf32, #tpu.memory_space<vmem>>, vector<1x1x130xf32>
    %422 = vector.shape_cast %421 : vector<1x1x130xf32> to vector<1x130xf32>
    %423 = vector.shape_cast %420 : vector<1x130xf32> to vector<1x1x130xf32>
    tpu.vector_store %arg19[%c1_371, %c0_372, %c0_373], %423 {strides = array<i32>} : memref<2x1x130xf32, #tpu.memory_space<vmem>>, vector<1x1x130xf32>,
    return
  }
  func.func @transform_0(%arg0: i32) -> (i32, i32, i32) {
    %c0_i32 = arith.constant 0 : i32
    %c0_i32_0 = arith.constant 0 : i32
    %c0_i32_1 = arith.constant 0 : i32
    return %arg0, %c0_i32, %c0_i32_0 : i32, i32, i32
  }
  func.func @transform_1(%arg0: i32) -> (i32, i32) {
    %c0_i32 = arith.constant 0 : i32
    %c0_i32_0 = arith.constant 0 : i32
    %c0_i32_1 = arith.constant 0 : i32
    return %c0_i32, %c0_i32_0 : i32, i32
  }
  func.func @transform_2(%arg0: i32) -> (i32, i32) {
    %c0_i32 = arith.constant 0 : i32
    %c0_i32_0 = arith.constant 0 : i32
    %c0_i32_1 = arith.constant 0 : i32
    return %c0_i32, %c0_i32_0 : i32, i32
  }
  func.func @transform_3(%arg0: i32) -> (i32, i32) {
    %c0_i32 = arith.constant 0 : i32
    %c0_i32_0 = arith.constant 0 : i32
    %c0_i32_1 = arith.constant 0 : i32
    return %c0_i32, %c0_i32_0 : i32, i32
  }
  func.func @transform_4(%arg0: i32) -> (i32, i32) {
    %c0_i32 = arith.constant 0 : i32
    %c0_i32_0 = arith.constant 0 : i32
    %c0_i32_1 = arith.constant 0 : i32
    return %c0_i32, %c0_i32_0 : i32, i32
  }
  func.func @transform_5(%arg0: i32) -> (i32, i32) {
    %c0_i32 = arith.constant 0 : i32
    %c0_i32_0 = arith.constant 0 : i32
    %c0_i32_1 = arith.constant 0 : i32
    return %c0_i32, %c0_i32_0 : i32, i32
  }
  func.func @transform_6(%arg0: i32) -> (i32, i32) {
    %c0_i32 = arith.constant 0 : i32
    %c0_i32_0 = arith.constant 0 : i32
    %c0_i32_1 = arith.constant 0 : i32
    return %c0_i32, %c0_i32_0 : i32, i32
  }
  func.func @transform_7(%arg0: i32) -> (i32, i32) {
    %c0_i32 = arith.constant 0 : i32
    %c0_i32_0 = arith.constant 0 : i32
    %c0_i32_1 = arith.constant 0 : i32
    return %c0_i32, %c0_i32_0 : i32, i32
  }
  func.func @transform_8(%arg0: i32) -> (i32, i32) {
    %c0_i32 = arith.constant 0 : i32
    %c0_i32_0 = arith.constant 0 : i32
    %c0_i32_1 = arith.constant 0 : i32
    return %c0_i32, %c0_i32_0 : i32, i32
  }
  func.func @transform_9(%arg0: i32) -> (i32, i32) {
    %c0_i32 = arith.constant 0 : i32
    %c0_i32_0 = arith.constant 0 : i32
    %c0_i32_1 = arith.constant 0 : i32
    return %c0_i32, %c0_i32_0 : i32, i32
  }
  func.func @transform_10(%arg0: i32) -> (i32, i32) {
    %c0_i32 = arith.constant 0 : i32
    %c0_i32_0 = arith.constant 0 : i32
    %c0_i32_1 = arith.constant 0 : i32
    return %c0_i32, %c0_i32_0 : i32, i32
  }
  func.func @transform_11(%arg0: i32) -> (i32, i32) {
    %c0_i32 = arith.constant 0 : i32
    %c0_i32_0 = arith.constant 0 : i32
    %c0_i32_1 = arith.constant 0 : i32
    return %c0_i32, %c0_i32_0 : i32, i32
  }
  func.func @transform_12(%arg0: i32) -> (i32, i32) {
    %c0_i32 = arith.constant 0 : i32
    %c0_i32_0 = arith.constant 0 : i32
    %c0_i32_1 = arith.constant 0 : i32
    return %c0_i32, %c0_i32_0 : i32, i32
  }
  func.func @transform_13(%arg0: i32) -> (i32, i32) {
    %c0_i32 = arith.constant 0 : i32
    %c0_i32_0 = arith.constant 0 : i32
    %c0_i32_1 = arith.constant 0 : i32
    return %c0_i32, %c0_i32_0 : i32, i32
  }
  func.func @transform_14(%arg0: i32) -> (i32, i32) {
    %c0_i32 = arith.constant 0 : i32
    %c0_i32_0 = arith.constant 0 : i32
    %c0_i32_1 = arith.constant 0 : i32
    return %c0_i32, %c0_i32_0 : i32, i32
  }
  func.func @transform_15(%arg0: i32) -> (i32, i32) {
    %c0_i32 = arith.constant 0 : i32
    %c0_i32_0 = arith.constant 0 : i32
    %c0_i32_1 = arith.constant 0 : i32
    return %c0_i32, %c0_i32_0 : i32, i32
  }
  func.func @transform_16(%arg0: i32) -> (i32, i32) {
    %c0_i32 = arith.constant 0 : i32
    %c0_i32_0 = arith.constant 0 : i32
    %c0_i32_1 = arith.constant 0 : i32
    return %c0_i32, %c0_i32_0 : i32, i32
  }
  func.func @transform_17(%arg0: i32) -> (i32, i32) {
    %c0_i32 = arith.constant 0 : i32
    %c0_i32_0 = arith.constant 0 : i32
    %c0_i32_1 = arith.constant 0 : i32
    return %c0_i32, %c0_i32_0 : i32, i32
  }
  func.func @transform_18(%arg0: i32) -> (i32, i32, i32) {
    %c0_i32 = arith.constant 0 : i32
    %c0_i32_0 = arith.constant 0 : i32
    %c0_i32_1 = arith.constant 0 : i32
    return %arg0, %c0_i32, %c0_i32_0 : i32, i32, i32
  }
}

</mosaic_0001>

<llo_original>
// kernel: forward.1
$region0: #{forward.1}
  #allocation0 [shape = 'u32[]', space=smem, size = 0x4, offset = 0x4, fixed_abs, tag = 'smem constant byte address 0x4 - core index']
  #allocation1 [shape = 'u32[144,128]{1,0:T(1,128)}', space=vmem, size = 0x12000, scoped, tag = 'internal scratch']
  #allocation2 [shape = 'f32[64,910]{1,0:T(8,128)}', space=vmem, size = 0x40000, scoped, tag = 'scratch operand']
  %s0 = inlined_call_operand.vmem [shape: f32[2,8,130], index: 0, kind: input, shape index: {}]
  %s1 = inlined_call_operand.hbm [shape: f32[64,8], index: 1, kind: input, shape index: {}]
  %s2 = inlined_call_operand.hbm [shape: bf16[56,8], index: 2, kind: input, shape index: {}]
  %s3 = inlined_call_operand.hbm [shape: bf16[910,65], index: 3, kind: input, shape index: {}]
  %s4 = inlined_call_operand.hbm [shape: bf16[112,8], index: 4, kind: input, shape index: {}]
  %s5 = inlined_call_operand.hbm [shape: bf16[455,33], index: 5, kind: input, shape index: {}]
  %s6 = inlined_call_operand.hbm [shape: bf16[224,16], index: 6, kind: input, shape index: {}]
  %s7 = inlined_call_operand.hbm [shape: bf16[231,17], index: 7, kind: input, shape index: {}]
  %s8 = inlined_call_operand.hbm [shape: bf16[448,32], index: 8, kind: input, shape index: {}]
  %s9 = inlined_call_operand.hbm [shape: bf16[119,9], index: 9, kind: input, shape index: {}]
  %s10 = inlined_call_operand.vmem [shape: bf16[224,64], index: 10, kind: input, shape index: {}]
  %s11 = inlined_call_operand.hbm [shape: bf16[63,17], index: 11, kind: input, shape index: {}]
  %s12 = inlined_call_operand.hbm [shape: bf16[112,32], index: 12, kind: input, shape index: {}]
  %s13 = inlined_call_operand.hbm [shape: bf16[119,33], index: 13, kind: input, shape index: {}]
  %s14 = inlined_call_operand.hbm [shape: bf16[56,16], index: 14, kind: input, shape index: {}]
  %s15 = inlined_call_operand.hbm [shape: bf16[231,65], index: 15, kind: input, shape index: {}]
  %s16 = inlined_call_operand.hbm [shape: bf16[56,8], index: 16, kind: input, shape index: {}]
  %s17 = inlined_call_operand.hbm [shape: bf16[455,130], index: 17, kind: input, shape index: {}]
  %s18 = inlined_call_operand.hbm [shape: f32[2,1,130], index: 18, kind: output, shape index: {}]
  %s19 = sld [smem:[#allocation0]]
  $region146: #{forward.1} parent=0
    _
  %s21 = ssub.s32 1, %s19
  %s22 = scalar_select 0, %s21, %s19
  $region1: #{forward.1} parent=0
    #allocation3 [shape = 'u8[32768]{0}', space=vmem, size = 0x8000, scoped, tag = 'input window, operand 1, single buffered']
    #allocation4 [shape = 's32[1]{0}', space=sflag, size = 0x4, scoped, tag = 'scoped memory for forward.1']
    #allocation5 [shape = 's32[1]{0}', space=sflag, size = 0x4, scoped, tag = 'scoped memory for forward.1']
    #allocation6 [shape = 'u8[14336]{0}', space=vmem, size = 0x3800, scoped, tag = 'input window, operand 2, single buffered']
    #allocation7 [shape = 's32[1]{0}', space=sflag, size = 0x4, scoped, tag = 'scoped memory for forward.1']
    #allocation8 [shape = 'u8[233472]{0}', space=vmem, size = 0x39000, scoped, tag = 'input window, operand 3, single buffered']
    #allocation9 [shape = 'u8[28672]{0}', space=vmem, size = 0x7000, scoped, tag = 'input window, operand 4, single buffered']
    #allocation10 [shape = 's32[1]{0}', space=sflag, size = 0x4, scoped, tag = 'scoped memory for forward.1']
    #allocation11 [shape = 'u8[116736]{0}', space=vmem, size = 0x1c800, scoped, tag = 'input window, operand 5, single buffered']
    #allocation12 [shape = 'u8[57344]{0}', space=vmem, size = 0xe000, scoped, tag = 'input window, operand 6, single buffered']
    #allocation13 [shape = 's32[1]{0}', space=sflag, size = 0x4, scoped, tag = 'scoped memory for forward.1']
    #allocation14 [shape = 'u8[59392]{0}', space=vmem, size = 0xe800, scoped, tag = 'input window, operand 7, single buffered']
    #allocation15 [shape = 'u8[114688]{0}', space=vmem, size = 0x1c000, scoped, tag = 'input window, operand 8, single buffered']
    #allocation16 [shape = 's32[1]{0}', space=sflag, size = 0x4, scoped, tag = 'scoped memory for forward.1']
    #allocation17 [shape = 'u8[30720]{0}', space=vmem, size = 0x7800, scoped, tag = 'input window, operand 9, single buffered']
    #allocation18 [shape = 'u8[16384]{0}', space=vmem, size = 0x4000, scoped, tag = 'input window, operand 11, single buffered']
    #allocation19 [shape = 's32[1]{0}', space=sflag, size = 0x4, scoped, tag = 'scoped memory for forward.1']
    #allocation20 [shape = 'u8[28672]{0}', space=vmem, size = 0x7000, scoped, tag = 'input window, operand 12, single buffered']
    #allocation21 [shape = 'u8[30720]{0}', space=vmem, size = 0x7800, scoped, tag = 'input window, operand 13, single buffered']
    #allocation22 [shape = 's32[1]{0}', space=sflag, size = 0x4, scoped, tag = 'scoped memory for forward.1']
    #allocation23 [shape = 'u8[14336]{0}', space=vmem, size = 0x3800, scoped, tag = 'input window, operand 14, single buffered']
    #allocation24 [shape = 'u8[59392]{0}', space=vmem, size = 0xe800, scoped, tag = 'input window, operand 15, single buffered']
    #allocation25 [shape = 's32[1]{0}', space=sflag, size = 0x4, scoped, tag = 'scoped memory for forward.1']
    #allocation26 [shape = 'u8[14336]{0}', space=vmem, size = 0x3800, scoped, tag = 'input window, operand 16, single buffered']
    #allocation27 [shape = 'u8[233472]{0}', space=vmem, size = 0x39000, scoped, tag = 'input window, operand 17, single buffered']
    #allocation28 [shape = 's32[1]{0}', space=sflag, size = 0x4, scoped, tag = 'scoped memory for forward.1']
    #allocation29 [shape = 'u8[2048]{0}', space=vmem, size = 0x800, scoped, tag = 'output window, operand 0, single buffered']
    %23 = vsyncpa [#allocation4], 0
    %24 = vsyncpa [#allocation7], 0
    %25 = vsyncpa [#allocation10], 0
    %26 = vsyncpa [#allocation13], 0
    %27 = vsyncpa [#allocation16], 0
    %28 = vsyncpa [#allocation19], 0
    %29 = vsyncpa [#allocation22], 0
    %30 = vsyncpa [#allocation25], 0
    %31 = vsyncpa [#allocation28], 0
    %32 = vsyncpa [#allocation5], 0
    // Predicated region
    $region2: #{forward.1} parent=1 // pred_check
      _
    $region3: #{forward.1} parent=1 // pred_check_branch
      %34 = sbr.rel (0) target = $region5
    $region4: #{forward.1} parent=1 // pred_region
      _
    $region5: #{forward.1} parent=1 // pred_fallthru
      _
    // Predicated region
    $region6: #{forward.1} parent=1 // pred_check
      _
    $region7: #{forward.1} parent=1 // pred_check_branch
      %36 = sbr.rel (0) target = $region9
    $region8: #{forward.1} parent=1 // pred_region
      %s38 = ssub.s32 1024, 1024
      %39 = vsyncadd [#allocation4], %s38
      %s40 = sshll.u32 [#allocation3], 4
      %s41 = int_to_ptr.vmem [resolvable:$true] %s40
      %46 = dma.hbm_to_vmem [thread:$0]  %s1, 1024, %s41, [#allocation4], 128, 128, 8
    $region9: #{forward.1} parent=1 // pred_fallthru
      _
    // Predicated region
    $region10: #{forward.1} parent=1 // pred_check
      _
    $region11: #{forward.1} parent=1 // pred_check_branch
      %48 = sbr.rel (0) target = $region13
    $region12: #{forward.1} parent=1 // pred_region
      %s50 = ssub.s32 448, 448
      %51 = vsyncadd [#allocation7], %s50
      %s52 = sshll.u32 [#allocation6], 4
      %s53 = int_to_ptr.vmem [resolvable:$true] %s52
      %58 = dma.hbm_to_vmem [thread:$0]  %s2, 448, %s53, [#allocation7], 64, 64, 4
    $region13: #{forward.1} parent=1 // pred_fallthru
      _
    // Predicated region
    $region14: #{forward.1} parent=1 // pred_check
      _
    $region15: #{forward.1} parent=1 // pred_check_branch
      %60 = sbr.rel (0) target = $region17
    $region16: #{forward.1} parent=1 // pred_region
      %s62 = ssub.s32 7296, 7296
      %63 = vsyncadd [#allocation7], %s62
      %s64 = sshll.u32 [#allocation8], 4
      %s65 = int_to_ptr.vmem [resolvable:$true] %s64
      %70 = dma.hbm_to_vmem [thread:$0]  %s3, 7296, %s65, [#allocation7], 64, 64, 4
    $region17: #{forward.1} parent=1 // pred_fallthru
      _
    // Predicated region
    $region18: #{forward.1} parent=1 // pred_check
      _
    $region19: #{forward.1} parent=1 // pred_check_branch
      %72 = sbr.rel (0) target = $region21
    $region20: #{forward.1} parent=1 // pred_region
      %s74 = ssub.s32 896, 896
      %75 = vsyncadd [#allocation10], %s74
      %s76 = sshll.u32 [#allocation9], 4
      %s77 = int_to_ptr.vmem [resolvable:$true] %s76
      %82 = dma.hbm_to_vmem [thread:$0]  %s4, 896, %s77, [#allocation10], 64, 64, 4
    $region21: #{forward.1} parent=1 // pred_fallthru
      _
    // Predicated region
    $region22: #{forward.1} parent=1 // pred_check
      _
    $region23: #{forward.1} parent=1 // pred_check_branch
      %84 = sbr.rel (0) target = $region25
    $region24: #{forward.1} parent=1 // pred_region
      %s86 = ssub.s32 3648, 3648
      %87 = vsyncadd [#allocation10], %s86
      %s88 = sshll.u32 [#allocation11], 4
      %s89 = int_to_ptr.vmem [resolvable:$true] %s88
      %94 = dma.hbm_to_vmem [thread:$0]  %s5, 3648, %s89, [#allocation10], 64, 64, 4
    $region25: #{forward.1} parent=1 // pred_fallthru
      _
    // Predicated region
    $region26: #{forward.1} parent=1 // pred_check
      _
    $region27: #{forward.1} parent=1 // pred_check_branch
      %96 = sbr.rel (0) target = $region29
    $region28: #{forward.1} parent=1 // pred_region
      %s98 = ssub.s32 1792, 1792
      %99 = vsyncadd [#allocation13], %s98
      %s100 = sshll.u32 [#allocation12], 4
      %s101 = int_to_ptr.vmem [resolvable:$true] %s100
      %106 = dma.hbm_to_vmem [thread:$0]  %s6, 1792, %s101, [#allocation13], 64, 64, 4
    $region29: #{forward.1} parent=1 // pred_fallthru
      _
    // Predicated region
    $region30: #{forward.1} parent=1 // pred_check
      _
    $region31: #{forward.1} parent=1 // pred_check_branch
      %108 = sbr.rel (0) target = $region33
    $region32: #{forward.1} parent=1 // pred_region
      %s110 = ssub.s32 1856, 1856
      %111 = vsyncadd [#allocation13], %s110
      %s112 = sshll.u32 [#allocation14], 4
      %s113 = int_to_ptr.vmem [resolvable:$true] %s112
      %118 = dma.hbm_to_vmem [thread:$0]  %s7, 1856, %s113, [#allocation13], 64, 64, 4
    $region33: #{forward.1} parent=1 // pred_fallthru
      _
    // Predicated region
    $region34: #{forward.1} parent=1 // pred_check
      _
    $region35: #{forward.1} parent=1 // pred_check_branch
      %120 = sbr.rel (0) target = $region37
    $region36: #{forward.1} parent=1 // pred_region
      %s122 = ssub.s32 3584, 3584
      %123 = vsyncadd [#allocation16], %s122
      %s124 = sshll.u32 [#allocation15], 4
      %s125 = int_to_ptr.vmem [resolvable:$true] %s124
      %130 = dma.hbm_to_vmem [thread:$0]  %s8, 3584, %s125, [#allocation16], 64, 64, 4
    $region37: #{forward.1} parent=1 // pred_fallthru
      _
    // Predicated region
    $region38: #{forward.1} parent=1 // pred_check
      _
    $region39: #{forward.1} parent=1 // pred_check_branch
      %132 = sbr.rel (0) target = $region41
    $region40: #{forward.1} parent=1 // pred_region
      %s134 = ssub.s32 960, 960
      %135 = vsyncadd [#allocation16], %s134
      %s136 = sshll.u32 [#allocation17], 4
      %s137 = int_to_ptr.vmem [resolvable:$true] %s136
      %142 = dma.hbm_to_vmem [thread:$0]  %s9, 960, %s137, [#allocation16], 64, 64, 4
    $region41: #{forward.1} parent=1 // pred_fallthru
      _
    // Predicated region
    $region42: #{forward.1} parent=1 // pred_check
      _
    $region43: #{forward.1} parent=1 // pred_check_branch
      %144 = sbr.rel (0) target = $region45
    $region44: #{forward.1} parent=1 // pred_region
      _
    $region45: #{forward.1} parent=1 // pred_fallthru
      _
    // Predicated region
    $region46: #{forward.1} parent=1 // pred_check
      _
    $region47: #{forward.1} parent=1 // pred_check_branch
      %146 = sbr.rel (0) target = $region49
    $region48: #{forward.1} parent=1 // pred_region
      %s148 = ssub.s32 512, 512
      %149 = vsyncadd [#allocation19], %s148
      %s150 = sshll.u32 [#allocation18], 4
      %s151 = int_to_ptr.vmem [resolvable:$true] %s150
      %156 = dma.hbm_to_vmem [thread:$0]  %s11, 512, %s151, [#allocation19], 64, 64, 4
    $region49: #{forward.1} parent=1 // pred_fallthru
      _
    // Predicated region
    $region50: #{forward.1} parent=1 // pred_check
      _
    $region51: #{forward.1} parent=1 // pred_check_branch
      %158 = sbr.rel (0) target = $region53
    $region52: #{forward.1} parent=1 // pred_region
      %s160 = ssub.s32 896, 896
      %161 = vsyncadd [#allocation19], %s160
      %s162 = sshll.u32 [#allocation20], 4
      %s163 = int_to_ptr.vmem [resolvable:$true] %s162
      %168 = dma.hbm_to_vmem [thread:$0]  %s12, 896, %s163, [#allocation19], 64, 64, 4
    $region53: #{forward.1} parent=1 // pred_fallthru
      _
    // Predicated region
    $region54: #{forward.1} parent=1 // pred_check
      _
    $region55: #{forward.1} parent=1 // pred_check_branch
      %170 = sbr.rel (0) target = $region57
    $region56: #{forward.1} parent=1 // pred_region
      %s172 = ssub.s32 960, 960
      %173 = vsyncadd [#allocation22], %s172
      %s174 = sshll.u32 [#allocation21], 4
      %s175 = int_to_ptr.vmem [resolvable:$true] %s174
      %180 = dma.hbm_to_vmem [thread:$0]  %s13, 960, %s175, [#allocation22], 64, 64, 4
    $region57: #{forward.1} parent=1 // pred_fallthru
      _
    // Predicated region
    $region58: #{forward.1} parent=1 // pred_check
      _
    $region59: #{forward.1} parent=1 // pred_check_branch
      %182 = sbr.rel (0) target = $region61
    $region60: #{forward.1} parent=1 // pred_region
      %s184 = ssub.s32 448, 448
      %185 = vsyncadd [#allocation22], %s184
      %s186 = sshll.u32 [#allocation23], 4
      %s187 = int_to_ptr.vmem [resolvable:$true] %s186
      %192 = dma.hbm_to_vmem [thread:$0]  %s14, 448, %s187, [#allocation22], 64, 64, 4
    $region61: #{forward.1} parent=1 // pred_fallthru
      _
    // Predicated region
    $region62: #{forward.1} parent=1 // pred_check
      _
    $region63: #{forward.1} parent=1 // pred_check_branch
      %194 = sbr.rel (0) target = $region65
    $region64: #{forward.1} parent=1 // pred_region
      %s196 = ssub.s32 1856, 1856
      %197 = vsyncadd [#allocation25], %s196
      %s198 = sshll.u32 [#allocation24], 4
      %s199 = int_to_ptr.vmem [resolvable:$true] %s198
      %204 = dma.hbm_to_vmem [thread:$0]  %s15, 1856, %s199, [#allocation25], 64, 64, 4
    $region65: #{forward.1} parent=1 // pred_fallthru
      _
    // Predicated region
    $region66: #{forward.1} parent=1 // pred_check
      _
    $region67: #{forward.1} parent=1 // pred_check_branch
      %206 = sbr.rel (0) target = $region69
    $region68: #{forward.1} parent=1 // pred_region
      %s208 = ssub.s32 448, 448
      %209 = vsyncadd [#allocation25], %s208
      %s210 = sshll.u32 [#allocation26], 4
      %s211 = int_to_ptr.vmem [resolvable:$true] %s210
      %216 = dma.hbm_to_vmem [thread:$0]  %s16, 448, %s211, [#allocation25], 64, 64, 4
    $region69: #{forward.1} parent=1 // pred_fallthru
      _
    // Predicated region
    $region70: #{forward.1} parent=1 // pred_check
      _
    $region71: #{forward.1} parent=1 // pred_check_branch
      %218 = sbr.rel (0) target = $region73
    $region72: #{forward.1} parent=1 // pred_region
      %s220 = ssub.s32 7296, 7296
      %221 = vsyncadd [#allocation28], %s220
      %s222 = sshll.u32 [#allocation27], 4
      %s223 = int_to_ptr.vmem [resolvable:$true] %s222
      %228 = dma.hbm_to_vmem [thread:$0]  %s17, 7296, %s223, [#allocation28], 128, 128, 8
    $region73: #{forward.1} parent=1 // pred_fallthru
      _
    // Predicated region
    $region74: #{forward.1} parent=1 // pred_check
      _
    $region75: #{forward.1} parent=1 // pred_check_branch
      %230 = sbr.rel (0) target = $region77
    $region76: #{forward.1} parent=1 // pred_region
      %231 = dma.done [#allocation4], 1024
    $region77: #{forward.1} parent=1 // pred_fallthru
      _
    // Predicated region
    $region78: #{forward.1} parent=1 // pred_check
      _
    $region79: #{forward.1} parent=1 // pred_check_branch
      %233 = sbr.rel (0) target = $region81
    $region80: #{forward.1} parent=1 // pred_region
      %234 = dma.done [#allocation7], 448
    $region81: #{forward.1} parent=1 // pred_fallthru
      _
    // Predicated region
    $region82: #{forward.1} parent=1 // pred_check
      _
    $region83: #{forward.1} parent=1 // pred_check_branch
      %236 = sbr.rel (0) target = $region85
    $region84: #{forward.1} parent=1 // pred_region
      %237 = dma.done [#allocation7], 7296
    $region85: #{forward.1} parent=1 // pred_fallthru
      _
    // Predicated region
    $region86: #{forward.1} parent=1 // pred_check
      _
    $region87: #{forward.1} parent=1 // pred_check_branch
      %239 = sbr.rel (0) target = $region89
    $region88: #{forward.1} parent=1 // pred_region
      %240 = dma.done [#allocation10], 896
    $region89: #{forward.1} parent=1 // pred_fallthru
      _
    // Predicated region
    $region90: #{forward.1} parent=1 // pred_check
      _
    $region91: #{forward.1} parent=1 // pred_check_branch
      %242 = sbr.rel (0) target = $region93
    $region92: #{forward.1} parent=1 // pred_region
      %243 = dma.done [#allocation10], 3648
    $region93: #{forward.1} parent=1 // pred_fallthru
      _
    // Predicated region
    $region94: #{forward.1} parent=1 // pred_check
      _
    $region95: #{forward.1} parent=1 // pred_check_branch
      %245 = sbr.rel (0) target = $region97
    $region96: #{forward.1} parent=1 // pred_region
      %246 = dma.done [#allocation13], 1792
    $region97: #{forward.1} parent=1 // pred_fallthru
      _
    // Predicated region
    $region98: #{forward.1} parent=1 // pred_check
      _
    $region99: #{forward.1} parent=1 // pred_check_branch
      %248 = sbr.rel (0) target = $region101
    $region100: #{forward.1} parent=1 // pred_region
      %249 = dma.done [#allocation13], 1856
    $region101: #{forward.1} parent=1 // pred_fallthru
      _
    // Predicated region
    $region102: #{forward.1} parent=1 // pred_check
      _
    $region103: #{forward.1} parent=1 // pred_check_branch
      %251 = sbr.rel (0) target = $region105
    $region104: #{forward.1} parent=1 // pred_region
      %252 = dma.done [#allocation16], 3584
    $region105: #{forward.1} parent=1 // pred_fallthru
      _
    // Predicated region
    $region106: #{forward.1} parent=1 // pred_check
      _
    $region107: #{forward.1} parent=1 // pred_check_branch
      %254 = sbr.rel (0) target = $region109
    $region108: #{forward.1} parent=1 // pred_region
      %255 = dma.done [#allocation16], 960
    $region109: #{forward.1} parent=1 // pred_fallthru
      _
    // Predicated region
    $region110: #{forward.1} parent=1 // pred_check
      _
    $region111: #{forward.1} parent=1 // pred_check_branch
      %257 = sbr.rel (0) target = $region113
    $region112: #{forward.1} parent=1 // pred_region
      %258 = dma.done [#allocation19], 512
    $region113: #{forward.1} parent=1 // pred_fallthru
      _
    // Predicated region
    $region114: #{forward.1} parent=1 // pred_check
      _
    $region115: #{forward.1} parent=1 // pred_check_branch
      %260 = sbr.rel (0) target = $region117
    $region116: #{forward.1} parent=1 // pred_region
      %261 = dma.done [#allocation19], 896
    $region117: #{forward.1} parent=1 // pred_fallthru
      _
    // Predicated region
    $region118: #{forward.1} parent=1 // pred_check
      _
    $region119: #{forward.1} parent=1 // pred_check_branch
      %263 = sbr.rel (0) target = $region121
    $region120: #{forward.1} parent=1 // pred_region
      %264 = dma.done [#allocation22], 960
    $region121: #{forward.1} parent=1 // pred_fallthru
      _
    // Predicated region
    $region122: #{forward.1} parent=1 // pred_check
      _
    $region123: #{forward.1} parent=1 // pred_check_branch
      %266 = sbr.rel (0) target = $region125
    $region124: #{forward.1} parent=1 // pred_region
      %267 = dma.done [#allocation22], 448
    $region125: #{forward.1} parent=1 // pred_fallthru
      _
    // Predicated region
    $region126: #{forward.1} parent=1 // pred_check
      _
    $region127: #{forward.1} parent=1 // pred_check_branch
      %269 = sbr.rel (0) target = $region129
    $region128: #{forward.1} parent=1 // pred_region
      %270 = dma.done [#allocation25], 1856
    $region129: #{forward.1} parent=1 // pred_fallthru
      _
    // Predicated region
    $region130: #{forward.1} parent=1 // pred_check
      _
    $region131: #{forward.1} parent=1 // pred_check_branch
      %272 = sbr.rel (0) target = $region133
    $region132: #{forward.1} parent=1 // pred_region
      %273 = dma.done [#allocation25], 448
    $region133: #{forward.1} parent=1 // pred_fallthru
      _
    // Predicated region
    $region134: #{forward.1} parent=1 // pred_check
      _
    $region135: #{forward.1} parent=1 // pred_check_branch
      %275 = sbr.rel (0) target = $region137
    $region136: #{forward.1} parent=1 // pred_region
      %276 = dma.done [#allocation28], 7296
    $region137: #{forward.1} parent=1 // pred_fallthru
      _
    %v278 = vld [vmem:[%s0] sm:$0xff]
    %v279 = vld [vmem:[%s0 + $0x8] sm:$0xff]
    %v280 = vld [vmem:[#allocation6] sm:$0xf]
    %v281 = vld [vmem:[#allocation6 + $0x4] sm:$0xf]
    %v282 = vld [vmem:[#allocation6 + $0x8] sm:$0xf]
    %v283 = vld [vmem:[#allocation6 + $0xc] sm:$0xf]
    %v284 = vld [vmem:[#allocation6 + $0x10] sm:$0xf]
    %v285 = vld [vmem:[#allocation6 + $0x14] sm:$0xf]
    %v286 = vld [vmem:[#allocation6 + $0x18] sm:$0xf]
    %v287 = vpack.c.bf16 %v278, %v278
    %v288 = vpack.c.bf16 %v279, %v279
    %v296 = vunpack.c.l.b16 %v280
    %v297 = vunpack.c.l.b16 %v281
    %v298 = vunpack.c.l.b16 %v282
    %v299 = vunpack.c.l.b16 %v283
    %v300 = vunpack.c.l.b16 %v284
    %v301 = vunpack.c.l.b16 %v285
    %v302 = vunpack.c.l.b16 %v286
    %v303 = vpack.c.b16 %v297, %v296
    %v304 = vpack.c.b16 %v299, %v298
    %v305 = vpack.c.b16 %v301, %v300
    %v306 = vpack.c.b16 %v302, %v302
    %vm307 = vcmask 64512
    %v309 = vsel %vm307, %v303, 0
    %v312 = vsel %vm307, %v304, 0
    %v315 = vsel %vm307, %v305, 0
    %v318 = vsel %vm307, %v306, 0
    %vm320 = vcmask 1043456
    %v322 = vsel %vm320, %v287, 0
    %v325 = vsel %vm320, %v288, 0
    %327 = vmatprep.subr.bf16.mxu0 %v325
    %328 = vmatpush1.bf16.msra.mxu0 %v322
    %329 = vmatprep.subr.bf16.mxu0 0
    %330 = vmatpush1.bf16.msra.mxu0 0
    %331 = vmatprep.subr.bf16.mxu0 0
    %332 = vmatpush1.bf16.msra.mxu0 0
    %333 = vmatprep.subr.bf16.mxu0 0
    %334 = vmatpush1.bf16.msra.mxu0 0
    %335 = vmatprep.subr.bf16.mxu0 0
    %336 = vmatpush1.bf16.msra.mxu0 0
    %337 = vmatprep.subr.bf16.mxu0 0
    %338 = vmatpush1.bf16.msra.mxu0 0
    %339 = vmatprep.subr.bf16.mxu0 0
    %340 = vmatpush1.bf16.msra.mxu0 0
    %341 = vmatprep.subr.bf16.mxu0 0
    %342 = vmatpush1.bf16.msra.mxu0 0
    %343 = vmatprep.subr.bf16.mxu0 0
    %344 = vmatpush1.bf16.msra.mxu0 0
    %345 = vmatprep.subr.bf16.mxu0 0
    %346 = vmatpush1.bf16.msra.mxu0 0
    %347 = vmatprep.subr.bf16.mxu0 0
    %348 = vmatpush1.bf16.msra.mxu0 0
    %349 = vmatprep.subr.bf16.mxu0 0
    %350 = vmatpush1.bf16.msra.mxu0 0
    %351 = vmatprep.subr.bf16.mxu0 0
    %352 = vmatpush1.bf16.msra.mxu0 0
    %353 = vmatprep.subr.bf16.mxu0 0
    %354 = vmatpush1.bf16.msra.mxu0 0
    %355 = vmatprep.subr.bf16.mxu0 0
    %356 = vmatpush1.bf16.msra.mxu0 0
    %357 = vmatprep.subr.bf16.mxu0 0
    %358 = vmatpush1.bf16.msra.mxu0 0
    %359 = vmatprep.mubr.bf16.mxu0 0
    %360 = vmatmul.mubr.bf16.gmra.mrb[0].mxu0 %v309
    %v361 = vpop.f32.mrb[0].mxu0
    %v362 = vadd.f32 0.0, %v361
    %v363 = vpop.f32.mrb[0].mxu0
    %v364 = vadd.f32 0.0, %v363
    %v365 = vpop.f32.mrb[0].mxu0
    %v366 = vadd.f32 0.0, %v365
    %v367 = vpop.f32.mrb[0].mxu0
    %v368 = vadd.f32 0.0, %v367
    %369 = vmatprep.mubr.bf16.mxu0 0
    %370 = vmatmul.mubr.bf16.gmra.mrb[0].mxu0 %v312
    %v371 = vpop.f32.mrb[0].mxu0
    %v372 = vadd.f32 0.0, %v371
    %v373 = vpop.f32.mrb[0].mxu0
    %v374 = vadd.f32 0.0, %v373
    %v375 = vpop.f32.mrb[0].mxu0
    %v376 = vadd.f32 0.0, %v375
    %v377 = vpop.f32.mrb[0].mxu0
    %v378 = vadd.f32 0.0, %v377
    %379 = vmatprep.mubr.bf16.mxu0 0
    %380 = vmatmul.mubr.bf16.gmra.mrb[0].mxu0 %v315
    %v381 = vpop.f32.mrb[0].mxu0
    %v382 = vadd.f32 0.0, %v381
    %v383 = vpop.f32.mrb[0].mxu0
    %v384 = vadd.f32 0.0, %v383
    %v385 = vpop.f32.mrb[0].mxu0
    %v386 = vadd.f32 0.0, %v385
    %v387 = vpop.f32.mrb[0].mxu0
    %v388 = vadd.f32 0.0, %v387
    %389 = vmatprep.mubr.bf16.mxu0 0
    %390 = vmatmul.mubr.bf16.gmra.mrb[0].mxu0 %v318
    %v391 = vpop.f32.mrb[0].mxu0
    %v392 = vadd.f32 0.0, %v391
    %v393 = vpop.f32.mrb[0].mxu0
    %v394 = vadd.f32 0.0, %v393
    %v395 = vpop.f32.mrb[0].mxu0
    %v396 = vpop.f32.mrb[0].mxu0
    %397 = vdwg.mxu0
    %398 = vst [vmem:[#allocation2] sm:$0xff] %v362
    %vm399 = vcmask 15360
    %400 = vst.msk [vmem:[#allocation2 + $0x8] sm:$0xff] %vm399, %v364
    %403 = vrot.lane.b32.xlu0 %v366, 2
    %v404 = vpop.permute.xlu0 %403
    %405 = vrot.lane.b32.xlu0 %v368, 2
    %v406 = vpop.permute.xlu0 %405
    %v407 = vsel %vm399, %v404, %v406
    %vm410 = vcmask 1047568
    %411 = vst.msk [vmem:[#allocation2 + $0x8] sm:$0xff] %vm410, %v404
    %vm412 = vcmask 31744
    %413 = vst.msk [vmem:[#allocation2 + $0x10] sm:$0xff] %vm412, %v407
    %416 = vrot.lane.b32.xlu0 %v372, 4
    %v417 = vpop.permute.xlu0 %416
    %418 = vrot.lane.b32.xlu0 %v374, 4
    %v419 = vpop.permute.xlu0 %418
    %v420 = vsel %vm412, %v417, %v419
    %vm423 = vcmask 1047584
    %424 = vst.msk [vmem:[#allocation2 + $0x10] sm:$0xff] %vm423, %v417
    %vm425 = vcmask 48128
    %426 = vst.msk [vmem:[#allocation2 + $0x18] sm:$0xff] %vm425, %v420
    %429 = vrot.lane.b32.xlu0 %v376, 6
    %v430 = vpop.permute.xlu0 %429
    %431 = vrot.lane.b32.xlu0 %v378, 6
    %v432 = vpop.permute.xlu0 %431
    %v433 = vsel %vm425, %v430, %v432
    %vm436 = vcmask 1047600
    %437 = vst.msk [vmem:[#allocation2 + $0x18] sm:$0xff] %vm436, %v430
    %438 = vst.msk [vmem:[#allocation2 + $0x20] sm:$0xff] %vm307, %v433
    %441 = vrot.lane.b32.xlu0 %v382, 8
    %v442 = vpop.permute.xlu0 %441
    %443 = vrot.lane.b32.xlu0 %v384, 8
    %v444 = vpop.permute.xlu0 %443
    %v445 = vsel %vm307, %v442, %v444
    %vm448 = vcmask 1047616
    %449 = vst.msk [vmem:[#allocation2 + $0x20] sm:$0xff] %vm448, %v442
    %vm450 = vcmask 80896
    %451 = vst.msk [vmem:[#allocation2 + $0x28] sm:$0xff] %vm450, %v445
    %454 = vrot.lane.b32.xlu0 %v386, 10
    %v455 = vpop.permute.xlu0 %454
    %456 = vrot.lane.b32.xlu0 %v388, 10
    %v457 = vpop.permute.xlu0 %456
    %v458 = vsel %vm450, %v455, %v457
    %vm461 = vcmask 1047632
    %462 = vst.msk [vmem:[#allocation2 + $0x28] sm:$0xff] %vm461, %v455
    %vm463 = vcmask 97280
    %464 = vst.msk [vmem:[#allocation2 + $0x30] sm:$0xff] %vm463, %v458
    %467 = vrot.lane.b32.xlu0 %v392, 12
    %v468 = vpop.permute.xlu0 %467
    %469 = vrot.lane.b32.xlu0 %v394, 12
    %v470 = vpop.permute.xlu0 %469
    %v471 = vsel %vm463, %v468, %v470
    %vm474 = vcmask 1047648
    %475 = vst.msk [vmem:[#allocation2 + $0x30] sm:$0xff] %vm474, %v468
    %vm476 = vcmask 113664
    %477 = vst.msk [vmem:[#allocation2 + $0x38] sm:$0xff] %vm476, %v471
    %v478 = vld [vmem:[#allocation2] sm:$0xff]
    %v479 = vld [vmem:[#allocation2 + $0x8] sm:$0xff]
    %v480 = vld [vmem:[#allocation2 + $0x10] sm:$0xff]
    %v481 = vld [vmem:[#allocation2 + $0x18] sm:$0xff]
    %v482 = vld [vmem:[#allocation2 + $0x20] sm:$0xff]
    %v483 = vld [vmem:[#allocation2 + $0x28] sm:$0xff]
    %v484 = vld [vmem:[#allocation2 + $0x30] sm:$0xff]
    %v485 = vld [vmem:[#allocation2 + $0x38] sm:$0xff]
    %v486 = vpack.c.bf16 %v478, %v478
    %v487 = vpack.c.bf16 %v479, %v479
    %v488 = vpack.c.bf16 %v480, %v480
    %v489 = vpack.c.bf16 %v481, %v481
    %v490 = vpack.c.bf16 %v482, %v482
    %v491 = vpack.c.bf16 %v483, %v483
    %v492 = vpack.c.bf16 %v484, %v484
    %v493 = vpack.c.bf16 %v485, %v485
    %v494 = vld [vmem:[#allocation8] sm:$0xf]
    %v495 = vld [vmem:[#allocation8 + $0x4] sm:$0xf]
    %v496 = vld [vmem:[#allocation8 + $0x8] sm:$0xf]
    %v497 = vld [vmem:[#allocation8 + $0xc] sm:$0xf]
    %v498 = vld [vmem:[#allocation8 + $0x10] sm:$0xf]
    %v499 = vld [vmem:[#allocation8 + $0x14] sm:$0xf]
    %v500 = vld [vmem:[#allocation8 + $0x18] sm:$0xf]
    %v501 = vld [vmem:[#allocation8 + $0x1c] sm:$0xf]
    %v502 = vld [vmem:[#allocation8 + $0x20] sm:$0xf]
    %v503 = vld [vmem:[#allocation8 + $0x24] sm:$0xf]
    %v504 = vld [vmem:[#allocation8 + $0x28] sm:$0xf]
    %v505 = vld [vmem:[#allocation8 + $0x2c] sm:$0xf]
    %v506 = vld [vmem:[#allocation8 + $0x30] sm:$0xf]
    %v507 = vld [vmem:[#allocation8 + $0x34] sm:$0xf]
    %v508 = vld [vmem:[#allocation8 + $0x38] sm:$0xf]
    %v509 = vld [vmem:[#allocation8 + $0x3c] sm:$0xf]
    %v510 = vld [vmem:[#allocation8 + $0x40] sm:$0xf]
    %v511 = vld [vmem:[#allocation8 + $0x44] sm:$0xf]
    %v512 = vld [vmem:[#allocation8 + $0x48] sm:$0xf]
    %v513 = vld [vmem:[#allocation8 + $0x4c] sm:$0xf]
    %v514 = vld [vmem:[#allocation8 + $0x50] sm:$0xf]
    %v515 = vld [vmem:[#allocation8 + $0x54] sm:$0xf]
    %v516 = vld [vmem:[#allocation8 + $0x58] sm:$0xf]
    %v517 = vld [vmem:[#allocation8 + $0x5c] sm:$0xf]
    %v518 = vld [vmem:[#allocation8 + $0x60] sm:$0xf]
    %v519 = vld [vmem:[#allocation8 + $0x64] sm:$0xf]
    %v520 = vld [vmem:[#allocation8 + $0x68] sm:$0xf]
    %v521 = vld [vmem:[#allocation8 + $0x6c] sm:$0xf]
    %v522 = vld [vmem:[#allocation8 + $0x70] sm:$0xf]
    %v523 = vld [vmem:[#allocation8 + $0x74] sm:$0xf]
    %v524 = vld [vmem:[#allocation8 + $0x78] sm:$0xf]
    %v525 = vld [vmem:[#allocation8 + $0x7c] sm:$0xf]
    %v526 = vld [vmem:[#allocation8 + $0x80] sm:$0xf]
    %v527 = vld [vmem:[#allocation8 + $0x84] sm:$0xf]
    %v528 = vld [vmem:[#allocation8 + $0x88] sm:$0xf]
    %v529 = vld [vmem:[#allocation8 + $0x8c] sm:$0xf]
    %v530 = vld [vmem:[#allocation8 + $0x90] sm:$0xf]
    %v531 = vld [vmem:[#allocation8 + $0x94] sm:$0xf]
    %v532 = vld [vmem:[#allocation8 + $0x98] sm:$0xf]
    %v533 = vld [vmem:[#allocation8 + $0x9c] sm:$0xf]
    %v534 = vld [vmem:[#allocation8 + $0xa0] sm:$0xf]
    %v535 = vld [vmem:[#allocation8 + $0xa4] sm:$0xf]
    %v536 = vld [vmem:[#allocation8 + $0xa8] sm:$0xf]
    %v537 = vld [vmem:[#allocation8 + $0xac] sm:$0xf]
    %v538 = vld [vmem:[#allocation8 + $0xb0] sm:$0xf]
    %v539 = vld [vmem:[#allocation8 + $0xb4] sm:$0xf]
    %v540 = vld [vmem:[#allocation8 + $0xb8] sm:$0xf]
    %v541 = vld [vmem:[#allocation8 + $0xbc] sm:$0xf]
    %v542 = vld [vmem:[#allocation8 + $0xc0] sm:$0xf]
    %v543 = vld [vmem:[#allocation8 + $0xc4] sm:$0xf]
    %v544 = vld [vmem:[#allocation8 + $0xc8] sm:$0xf]
    %v545 = vld [vmem:[#allocation8 + $0xcc] sm:$0xf]
    %v546 = vld [vmem:[#allocation8 + $0xd0] sm:$0xf]
    %v547 = vld [vmem:[#allocation8 + $0xd4] sm:$0xf]
    %v548 = vld [vmem:[#allocation8 + $0xd8] sm:$0xf]
    %v549 = vld [vmem:[#allocation8 + $0xdc] sm:$0xf]
    %v550 = vld [vmem:[#allocation8 + $0xe0] sm:$0xf]
    %v551 = vld [vmem:[#allocation8 + $0xe4] sm:$0xf]
    %v552 = vld [vmem:[#allocation8 + $0xe8] sm:$0xf]
    %v553 = vld [vmem:[#allocation8 + $0xec] sm:$0xf]
    %v554 = vld [vmem:[#allocation8 + $0xf0] sm:$0xf]
    %v555 = vld [vmem:[#allocation8 + $0xf4] sm:$0xf]
    %v556 = vld [vmem:[#allocation8 + $0xf8] sm:$0xf]
    %v557 = vld [vmem:[#allocation8 + $0xfc] sm:$0xf]
    %v558 = vld [vmem:[#allocation8 + $0x100] sm:$0xf]
    %v559 = vld [vmem:[#allocation8 + $0x104] sm:$0xf]
    %v560 = vld [vmem:[#allocation8 + $0x108] sm:$0xf]
    %v561 = vld [vmem:[#allocation8 + $0x10c] sm:$0xf]
    %v562 = vld [vmem:[#allocation8 + $0x110] sm:$0xf]
    %v563 = vld [vmem:[#allocation8 + $0x114] sm:$0xf]
    %v564 = vld [vmem:[#allocation8 + $0x118] sm:$0xf]
    %v565 = vld [vmem:[#allocation8 + $0x11c] sm:$0xf]
    %v566 = vld [vmem:[#allocation8 + $0x120] sm:$0xf]
    %v567 = vld [vmem:[#allocation8 + $0x124] sm:$0xf]
    %v568 = vld [vmem:[#allocation8 + $0x128] sm:$0xf]
    %v569 = vld [vmem:[#allocation8 + $0x12c] sm:$0xf]
    %v570 = vld [vmem:[#allocation8 + $0x130] sm:$0xf]
    %v571 = vld [vmem:[#allocation8 + $0x134] sm:$0xf]
    %v572 = vld [vmem:[#allocation8 + $0x138] sm:$0xf]
    %v573 = vld [vmem:[#allocation8 + $0x13c] sm:$0xf]
    %v574 = vld [vmem:[#allocation8 + $0x140] sm:$0xf]
    %v575 = vld [vmem:[#allocation8 + $0x144] sm:$0xf]
    %v576 = vld [vmem:[#allocation8 + $0x148] sm:$0xf]
    %v577 = vld [vmem:[#allocation8 + $0x14c] sm:$0xf]
    %v578 = vld [vmem:[#allocation8 + $0x150] sm:$0xf]
    %v579 = vld [vmem:[#allocation8 + $0x154] sm:$0xf]
    %v580 = vld [vmem:[#allocation8 + $0x158] sm:$0xf]
    %v581 = vld [vmem:[#allocation8 + $0x15c] sm:$0xf]
    %v582 = vld [vmem:[#allocation8 + $0x160] sm:$0xf]
    %v583 = vld [vmem:[#allocation8 + $0x164] sm:$0xf]
    %v584 = vld [vmem:[#allocation8 + $0x168] sm:$0xf]
    %v585 = vld [vmem:[#allocation8 + $0x16c] sm:$0xf]
    %v586 = vld [vmem:[#allocation8 + $0x170] sm:$0xf]
    %v587 = vld [vmem:[#allocation8 + $0x174] sm:$0xf]
    %v588 = vld [vmem:[#allocation8 + $0x178] sm:$0xf]
    %v589 = vld [vmem:[#allocation8 + $0x17c] sm:$0xf]
    %v590 = vld [vmem:[#allocation8 + $0x180] sm:$0xf]
    %v591 = vld [vmem:[#allocation8 + $0x184] sm:$0xf]
    %v592 = vld [vmem:[#allocation8 + $0x188] sm:$0xf]
    %v593 = vld [vmem:[#allocation8 + $0x18c] sm:$0xf]
    %v594 = vld [vmem:[#allocation8 + $0x190] sm:$0xf]
    %v595 = vld [vmem:[#allocation8 + $0x194] sm:$0xf]
    %v596 = vld [vmem:[#allocation8 + $0x198] sm:$0xf]
    %v597 = vld [vmem:[#allocation8 + $0x19c] sm:$0xf]
    %v598 = vld [vmem:[#allocation8 + $0x1a0] sm:$0xf]
    %v599 = vld [vmem:[#allocation8 + $0x1a4] sm:$0xf]
    %v600 = vld [vmem:[#allocation8 + $0x1a8] sm:$0xf]
    %v601 = vld [vmem:[#allocation8 + $0x1ac] sm:$0xf]
    %v602 = vld [vmem:[#allocation8 + $0x1b0] sm:$0xf]
    %v603 = vld [vmem:[#allocation8 + $0x1b4] sm:$0xf]
    %v604 = vld [vmem:[#allocation8 + $0x1b8] sm:$0xf]
    %v605 = vld [vmem:[#allocation8 + $0x1bc] sm:$0xf]
    %v606 = vld [vmem:[#allocation8 + $0x1c0] sm:$0xf]
    %v607 = vld [vmem:[#allocation8 + $0x1c4] sm:$0x7]
    %v608 = vld [vmem:[#allocation3] sm:$0xff]
    %610 = vset.pattern.permute.xlu0 0
    %611 = vperm.xlu0 %610, %v608
    %v612 = vpop.permute.xlu0 %611
    %v728 = vunpack.c.l.b16 %v494
    %v729 = vunpack.c.l.b16 %v495
    %v730 = vunpack.c.l.b16 %v496
    %v731 = vunpack.c.l.b16 %v497
    %v732 = vunpack.c.l.b16 %v498
    %v733 = vunpack.c.l.b16 %v499
    %v734 = vunpack.c.l.b16 %v500
    %v735 = vunpack.c.l.b16 %v501
    %v736 = vunpack.c.l.b16 %v502
    %v737 = vunpack.c.l.b16 %v503
    %v738 = vunpack.c.l.b16 %v504
    %v739 = vunpack.c.l.b16 %v505
    %v740 = vunpack.c.l.b16 %v506
    %v741 = vunpack.c.l.b16 %v507
    %v742 = vunpack.c.l.b16 %v508
    %v743 = vunpack.c.l.b16 %v509
    %v744 = vunpack.c.l.b16 %v510
    %v745 = vunpack.c.l.b16 %v511
    %v746 = vunpack.c.l.b16 %v512
    %v747 = vunpack.c.l.b16 %v513
    %v748 = vunpack.c.l.b16 %v514
    %v749 = vunpack.c.l.b16 %v515
    %v750 = vunpack.c.l.b16 %v516
    %v751 = vunpack.c.l.b16 %v517
    %v752 = vunpack.c.l.b16 %v518
    %v753 = vunpack.c.l.b16 %v519
    %v754 = vunpack.c.l.b16 %v520
    %v755 = vunpack.c.l.b16 %v521
    %v756 = vunpack.c.l.b16 %v522
    %v757 = vunpack.c.l.b16 %v523
    %v758 = vunpack.c.l.b16 %v524
    %v759 = vunpack.c.l.b16 %v525
    %v760 = vunpack.c.l.b16 %v526
    %v761 = vunpack.c.l.b16 %v527
    %v762 = vunpack.c.l.b16 %v528
    %v763 = vunpack.c.l.b16 %v529
    %v764 = vunpack.c.l.b16 %v530
    %v765 = vunpack.c.l.b16 %v531
    %v766 = vunpack.c.l.b16 %v532
    %v767 = vunpack.c.l.b16 %v533
    %v768 = vunpack.c.l.b16 %v534
    %v769 = vunpack.c.l.b16 %v535
    %v770 = vunpack.c.l.b16 %v536
    %v771 = vunpack.c.l.b16 %v537
    %v772 = vunpack.c.l.b16 %v538
    %v773 = vunpack.c.l.b16 %v539
    %v774 = vunpack.c.l.b16 %v540
    %v775 = vunpack.c.l.b16 %v541
    %v776 = vunpack.c.l.b16 %v542
    %v777 = vunpack.c.l.b16 %v543
    %v778 = vunpack.c.l.b16 %v544
    %v779 = vunpack.c.l.b16 %v545
    %v780 = vunpack.c.l.b16 %v546
    %v781 = vunpack.c.l.b16 %v547
    %v782 = vunpack.c.l.b16 %v548
    %v783 = vunpack.c.l.b16 %v549
    %v784 = vunpack.c.l.b16 %v550
    %v785 = vunpack.c.l.b16 %v551
    %v786 = vunpack.c.l.b16 %v552
    %v787 = vunpack.c.l.b16 %v553
    %v788 = vunpack.c.l.b16 %v554
    %v789 = vunpack.c.l.b16 %v555
    %v790 = vunpack.c.l.b16 %v556
    %v791 = vunpack.c.l.b16 %v557
    %v792 = vunpack.c.l.b16 %v558
    %v793 = vunpack.c.l.b16 %v559
    %v794 = vunpack.c.l.b16 %v560
    %v795 = vunpack.c.l.b16 %v561
    %v796 = vunpack.c.l.b16 %v562
    %v797 = vunpack.c.l.b16 %v563
    %v798 = vunpack.c.l.b16 %v564
    %v799 = vunpack.c.l.b16 %v565
    %v800 = vunpack.c.l.b16 %v566
    %v801 = vunpack.c.l.b16 %v567
    %v802 = vunpack.c.l.b16 %v568
    %v803 = vunpack.c.l.b16 %v569
    %v804 = vunpack.c.l.b16 %v570
    %v805 = vunpack.c.l.b16 %v571
    %v806 = vunpack.c.l.b16 %v572
    %v807 = vunpack.c.l.b16 %v573
    %v808 = vunpack.c.l.b16 %v574
    %v809 = vunpack.c.l.b16 %v575
    %v810 = vunpack.c.l.b16 %v576
    %v811 = vunpack.c.l.b16 %v577
    %v812 = vunpack.c.l.b16 %v578
    %v813 = vunpack.c.l.b16 %v579
    %v814 = vunpack.c.l.b16 %v580
    %v815 = vunpack.c.l.b16 %v581
    %v816 = vunpack.c.l.b16 %v582
    %v817 = vunpack.c.l.b16 %v583
    %v818 = vunpack.c.l.b16 %v584
    %v819 = vunpack.c.l.b16 %v585
    %v820 = vunpack.c.l.b16 %v586
    %v821 = vunpack.c.l.b16 %v587
    %v822 = vunpack.c.l.b16 %v588
    %v823 = vunpack.c.l.b16 %v589
    %v824 = vunpack.c.l.b16 %v590
    %v825 = vunpack.c.l.b16 %v591
    %v826 = vunpack.c.l.b16 %v592
    %v827 = vunpack.c.l.b16 %v593
    %v828 = vunpack.c.l.b16 %v594
    %v829 = vunpack.c.l.b16 %v595
    %v830 = vunpack.c.l.b16 %v596
    %v831 = vunpack.c.l.b16 %v597
    %v832 = vunpack.c.l.b16 %v598
    %v833 = vunpack.c.l.b16 %v599
    %v834 = vunpack.c.l.b16 %v600
    %v835 = vunpack.c.l.b16 %v601
    %v836 = vunpack.c.l.b16 %v602
    %v837 = vunpack.c.l.b16 %v603
    %v838 = vunpack.c.l.b16 %v604
    %v839 = vunpack.c.l.b16 %v605
    %v840 = vunpack.c.l.b16 %v606
    %v841 = vunpack.c.l.b16 %v607
    %v842 = vpack.c.b16 %v729, %v728
    %v843 = vpack.c.b16 %v731, %v730
    %v844 = vpack.c.b16 %v733, %v732
    %v845 = vpack.c.b16 %v735, %v734
    %v846 = vpack.c.b16 %v737, %v736
    %v847 = vpack.c.b16 %v739, %v738
    %v848 = vpack.c.b16 %v741, %v740
    %v849 = vpack.c.b16 %v743, %v742
    %v850 = vpack.c.b16 %v745, %v744
    %v851 = vpack.c.b16 %v747, %v746
    %v852 = vpack.c.b16 %v749, %v748
    %v853 = vpack.c.b16 %v751, %v750
    %v854 = vpack.c.b16 %v753, %v752
    %v855 = vpack.c.b16 %v755, %v754
    %v856 = vpack.c.b16 %v757, %v756
    %v857 = vpack.c.b16 %v759, %v758
    %v858 = vpack.c.b16 %v761, %v760
    %v859 = vpack.c.b16 %v763, %v762
    %v860 = vpack.c.b16 %v765, %v764
    %v861 = vpack.c.b16 %v767, %v766
    %v862 = vpack.c.b16 %v769, %v768
    %v863 = vpack.c.b16 %v771, %v770
    %v864 = vpack.c.b16 %v773, %v772
    %v865 = vpack.c.b16 %v775, %v774
    %v866 = vpack.c.b16 %v777, %v776
    %v867 = vpack.c.b16 %v779, %v778
    %v868 = vpack.c.b16 %v781, %v780
    %v869 = vpack.c.b16 %v783, %v782
    %v870 = vpack.c.b16 %v785, %v784
    %v871 = vpack.c.b16 %v787, %v786
    %v872 = vpack.c.b16 %v789, %v788
    %v873 = vpack.c.b16 %v791, %v790
    %v874 = vpack.c.b16 %v793, %v792
    %v875 = vpack.c.b16 %v795, %v794
    %v876 = vpack.c.b16 %v797, %v796
    %v877 = vpack.c.b16 %v799, %v798
    %v878 = vpack.c.b16 %v801, %v800
    %v879 = vpack.c.b16 %v803, %v802
    %v880 = vpack.c.b16 %v805, %v804
    %v881 = vpack.c.b16 %v807, %v806
    %v882 = vpack.c.b16 %v809, %v808
    %v883 = vpack.c.b16 %v811, %v810
    %v884 = vpack.c.b16 %v813, %v812
    %v885 = vpack.c.b16 %v815, %v814
    %v886 = vpack.c.b16 %v817, %v816
    %v887 = vpack.c.b16 %v819, %v818
    %v888 = vpack.c.b16 %v821, %v820
    %v889 = vpack.c.b16 %v823, %v822
    %v890 = vpack.c.b16 %v825, %v824
    %v891 = vpack.c.b16 %v827, %v826
    %v892 = vpack.c.b16 %v829, %v828
    %v893 = vpack.c.b16 %v831, %v830
    %v894 = vpack.c.b16 %v833, %v832
    %v895 = vpack.c.b16 %v835, %v834
    %v896 = vpack.c.b16 %v837, %v836
    %v897 = vpack.c.b16 %v839, %v838
    %v898 = vpack.c.b16 %v841, %v840
    %v956 = vsel %vm476, %v493, 0
    %vm958 = vcmask 1046528
    %v960 = vsel %vm958, %v898, 0
    %962 = vmatprep.subr.bf16.mxu0 0
    %963 = vmatpush1.bf16.msra.mxu0 %v842
    %964 = vmatprep.subr.bf16.mxu0 0
    %965 = vmatpush1.bf16.msra.mxu0 %v843
    %966 = vmatprep.subr.bf16.mxu0 0
    %967 = vmatpush1.bf16.msra.mxu0 %v844
    %968 = vmatprep.subr.bf16.mxu0 0
    %969 = vmatpush1.bf16.msra.mxu0 %v845
    %970 = vmatprep.subr.bf16.mxu0 0
    %971 = vmatpush1.bf16.msra.mxu0 %v846
    %972 = vmatprep.subr.bf16.mxu0 0
    %973 = vmatpush1.bf16.msra.mxu0 %v847
    %974 = vmatprep.subr.bf16.mxu0 0
    %975 = vmatpush1.bf16.msra.mxu0 %v848
    %976 = vmatprep.subr.bf16.mxu0 0
    %977 = vmatpush1.bf16.msra.mxu0 %v849
    %978 = vmatprep.subr.bf16.mxu0 0
    %979 = vmatpush1.bf16.msra.mxu0 %v850
    %980 = vmatprep.subr.bf16.mxu0 0
    %981 = vmatpush1.bf16.msra.mxu0 %v851
    %982 = vmatprep.subr.bf16.mxu0 0
    %983 = vmatpush1.bf16.msra.mxu0 %v852
    %984 = vmatprep.subr.bf16.mxu0 0
    %985 = vmatpush1.bf16.msra.mxu0 %v853
    %986 = vmatprep.subr.bf16.mxu0 0
    %987 = vmatpush1.bf16.msra.mxu0 %v854
    %988 = vmatprep.subr.bf16.mxu0 0
    %989 = vmatpush1.bf16.msra.mxu0 %v855
    %990 = vmatprep.subr.bf16.mxu0 0
    %991 = vmatpush1.bf16.msra.mxu0 %v856
    %992 = vmatprep.subr.bf16.mxu0 0
    %993 = vmatpush1.bf16.msra.mxu0 %v857
    %994 = vmatprep.mubr.bf16.mxu0 %v487
    %995 = vmatmul.mubr.bf16.gmra.mrb[0].mxu0 %v486
    %v996 = vpop.f32.mrb[0].mxu0
    %v997 = vadd.f32 %v612, %v996
    %v998 = vpop.f32.mrb[0].mxu0
    %v999 = vpop.f32.mrb[0].mxu0
    %v1000 = vpop.f32.mrb[0].mxu0
    %1001 = vdwg.mxu0
    %1002 = vmatprep.subr.bf16.mxu0 0
    %1003 = vmatpush1.bf16.msra.mxu0 %v858
    %1004 = vmatprep.subr.bf16.mxu0 0
    %1005 = vmatpush1.bf16.msra.mxu0 %v859
    %1006 = vmatprep.subr.bf16.mxu0 0
    %1007 = vmatpush1.bf16.msra.mxu0 %v860
    %1008 = vmatprep.subr.bf16.mxu0 0
    %1009 = vmatpush1.bf16.msra.mxu0 %v861
    %1010 = vmatprep.subr.bf16.mxu0 0
    %1011 = vmatpush1.bf16.msra.mxu0 %v862
    %1012 = vmatprep.subr.bf16.mxu0 0
    %1013 = vmatpush1.bf16.msra.mxu0 %v863
    %1014 = vmatprep.subr.bf16.mxu0 0
    %1015 = vmatpush1.bf16.msra.mxu0 %v864
    %1016 = vmatprep.subr.bf16.mxu0 0
    %1017 = vmatpush1.bf16.msra.mxu0 %v865
    %1018 = vmatprep.subr.bf16.mxu0 0
    %1019 = vmatpush1.bf16.msra.mxu0 %v866
    %1020 = vmatprep.subr.bf16.mxu0 0
    %1021 = vmatpush1.bf16.msra.mxu0 %v867
    %1022 = vmatprep.subr.bf16.mxu0 0
    %1023 = vmatpush1.bf16.msra.mxu0 %v868
    %1024 = vmatprep.subr.bf16.mxu0 0
    %1025 = vmatpush1.bf16.msra.mxu0 %v869
    %1026 = vmatprep.subr.bf16.mxu0 0
    %1027 = vmatpush1.bf16.msra.mxu0 %v870
    %1028 = vmatprep.subr.bf16.mxu0 0
    %1029 = vmatpush1.bf16.msra.mxu0 %v871
    %1030 = vmatprep.subr.bf16.mxu0 0
    %1031 = vmatpush1.bf16.msra.mxu0 %v872
    %1032 = vmatprep.subr.bf16.mxu0 0
    %1033 = vmatpush1.bf16.msra.mxu0 %v873
    %1034 = vmatprep.mubr.bf16.mxu0 %v489
    %1035 = vmatmul.mubr.bf16.gmra.mrb[0].mxu0 %v488
    %v1036 = vpop.f32.mrb[0].mxu0
    %v1037 = vadd.f32 %v997, %v1036
    %v1038 = vpop.f32.mrb[0].mxu0
    %v1039 = vpop.f32.mrb[0].mxu0
    %v1040 = vpop.f32.mrb[0].mxu0
    %1041 = vdwg.mxu0
    %1042 = vmatprep.subr.bf16.mxu0 0
    %1043 = vmatpush1.bf16.msra.mxu0 %v874
    %1044 = vmatprep.subr.bf16.mxu0 0
    %1045 = vmatpush1.bf16.msra.mxu0 %v875
    %1046 = vmatprep.subr.bf16.mxu0 0
    %1047 = vmatpush1.bf16.msra.mxu0 %v876
    %1048 = vmatprep.subr.bf16.mxu0 0
    %1049 = vmatpush1.bf16.msra.mxu0 %v877
    %1050 = vmatprep.subr.bf16.mxu0 0
    %1051 = vmatpush1.bf16.msra.mxu0 %v878
    %1052 = vmatprep.subr.bf16.mxu0 0
    %1053 = vmatpush1.bf16.msra.mxu0 %v879
    %1054 = vmatprep.subr.bf16.mxu0 0
    %1055 = vmatpush1.bf16.msra.mxu0 %v880
    %1056 = vmatprep.subr.bf16.mxu0 0
    %1057 = vmatpush1.bf16.msra.mxu0 %v881
    %1058 = vmatprep.subr.bf16.mxu0 0
    %1059 = vmatpush1.bf16.msra.mxu0 %v882
    %1060 = vmatprep.subr.bf16.mxu0 0
    %1061 = vmatpush1.bf16.msra.mxu0 %v883
    %1062 = vmatprep.subr.bf16.mxu0 0
    %1063 = vmatpush1.bf16.msra.mxu0 %v884
    %1064 = vmatprep.subr.bf16.mxu0 0
    %1065 = vmatpush1.bf16.msra.mxu0 %v885
    %1066 = vmatprep.subr.bf16.mxu0 0
    %1067 = vmatpush1.bf16.msra.mxu0 %v886
    %1068 = vmatprep.subr.bf16.mxu0 0
    %1069 = vmatpush1.bf16.msra.mxu0 %v887
    %1070 = vmatprep.subr.bf16.mxu0 0
    %1071 = vmatpush1.bf16.msra.mxu0 %v888
    %1072 = vmatprep.subr.bf16.mxu0 0
    %1073 = vmatpush1.bf16.msra.mxu0 %v889
    %1074 = vmatprep.mubr.bf16.mxu0 %v491
    %1075 = vmatmul.mubr.bf16.gmra.mrb[0].mxu0 %v490
    %v1076 = vpop.f32.mrb[0].mxu0
    %v1077 = vadd.f32 %v1037, %v1076
    %v1078 = vpop.f32.mrb[0].mxu0
    %v1079 = vpop.f32.mrb[0].mxu0
    %v1080 = vpop.f32.mrb[0].mxu0
    %1081 = vdwg.mxu0
    %1082 = vmatprep.subr.bf16.mxu0 0
    %1083 = vmatpush1.bf16.msra.mxu0 %v890
    %1084 = vmatprep.subr.bf16.mxu0 0
    %1085 = vmatpush1.bf16.msra.mxu0 %v891
    %1086 = vmatprep.subr.bf16.mxu0 0
    %1087 = vmatpush1.bf16.msra.mxu0 %v892
    %1088 = vmatprep.subr.bf16.mxu0 0
    %1089 = vmatpush1.bf16.msra.mxu0 %v893
    %1090 = vmatprep.subr.bf16.mxu0 0
    %1091 = vmatpush1.bf16.msra.mxu0 %v894
    %1092 = vmatprep.subr.bf16.mxu0 0
    %1093 = vmatpush1.bf16.msra.mxu0 %v895
    %1094 = vmatprep.subr.bf16.mxu0 0
    %1095 = vmatpush1.bf16.msra.mxu0 %v896
    %1096 = vmatprep.subr.bf16.mxu0 0
    %1097 = vmatpush1.bf16.msra.mxu0 %v897
    %1098 = vmatprep.subr.bf16.mxu0 0
    %1099 = vmatpush1.bf16.msra.mxu0 %v960
    %1100 = vmatprep.subr.bf16.mxu0 0
    %1101 = vmatpush1.bf16.msra.mxu0 0
    %1102 = vmatprep.subr.bf16.mxu0 0
    %1103 = vmatpush1.bf16.msra.mxu0 0
    %1104 = vmatprep.subr.bf16.mxu0 0
    %1105 = vmatpush1.bf16.msra.mxu0 0
    %1106 = vmatprep.subr.bf16.mxu0 0
    %1107 = vmatpush1.bf16.msra.mxu0 0
    %1108 = vmatprep.subr.bf16.mxu0 0
    %1109 = vmatpush1.bf16.msra.mxu0 0
    %1110 = vmatprep.subr.bf16.mxu0 0
    %1111 = vmatpush1.bf16.msra.mxu0 0
    %1112 = vmatprep.subr.bf16.mxu0 0
    %1113 = vmatpush1.bf16.msra.mxu0 0
    %1114 = vmatprep.mubr.bf16.mxu0 %v956
    %1115 = vmatmul.mubr.bf16.gmra.mrb[0].mxu0 %v492
    %v1116 = vpop.f32.mrb[0].mxu0
    %v1117 = vadd.f32 %v1077, %v1116
    %v1118 = vpop.f32.mrb[0].mxu0
    %v1119 = vpop.f32.mrb[0].mxu0
    %v1120 = vpop.f32.mrb[0].mxu0
    %1121 = vdwg.mxu0
    %v1122 = vmax.f32 %v1117, 0.0
    %v1123 = vld [vmem:[#allocation9] sm:$0xf]
    %v1124 = vld [vmem:[#allocation9 + $0x4] sm:$0xf]
    %v1125 = vld [vmem:[#allocation9 + $0x8] sm:$0xf]
    %v1126 = vld [vmem:[#allocation9 + $0xc] sm:$0xf]
    %v1127 = vld [vmem:[#allocation9 + $0x10] sm:$0xf]
    %v1128 = vld [vmem:[#allocation9 + $0x14] sm:$0xf]
    %v1129 = vld [vmem:[#allocation9 + $0x18] sm:$0xf]
    %v1130 = vld [vmem:[#allocation9 + $0x1c] sm:$0xf]
    %v1131 = vld [vmem:[#allocation9 + $0x20] sm:$0xf]
    %v1132 = vld [vmem:[#allocation9 + $0x24] sm:$0xf]
    %v1133 = vld [vmem:[#allocation9 + $0x28] sm:$0xf]
    %v1134 = vld [vmem:[#allocation9 + $0x2c] sm:$0xf]
    %v1135 = vld [vmem:[#allocation9 + $0x30] sm:$0xf]
    %v1136 = vld [vmem:[#allocation9 + $0x34] sm:$0xf]
    %v1137 = vpack.c.bf16 %v1122, %v1122
    %v1152 = vunpack.c.l.b16 %v1123
    %v1153 = vunpack.c.l.b16 %v1124
    %v1154 = vunpack.c.l.b16 %v1125
    %v1155 = vunpack.c.l.b16 %v1126
    %v1156 = vunpack.c.l.b16 %v1127
    %v1157 = vunpack.c.l.b16 %v1128
    %v1158 = vunpack.c.l.b16 %v1129
    %v1159 = vunpack.c.l.b16 %v1130
    %v1160 = vunpack.c.l.b16 %v1131
    %v1161 = vunpack.c.l.b16 %v1132
    %v1162 = vunpack.c.l.b16 %v1133
    %v1163 = vunpack.c.l.b16 %v1134
    %v1164 = vunpack.c.l.b16 %v1135
    %v1165 = vunpack.c.l.b16 %v1136
    %v1166 = vpack.c.b16 %v1153, %v1152
    %v1167 = vpack.c.b16 %v1155, %v1154
    %v1168 = vpack.c.b16 %v1157, %v1156
    %v1169 = vpack.c.b16 %v1159, %v1158
    %v1170 = vpack.c.b16 %v1161, %v1160
    %v1171 = vpack.c.b16 %v1163, %v1162
    %v1172 = vpack.c.b16 %v1165, %v1164
    %v1174 = vsel %vm307, %v1166, 0
    %v1177 = vsel %vm307, %v1167, 0
    %v1180 = vsel %vm307, %v1168, 0
    %v1183 = vsel %vm307, %v1169, 0
    %v1186 = vsel %vm307, %v1170, 0
    %v1189 = vsel %vm307, %v1171, 0
    %v1192 = vsel %vm307, %v1172, 0
    %v1195 = vsel %vm320, %v1137, 0
    %1197 = vmatprep.subr.bf16.mxu0 0
    %1198 = vmatpush1.bf16.msra.mxu0 %v1195
    %1199 = vmatprep.subr.bf16.mxu0 0
    %1200 = vmatpush1.bf16.msra.mxu0 0
    %1201 = vmatprep.subr.bf16.mxu0 0
    %1202 = vmatpush1.bf16.msra.mxu0 0
    %1203 = vmatprep.subr.bf16.mxu0 0
    %1204 = vmatpush1.bf16.msra.mxu0 0
    %1205 = vmatprep.subr.bf16.mxu0 0
    %1206 = vmatpush1.bf16.msra.mxu0 0
    %1207 = vmatprep.subr.bf16.mxu0 0
    %1208 = vmatpush1.bf16.msra.mxu0 0
    %1209 = vmatprep.subr.bf16.mxu0 0
    %1210 = vmatpush1.bf16.msra.mxu0 0
    %1211 = vmatprep.subr.bf16.mxu0 0
    %1212 = vmatpush1.bf16.msra.mxu0 0
    %1213 = vmatprep.subr.bf16.mxu0 0
    %1214 = vmatpush1.bf16.msra.mxu0 0
    %1215 = vmatprep.subr.bf16.mxu0 0
    %1216 = vmatpush1.bf16.msra.mxu0 0
    %1217 = vmatprep.subr.bf16.mxu0 0
    %1218 = vmatpush1.bf16.msra.mxu0 0
    %1219 = vmatprep.subr.bf16.mxu0 0
    %1220 = vmatpush1.bf16.msra.mxu0 0
    %1221 = vmatprep.subr.bf16.mxu0 0
    %1222 = vmatpush1.bf16.msra.mxu0 0
    %1223 = vmatprep.subr.bf16.mxu0 0
    %1224 = vmatpush1.bf16.msra.mxu0 0
    %1225 = vmatprep.subr.bf16.mxu0 0
    %1226 = vmatpush1.bf16.msra.mxu0 0
    %1227 = vmatprep.subr.bf16.mxu0 0
    %1228 = vmatpush1.bf16.msra.mxu0 0
    %1229 = vmatprep.mubr.bf16.mxu0 0
    %1230 = vmatmul.mubr.bf16.gmra.mrb[0].mxu0 %v1174
    %v1231 = vpop.f32.mrb[0].mxu0
    %v1232 = vadd.f32 0.0, %v1231
    %v1233 = vpop.f32.mrb[0].mxu0
    %v1234 = vpop.f32.mrb[0].mxu0
    %v1235 = vadd.f32 0.0, %v1234
    %v1236 = vpop.f32.mrb[0].mxu0
    %1237 = vmatprep.mubr.bf16.mxu0 0
    %1238 = vmatmul.mubr.bf16.gmra.mrb[0].mxu0 %v1177
    %v1239 = vpop.f32.mrb[0].mxu0
    %v1240 = vadd.f32 0.0, %v1239
    %v1241 = vpop.f32.mrb[0].mxu0
    %v1242 = vpop.f32.mrb[0].mxu0
    %v1243 = vadd.f32 0.0, %v1242
    %v1244 = vpop.f32.mrb[0].mxu0
    %1245 = vmatprep.mubr.bf16.mxu0 0
    %1246 = vmatmul.mubr.bf16.gmra.mrb[0].mxu0 %v1180
    %v1247 = vpop.f32.mrb[0].mxu0
    %v1248 = vadd.f32 0.0, %v1247
    %v1249 = vpop.f32.mrb[0].mxu0
    %v1250 = vpop.f32.mrb[0].mxu0
    %v1251 = vadd.f32 0.0, %v1250
    %v1252 = vpop.f32.mrb[0].mxu0
    %1253 = vmatprep.mubr.bf16.mxu0 0
    %1254 = vmatmul.mubr.bf16.gmra.mrb[0].mxu0 %v1183
    %v1255 = vpop.f32.mrb[0].mxu0
    %v1256 = vadd.f32 0.0, %v1255
    %v1257 = vpop.f32.mrb[0].mxu0
    %v1258 = vpop.f32.mrb[0].mxu0
    %v1259 = vadd.f32 0.0, %v1258
    %v1260 = vpop.f32.mrb[0].mxu0
    %1261 = vmatprep.mubr.bf16.mxu0 0
    %1262 = vmatmul.mubr.bf16.gmra.mrb[0].mxu0 %v1186
    %v1263 = vpop.f32.mrb[0].mxu0
    %v1264 = vadd.f32 0.0, %v1263
    %v1265 = vpop.f32.mrb[0].mxu0
    %v1266 = vpop.f32.mrb[0].mxu0
    %v1267 = vadd.f32 0.0, %v1266
    %v1268 = vpop.f32.mrb[0].mxu0
    %1269 = vmatprep.mubr.bf16.mxu0 0
    %1270 = vmatmul.mubr.bf16.gmra.mrb[0].mxu0 %v1189
    %v1271 = vpop.f32.mrb[0].mxu0
    %v1272 = vadd.f32 0.0, %v1271
    %v1273 = vpop.f32.mrb[0].mxu0
    %v1274 = vpop.f32.mrb[0].mxu0
    %v1275 = vadd.f32 0.0, %v1274
    %v1276 = vpop.f32.mrb[0].mxu0
    %1277 = vmatprep.mubr.bf16.mxu0 0
    %1278 = vmatmul.mubr.bf16.gmra.mrb[0].mxu0 %v1192
    %v1279 = vpop.f32.mrb[0].mxu0
    %v1280 = vadd.f32 0.0, %v1279
    %v1281 = vpop.f32.mrb[0].mxu0
    %v1282 = vpop.f32.mrb[0].mxu0
    %v1283 = vadd.f32 0.0, %v1282
    %v1284 = vpop.f32.mrb[0].mxu0
    %1285 = vdwg.mxu0
    %vm1286 = vcmask 531456
    %1287 = vst.msk [vmem:[#allocation2] sm:$0xff] %vm1286, %v1232
    %1288 = vst.msk [vmem:[#allocation2 + $0x40] sm:$0xff] %vm1286, %v1235
    %1291 = vrot.lane.b32.xlu0 %v1240, 65
    %v1292 = vpop.permute.xlu0 %1291
    %1293 = vrot.lane.b32.xlu0 %v1243, 65
    %v1294 = vpop.permute.xlu0 %1293
    %vm1297 = vcmask 1048072
    %1298 = vst.msk [vmem:[#allocation2] sm:$0xff] %vm1297, %v1292
    %1299 = vst.msk [vmem:[#allocation2 + $0x8] sm:$0xff] %vm399, %v1292
    %1300 = vst.msk [vmem:[#allocation2 + $0x40] sm:$0xff] %vm1297, %v1294
    %1301 = vst.msk [vmem:[#allocation2 + $0x48] sm:$0xff] %vm399, %v1294
    %1304 = vrot.lane.b32.xlu0 %v1248, 2
    %v1305 = vpop.permute.xlu0 %1304
    %1306 = vrot.lane.b32.xlu0 %v1251, 2
    %v1307 = vpop.permute.xlu0 %1306
    %vm1310 = vcmask 547856
    %1311 = vst.msk [vmem:[#allocation2 + $0x8] sm:$0xff] %vm1310, %v1305
    %1312 = vst.msk [vmem:[#allocation2 + $0x48] sm:$0xff] %vm1310, %v1307
    %1315 = vrot.lane.b32.xlu0 %v1256, 67
    %v1316 = vpop.permute.xlu0 %1315
    %1317 = vrot.lane.b32.xlu0 %v1259, 67
    %v1318 = vpop.permute.xlu0 %1317
    %vm1321 = vcmask 1048088
    %1322 = vst.msk [vmem:[#allocation2 + $0x8] sm:$0xff] %vm1321, %v1316
    %1323 = vst.msk [vmem:[#allocation2 + $0x10] sm:$0xff] %vm412, %v1316
    %1324 = vst.msk [vmem:[#allocation2 + $0x48] sm:$0xff] %vm1321, %v1318
    %1325 = vst.msk [vmem:[#allocation2 + $0x50] sm:$0xff] %vm412, %v1318
    %1328 = vrot.lane.b32.xlu0 %v1264, 4
    %v1329 = vpop.permute.xlu0 %1328
    %1330 = vrot.lane.b32.xlu0 %v1267, 4
    %v1331 = vpop.permute.xlu0 %1330
    %vm1334 = vcmask 564256
    %1335 = vst.msk [vmem:[#allocation2 + $0x10] sm:$0xff] %vm1334, %v1329
    %1336 = vst.msk [vmem:[#allocation2 + $0x50] sm:$0xff] %vm1334, %v1331
    %1339 = vrot.lane.b32.xlu0 %v1272, 69
    %v1340 = vpop.permute.xlu0 %1339
    %1341 = vrot.lane.b32.xlu0 %v1275, 69
    %v1342 = vpop.permute.xlu0 %1341
    %vm1345 = vcmask 1048104
    %1346 = vst.msk [vmem:[#allocation2 + $0x10] sm:$0xff] %vm1345, %v1340
    %1347 = vst.msk [vmem:[#allocation2 + $0x18] sm:$0xff] %vm425, %v1340
    %1348 = vst.msk [vmem:[#allocation2 + $0x50] sm:$0xff] %vm1345, %v1342
    %1349 = vst.msk [vmem:[#allocation2 + $0x58] sm:$0xff] %vm425, %v1342
    %1352 = vrot.lane.b32.xlu0 %v1280, 6
    %v1353 = vpop.permute.xlu0 %1352
    %1354 = vrot.lane.b32.xlu0 %v1283, 6
    %v1355 = vpop.permute.xlu0 %1354
    %vm1358 = vcmask 580656
    %1359 = vst.msk [vmem:[#allocation2 + $0x18] sm:$0xff] %vm1358, %v1353
    %1360 = vst.msk [vmem:[#allocation2 + $0x58] sm:$0xff] %vm1358, %v1355
    %v1361 = vld [vmem:[#allocation2] sm:$0xff]
    %v1362 = vld [vmem:[#allocation2 + $0x8] sm:$0xff]
    %v1363 = vld [vmem:[#allocation2 + $0x10] sm:$0xff]
    %v1364 = vld [vmem:[#allocation2 + $0x18] sm:$0xff]
    %v1365 = vld [vmem:[#allocation2 + $0x40] sm:$0xff]
    %v1366 = vld [vmem:[#allocation2 + $0x48] sm:$0xff]
    %v1367 = vld [vmem:[#allocation2 + $0x50] sm:$0xff]
    %v1368 = vld [vmem:[#allocation2 + $0x58] sm:$0xff]
    %v1369 = vpack.c.bf16 %v1365, %v1361
    %v1370 = vpack.c.bf16 %v1366, %v1362
    %v1371 = vpack.c.bf16 %v1367, %v1363
    %v1372 = vpack.c.bf16 %v1368, %v1364
    %v1373 = vld [vmem:[#allocation11] sm:$0xf]
    %v1374 = vld [vmem:[#allocation11 + $0x4] sm:$0xf]
    %v1375 = vld [vmem:[#allocation11 + $0x8] sm:$0xf]
    %v1376 = vld [vmem:[#allocation11 + $0xc] sm:$0xf]
    %v1377 = vld [vmem:[#allocation11 + $0x10] sm:$0xf]
    %v1378 = vld [vmem:[#allocation11 + $0x14] sm:$0xf]
    %v1379 = vld [vmem:[#allocation11 + $0x18] sm:$0xf]
    %v1380 = vld [vmem:[#allocation11 + $0x1c] sm:$0xf]
    %v1381 = vld [vmem:[#allocation11 + $0x20] sm:$0xf]
    %v1382 = vld [vmem:[#allocation11 + $0x24] sm:$0xf]
    %v1383 = vld [vmem:[#allocation11 + $0x28] sm:$0xf]
    %v1384 = vld [vmem:[#allocation11 + $0x2c] sm:$0xf]
    %v1385 = vld [vmem:[#allocation11 + $0x30] sm:$0xf]
    %v1386 = vld [vmem:[#allocation11 + $0x34] sm:$0xf]
    %v1387 = vld [vmem:[#allocation11 + $0x38] sm:$0xf]
    %v1388 = vld [vmem:[#allocation11 + $0x3c] sm:$0xf]
    %v1389 = vld [vmem:[#allocation11 + $0x40] sm:$0xf]
    %v1390 = vld [vmem:[#allocation11 + $0x44] sm:$0xf]
    %v1391 = vld [vmem:[#allocation11 + $0x48] sm:$0xf]
    %v1392 = vld [vmem:[#allocation11 + $0x4c] sm:$0xf]
    %v1393 = vld [vmem:[#allocation11 + $0x50] sm:$0xf]
    %v1394 = vld [vmem:[#allocation11 + $0x54] sm:$0xf]
    %v1395 = vld [vmem:[#allocation11 + $0x58] sm:$0xf]
    %v1396 = vld [vmem:[#allocation11 + $0x5c] sm:$0xf]
    %v1397 = vld [vmem:[#allocation11 + $0x60] sm:$0xf]
    %v1398 = vld [vmem:[#allocation11 + $0x64] sm:$0xf]
    %v1399 = vld [vmem:[#allocation11 + $0x68] sm:$0xf]
    %v1400 = vld [vmem:[#allocation11 + $0x6c] sm:$0xf]
    %v1401 = vld [vmem:[#allocation11 + $0x70] sm:$0xf]
    %v1402 = vld [vmem:[#allocation11 + $0x74] sm:$0xf]
    %v1403 = vld [vmem:[#allocation11 + $0x78] sm:$0xf]
    %v1404 = vld [vmem:[#allocation11 + $0x7c] sm:$0xf]
    %v1405 = vld [vmem:[#allocation11 + $0x80] sm:$0xf]
    %v1406 = vld [vmem:[#allocation11 + $0x84] sm:$0xf]
    %v1407 = vld [vmem:[#allocation11 + $0x88] sm:$0xf]
    %v1408 = vld [vmem:[#allocation11 + $0x8c] sm:$0xf]
    %v1409 = vld [vmem:[#allocation11 + $0x90] sm:$0xf]
    %v1410 = vld [vmem:[#allocation11 + $0x94] sm:$0xf]
    %v1411 = vld [vmem:[#allocation11 + $0x98] sm:$0xf]
    %v1412 = vld [vmem:[#allocation11 + $0x9c] sm:$0xf]
    %v1413 = vld [vmem:[#allocation11 + $0xa0] sm:$0xf]
    %v1414 = vld [vmem:[#allocation11 + $0xa4] sm:$0xf]
    %v1415 = vld [vmem:[#allocation11 + $0xa8] sm:$0xf]
    %v1416 = vld [vmem:[#allocation11 + $0xac] sm:$0xf]
    %v1417 = vld [vmem:[#allocation11 + $0xb0] sm:$0xf]
    %v1418 = vld [vmem:[#allocation11 + $0xb4] sm:$0xf]
    %v1419 = vld [vmem:[#allocation11 + $0xb8] sm:$0xf]
    %v1420 = vld [vmem:[#allocation11 + $0xbc] sm:$0xf]
    %v1421 = vld [vmem:[#allocation11 + $0xc0] sm:$0xf]
    %v1422 = vld [vmem:[#allocation11 + $0xc4] sm:$0xf]
    %v1423 = vld [vmem:[#allocation11 + $0xc8] sm:$0xf]
    %v1424 = vld [vmem:[#allocation11 + $0xcc] sm:$0xf]
    %v1425 = vld [vmem:[#allocation11 + $0xd0] sm:$0xf]
    %v1426 = vld [vmem:[#allocation11 + $0xd4] sm:$0xf]
    %v1427 = vld [vmem:[#allocation11 + $0xd8] sm:$0xf]
    %v1428 = vld [vmem:[#allocation11 + $0xdc] sm:$0xf]
    %v1429 = vld [vmem:[#allocation11 + $0xe0] sm:$0xf]
    %v1430 = vld [vmem:[#allocation3] sm:$0xff]
    %v1431 = vld [vmem:[#allocation3 + $0x8] sm:$0xff]
    %1433 = vset.pattern.permute.xlu0 1
    %1434 = vperm.xlu0 %1433, %v1430
    %v1435 = vpop.permute.xlu0 %1434
    %1438 = vset.pattern.permute.xlu0 1
    %1439 = vperm.xlu0 %1438, %v1431
    %v1440 = vpop.permute.xlu0 %1439
    %v1499 = vunpack.c.l.b16 %v1373
    %v1500 = vunpack.c.l.b16 %v1374
    %v1501 = vunpack.c.l.b16 %v1375
    %v1502 = vunpack.c.l.b16 %v1376
    %v1503 = vunpack.c.l.b16 %v1377
    %v1504 = vunpack.c.l.b16 %v1378
    %v1505 = vunpack.c.l.b16 %v1379
    %v1506 = vunpack.c.l.b16 %v1380
    %v1507 = vunpack.c.l.b16 %v1381
    %v1508 = vunpack.c.l.b16 %v1382
    %v1509 = vunpack.c.l.b16 %v1383
    %v1510 = vunpack.c.l.b16 %v1384
    %v1511 = vunpack.c.l.b16 %v1385
    %v1512 = vunpack.c.l.b16 %v1386
    %v1513 = vunpack.c.l.b16 %v1387
    %v1514 = vunpack.c.l.b16 %v1388
    %v1515 = vunpack.c.l.b16 %v1389
    %v1516 = vunpack.c.l.b16 %v1390
    %v1517 = vunpack.c.l.b16 %v1391
    %v1518 = vunpack.c.l.b16 %v1392
    %v1519 = vunpack.c.l.b16 %v1393
    %v1520 = vunpack.c.l.b16 %v1394
    %v1521 = vunpack.c.l.b16 %v1395
    %v1522 = vunpack.c.l.b16 %v1396
    %v1523 = vunpack.c.l.b16 %v1397
    %v1524 = vunpack.c.l.b16 %v1398
    %v1525 = vunpack.c.l.b16 %v1399
    %v1526 = vunpack.c.l.b16 %v1400
    %v1527 = vunpack.c.l.b16 %v1401
    %v1528 = vunpack.c.l.b16 %v1402
    %v1529 = vunpack.c.l.b16 %v1403
    %v1530 = vunpack.c.l.b16 %v1404
    %v1531 = vunpack.c.l.b16 %v1405
    %v1532 = vunpack.c.l.b16 %v1406
    %v1533 = vunpack.c.l.b16 %v1407
    %v1534 = vunpack.c.l.b16 %v1408
    %v1535 = vunpack.c.l.b16 %v1409
    %v1536 = vunpack.c.l.b16 %v1410
    %v1537 = vunpack.c.l.b16 %v1411
    %v1538 = vunpack.c.l.b16 %v1412
    %v1539 = vunpack.c.l.b16 %v1413
    %v1540 = vunpack.c.l.b16 %v1414
    %v1541 = vunpack.c.l.b16 %v1415
    %v1542 = vunpack.c.l.b16 %v1416
    %v1543 = vunpack.c.l.b16 %v1417
    %v1544 = vunpack.c.l.b16 %v1418
    %v1545 = vunpack.c.l.b16 %v1419
    %v1546 = vunpack.c.l.b16 %v1420
    %v1547 = vunpack.c.l.b16 %v1421
    %v1548 = vunpack.c.l.b16 %v1422
    %v1549 = vunpack.c.l.b16 %v1423
    %v1550 = vunpack.c.l.b16 %v1424
    %v1551 = vunpack.c.l.b16 %v1425
    %v1552 = vunpack.c.l.b16 %v1426
    %v1553 = vunpack.c.l.b16 %v1427
    %v1554 = vunpack.c.l.b16 %v1428
    %v1555 = vunpack.c.l.b16 %v1429
    %v1556 = vpack.c.b16 %v1500, %v1499
    %v1557 = vpack.c.b16 %v1502, %v1501
    %v1558 = vpack.c.b16 %v1504, %v1503
    %v1559 = vpack.c.b16 %v1506, %v1505
    %v1560 = vpack.c.b16 %v1508, %v1507
    %v1561 = vpack.c.b16 %v1510, %v1509
    %v1562 = vpack.c.b16 %v1512, %v1511
    %v1563 = vpack.c.b16 %v1514, %v1513
    %v1564 = vpack.c.b16 %v1516, %v1515
    %v1565 = vpack.c.b16 %v1518, %v1517
    %v1566 = vpack.c.b16 %v1520, %v1519
    %v1567 = vpack.c.b16 %v1522, %v1521
    %v1568 = vpack.c.b16 %v1524, %v1523
    %v1569 = vpack.c.b16 %v1526, %v1525
    %v1570 = vpack.c.b16 %v1528, %v1527
    %v1571 = vpack.c.b16 %v1530, %v1529
    %v1572 = vpack.c.b16 %v1532, %v1531
    %v1573 = vpack.c.b16 %v1534, %v1533
    %v1574 = vpack.c.b16 %v1536, %v1535
    %v1575 = vpack.c.b16 %v1538, %v1537
    %v1576 = vpack.c.b16 %v1540, %v1539
    %v1577 = vpack.c.b16 %v1542, %v1541
    %v1578 = vpack.c.b16 %v1544, %v1543
    %v1579 = vpack.c.b16 %v1546, %v1545
    %v1580 = vpack.c.b16 %v1548, %v1547
    %v1581 = vpack.c.b16 %v1550, %v1549
    %v1582 = vpack.c.b16 %v1552, %v1551
    %v1583 = vpack.c.b16 %v1554, %v1553
    %v1584 = vpack.c.b16 %v1555, %v1555
    %vm1613 = vcmask 580608
    %v1615 = vsel %vm1613, %v1372, 0
    %vm1617 = vcmask 1042432
    %v1618 = vsel %vm1617, 4294967295, 65535
    %v1619 = vsel %vm320, %v1618, 0
    %v1621 = vand.u32 %v1584, %v1619
    %1623 = vmatprep.subr.bf16.mxu0 0
    %1624 = vmatpush1.bf16.msra.mxu0 %v1556
    %1625 = vmatprep.subr.bf16.mxu0 0
    %1626 = vmatpush1.bf16.msra.mxu0 %v1557
    %1627 = vmatprep.subr.bf16.mxu0 0
    %1628 = vmatpush1.bf16.msra.mxu0 %v1558
    %1629 = vmatprep.subr.bf16.mxu0 0
    %1630 = vmatpush1.bf16.msra.mxu0 %v1559
    %1631 = vmatprep.subr.bf16.mxu0 0
    %1632 = vmatpush1.bf16.msra.mxu0 %v1560
    %1633 = vmatprep.subr.bf16.mxu0 0
    %1634 = vmatpush1.bf16.msra.mxu0 %v1561
    %1635 = vmatprep.subr.bf16.mxu0 0
    %1636 = vmatpush1.bf16.msra.mxu0 %v1562
    %1637 = vmatprep.subr.bf16.mxu0 0
    %1638 = vmatpush1.bf16.msra.mxu0 %v1563
    %1639 = vmatprep.subr.bf16.mxu0 0
    %1640 = vmatpush1.bf16.msra.mxu0 %v1564
    %1641 = vmatprep.subr.bf16.mxu0 0
    %1642 = vmatpush1.bf16.msra.mxu0 %v1565
    %1643 = vmatprep.subr.bf16.mxu0 0
    %1644 = vmatpush1.bf16.msra.mxu0 %v1566
    %1645 = vmatprep.subr.bf16.mxu0 0
    %1646 = vmatpush1.bf16.msra.mxu0 %v1567
    %1647 = vmatprep.subr.bf16.mxu0 0
    %1648 = vmatpush1.bf16.msra.mxu0 %v1568
    %1649 = vmatprep.subr.bf16.mxu0 0
    %1650 = vmatpush1.bf16.msra.mxu0 %v1569
    %1651 = vmatprep.subr.bf16.mxu0 0
    %1652 = vmatpush1.bf16.msra.mxu0 %v1570
    %1653 = vmatprep.subr.bf16.mxu0 0
    %1654 = vmatpush1.bf16.msra.mxu0 %v1571
    %1655 = vmatprep.mubr.bf16.mxu0 %v1370
    %1656 = vmatmul.mubr.bf16.gmra.mrb[0].mxu0 %v1369
    %v1657 = vpop.f32.mrb[0].mxu0
    %v1658 = vadd.f32 %v1435, %v1657
    %v1659 = vpop.f32.mrb[0].mxu0
    %v1660 = vpop.f32.mrb[0].mxu0
    %v1661 = vadd.f32 %v1440, %v1660
    %v1662 = vpop.f32.mrb[0].mxu0
    %1663 = vdwg.mxu0
    %1664 = vmatprep.subr.bf16.mxu0 0
    %1665 = vmatpush1.bf16.msra.mxu0 %v1572
    %1666 = vmatprep.subr.bf16.mxu0 0
    %1667 = vmatpush1.bf16.msra.mxu0 %v1573
    %1668 = vmatprep.subr.bf16.mxu0 0
    %1669 = vmatpush1.bf16.msra.mxu0 %v1574
    %1670 = vmatprep.subr.bf16.mxu0 0
    %1671 = vmatpush1.bf16.msra.mxu0 %v1575
    %1672 = vmatprep.subr.bf16.mxu0 0
    %1673 = vmatpush1.bf16.msra.mxu0 %v1576
    %1674 = vmatprep.subr.bf16.mxu0 0
    %1675 = vmatpush1.bf16.msra.mxu0 %v1577
    %1676 = vmatprep.subr.bf16.mxu0 0
    %1677 = vmatpush1.bf16.msra.mxu0 %v1578
    %1678 = vmatprep.subr.bf16.mxu0 0
    %1679 = vmatpush1.bf16.msra.mxu0 %v1579
    %1680 = vmatprep.subr.bf16.mxu0 0
    %1681 = vmatpush1.bf16.msra.mxu0 %v1580
    %1682 = vmatprep.subr.bf16.mxu0 0
    %1683 = vmatpush1.bf16.msra.mxu0 %v1581
    %1684 = vmatprep.subr.bf16.mxu0 0
    %1685 = vmatpush1.bf16.msra.mxu0 %v1582
    %1686 = vmatprep.subr.bf16.mxu0 0
    %1687 = vmatpush1.bf16.msra.mxu0 %v1583
    %1688 = vmatprep.subr.bf16.mxu0 0
    %1689 = vmatpush1.bf16.msra.mxu0 %v1621
    %1690 = vmatprep.subr.bf16.mxu0 0
    %1691 = vmatpush1.bf16.msra.mxu0 0
    %1692 = vmatprep.subr.bf16.mxu0 0
    %1693 = vmatpush1.bf16.msra.mxu0 0
    %1694 = vmatprep.subr.bf16.mxu0 0
    %1695 = vmatpush1.bf16.msra.mxu0 0
    %1696 = vmatprep.mubr.bf16.mxu0 %v1615
    %1697 = vmatmul.mubr.bf16.gmra.mrb[0].mxu0 %v1371
    %v1698 = vpop.f32.mrb[0].mxu0
    %v1699 = vadd.f32 %v1658, %v1698
    %v1700 = vpop.f32.mrb[0].mxu0
    %v1701 = vpop.f32.mrb[0].mxu0
    %v1702 = vadd.f32 %v1661, %v1701
    %v1703 = vpop.f32.mrb[0].mxu0
    %1704 = vdwg.mxu0
    %v1705 = vmax.f32 %v1699, 0.0
    %v1706 = vmax.f32 %v1702, 0.0
    %v1707 = vld [vmem:[#allocation12] sm:$0xf]
    %v1708 = vld [vmem:[#allocation12 + $0x4] sm:$0xf]
    %v1709 = vld [vmem:[#allocation12 + $0x8] sm:$0xf]
    %v1710 = vld [vmem:[#allocation12 + $0xc] sm:$0xf]
    %v1711 = vld [vmem:[#allocation12 + $0x10] sm:$0xf]
    %v1712 = vld [vmem:[#allocation12 + $0x14] sm:$0xf]
    %v1713 = vld [vmem:[#allocation12 + $0x18] sm:$0xf]
    %v1714 = vld [vmem:[#allocation12 + $0x1c] sm:$0xf]
    %v1715 = vld [vmem:[#allocation12 + $0x20] sm:$0xf]
    %v1716 = vld [vmem:[#allocation12 + $0x24] sm:$0xf]
    %v1717 = vld [vmem:[#allocation12 + $0x28] sm:$0xf]
    %v1718 = vld [vmem:[#allocation12 + $0x2c] sm:$0xf]
    %v1719 = vld [vmem:[#allocation12 + $0x30] sm:$0xf]
    %v1720 = vld [vmem:[#allocation12 + $0x34] sm:$0xf]
    %v1721 = vld [vmem:[#allocation12 + $0x38] sm:$0xf]
    %v1722 = vld [vmem:[#allocation12 + $0x3c] sm:$0xf]
    %v1723 = vld [vmem:[#allocation12 + $0x40] sm:$0xf]
    %v1724 = vld [vmem:[#allocation12 + $0x44] sm:$0xf]
    %v1725 = vld [vmem:[#allocation12 + $0x48] sm:$0xf]
    %v1726 = vld [vmem:[#allocation12 + $0x4c] sm:$0xf]
    %v1727 = vld [vmem:[#allocation12 + $0x50] sm:$0xf]
    %v1728 = vld [vmem:[#allocation12 + $0x54] sm:$0xf]
    %v1729 = vld [vmem:[#allocation12 + $0x58] sm:$0xf]
    %v1730 = vld [vmem:[#allocation12 + $0x5c] sm:$0xf]
    %v1731 = vld [vmem:[#allocation12 + $0x60] sm:$0xf]
    %v1732 = vld [vmem:[#allocation12 + $0x64] sm:$0xf]
    %v1733 = vld [vmem:[#allocation12 + $0x68] sm:$0xf]
    %v1734 = vld [vmem:[#allocation12 + $0x6c] sm:$0xf]
    %v1735 = vpack.c.bf16 %v1706, %v1705
    %v1764 = vunpack.c.l.b16 %v1707
    %v1765 = vunpack.c.l.b16 %v1708
    %v1766 = vunpack.c.l.b16 %v1709
    %v1767 = vunpack.c.l.b16 %v1710
    %v1768 = vunpack.c.l.b16 %v1711
    %v1769 = vunpack.c.l.b16 %v1712
    %v1770 = vunpack.c.l.b16 %v1713
    %v1771 = vunpack.c.l.b16 %v1714
    %v1772 = vunpack.c.l.b16 %v1715
    %v1773 = vunpack.c.l.b16 %v1716
    %v1774 = vunpack.c.l.b16 %v1717
    %v1775 = vunpack.c.l.b16 %v1718
    %v1776 = vunpack.c.l.b16 %v1719
    %v1777 = vunpack.c.l.b16 %v1720
    %v1778 = vunpack.c.l.b16 %v1721
    %v1779 = vunpack.c.l.b16 %v1722
    %v1780 = vunpack.c.l.b16 %v1723
    %v1781 = vunpack.c.l.b16 %v1724
    %v1782 = vunpack.c.l.b16 %v1725
    %v1783 = vunpack.c.l.b16 %v1726
    %v1784 = vunpack.c.l.b16 %v1727
    %v1785 = vunpack.c.l.b16 %v1728
    %v1786 = vunpack.c.l.b16 %v1729
    %v1787 = vunpack.c.l.b16 %v1730
    %v1788 = vunpack.c.l.b16 %v1731
    %v1789 = vunpack.c.l.b16 %v1732
    %v1790 = vunpack.c.l.b16 %v1733
    %v1791 = vunpack.c.l.b16 %v1734
    %v1792 = vpack.c.b16 %v1765, %v1764
    %v1793 = vpack.c.b16 %v1767, %v1766
    %v1794 = vpack.c.b16 %v1769, %v1768
    %v1795 = vpack.c.b16 %v1771, %v1770
    %v1796 = vpack.c.b16 %v1773, %v1772
    %v1797 = vpack.c.b16 %v1775, %v1774
    %v1798 = vpack.c.b16 %v1777, %v1776
    %v1799 = vpack.c.b16 %v1779, %v1778
    %v1800 = vpack.c.b16 %v1781, %v1780
    %v1801 = vpack.c.b16 %v1783, %v1782
    %v1802 = vpack.c.b16 %v1785, %v1784
    %v1803 = vpack.c.b16 %v1787, %v1786
    %v1804 = vpack.c.b16 %v1789, %v1788
    %v1805 = vpack.c.b16 %v1791, %v1790
    %vm1806 = vcmask 130048
    %v1808 = vsel %vm1806, %v1792, 0
    %v1811 = vsel %vm1806, %v1793, 0
    %v1814 = vsel %vm1806, %v1794, 0
    %v1817 = vsel %vm1806, %v1795, 0
    %v1820 = vsel %vm1806, %v1796, 0
    %v1823 = vsel %vm1806, %v1797, 0
    %v1826 = vsel %vm1806, %v1798, 0
    %v1829 = vsel %vm1806, %v1799, 0
    %v1832 = vsel %vm1806, %v1800, 0
    %v1835 = vsel %vm1806, %v1801, 0
    %v1838 = vsel %vm1806, %v1802, 0
    %v1841 = vsel %vm1806, %v1803, 0
    %v1844 = vsel %vm1806, %v1804, 0
    %v1847 = vsel %vm1806, %v1805, 0
    %1849 = vmatprep.subr.bf16.mxu0 0
    %1850 = vmatpush1.bf16.msra.mxu0 %v1735
    %1851 = vmatprep.subr.bf16.mxu0 0
    %1852 = vmatpush1.bf16.msra.mxu0 0
    %1853 = vmatprep.subr.bf16.mxu0 0
    %1854 = vmatpush1.bf16.msra.mxu0 0
    %1855 = vmatprep.subr.bf16.mxu0 0
    %1856 = vmatpush1.bf16.msra.mxu0 0
    %1857 = vmatprep.subr.bf16.mxu0 0
    %1858 = vmatpush1.bf16.msra.mxu0 0
    %1859 = vmatprep.subr.bf16.mxu0 0
    %1860 = vmatpush1.bf16.msra.mxu0 0
    %1861 = vmatprep.subr.bf16.mxu0 0
    %1862 = vmatpush1.bf16.msra.mxu0 0
    %1863 = vmatprep.subr.bf16.mxu0 0
    %1864 = vmatpush1.bf16.msra.mxu0 0
    %1865 = vmatprep.subr.bf16.mxu0 0
    %1866 = vmatpush1.bf16.msra.mxu0 0
    %1867 = vmatprep.subr.bf16.mxu0 0
    %1868 = vmatpush1.bf16.msra.mxu0 0
    %1869 = vmatprep.subr.bf16.mxu0 0
    %1870 = vmatpush1.bf16.msra.mxu0 0
    %1871 = vmatprep.subr.bf16.mxu0 0
    %1872 = vmatpush1.bf16.msra.mxu0 0
    %1873 = vmatprep.subr.bf16.mxu0 0
    %1874 = vmatpush1.bf16.msra.mxu0 0
    %1875 = vmatprep.subr.bf16.mxu0 0
    %1876 = vmatpush1.bf16.msra.mxu0 0
    %1877 = vmatprep.subr.bf16.mxu0 0
    %1878 = vmatpush1.bf16.msra.mxu0 0
    %1879 = vmatprep.subr.bf16.mxu0 0
    %1880 = vmatpush1.bf16.msra.mxu0 0
    %1881 = vmatprep.mubr.bf16.mxu0 0
    %1882 = vmatmul.mubr.bf16.gmra.mrb[0].mxu0 %v1808
    %v1883 = vpop.f32.mrb[0].mxu0
    %v1884 = vadd.f32 0.0, %v1883
    %v1885 = vpop.f32.mrb[0].mxu0
    %v1886 = vpop.f32.mrb[0].mxu0
    %v1887 = vadd.f32 0.0, %v1886
    %v1888 = vpop.f32.mrb[0].mxu0
    %1889 = vmatprep.mubr.bf16.mxu0 0
    %1890 = vmatmul.mubr.bf16.gmra.mrb[0].mxu0 %v1811
    %v1891 = vpop.f32.mrb[0].mxu0
    %v1892 = vadd.f32 0.0, %v1891
    %v1893 = vpop.f32.mrb[0].mxu0
    %v1894 = vpop.f32.mrb[0].mxu0
    %v1895 = vadd.f32 0.0, %v1894
    %v1896 = vpop.f32.mrb[0].mxu0
    %1897 = vmatprep.mubr.bf16.mxu0 0
    %1898 = vmatmul.mubr.bf16.gmra.mrb[0].mxu0 %v1814
    %v1899 = vpop.f32.mrb[0].mxu0
    %v1900 = vadd.f32 0.0, %v1899
    %v1901 = vpop.f32.mrb[0].mxu0
    %v1902 = vpop.f32.mrb[0].mxu0
    %v1903 = vadd.f32 0.0, %v1902
    %v1904 = vpop.f32.mrb[0].mxu0
    %1905 = vmatprep.mubr.bf16.mxu0 0
    %1906 = vmatmul.mubr.bf16.gmra.mrb[0].mxu0 %v1817
    %v1907 = vpop.f32.mrb[0].mxu0
    %v1908 = vadd.f32 0.0, %v1907
    %v1909 = vpop.f32.mrb[0].mxu0
    %v1910 = vpop.f32.mrb[0].mxu0
    %v1911 = vadd.f32 0.0, %v1910
    %v1912 = vpop.f32.mrb[0].mxu0
    %1913 = vmatprep.mubr.bf16.mxu0 0
    %1914 = vmatmul.mubr.bf16.gmra.mrb[0].mxu0 %v1820
    %v1915 = vpop.f32.mrb[0].mxu0
    %v1916 = vadd.f32 0.0, %v1915
    %v1917 = vpop.f32.mrb[0].mxu0
    %v1918 = vpop.f32.mrb[0].mxu0
    %v1919 = vadd.f32 0.0, %v1918
    %v1920 = vpop.f32.mrb[0].mxu0
    %1921 = vmatprep.mubr.bf16.mxu0 0
    %1922 = vmatmul.mubr.bf16.gmra.mrb[0].mxu0 %v1823
    %v1923 = vpop.f32.mrb[0].mxu0
    %v1924 = vadd.f32 0.0, %v1923
    %v1925 = vpop.f32.mrb[0].mxu0
    %v1926 = vpop.f32.mrb[0].mxu0
    %v1927 = vadd.f32 0.0, %v1926
    %v1928 = vpop.f32.mrb[0].mxu0
    %1929 = vmatprep.mubr.bf16.mxu0 0
    %1930 = vmatmul.mubr.bf16.gmra.mrb[0].mxu0 %v1826
    %v1931 = vpop.f32.mrb[0].mxu0
    %v1932 = vadd.f32 0.0, %v1931
    %v1933 = vpop.f32.mrb[0].mxu0
    %v1934 = vpop.f32.mrb[0].mxu0
    %v1935 = vadd.f32 0.0, %v1934
    %v1936 = vpop.f32.mrb[0].mxu0
    %1937 = vmatprep.mubr.bf16.mxu0 0
    %1938 = vmatmul.mubr.bf16.gmra.mrb[0].mxu0 %v1829
    %v1939 = vpop.f32.mrb[0].mxu0
    %v1940 = vadd.f32 0.0, %v1939
    %v1941 = vpop.f32.mrb[0].mxu0
    %v1942 = vpop.f32.mrb[0].mxu0
    %v1943 = vadd.f32 0.0, %v1942
    %v1944 = vpop.f32.mrb[0].mxu0
    %1945 = vmatprep.mubr.bf16.mxu0 0
    %1946 = vmatmul.mubr.bf16.gmra.mrb[0].mxu0 %v1832
    %v1947 = vpop.f32.mrb[0].mxu0
    %v1948 = vadd.f32 0.0, %v1947
    %v1949 = vpop.f32.mrb[0].mxu0
    %v1950 = vpop.f32.mrb[0].mxu0
    %v1951 = vadd.f32 0.0, %v1950
    %v1952 = vpop.f32.mrb[0].mxu0
    %1953 = vmatprep.mubr.bf16.mxu0 0
    %1954 = vmatmul.mubr.bf16.gmra.mrb[0].mxu0 %v1835
    %v1955 = vpop.f32.mrb[0].mxu0
    %v1956 = vadd.f32 0.0, %v1955
    %v1957 = vpop.f32.mrb[0].mxu0
    %v1958 = vpop.f32.mrb[0].mxu0
    %v1959 = vadd.f32 0.0, %v1958
    %v1960 = vpop.f32.mrb[0].mxu0
    %1961 = vmatprep.mubr.bf16.mxu0 0
    %1962 = vmatmul.mubr.bf16.gmra.mrb[0].mxu0 %v1838
    %v1963 = vpop.f32.mrb[0].mxu0
    %v1964 = vadd.f32 0.0, %v1963
    %v1965 = vpop.f32.mrb[0].mxu0
    %v1966 = vpop.f32.mrb[0].mxu0
    %v1967 = vadd.f32 0.0, %v1966
    %v1968 = vpop.f32.mrb[0].mxu0
    %1969 = vmatprep.mubr.bf16.mxu0 0
    %1970 = vmatmul.mubr.bf16.gmra.mrb[0].mxu0 %v1841
    %v1971 = vpop.f32.mrb[0].mxu0
    %v1972 = vadd.f32 0.0, %v1971
    %v1973 = vpop.f32.mrb[0].mxu0
    %v1974 = vpop.f32.mrb[0].mxu0
    %v1975 = vadd.f32 0.0, %v1974
    %v1976 = vpop.f32.mrb[0].mxu0
    %1977 = vmatprep.mubr.bf16.mxu0 0
    %1978 = vmatmul.mubr.bf16.gmra.mrb[0].mxu0 %v1844
    %v1979 = vpop.f32.mrb[0].mxu0
    %v1980 = vadd.f32 0.0, %v1979
    %v1981 = vpop.f32.mrb[0].mxu0
    %v1982 = vpop.f32.mrb[0].mxu0
    %v1983 = vadd.f32 0.0, %v1982
    %v1984 = vpop.f32.mrb[0].mxu0
    %1985 = vmatprep.mubr.bf16.mxu0 0
    %1986 = vmatmul.mubr.bf16.gmra.mrb[0].mxu0 %v1847
    %v1987 = vpop.f32.mrb[0].mxu0
    %v1988 = vadd.f32 0.0, %v1987
    %v1989 = vpop.f32.mrb[0].mxu0
    %v1990 = vpop.f32.mrb[0].mxu0
    %v1991 = vadd.f32 0.0, %v1990
    %v1992 = vpop.f32.mrb[0].mxu0
    %1993 = vdwg.mxu0
    %vm1994 = vcmask 269312
    %1995 = vst.msk [vmem:[#allocation2] sm:$0xff] %vm1994, %v1884
    %1996 = vst.msk [vmem:[#allocation2 + $0x40] sm:$0xff] %vm1994, %v1887
    %1997 = vst.msk [vmem:[#allocation2 + $0x80] sm:$0xff] %vm1994, %v1892
    %1998 = vst.msk [vmem:[#allocation2 + $0xc0] sm:$0xff] %vm1994, %v1895
    %2003 = vrot.lane.b32.xlu0 %v1900, 33
    %v2004 = vpop.permute.xlu0 %2003
    %2005 = vrot.lane.b32.xlu0 %v1903, 33
    %v2006 = vpop.permute.xlu0 %2005
    %2007 = vrot.lane.b32.xlu0 %v1908, 33
    %v2008 = vpop.permute.xlu0 %2007
    %2009 = vrot.lane.b32.xlu0 %v1911, 33
    %v2010 = vpop.permute.xlu0 %2009
    %vm2015 = vcmask 539912
    %2016 = vst.msk [vmem:[#allocation2] sm:$0xff] %vm2015, %v2004
    %2017 = vst.msk [vmem:[#allocation2 + $0x40] sm:$0xff] %vm2015, %v2006
    %2018 = vst.msk [vmem:[#allocation2 + $0x80] sm:$0xff] %vm2015, %v2008
    %2019 = vst.msk [vmem:[#allocation2 + $0xc0] sm:$0xff] %vm2015, %v2010
    %2024 = vrot.lane.b32.xlu0 %v1916, 66
    %v2025 = vpop.permute.xlu0 %2024
    %2026 = vrot.lane.b32.xlu0 %v1919, 66
    %v2027 = vpop.permute.xlu0 %2026
    %2028 = vrot.lane.b32.xlu0 %v1924, 66
    %v2029 = vpop.permute.xlu0 %2028
    %2030 = vrot.lane.b32.xlu0 %v1927, 66
    %v2031 = vpop.permute.xlu0 %2030
    %vm2036 = vcmask 810512
    %2037 = vst.msk [vmem:[#allocation2] sm:$0xff] %vm2036, %v2025
    %2038 = vst.msk [vmem:[#allocation2 + $0x40] sm:$0xff] %vm2036, %v2027
    %2039 = vst.msk [vmem:[#allocation2 + $0x80] sm:$0xff] %vm2036, %v2029
    %2040 = vst.msk [vmem:[#allocation2 + $0xc0] sm:$0xff] %vm2036, %v2031
    %2045 = vrot.lane.b32.xlu0 %v1932, 99
    %v2046 = vpop.permute.xlu0 %2045
    %2047 = vrot.lane.b32.xlu0 %v1935, 99
    %v2048 = vpop.permute.xlu0 %2047
    %2049 = vrot.lane.b32.xlu0 %v1940, 99
    %v2050 = vpop.permute.xlu0 %2049
    %2051 = vrot.lane.b32.xlu0 %v1943, 99
    %v2052 = vpop.permute.xlu0 %2051
    %vm2057 = vcmask 1048344
    %2058 = vst.msk [vmem:[#allocation2] sm:$0xff] %vm2057, %v2046
    %2059 = vst.msk [vmem:[#allocation2 + $0x8] sm:$0xff] %vm412, %v2046
    %2060 = vst.msk [vmem:[#allocation2 + $0x40] sm:$0xff] %vm2057, %v2048
    %2061 = vst.msk [vmem:[#allocation2 + $0x48] sm:$0xff] %vm412, %v2048
    %2062 = vst.msk [vmem:[#allocation2 + $0x80] sm:$0xff] %vm2057, %v2050
    %2063 = vst.msk [vmem:[#allocation2 + $0x88] sm:$0xff] %vm412, %v2050
    %2064 = vst.msk [vmem:[#allocation2 + $0xc0] sm:$0xff] %vm2057, %v2052
    %2065 = vst.msk [vmem:[#allocation2 + $0xc8] sm:$0xff] %vm412, %v2052
    %2070 = vrot.lane.b32.xlu0 %v1948, 4
    %v2071 = vpop.permute.xlu0 %2070
    %2072 = vrot.lane.b32.xlu0 %v1951, 4
    %v2073 = vpop.permute.xlu0 %2072
    %2074 = vrot.lane.b32.xlu0 %v1956, 4
    %v2075 = vpop.permute.xlu0 %2074
    %2076 = vrot.lane.b32.xlu0 %v1959, 4
    %v2077 = vpop.permute.xlu0 %2076
    %vm2082 = vcmask 302112
    %2083 = vst.msk [vmem:[#allocation2 + $0x8] sm:$0xff] %vm2082, %v2071
    %2084 = vst.msk [vmem:[#allocation2 + $0x48] sm:$0xff] %vm2082, %v2073
    %2085 = vst.msk [vmem:[#allocation2 + $0x88] sm:$0xff] %vm2082, %v2075
    %2086 = vst.msk [vmem:[#allocation2 + $0xc8] sm:$0xff] %vm2082, %v2077
    %2091 = vrot.lane.b32.xlu0 %v1964, 37
    %v2092 = vpop.permute.xlu0 %2091
    %2093 = vrot.lane.b32.xlu0 %v1967, 37
    %v2094 = vpop.permute.xlu0 %2093
    %2095 = vrot.lane.b32.xlu0 %v1972, 37
    %v2096 = vpop.permute.xlu0 %2095
    %2097 = vrot.lane.b32.xlu0 %v1975, 37
    %v2098 = vpop.permute.xlu0 %2097
    %vm2103 = vcmask 572712
    %2104 = vst.msk [vmem:[#allocation2 + $0x8] sm:$0xff] %vm2103, %v2092
    %2105 = vst.msk [vmem:[#allocation2 + $0x48] sm:$0xff] %vm2103, %v2094
    %2106 = vst.msk [vmem:[#allocation2 + $0x88] sm:$0xff] %vm2103, %v2096
    %2107 = vst.msk [vmem:[#allocation2 + $0xc8] sm:$0xff] %vm2103, %v2098
    %2112 = vrot.lane.b32.xlu0 %v1980, 70
    %v2113 = vpop.permute.xlu0 %2112
    %2114 = vrot.lane.b32.xlu0 %v1983, 70
    %v2115 = vpop.permute.xlu0 %2114
    %2116 = vrot.lane.b32.xlu0 %v1988, 70
    %v2117 = vpop.permute.xlu0 %2116
    %2118 = vrot.lane.b32.xlu0 %v1991, 70
    %v2119 = vpop.permute.xlu0 %2118
    %vm2124 = vcmask 843312
    %2125 = vst.msk [vmem:[#allocation2 + $0x8] sm:$0xff] %vm2124, %v2113
    %2126 = vst.msk [vmem:[#allocation2 + $0x48] sm:$0xff] %vm2124, %v2115
    %2127 = vst.msk [vmem:[#allocation2 + $0x88] sm:$0xff] %vm2124, %v2117
    %2128 = vst.msk [vmem:[#allocation2 + $0xc8] sm:$0xff] %vm2124, %v2119
    %v2129 = vld [vmem:[#allocation2] sm:$0xff]
    %v2130 = vld [vmem:[#allocation2 + $0x8] sm:$0xff]
    %v2131 = vld [vmem:[#allocation2 + $0x40] sm:$0xff]
    %v2132 = vld [vmem:[#allocation2 + $0x48] sm:$0xff]
    %v2133 = vld [vmem:[#allocation2 + $0x80] sm:$0xff]
    %v2134 = vld [vmem:[#allocation2 + $0x88] sm:$0xff]
    %v2135 = vld [vmem:[#allocation2 + $0xc0] sm:$0xff]
    %v2136 = vld [vmem:[#allocation2 + $0xc8] sm:$0xff]
    %v2137 = vpack.c.bf16 %v2131, %v2129
    %v2138 = vpack.c.bf16 %v2132, %v2130
    %v2139 = vpack.c.bf16 %v2135, %v2133
    %v2140 = vpack.c.bf16 %v2136, %v2134
    %v2141 = vld [vmem:[#allocation14] sm:$0xf]
    %v2142 = vld [vmem:[#allocation14 + $0x4] sm:$0xf]
    %v2143 = vld [vmem:[#allocation14 + $0x8] sm:$0xf]
    %v2144 = vld [vmem:[#allocation14 + $0xc] sm:$0xf]
    %v2145 = vld [vmem:[#allocation14 + $0x10] sm:$0xf]
    %v2146 = vld [vmem:[#allocation14 + $0x14] sm:$0xf]
    %v2147 = vld [vmem:[#allocation14 + $0x18] sm:$0xf]
    %v2148 = vld [vmem:[#allocation14 + $0x1c] sm:$0xf]
    %v2149 = vld [vmem:[#allocation14 + $0x20] sm:$0xf]
    %v2150 = vld [vmem:[#allocation14 + $0x24] sm:$0xf]
    %v2151 = vld [vmem:[#allocation14 + $0x28] sm:$0xf]
    %v2152 = vld [vmem:[#allocation14 + $0x2c] sm:$0xf]
    %v2153 = vld [vmem:[#allocation14 + $0x30] sm:$0xf]
    %v2154 = vld [vmem:[#allocation14 + $0x34] sm:$0xf]
    %v2155 = vld [vmem:[#allocation14 + $0x38] sm:$0xf]
    %v2156 = vld [vmem:[#allocation14 + $0x3c] sm:$0xf]
    %v2157 = vld [vmem:[#allocation14 + $0x40] sm:$0xf]
    %v2158 = vld [vmem:[#allocation14 + $0x44] sm:$0xf]
    %v2159 = vld [vmem:[#allocation14 + $0x48] sm:$0xf]
    %v2160 = vld [vmem:[#allocation14 + $0x4c] sm:$0xf]
    %v2161 = vld [vmem:[#allocation14 + $0x50] sm:$0xf]
    %v2162 = vld [vmem:[#allocation14 + $0x54] sm:$0xf]
    %v2163 = vld [vmem:[#allocation14 + $0x58] sm:$0xf]
    %v2164 = vld [vmem:[#allocation14 + $0x5c] sm:$0xf]
    %v2165 = vld [vmem:[#allocation14 + $0x60] sm:$0xf]
    %v2166 = vld [vmem:[#allocation14 + $0x64] sm:$0xf]
    %v2167 = vld [vmem:[#allocation14 + $0x68] sm:$0xf]
    %v2168 = vld [vmem:[#allocation14 + $0x6c] sm:$0xf]
    %v2169 = vld [vmem:[#allocation14 + $0x70] sm:$0xf]
    %v2170 = vld [vmem:[#allocation3] sm:$0xff]
    %v2171 = vld [vmem:[#allocation3 + $0x8] sm:$0xff]
    %v2172 = vld [vmem:[#allocation3 + $0x10] sm:$0xff]
    %v2173 = vld [vmem:[#allocation3 + $0x18] sm:$0xff]
    %2175 = vset.pattern.permute.xlu0 2
    %2176 = vperm.xlu0 %2175, %v2170
    %v2177 = vpop.permute.xlu0 %2176
    %2180 = vset.pattern.permute.xlu0 2
    %2181 = vperm.xlu0 %2180, %v2171
    %v2182 = vpop.permute.xlu0 %2181
    %2185 = vset.pattern.permute.xlu0 2
    %2186 = vperm.xlu0 %2185, %v2172
    %v2187 = vpop.permute.xlu0 %2186
    %2190 = vset.pattern.permute.xlu0 2
    %2191 = vperm.xlu0 %2190, %v2173
    %v2192 = vpop.permute.xlu0 %2191
    %v2223 = vunpack.c.l.b16 %v2141
    %v2224 = vunpack.c.l.b16 %v2142
    %v2225 = vunpack.c.l.b16 %v2143
    %v2226 = vunpack.c.l.b16 %v2144
    %v2227 = vunpack.c.l.b16 %v2145
    %v2228 = vunpack.c.l.b16 %v2146
    %v2229 = vunpack.c.l.b16 %v2147
    %v2230 = vunpack.c.l.b16 %v2148
    %v2231 = vunpack.c.l.b16 %v2149
    %v2232 = vunpack.c.l.b16 %v2150
    %v2233 = vunpack.c.l.b16 %v2151
    %v2234 = vunpack.c.l.b16 %v2152
    %v2235 = vunpack.c.l.b16 %v2153
    %v2236 = vunpack.c.l.b16 %v2154
    %v2237 = vunpack.c.l.b16 %v2155
    %v2238 = vunpack.c.l.b16 %v2156
    %v2239 = vunpack.c.l.b16 %v2157
    %v2240 = vunpack.c.l.b16 %v2158
    %v2241 = vunpack.c.l.b16 %v2159
    %v2242 = vunpack.c.l.b16 %v2160
    %v2243 = vunpack.c.l.b16 %v2161
    %v2244 = vunpack.c.l.b16 %v2162
    %v2245 = vunpack.c.l.b16 %v2163
    %v2246 = vunpack.c.l.b16 %v2164
    %v2247 = vunpack.c.l.b16 %v2165
    %v2248 = vunpack.c.l.b16 %v2166
    %v2249 = vunpack.c.l.b16 %v2167
    %v2250 = vunpack.c.l.b16 %v2168
    %v2251 = vunpack.c.l.b16 %v2169
    %v2252 = vpack.c.b16 %v2224, %v2223
    %v2253 = vpack.c.b16 %v2226, %v2225
    %v2254 = vpack.c.b16 %v2228, %v2227
    %v2255 = vpack.c.b16 %v2230, %v2229
    %v2256 = vpack.c.b16 %v2232, %v2231
    %v2257 = vpack.c.b16 %v2234, %v2233
    %v2258 = vpack.c.b16 %v2236, %v2235
    %v2259 = vpack.c.b16 %v2238, %v2237
    %v2260 = vpack.c.b16 %v2240, %v2239
    %v2261 = vpack.c.b16 %v2242, %v2241
    %v2262 = vpack.c.b16 %v2244, %v2243
    %v2263 = vpack.c.b16 %v2246, %v2245
    %v2264 = vpack.c.b16 %v2248, %v2247
    %v2265 = vpack.c.b16 %v2250, %v2249
    %v2266 = vpack.c.b16 %v2251, %v2251
    %vm2281 = vcmask 842752
    %v2283 = vsel %vm2281, %v2138, 0
    %v2286 = vsel %vm2281, %v2140, 0
    %v2289 = vand.u32 %v2266, %v1619
    %2291 = vmatprep.subr.bf16.mxu0 0
    %2292 = vmatpush1.bf16.msra.mxu0 %v2252
    %2293 = vmatprep.subr.bf16.mxu0 0
    %2294 = vmatpush1.bf16.msra.mxu0 %v2253
    %2295 = vmatprep.subr.bf16.mxu0 0
    %2296 = vmatpush1.bf16.msra.mxu0 %v2254
    %2297 = vmatprep.subr.bf16.mxu0 0
    %2298 = vmatpush1.bf16.msra.mxu0 %v2255
    %2299 = vmatprep.subr.bf16.mxu0 0
    %2300 = vmatpush1.bf16.msra.mxu0 %v2256
    %2301 = vmatprep.subr.bf16.mxu0 0
    %2302 = vmatpush1.bf16.msra.mxu0 %v2257
    %2303 = vmatprep.subr.bf16.mxu0 0
    %2304 = vmatpush1.bf16.msra.mxu0 %v2258
    %2305 = vmatprep.subr.bf16.mxu0 0
    %2306 = vmatpush1.bf16.msra.mxu0 %v2259
    %2307 = vmatprep.subr.bf16.mxu0 0
    %2308 = vmatpush1.bf16.msra.mxu0 %v2260
    %2309 = vmatprep.subr.bf16.mxu0 0
    %2310 = vmatpush1.bf16.msra.mxu0 %v2261
    %2311 = vmatprep.subr.bf16.mxu0 0
    %2312 = vmatpush1.bf16.msra.mxu0 %v2262
    %2313 = vmatprep.subr.bf16.mxu0 0
    %2314 = vmatpush1.bf16.msra.mxu0 %v2263
    %2315 = vmatprep.subr.bf16.mxu0 0
    %2316 = vmatpush1.bf16.msra.mxu0 %v2264
    %2317 = vmatprep.subr.bf16.mxu0 0
    %2318 = vmatpush1.bf16.msra.mxu0 %v2265
    %2319 = vmatprep.subr.bf16.mxu0 0
    %2320 = vmatpush1.bf16.msra.mxu0 %v2289
    %2321 = vmatprep.subr.bf16.mxu0 0
    %2322 = vmatpush1.bf16.msra.mxu0 0
    %2323 = vmatprep.mubr.bf16.mxu0 %v2283
    %2324 = vmatmul.mubr.bf16.gmra.mrb[0].mxu0 %v2137
    %v2325 = vpop.f32.mrb[0].mxu0
    %v2326 = vadd.f32 %v2177, %v2325
    %v2327 = vpop.f32.mrb[0].mxu0
    %v2328 = vpop.f32.mrb[0].mxu0
    %v2329 = vadd.f32 %v2182, %v2328
    %v2330 = vpop.f32.mrb[0].mxu0
    %2331 = vmatprep.mubr.bf16.mxu0 %v2286
    %2332 = vmatmul.mubr.bf16.gmra.mrb[0].mxu0 %v2139
    %v2333 = vpop.f32.mrb[0].mxu0
    %v2334 = vadd.f32 %v2187, %v2333
    %v2335 = vpop.f32.mrb[0].mxu0
    %v2336 = vpop.f32.mrb[0].mxu0
    %v2337 = vadd.f32 %v2192, %v2336
    %v2338 = vpop.f32.mrb[0].mxu0
    %2339 = vdwg.mxu0
    %v2340 = vmax.f32 %v2326, 0.0
    %v2341 = vmax.f32 %v2329, 0.0
    %v2342 = vmax.f32 %v2334, 0.0
    %v2343 = vmax.f32 %v2337, 0.0
    %v2344 = vld [vmem:[#allocation15] sm:$0xf]
    %v2345 = vld [vmem:[#allocation15 + $0x4] sm:$0xf]
    %v2346 = vld [vmem:[#allocation15 + $0x8] sm:$0xf]
    %v2347 = vld [vmem:[#allocation15 + $0xc] sm:$0xf]
    %v2348 = vld [vmem:[#allocation15 + $0x10] sm:$0xf]
    %v2349 = vld [vmem:[#allocation15 + $0x14] sm:$0xf]
    %v2350 = vld [vmem:[#allocation15 + $0x18] sm:$0xf]
    %v2351 = vld [vmem:[#allocation15 + $0x1c] sm:$0xf]
    %v2352 = vld [vmem:[#allocation15 + $0x20] sm:$0xf]
    %v2353 = vld [vmem:[#allocation15 + $0x24] sm:$0xf]
    %v2354 = vld [vmem:[#allocation15 + $0x28] sm:$0xf]
    %v2355 = vld [vmem:[#allocation15 + $0x2c] sm:$0xf]
    %v2356 = vld [vmem:[#allocation15 + $0x30] sm:$0xf]
    %v2357 = vld [vmem:[#allocation15 + $0x34] sm:$0xf]
    %v2358 = vld [vmem:[#allocation15 + $0x38] sm:$0xf]
    %v2359 = vld [vmem:[#allocation15 + $0x3c] sm:$0xf]
    %v2360 = vld [vmem:[#allocation15 + $0x40] sm:$0xf]
    %v2361 = vld [vmem:[#allocation15 + $0x44] sm:$0xf]
    %v2362 = vld [vmem:[#allocation15 + $0x48] sm:$0xf]
    %v2363 = vld [vmem:[#allocation15 + $0x4c] sm:$0xf]
    %v2364 = vld [vmem:[#allocation15 + $0x50] sm:$0xf]
    %v2365 = vld [vmem:[#allocation15 + $0x54] sm:$0xf]
    %v2366 = vld [vmem:[#allocation15 + $0x58] sm:$0xf]
    %v2367 = vld [vmem:[#allocation15 + $0x5c] sm:$0xf]
    %v2368 = vld [vmem:[#allocation15 + $0x60] sm:$0xf]
    %v2369 = vld [vmem:[#allocation15 + $0x64] sm:$0xf]
    %v2370 = vld [vmem:[#allocation15 + $0x68] sm:$0xf]
    %v2371 = vld [vmem:[#allocation15 + $0x6c] sm:$0xf]
    %v2372 = vld [vmem:[#allocation15 + $0x70] sm:$0xf]
    %v2373 = vld [vmem:[#allocation15 + $0x74] sm:$0xf]
    %v2374 = vld [vmem:[#allocation15 + $0x78] sm:$0xf]
    %v2375 = vld [vmem:[#allocation15 + $0x7c] sm:$0xf]
    %v2376 = vld [vmem:[#allocation15 + $0x80] sm:$0xf]
    %v2377 = vld [vmem:[#allocation15 + $0x84] sm:$0xf]
    %v2378 = vld [vmem:[#allocation15 + $0x88] sm:$0xf]
    %v2379 = vld [vmem:[#allocation15 + $0x8c] sm:$0xf]
    %v2380 = vld [vmem:[#allocation15 + $0x90] sm:$0xf]
    %v2381 = vld [vmem:[#allocation15 + $0x94] sm:$0xf]
    %v2382 = vld [vmem:[#allocation15 + $0x98] sm:$0xf]
    %v2383 = vld [vmem:[#allocation15 + $0x9c] sm:$0xf]
    %v2384 = vld [vmem:[#allocation15 + $0xa0] sm:$0xf]
    %v2385 = vld [vmem:[#allocation15 + $0xa4] sm:$0xf]
    %v2386 = vld [vmem:[#allocation15 + $0xa8] sm:$0xf]
    %v2387 = vld [vmem:[#allocation15 + $0xac] sm:$0xf]
    %v2388 = vld [vmem:[#allocation15 + $0xb0] sm:$0xf]
    %v2389 = vld [vmem:[#allocation15 + $0xb4] sm:$0xf]
    %v2390 = vld [vmem:[#allocation15 + $0xb8] sm:$0xf]
    %v2391 = vld [vmem:[#allocation15 + $0xbc] sm:$0xf]
    %v2392 = vld [vmem:[#allocation15 + $0xc0] sm:$0xf]
    %v2393 = vld [vmem:[#allocation15 + $0xc4] sm:$0xf]
    %v2394 = vld [vmem:[#allocation15 + $0xc8] sm:$0xf]
    %v2395 = vld [vmem:[#allocation15 + $0xcc] sm:$0xf]
    %v2396 = vld [vmem:[#allocation15 + $0xd0] sm:$0xf]
    %v2397 = vld [vmem:[#allocation15 + $0xd4] sm:$0xf]
    %v2398 = vld [vmem:[#allocation15 + $0xd8] sm:$0xf]
    %v2399 = vld [vmem:[#allocation15 + $0xdc] sm:$0xf]
    %v2400 = vpack.c.bf16 %v2341, %v2340
    %v2401 = vpack.c.bf16 %v2343, %v2342
    %v2458 = vunpack.c.l.b16 %v2344
    %v2459 = vunpack.c.l.b16 %v2345
    %v2460 = vunpack.c.l.b16 %v2346
    %v2461 = vunpack.c.l.b16 %v2347
    %v2462 = vunpack.c.l.b16 %v2348
    %v2463 = vunpack.c.l.b16 %v2349
    %v2464 = vunpack.c.l.b16 %v2350
    %v2465 = vunpack.c.l.b16 %v2351
    %v2466 = vunpack.c.l.b16 %v2352
    %v2467 = vunpack.c.l.b16 %v2353
    %v2468 = vunpack.c.l.b16 %v2354
    %v2469 = vunpack.c.l.b16 %v2355
    %v2470 = vunpack.c.l.b16 %v2356
    %v2471 = vunpack.c.l.b16 %v2357
    %v2472 = vunpack.c.l.b16 %v2358
    %v2473 = vunpack.c.l.b16 %v2359
    %v2474 = vunpack.c.l.b16 %v2360
    %v2475 = vunpack.c.l.b16 %v2361
    %v2476 = vunpack.c.l.b16 %v2362
    %v2477 = vunpack.c.l.b16 %v2363
    %v2478 = vunpack.c.l.b16 %v2364
    %v2479 = vunpack.c.l.b16 %v2365
    %v2480 = vunpack.c.l.b16 %v2366
    %v2481 = vunpack.c.l.b16 %v2367
    %v2482 = vunpack.c.l.b16 %v2368
    %v2483 = vunpack.c.l.b16 %v2369
    %v2484 = vunpack.c.l.b16 %v2370
    %v2485 = vunpack.c.l.b16 %v2371
    %v2486 = vunpack.c.l.b16 %v2372
    %v2487 = vunpack.c.l.b16 %v2373
    %v2488 = vunpack.c.l.b16 %v2374
    %v2489 = vunpack.c.l.b16 %v2375
    %v2490 = vunpack.c.l.b16 %v2376
    %v2491 = vunpack.c.l.b16 %v2377
    %v2492 = vunpack.c.l.b16 %v2378
    %v2493 = vunpack.c.l.b16 %v2379
    %v2494 = vunpack.c.l.b16 %v2380
    %v2495 = vunpack.c.l.b16 %v2381
    %v2496 = vunpack.c.l.b16 %v2382
    %v2497 = vunpack.c.l.b16 %v2383
    %v2498 = vunpack.c.l.b16 %v2384
    %v2499 = vunpack.c.l.b16 %v2385
    %v2500 = vunpack.c.l.b16 %v2386
    %v2501 = vunpack.c.l.b16 %v2387
    %v2502 = vunpack.c.l.b16 %v2388
    %v2503 = vunpack.c.l.b16 %v2389
    %v2504 = vunpack.c.l.b16 %v2390
    %v2505 = vunpack.c.l.b16 %v2391
    %v2506 = vunpack.c.l.b16 %v2392
    %v2507 = vunpack.c.l.b16 %v2393
    %v2508 = vunpack.c.l.b16 %v2394
    %v2509 = vunpack.c.l.b16 %v2395
    %v2510 = vunpack.c.l.b16 %v2396
    %v2511 = vunpack.c.l.b16 %v2397
    %v2512 = vunpack.c.l.b16 %v2398
    %v2513 = vunpack.c.l.b16 %v2399
    %v2514 = vpack.c.b16 %v2459, %v2458
    %v2515 = vpack.c.b16 %v2461, %v2460
    %v2516 = vpack.c.b16 %v2463, %v2462
    %v2517 = vpack.c.b16 %v2465, %v2464
    %v2518 = vpack.c.b16 %v2467, %v2466
    %v2519 = vpack.c.b16 %v2469, %v2468
    %v2520 = vpack.c.b16 %v2471, %v2470
    %v2521 = vpack.c.b16 %v2473, %v2472
    %v2522 = vpack.c.b16 %v2475, %v2474
    %v2523 = vpack.c.b16 %v2477, %v2476
    %v2524 = vpack.c.b16 %v2479, %v2478
    %v2525 = vpack.c.b16 %v2481, %v2480
    %v2526 = vpack.c.b16 %v2483, %v2482
    %v2527 = vpack.c.b16 %v2485, %v2484
    %v2528 = vpack.c.b16 %v2487, %v2486
    %v2529 = vpack.c.b16 %v2489, %v2488
    %v2530 = vpack.c.b16 %v2491, %v2490
    %v2531 = vpack.c.b16 %v2493, %v2492
    %v2532 = vpack.c.b16 %v2495, %v2494
    %v2533 = vpack.c.b16 %v2497, %v2496
    %v2534 = vpack.c.b16 %v2499, %v2498
    %v2535 = vpack.c.b16 %v2501, %v2500
    %v2536 = vpack.c.b16 %v2503, %v2502
    %v2537 = vpack.c.b16 %v2505, %v2504
    %v2538 = vpack.c.b16 %v2507, %v2506
    %v2539 = vpack.c.b16 %v2509, %v2508
    %v2540 = vpack.c.b16 %v2511, %v2510
    %v2541 = vpack.c.b16 %v2513, %v2512
    %vm2542 = vcmask 261120
    %v2544 = vsel %vm2542, %v2514, 0
    %v2547 = vsel %vm2542, %v2515, 0
    %v2550 = vsel %vm2542, %v2516, 0
    %v2553 = vsel %vm2542, %v2517, 0
    %v2556 = vsel %vm2542, %v2518, 0
    %v2559 = vsel %vm2542, %v2519, 0
    %v2562 = vsel %vm2542, %v2520, 0
    %v2565 = vsel %vm2542, %v2521, 0
    %v2568 = vsel %vm2542, %v2522, 0
    %v2571 = vsel %vm2542, %v2523, 0
    %v2574 = vsel %vm2542, %v2524, 0
    %v2577 = vsel %vm2542, %v2525, 0
    %v2580 = vsel %vm2542, %v2526, 0
    %v2583 = vsel %vm2542, %v2527, 0
    %v2586 = vsel %vm2542, %v2528, 0
    %v2589 = vsel %vm2542, %v2529, 0
    %v2592 = vsel %vm2542, %v2530, 0
    %v2595 = vsel %vm2542, %v2531, 0
    %v2598 = vsel %vm2542, %v2532, 0
    %v2601 = vsel %vm2542, %v2533, 0
    %v2604 = vsel %vm2542, %v2534, 0
    %v2607 = vsel %vm2542, %v2535, 0
    %v2610 = vsel %vm2542, %v2536, 0
    %v2613 = vsel %vm2542, %v2537, 0
    %v2616 = vsel %vm2542, %v2538, 0
    %v2619 = vsel %vm2542, %v2539, 0
    %v2622 = vsel %vm2542, %v2540, 0
    %v2625 = vsel %vm2542, %v2541, 0
    %2627 = vmatprep.subr.bf16.mxu0 0
    %2628 = vmatpush1.bf16.msra.mxu0 %v2400
    %2629 = vmatprep.subr.bf16.mxu0 0
    %2630 = vmatpush1.bf16.msra.mxu0 %v2401
    %2631 = vmatprep.subr.bf16.mxu0 0
    %2632 = vmatpush1.bf16.msra.mxu0 0
    %2633 = vmatprep.subr.bf16.mxu0 0
    %2634 = vmatpush1.bf16.msra.mxu0 0
    %2635 = vmatprep.subr.bf16.mxu0 0
    %2636 = vmatpush1.bf16.msra.mxu0 0
    %2637 = vmatprep.subr.bf16.mxu0 0
    %2638 = vmatpush1.bf16.msra.mxu0 0
    %2639 = vmatprep.subr.bf16.mxu0 0
    %2640 = vmatpush1.bf16.msra.mxu0 0
    %2641 = vmatprep.subr.bf16.mxu0 0
    %2642 = vmatpush1.bf16.msra.mxu0 0
    %2643 = vmatprep.subr.bf16.mxu0 0
    %2644 = vmatpush1.bf16.msra.mxu0 0
    %2645 = vmatprep.subr.bf16.mxu0 0
    %2646 = vmatpush1.bf16.msra.mxu0 0
    %2647 = vmatprep.subr.bf16.mxu0 0
    %2648 = vmatpush1.bf16.msra.mxu0 0
    %2649 = vmatprep.subr.bf16.mxu0 0
    %2650 = vmatpush1.bf16.msra.mxu0 0
    %2651 = vmatprep.subr.bf16.mxu0 0
    %2652 = vmatpush1.bf16.msra.mxu0 0
    %2653 = vmatprep.subr.bf16.mxu0 0
    %2654 = vmatpush1.bf16.msra.mxu0 0
    %2655 = vmatprep.subr.bf16.mxu0 0
    %2656 = vmatpush1.bf16.msra.mxu0 0
    %2657 = vmatprep.subr.bf16.mxu0 0
    %2658 = vmatpush1.bf16.msra.mxu0 0
    %2659 = vmatprep.mubr.bf16.mxu0 0
    %2660 = vmatmul.mubr.bf16.gmra.mrb[0].mxu0 %v2544
    %v2661 = vpop.f32.mrb[0].mxu0
    %v2662 = vadd.f32 0.0, %v2661
    %v2663 = vpop.f32.mrb[0].mxu0
    %v2664 = vpop.f32.mrb[0].mxu0
    %v2665 = vadd.f32 0.0, %v2664
    %v2666 = vpop.f32.mrb[0].mxu0
    %2667 = vmatprep.mubr.bf16.mxu0 0
    %2668 = vmatmul.mubr.bf16.gmra.mrb[0].mxu0 %v2547
    %v2669 = vpop.f32.mrb[0].mxu0
    %v2670 = vadd.f32 0.0, %v2669
    %v2671 = vpop.f32.mrb[0].mxu0
    %v2672 = vpop.f32.mrb[0].mxu0
    %v2673 = vadd.f32 0.0, %v2672
    %v2674 = vpop.f32.mrb[0].mxu0
    %2675 = vmatprep.mubr.bf16.mxu0 0
    %2676 = vmatmul.mubr.bf16.gmra.mrb[0].mxu0 %v2550
    %v2677 = vpop.f32.mrb[0].mxu0
    %v2678 = vadd.f32 0.0, %v2677
    %v2679 = vpop.f32.mrb[0].mxu0
    %v2680 = vpop.f32.mrb[0].mxu0
    %v2681 = vadd.f32 0.0, %v2680
    %v2682 = vpop.f32.mrb[0].mxu0
    %2683 = vmatprep.mubr.bf16.mxu0 0
    %2684 = vmatmul.mubr.bf16.gmra.mrb[0].mxu0 %v2553
    %v2685 = vpop.f32.mrb[0].mxu0
    %v2686 = vadd.f32 0.0, %v2685
    %v2687 = vpop.f32.mrb[0].mxu0
    %v2688 = vpop.f32.mrb[0].mxu0
    %v2689 = vadd.f32 0.0, %v2688
    %v2690 = vpop.f32.mrb[0].mxu0
    %2691 = vmatprep.mubr.bf16.mxu0 0
    %2692 = vmatmul.mubr.bf16.gmra.mrb[0].mxu0 %v2556
    %v2693 = vpop.f32.mrb[0].mxu0
    %v2694 = vadd.f32 0.0, %v2693
    %v2695 = vpop.f32.mrb[0].mxu0
    %v2696 = vpop.f32.mrb[0].mxu0
    %v2697 = vadd.f32 0.0, %v2696
    %v2698 = vpop.f32.mrb[0].mxu0
    %2699 = vmatprep.mubr.bf16.mxu0 0
    %2700 = vmatmul.mubr.bf16.gmra.mrb[0].mxu0 %v2559
    %v2701 = vpop.f32.mrb[0].mxu0
    %v2702 = vadd.f32 0.0, %v2701
    %v2703 = vpop.f32.mrb[0].mxu0
    %v2704 = vpop.f32.mrb[0].mxu0
    %v2705 = vadd.f32 0.0, %v2704
    %v2706 = vpop.f32.mrb[0].mxu0
    %2707 = vmatprep.mubr.bf16.mxu0 0
    %2708 = vmatmul.mubr.bf16.gmra.mrb[0].mxu0 %v2562
    %v2709 = vpop.f32.mrb[0].mxu0
    %v2710 = vadd.f32 0.0, %v2709
    %v2711 = vpop.f32.mrb[0].mxu0
    %v2712 = vpop.f32.mrb[0].mxu0
    %v2713 = vadd.f32 0.0, %v2712
    %v2714 = vpop.f32.mrb[0].mxu0
    %2715 = vmatprep.mubr.bf16.mxu0 0
    %2716 = vmatmul.mubr.bf16.gmra.mrb[0].mxu0 %v2565
    %v2717 = vpop.f32.mrb[0].mxu0
    %v2718 = vadd.f32 0.0, %v2717
    %v2719 = vpop.f32.mrb[0].mxu0
    %v2720 = vpop.f32.mrb[0].mxu0
    %v2721 = vadd.f32 0.0, %v2720
    %v2722 = vpop.f32.mrb[0].mxu0
    %2723 = vmatprep.mubr.bf16.mxu0 0
    %2724 = vmatmul.mubr.bf16.gmra.mrb[0].mxu0 %v2568
    %v2725 = vpop.f32.mrb[0].mxu0
    %v2726 = vadd.f32 0.0, %v2725
    %v2727 = vpop.f32.mrb[0].mxu0
    %v2728 = vpop.f32.mrb[0].mxu0
    %v2729 = vadd.f32 0.0, %v2728
    %v2730 = vpop.f32.mrb[0].mxu0
    %2731 = vmatprep.mubr.bf16.mxu0 0
    %2732 = vmatmul.mubr.bf16.gmra.mrb[0].mxu0 %v2571
    %v2733 = vpop.f32.mrb[0].mxu0
    %v2734 = vadd.f32 0.0, %v2733
    %v2735 = vpop.f32.mrb[0].mxu0
    %v2736 = vpop.f32.mrb[0].mxu0
    %v2737 = vadd.f32 0.0, %v2736
    %v2738 = vpop.f32.mrb[0].mxu0
    %2739 = vmatprep.mubr.bf16.mxu0 0
    %2740 = vmatmul.mubr.bf16.gmra.mrb[0].mxu0 %v2574
    %v2741 = vpop.f32.mrb[0].mxu0
    %v2742 = vadd.f32 0.0, %v2741
    %v2743 = vpop.f32.mrb[0].mxu0
    %v2744 = vpop.f32.mrb[0].mxu0
    %v2745 = vadd.f32 0.0, %v2744
    %v2746 = vpop.f32.mrb[0].mxu0
    %2747 = vmatprep.mubr.bf16.mxu0 0
    %2748 = vmatmul.mubr.bf16.gmra.mrb[0].mxu0 %v2577
    %v2749 = vpop.f32.mrb[0].mxu0
    %v2750 = vadd.f32 0.0, %v2749
    %v2751 = vpop.f32.mrb[0].mxu0
    %v2752 = vpop.f32.mrb[0].mxu0
    %v2753 = vadd.f32 0.0, %v2752
    %v2754 = vpop.f32.mrb[0].mxu0
    %2755 = vmatprep.mubr.bf16.mxu0 0
    %2756 = vmatmul.mubr.bf16.gmra.mrb[0].mxu0 %v2580
    %v2757 = vpop.f32.mrb[0].mxu0
    %v2758 = vadd.f32 0.0, %v2757
    %v2759 = vpop.f32.mrb[0].mxu0
    %v2760 = vpop.f32.mrb[0].mxu0
    %v2761 = vadd.f32 0.0, %v2760
    %v2762 = vpop.f32.mrb[0].mxu0
    %2763 = vmatprep.mubr.bf16.mxu0 0
    %2764 = vmatmul.mubr.bf16.gmra.mrb[0].mxu0 %v2583
    %v2765 = vpop.f32.mrb[0].mxu0
    %v2766 = vadd.f32 0.0, %v2765
    %v2767 = vpop.f32.mrb[0].mxu0
    %v2768 = vpop.f32.mrb[0].mxu0
    %v2769 = vadd.f32 0.0, %v2768
    %v2770 = vpop.f32.mrb[0].mxu0
    %2771 = vmatprep.mubr.bf16.mxu0 0
    %2772 = vmatmul.mubr.bf16.gmra.mrb[0].mxu0 %v2586
    %v2773 = vpop.f32.mrb[0].mxu0
    %v2774 = vadd.f32 0.0, %v2773
    %v2775 = vpop.f32.mrb[0].mxu0
    %v2776 = vpop.f32.mrb[0].mxu0
    %v2777 = vadd.f32 0.0, %v2776
    %v2778 = vpop.f32.mrb[0].mxu0
    %2779 = vmatprep.mubr.bf16.mxu0 0
    %2780 = vmatmul.mubr.bf16.gmra.mrb[0].mxu0 %v2589
    %v2781 = vpop.f32.mrb[0].mxu0
    %v2782 = vadd.f32 0.0, %v2781
    %v2783 = vpop.f32.mrb[0].mxu0
    %v2784 = vpop.f32.mrb[0].mxu0
    %v2785 = vadd.f32 0.0, %v2784
    %v2786 = vpop.f32.mrb[0].mxu0
    %2787 = vmatprep.mubr.bf16.mxu0 0
    %2788 = vmatmul.mubr.bf16.gmra.mrb[0].mxu0 %v2592
    %v2789 = vpop.f32.mrb[0].mxu0
    %v2790 = vadd.f32 0.0, %v2789
    %v2791 = vpop.f32.mrb[0].mxu0
    %v2792 = vpop.f32.mrb[0].mxu0
    %v2793 = vadd.f32 0.0, %v2792
    %v2794 = vpop.f32.mrb[0].mxu0
    %2795 = vmatprep.mubr.bf16.mxu0 0
    %2796 = vmatmul.mubr.bf16.gmra.mrb[0].mxu0 %v2595
    %v2797 = vpop.f32.mrb[0].mxu0
    %v2798 = vadd.f32 0.0, %v2797
    %v2799 = vpop.f32.mrb[0].mxu0
    %v2800 = vpop.f32.mrb[0].mxu0
    %v2801 = vadd.f32 0.0, %v2800
    %v2802 = vpop.f32.mrb[0].mxu0
    %2803 = vmatprep.mubr.bf16.mxu0 0
    %2804 = vmatmul.mubr.bf16.gmra.mrb[0].mxu0 %v2598
    %v2805 = vpop.f32.mrb[0].mxu0
    %v2806 = vadd.f32 0.0, %v2805
    %v2807 = vpop.f32.mrb[0].mxu0
    %v2808 = vpop.f32.mrb[0].mxu0
    %v2809 = vadd.f32 0.0, %v2808
    %v2810 = vpop.f32.mrb[0].mxu0
    %2811 = vmatprep.mubr.bf16.mxu0 0
    %2812 = vmatmul.mubr.bf16.gmra.mrb[0].mxu0 %v2601
    %v2813 = vpop.f32.mrb[0].mxu0
    %v2814 = vadd.f32 0.0, %v2813
    %v2815 = vpop.f32.mrb[0].mxu0
    %v2816 = vpop.f32.mrb[0].mxu0
    %v2817 = vadd.f32 0.0, %v2816
    %v2818 = vpop.f32.mrb[0].mxu0
    %2819 = vmatprep.mubr.bf16.mxu0 0
    %2820 = vmatmul.mubr.bf16.gmra.mrb[0].mxu0 %v2604
    %v2821 = vpop.f32.mrb[0].mxu0
    %v2822 = vadd.f32 0.0, %v2821
    %v2823 = vpop.f32.mrb[0].mxu0
    %v2824 = vpop.f32.mrb[0].mxu0
    %v2825 = vadd.f32 0.0, %v2824
    %v2826 = vpop.f32.mrb[0].mxu0
    %2827 = vmatprep.mubr.bf16.mxu0 0
    %2828 = vmatmul.mubr.bf16.gmra.mrb[0].mxu0 %v2607
    %v2829 = vpop.f32.mrb[0].mxu0
    %v2830 = vadd.f32 0.0, %v2829
    %v2831 = vpop.f32.mrb[0].mxu0
    %v2832 = vpop.f32.mrb[0].mxu0
    %v2833 = vadd.f32 0.0, %v2832
    %v2834 = vpop.f32.mrb[0].mxu0
    %2835 = vmatprep.mubr.bf16.mxu0 0
    %2836 = vmatmul.mubr.bf16.gmra.mrb[0].mxu0 %v2610
    %v2837 = vpop.f32.mrb[0].mxu0
    %v2838 = vadd.f32 0.0, %v2837
    %v2839 = vpop.f32.mrb[0].mxu0
    %v2840 = vpop.f32.mrb[0].mxu0
    %v2841 = vadd.f32 0.0, %v2840
    %v2842 = vpop.f32.mrb[0].mxu0
    %2843 = vmatprep.mubr.bf16.mxu0 0
    %2844 = vmatmul.mubr.bf16.gmra.mrb[0].mxu0 %v2613
    %v2845 = vpop.f32.mrb[0].mxu0
    %v2846 = vadd.f32 0.0, %v2845
    %v2847 = vpop.f32.mrb[0].mxu0
    %v2848 = vpop.f32.mrb[0].mxu0
    %v2849 = vadd.f32 0.0, %v2848
    %v2850 = vpop.f32.mrb[0].mxu0
    %2851 = vmatprep.mubr.bf16.mxu0 0
    %2852 = vmatmul.mubr.bf16.gmra.mrb[0].mxu0 %v2616
    %v2853 = vpop.f32.mrb[0].mxu0
    %v2854 = vadd.f32 0.0, %v2853
    %v2855 = vpop.f32.mrb[0].mxu0
    %v2856 = vpop.f32.mrb[0].mxu0
    %v2857 = vadd.f32 0.0, %v2856
    %v2858 = vpop.f32.mrb[0].mxu0
    %2859 = vmatprep.mubr.bf16.mxu0 0
    %2860 = vmatmul.mubr.bf16.gmra.mrb[0].mxu0 %v2619
    %v2861 = vpop.f32.mrb[0].mxu0
    %v2862 = vadd.f32 0.0, %v2861
    %v2863 = vpop.f32.mrb[0].mxu0
    %v2864 = vpop.f32.mrb[0].mxu0
    %v2865 = vadd.f32 0.0, %v2864
    %v2866 = vpop.f32.mrb[0].mxu0
    %2867 = vmatprep.mubr.bf16.mxu0 0
    %2868 = vmatmul.mubr.bf16.gmra.mrb[0].mxu0 %v2622
    %v2869 = vpop.f32.mrb[0].mxu0
    %v2870 = vadd.f32 0.0, %v2869
    %v2871 = vpop.f32.mrb[0].mxu0
    %v2872 = vpop.f32.mrb[0].mxu0
    %v2873 = vadd.f32 0.0, %v2872
    %v2874 = vpop.f32.mrb[0].mxu0
    %2875 = vmatprep.mubr.bf16.mxu0 0
    %2876 = vmatmul.mubr.bf16.gmra.mrb[0].mxu0 %v2625
    %v2877 = vpop.f32.mrb[0].mxu0
    %v2878 = vadd.f32 0.0, %v2877
    %v2879 = vpop.f32.mrb[0].mxu0
    %v2880 = vpop.f32.mrb[0].mxu0
    %v2881 = vadd.f32 0.0, %v2880
    %v2882 = vpop.f32.mrb[0].mxu0
    %2883 = vdwg.mxu0
    %vm2884 = vcmask 138240
    %2885 = vst.msk [vmem:[#allocation2] sm:$0xff] %vm2884, %v2662
    %2886 = vst.msk [vmem:[#allocation2 + $0x40] sm:$0xff] %vm2884, %v2665
    %2887 = vst.msk [vmem:[#allocation2 + $0x80] sm:$0xff] %vm2884, %v2670
    %2888 = vst.msk [vmem:[#allocation2 + $0xc0] sm:$0xff] %vm2884, %v2673
    %2889 = vst.msk [vmem:[#allocation2 + $0x100] sm:$0xff] %vm2884, %v2678
    %2890 = vst.msk [vmem:[#allocation2 + $0x140] sm:$0xff] %vm2884, %v2681
    %2891 = vst.msk [vmem:[#allocation2 + $0x180] sm:$0xff] %vm2884, %v2686
    %2892 = vst.msk [vmem:[#allocation2 + $0x1c0] sm:$0xff] %vm2884, %v2689
    %2901 = vrot.lane.b32.xlu0 %v2694, 17
    %v2902 = vpop.permute.xlu0 %2901
    %2903 = vrot.lane.b32.xlu0 %v2697, 17
    %v2904 = vpop.permute.xlu0 %2903
    %2905 = vrot.lane.b32.xlu0 %v2702, 17
    %v2906 = vpop.permute.xlu0 %2905
    %2907 = vrot.lane.b32.xlu0 %v2705, 17
    %v2908 = vpop.permute.xlu0 %2907
    %2909 = vrot.lane.b32.xlu0 %v2710, 17
    %v2910 = vpop.permute.xlu0 %2909
    %2911 = vrot.lane.b32.xlu0 %v2713, 17
    %v2912 = vpop.permute.xlu0 %2911
    %2913 = vrot.lane.b32.xlu0 %v2718, 17
    %v2914 = vpop.permute.xlu0 %2913
    %2915 = vrot.lane.b32.xlu0 %v2721, 17
    %v2916 = vpop.permute.xlu0 %2915
    %vm2925 = vcmask 277640
    %2926 = vst.msk [vmem:[#allocation2] sm:$0xff] %vm2925, %v2902
    %2927 = vst.msk [vmem:[#allocation2 + $0x40] sm:$0xff] %vm2925, %v2904
    %2928 = vst.msk [vmem:[#allocation2 + $0x80] sm:$0xff] %vm2925, %v2906
    %2929 = vst.msk [vmem:[#allocation2 + $0xc0] sm:$0xff] %vm2925, %v2908
    %2930 = vst.msk [vmem:[#allocation2 + $0x100] sm:$0xff] %vm2925, %v2910
    %2931 = vst.msk [vmem:[#allocation2 + $0x140] sm:$0xff] %vm2925, %v2912
    %2932 = vst.msk [vmem:[#allocation2 + $0x180] sm:$0xff] %vm2925, %v2914
    %2933 = vst.msk [vmem:[#allocation2 + $0x1c0] sm:$0xff] %vm2925, %v2916
    %2942 = vrot.lane.b32.xlu0 %v2726, 34
    %v2943 = vpop.permute.xlu0 %2942
    %2944 = vrot.lane.b32.xlu0 %v2729, 34
    %v2945 = vpop.permute.xlu0 %2944
    %2946 = vrot.lane.b32.xlu0 %v2734, 34
    %v2947 = vpop.permute.xlu0 %2946
    %2948 = vrot.lane.b32.xlu0 %v2737, 34
    %v2949 = vpop.permute.xlu0 %2948
    %2950 = vrot.lane.b32.xlu0 %v2742, 34
    %v2951 = vpop.permute.xlu0 %2950
    %2952 = vrot.lane.b32.xlu0 %v2745, 34
    %v2953 = vpop.permute.xlu0 %2952
    %2954 = vrot.lane.b32.xlu0 %v2750, 34
    %v2955 = vpop.permute.xlu0 %2954
    %2956 = vrot.lane.b32.xlu0 %v2753, 34
    %v2957 = vpop.permute.xlu0 %2956
    %vm2966 = vcmask 417040
    %2967 = vst.msk [vmem:[#allocation2] sm:$0xff] %vm2966, %v2943
    %2968 = vst.msk [vmem:[#allocation2 + $0x40] sm:$0xff] %vm2966, %v2945
    %2969 = vst.msk [vmem:[#allocation2 + $0x80] sm:$0xff] %vm2966, %v2947
    %2970 = vst.msk [vmem:[#allocation2 + $0xc0] sm:$0xff] %vm2966, %v2949
    %2971 = vst.msk [vmem:[#allocation2 + $0x100] sm:$0xff] %vm2966, %v2951
    %2972 = vst.msk [vmem:[#allocation2 + $0x140] sm:$0xff] %vm2966, %v2953
    %2973 = vst.msk [vmem:[#allocation2 + $0x180] sm:$0xff] %vm2966, %v2955
    %2974 = vst.msk [vmem:[#allocation2 + $0x1c0] sm:$0xff] %vm2966, %v2957
    %2983 = vrot.lane.b32.xlu0 %v2758, 51
    %v2984 = vpop.permute.xlu0 %2983
    %2985 = vrot.lane.b32.xlu0 %v2761, 51
    %v2986 = vpop.permute.xlu0 %2985
    %2987 = vrot.lane.b32.xlu0 %v2766, 51
    %v2988 = vpop.permute.xlu0 %2987
    %2989 = vrot.lane.b32.xlu0 %v2769, 51
    %v2990 = vpop.permute.xlu0 %2989
    %2991 = vrot.lane.b32.xlu0 %v2774, 51
    %v2992 = vpop.permute.xlu0 %2991
    %2993 = vrot.lane.b32.xlu0 %v2777, 51
    %v2994 = vpop.permute.xlu0 %2993
    %2995 = vrot.lane.b32.xlu0 %v2782, 51
    %v2996 = vpop.permute.xlu0 %2995
    %2997 = vrot.lane.b32.xlu0 %v2785, 51
    %v2998 = vpop.permute.xlu0 %2997
    %vm3007 = vcmask 556440
    %3008 = vst.msk [vmem:[#allocation2] sm:$0xff] %vm3007, %v2984
    %3009 = vst.msk [vmem:[#allocation2 + $0x40] sm:$0xff] %vm3007, %v2986
    %3010 = vst.msk [vmem:[#allocation2 + $0x80] sm:$0xff] %vm3007, %v2988
    %3011 = vst.msk [vmem:[#allocation2 + $0xc0] sm:$0xff] %vm3007, %v2990
    %3012 = vst.msk [vmem:[#allocation2 + $0x100] sm:$0xff] %vm3007, %v2992
    %3013 = vst.msk [vmem:[#allocation2 + $0x140] sm:$0xff] %vm3007, %v2994
    %3014 = vst.msk [vmem:[#allocation2 + $0x180] sm:$0xff] %vm3007, %v2996
    %3015 = vst.msk [vmem:[#allocation2 + $0x1c0] sm:$0xff] %vm3007, %v2998
    %3024 = vrot.lane.b32.xlu0 %v2790, 68
    %v3025 = vpop.permute.xlu0 %3024
    %3026 = vrot.lane.b32.xlu0 %v2793, 68
    %v3027 = vpop.permute.xlu0 %3026
    %3028 = vrot.lane.b32.xlu0 %v2798, 68
    %v3029 = vpop.permute.xlu0 %3028
    %3030 = vrot.lane.b32.xlu0 %v2801, 68
    %v3031 = vpop.permute.xlu0 %3030
    %3032 = vrot.lane.b32.xlu0 %v2806, 68
    %v3033 = vpop.permute.xlu0 %3032
    %3034 = vrot.lane.b32.xlu0 %v2809, 68
    %v3035 = vpop.permute.xlu0 %3034
    %3036 = vrot.lane.b32.xlu0 %v2814, 68
    %v3037 = vpop.permute.xlu0 %3036
    %3038 = vrot.lane.b32.xlu0 %v2817, 68
    %v3039 = vpop.permute.xlu0 %3038
    %vm3048 = vcmask 695840
    %3049 = vst.msk [vmem:[#allocation2] sm:$0xff] %vm3048, %v3025
    %3050 = vst.msk [vmem:[#allocation2 + $0x40] sm:$0xff] %vm3048, %v3027
    %3051 = vst.msk [vmem:[#allocation2 + $0x80] sm:$0xff] %vm3048, %v3029
    %3052 = vst.msk [vmem:[#allocation2 + $0xc0] sm:$0xff] %vm3048, %v3031
    %3053 = vst.msk [vmem:[#allocation2 + $0x100] sm:$0xff] %vm3048, %v3033
    %3054 = vst.msk [vmem:[#allocation2 + $0x140] sm:$0xff] %vm3048, %v3035
    %3055 = vst.msk [vmem:[#allocation2 + $0x180] sm:$0xff] %vm3048, %v3037
    %3056 = vst.msk [vmem:[#allocation2 + $0x1c0] sm:$0xff] %vm3048, %v3039
    %3065 = vrot.lane.b32.xlu0 %v2822, 85
    %v3066 = vpop.permute.xlu0 %3065
    %3067 = vrot.lane.b32.xlu0 %v2825, 85
    %v3068 = vpop.permute.xlu0 %3067
    %3069 = vrot.lane.b32.xlu0 %v2830, 85
    %v3070 = vpop.permute.xlu0 %3069
    %3071 = vrot.lane.b32.xlu0 %v2833, 85
    %v3072 = vpop.permute.xlu0 %3071
    %3073 = vrot.lane.b32.xlu0 %v2838, 85
    %v3074 = vpop.permute.xlu0 %3073
    %3075 = vrot.lane.b32.xlu0 %v2841, 85
    %v3076 = vpop.permute.xlu0 %3075
    %3077 = vrot.lane.b32.xlu0 %v2846, 85
    %v3078 = vpop.permute.xlu0 %3077
    %3079 = vrot.lane.b32.xlu0 %v2849, 85
    %v3080 = vpop.permute.xlu0 %3079
    %vm3089 = vcmask 835240
    %3090 = vst.msk [vmem:[#allocation2] sm:$0xff] %vm3089, %v3066
    %3091 = vst.msk [vmem:[#allocation2 + $0x40] sm:$0xff] %vm3089, %v3068
    %3092 = vst.msk [vmem:[#allocation2 + $0x80] sm:$0xff] %vm3089, %v3070
    %3093 = vst.msk [vmem:[#allocation2 + $0xc0] sm:$0xff] %vm3089, %v3072
    %3094 = vst.msk [vmem:[#allocation2 + $0x100] sm:$0xff] %vm3089, %v3074
    %3095 = vst.msk [vmem:[#allocation2 + $0x140] sm:$0xff] %vm3089, %v3076
    %3096 = vst.msk [vmem:[#allocation2 + $0x180] sm:$0xff] %vm3089, %v3078
    %3097 = vst.msk [vmem:[#allocation2 + $0x1c0] sm:$0xff] %vm3089, %v3080
    %3106 = vrot.lane.b32.xlu0 %v2854, 102
    %v3107 = vpop.permute.xlu0 %3106
    %3108 = vrot.lane.b32.xlu0 %v2857, 102
    %v3109 = vpop.permute.xlu0 %3108
    %3110 = vrot.lane.b32.xlu0 %v2862, 102
    %v3111 = vpop.permute.xlu0 %3110
    %3112 = vrot.lane.b32.xlu0 %v2865, 102
    %v3113 = vpop.permute.xlu0 %3112
    %3114 = vrot.lane.b32.xlu0 %v2870, 102
    %v3115 = vpop.permute.xlu0 %3114
    %3116 = vrot.lane.b32.xlu0 %v2873, 102
    %v3117 = vpop.permute.xlu0 %3116
    %3118 = vrot.lane.b32.xlu0 %v2878, 102
    %v3119 = vpop.permute.xlu0 %3118
    %3120 = vrot.lane.b32.xlu0 %v2881, 102
    %v3121 = vpop.permute.xlu0 %3120
    %vm3130 = vcmask 974640
    %3131 = vst.msk [vmem:[#allocation2] sm:$0xff] %vm3130, %v3107
    %3132 = vst.msk [vmem:[#allocation2 + $0x40] sm:$0xff] %vm3130, %v3109
    %3133 = vst.msk [vmem:[#allocation2 + $0x80] sm:$0xff] %vm3130, %v3111
    %3134 = vst.msk [vmem:[#allocation2 + $0xc0] sm:$0xff] %vm3130, %v3113
    %3135 = vst.msk [vmem:[#allocation2 + $0x100] sm:$0xff] %vm3130, %v3115
    %3136 = vst.msk [vmem:[#allocation2 + $0x140] sm:$0xff] %vm3130, %v3117
    %3137 = vst.msk [vmem:[#allocation2 + $0x180] sm:$0xff] %vm3130, %v3119
    %3138 = vst.msk [vmem:[#allocation2 + $0x1c0] sm:$0xff] %vm3130, %v3121
    %v3139 = vld [vmem:[#allocation2] sm:$0xff]
    %v3140 = vld [vmem:[#allocation2 + $0x40] sm:$0xff]
    %v3141 = vld [vmem:[#allocation2 + $0x80] sm:$0xff]
    %v3142 = vld [vmem:[#allocation2 + $0xc0] sm:$0xff]
    %v3143 = vld [vmem:[#allocation2 + $0x100] sm:$0xff]
    %v3144 = vld [vmem:[#allocation2 + $0x140] sm:$0xff]
    %v3145 = vld [vmem:[#allocation2 + $0x180] sm:$0xff]
    %v3146 = vld [vmem:[#allocation2 + $0x1c0] sm:$0xff]
    %v3147 = vpack.c.bf16 %v3140, %v3139
    %v3148 = vpack.c.bf16 %v3142, %v3141
    %v3149 = vpack.c.bf16 %v3144, %v3143
    %v3150 = vpack.c.bf16 %v3146, %v3145
    %v3151 = vld [vmem:[#allocation17] sm:$0xf]
    %v3152 = vld [vmem:[#allocation17 + $0x4] sm:$0xf]
    %v3153 = vld [vmem:[#allocation17 + $0x8] sm:$0xf]
    %v3154 = vld [vmem:[#allocation17 + $0xc] sm:$0xf]
    %v3155 = vld [vmem:[#allocation17 + $0x10] sm:$0xf]
    %v3156 = vld [vmem:[#allocation17 + $0x14] sm:$0xf]
    %v3157 = vld [vmem:[#allocation17 + $0x18] sm:$0xf]
    %v3158 = vld [vmem:[#allocation17 + $0x1c] sm:$0xf]
    %v3159 = vld [vmem:[#allocation17 + $0x20] sm:$0xf]
    %v3160 = vld [vmem:[#allocation17 + $0x24] sm:$0xf]
    %v3161 = vld [vmem:[#allocation17 + $0x28] sm:$0xf]
    %v3162 = vld [vmem:[#allocation17 + $0x2c] sm:$0xf]
    %v3163 = vld [vmem:[#allocation17 + $0x30] sm:$0xf]
    %v3164 = vld [vmem:[#allocation17 + $0x34] sm:$0xf]
    %v3165 = vld [vmem:[#allocation17 + $0x38] sm:$0xf]
    %v3166 = vld [vmem:[#allocation3] sm:$0xff]
    %v3167 = vld [vmem:[#allocation3 + $0x8] sm:$0xff]
    %v3168 = vld [vmem:[#allocation3 + $0x10] sm:$0xff]
    %v3169 = vld [vmem:[#allocation3 + $0x18] sm:$0xff]
    %v3170 = vld [vmem:[#allocation3 + $0x20] sm:$0xff]
    %v3171 = vld [vmem:[#allocation3 + $0x28] sm:$0xff]
    %v3172 = vld [vmem:[#allocation3 + $0x30] sm:$0xff]
    %v3173 = vld [vmem:[#allocation3 + $0x38] sm:$0xff]
    %3175 = vset.pattern.permute.xlu0 3
    %3176 = vperm.xlu0 %3175, %v3166
    %v3177 = vpop.permute.xlu0 %3176
    %3180 = vset.pattern.permute.xlu0 3
    %3181 = vperm.xlu0 %3180, %v3167
    %v3182 = vpop.permute.xlu0 %3181
    %3185 = vset.pattern.permute.xlu0 3
    %3186 = vperm.xlu0 %3185, %v3168
    %v3187 = vpop.permute.xlu0 %3186
    %3190 = vset.pattern.permute.xlu0 3
    %3191 = vperm.xlu0 %3190, %v3169
    %v3192 = vpop.permute.xlu0 %3191
    %3195 = vset.pattern.permute.xlu0 3
    %3196 = vperm.xlu0 %3195, %v3170
    %v3197 = vpop.permute.xlu0 %3196
    %3200 = vset.pattern.permute.xlu0 3
    %3201 = vperm.xlu0 %3200, %v3171
    %v3202 = vpop.permute.xlu0 %3201
    %3205 = vset.pattern.permute.xlu0 3
    %3206 = vperm.xlu0 %3205, %v3172
    %v3207 = vpop.permute.xlu0 %3206
    %3210 = vset.pattern.permute.xlu0 3
    %3211 = vperm.xlu0 %3210, %v3173
    %v3212 = vpop.permute.xlu0 %3211
    %v3229 = vunpack.c.l.b16 %v3151
    %v3230 = vunpack.c.l.b16 %v3152
    %v3231 = vunpack.c.l.b16 %v3153
    %v3232 = vunpack.c.l.b16 %v3154
    %v3233 = vunpack.c.l.b16 %v3155
    %v3234 = vunpack.c.l.b16 %v3156
    %v3235 = vunpack.c.l.b16 %v3157
    %v3236 = vunpack.c.l.b16 %v3158
    %v3237 = vunpack.c.l.b16 %v3159
    %v3238 = vunpack.c.l.b16 %v3160
    %v3239 = vunpack.c.l.b16 %v3161
    %v3240 = vunpack.c.l.b16 %v3162
    %v3241 = vunpack.c.l.b16 %v3163
    %v3242 = vunpack.c.l.b16 %v3164
    %v3243 = vunpack.c.l.b16 %v3165
    %v3244 = vpack.c.b16 %v3230, %v3229
    %v3245 = vpack.c.b16 %v3232, %v3231
    %v3246 = vpack.c.b16 %v3234, %v3233
    %v3247 = vpack.c.b16 %v3236, %v3235
    %v3248 = vpack.c.b16 %v3238, %v3237
    %v3249 = vpack.c.b16 %v3240, %v3239
    %v3250 = vpack.c.b16 %v3242, %v3241
    %v3251 = vpack.c.b16 %v3243, %v3243
    %vm3259 = vcmask 973824
    %v3261 = vsel %vm3259, %v3147, 0
    %v3264 = vsel %vm3259, %v3148, 0
    %v3267 = vsel %vm3259, %v3149, 0
    %v3270 = vsel %vm3259, %v3150, 0
    %v3273 = vand.u32 %v3251, %v1619
    %3275 = vmatprep.subr.bf16.mxu0 0
    %3276 = vmatpush1.bf16.msra.mxu0 %v3244
    %3277 = vmatprep.subr.bf16.mxu0 0
    %3278 = vmatpush1.bf16.msra.mxu0 %v3245
    %3279 = vmatprep.subr.bf16.mxu0 0
    %3280 = vmatpush1.bf16.msra.mxu0 %v3246
    %3281 = vmatprep.subr.bf16.mxu0 0
    %3282 = vmatpush1.bf16.msra.mxu0 %v3247
    %3283 = vmatprep.subr.bf16.mxu0 0
    %3284 = vmatpush1.bf16.msra.mxu0 %v3248
    %3285 = vmatprep.subr.bf16.mxu0 0
    %3286 = vmatpush1.bf16.msra.mxu0 %v3249
    %3287 = vmatprep.subr.bf16.mxu0 0
    %3288 = vmatpush1.bf16.msra.mxu0 %v3250
    %3289 = vmatprep.subr.bf16.mxu0 0
    %3290 = vmatpush1.bf16.msra.mxu0 %v3273
    %3291 = vmatprep.subr.bf16.mxu0 0
    %3292 = vmatpush1.bf16.msra.mxu0 0
    %3293 = vmatprep.subr.bf16.mxu0 0
    %3294 = vmatpush1.bf16.msra.mxu0 0
    %3295 = vmatprep.subr.bf16.mxu0 0
    %3296 = vmatpush1.bf16.msra.mxu0 0
    %3297 = vmatprep.subr.bf16.mxu0 0
    %3298 = vmatpush1.bf16.msra.mxu0 0
    %3299 = vmatprep.subr.bf16.mxu0 0
    %3300 = vmatpush1.bf16.msra.mxu0 0
    %3301 = vmatprep.subr.bf16.mxu0 0
    %3302 = vmatpush1.bf16.msra.mxu0 0
    %3303 = vmatprep.subr.bf16.mxu0 0
    %3304 = vmatpush1.bf16.msra.mxu0 0
    %3305 = vmatprep.subr.bf16.mxu0 0
    %3306 = vmatpush1.bf16.msra.mxu0 0
    %3307 = vmatprep.mubr.bf16.mxu0 0
    %3308 = vmatmul.mubr.bf16.gmra.mrb[0].mxu0 %v3261
    %v3309 = vpop.f32.mrb[0].mxu0
    %v3310 = vadd.f32 %v3177, %v3309
    %v3311 = vpop.f32.mrb[0].mxu0
    %v3312 = vpop.f32.mrb[0].mxu0
    %v3313 = vadd.f32 %v3182, %v3312
    %v3314 = vpop.f32.mrb[0].mxu0
    %3315 = vmatprep.mubr.bf16.mxu0 0
    %3316 = vmatmul.mubr.bf16.gmra.mrb[0].mxu0 %v3264
    %v3317 = vpop.f32.mrb[0].mxu0
    %v3318 = vadd.f32 %v3187, %v3317
    %v3319 = vpop.f32.mrb[0].mxu0
    %v3320 = vpop.f32.mrb[0].mxu0
    %v3321 = vadd.f32 %v3192, %v3320
    %v3322 = vpop.f32.mrb[0].mxu0
    %3323 = vmatprep.mubr.bf16.mxu0 0
    %3324 = vmatmul.mubr.bf16.gmra.mrb[0].mxu0 %v3267
    %v3325 = vpop.f32.mrb[0].mxu0
    %v3326 = vadd.f32 %v3197, %v3325
    %v3327 = vpop.f32.mrb[0].mxu0
    %v3328 = vpop.f32.mrb[0].mxu0
    %v3329 = vadd.f32 %v3202, %v3328
    %v3330 = vpop.f32.mrb[0].mxu0
    %3331 = vmatprep.mubr.bf16.mxu0 0
    %3332 = vmatmul.mubr.bf16.gmra.mrb[0].mxu0 %v3270
    %v3333 = vpop.f32.mrb[0].mxu0
    %v3334 = vadd.f32 %v3207, %v3333
    %v3335 = vpop.f32.mrb[0].mxu0
    %v3336 = vpop.f32.mrb[0].mxu0
    %v3337 = vadd.f32 %v3212, %v3336
    %v3338 = vpop.f32.mrb[0].mxu0
    %3339 = vdwg.mxu0
    %v3340 = vmax.f32 %v3310, 0.0
    %v3341 = vmax.f32 %v3313, 0.0
    %v3342 = vmax.f32 %v3318, 0.0
    %v3343 = vmax.f32 %v3321, 0.0
    %v3344 = vmax.f32 %v3326, 0.0
    %v3345 = vmax.f32 %v3329, 0.0
    %v3346 = vmax.f32 %v3334, 0.0
    %v3347 = vmax.f32 %v3337, 0.0
    %v3348 = vld [vmem:[%s10] sm:$0xf]
    %v3349 = vld [vmem:[%s10 + $0x4] sm:$0xf]
    %v3350 = vld [vmem:[%s10 + $0x8] sm:$0xf]
    %v3351 = vld [vmem:[%s10 + $0xc] sm:$0xf]
    %v3352 = vld [vmem:[%s10 + $0x10] sm:$0xf]
    %v3353 = vld [vmem:[%s10 + $0x14] sm:$0xf]
    %v3354 = vld [vmem:[%s10 + $0x18] sm:$0xf]
    %v3355 = vld [vmem:[%s10 + $0x1c] sm:$0xf]
    %v3356 = vld [vmem:[%s10 + $0x20] sm:$0xf]
    %v3357 = vld [vmem:[%s10 + $0x24] sm:$0xf]
    %v3358 = vld [vmem:[%s10 + $0x28] sm:$0xf]
    %v3359 = vld [vmem:[%s10 + $0x2c] sm:$0xf]
    %v3360 = vld [vmem:[%s10 + $0x30] sm:$0xf]
    %v3361 = vld [vmem:[%s10 + $0x34] sm:$0xf]
    %v3362 = vld [vmem:[%s10 + $0x38] sm:$0xf]
    %v3363 = vld [vmem:[%s10 + $0x3c] sm:$0xf]
    %v3364 = vld [vmem:[%s10 + $0x40] sm:$0xf]
    %v3365 = vld [vmem:[%s10 + $0x44] sm:$0xf]
    %v3366 = vld [vmem:[%s10 + $0x48] sm:$0xf]
    %v3367 = vld [vmem:[%s10 + $0x4c] sm:$0xf]
    %v3368 = vld [vmem:[%s10 + $0x50] sm:$0xf]
    %v3369 = vld [vmem:[%s10 + $0x54] sm:$0xf]
    %v3370 = vld [vmem:[%s10 + $0x58] sm:$0xf]
    %v3371 = vld [vmem:[%s10 + $0x5c] sm:$0xf]
    %v3372 = vld [vmem:[%s10 + $0x60] sm:$0xf]
    %v3373 = vld [vmem:[%s10 + $0x64] sm:$0xf]
    %v3374 = vld [vmem:[%s10 + $0x68] sm:$0xf]
    %v3375 = vld [vmem:[%s10 + $0x6c] sm:$0xf]
    %v3376 = vpack.c.bf16 %v3341, %v3340
    %v3377 = vpack.c.bf16 %v3343, %v3342
    %v3378 = vpack.c.bf16 %v3345, %v3344
    %v3379 = vpack.c.bf16 %v3347, %v3346
    %v3408 = vunpack.c.l.b16 %v3348
    %v3409 = vunpack.c.l.b16 %v3349
    %v3410 = vunpack.c.l.b16 %v3350
    %v3411 = vunpack.c.l.b16 %v3351
    %v3412 = vunpack.c.l.b16 %v3352
    %v3413 = vunpack.c.l.b16 %v3353
    %v3414 = vunpack.c.l.b16 %v3354
    %v3415 = vunpack.c.l.b16 %v3355
    %v3416 = vunpack.c.l.b16 %v3356
    %v3417 = vunpack.c.l.b16 %v3357
    %v3418 = vunpack.c.l.b16 %v3358
    %v3419 = vunpack.c.l.b16 %v3359
    %v3420 = vunpack.c.l.b16 %v3360
    %v3421 = vunpack.c.l.b16 %v3361
    %v3422 = vunpack.c.l.b16 %v3362
    %v3423 = vunpack.c.l.b16 %v3363
    %v3424 = vunpack.c.l.b16 %v3364
    %v3425 = vunpack.c.l.b16 %v3365
    %v3426 = vunpack.c.l.b16 %v3366
    %v3427 = vunpack.c.l.b16 %v3367
    %v3428 = vunpack.c.l.b16 %v3368
    %v3429 = vunpack.c.l.b16 %v3369
    %v3430 = vunpack.c.l.b16 %v3370
    %v3431 = vunpack.c.l.b16 %v3371
    %v3432 = vunpack.c.l.b16 %v3372
    %v3433 = vunpack.c.l.b16 %v3373
    %v3434 = vunpack.c.l.b16 %v3374
    %v3435 = vunpack.c.l.b16 %v3375
    %v3436 = vpack.c.b16 %v3409, %v3408
    %v3437 = vpack.c.b16 %v3411, %v3410
    %v3438 = vpack.c.b16 %v3413, %v3412
    %v3439 = vpack.c.b16 %v3415, %v3414
    %v3440 = vpack.c.b16 %v3417, %v3416
    %v3441 = vpack.c.b16 %v3419, %v3418
    %v3442 = vpack.c.b16 %v3421, %v3420
    %v3443 = vpack.c.b16 %v3423, %v3422
    %v3444 = vpack.c.b16 %v3425, %v3424
    %v3445 = vpack.c.b16 %v3427, %v3426
    %v3446 = vpack.c.b16 %v3429, %v3428
    %v3447 = vpack.c.b16 %v3431, %v3430
    %v3448 = vpack.c.b16 %v3433, %v3432
    %v3449 = vpack.c.b16 %v3435, %v3434
    %vm3450 = vcmask 523264
    %v3452 = vsel %vm3450, %v3436, 0
    %v3455 = vsel %vm3450, %v3437, 0
    %v3458 = vsel %vm3450, %v3438, 0
    %v3461 = vsel %vm3450, %v3439, 0
    %v3464 = vsel %vm3450, %v3440, 0
    %v3467 = vsel %vm3450, %v3441, 0
    %v3470 = vsel %vm3450, %v3442, 0
    %v3473 = vsel %vm3450, %v3443, 0
    %v3476 = vsel %vm3450, %v3444, 0
    %v3479 = vsel %vm3450, %v3445, 0
    %v3482 = vsel %vm3450, %v3446, 0
    %v3485 = vsel %vm3450, %v3447, 0
    %v3488 = vsel %vm3450, %v3448, 0
    %v3491 = vsel %vm3450, %v3449, 0
    %3493 = vmatprep.subr.bf16.mxu0 0
    %3494 = vmatpush1.bf16.msra.mxu0 %v3376
    %3495 = vmatprep.subr.bf16.mxu0 0
    %3496 = vmatpush1.bf16.msra.mxu0 %v3377
    %3497 = vmatprep.subr.bf16.mxu0 0
    %3498 = vmatpush1.bf16.msra.mxu0 %v3378
    %3499 = vmatprep.subr.bf16.mxu0 0
    %3500 = vmatpush1.bf16.msra.mxu0 %v3379
    %3501 = vmatprep.subr.bf16.mxu0 0
    %3502 = vmatpush1.bf16.msra.mxu0 0
    %3503 = vmatprep.subr.bf16.mxu0 0
    %3504 = vmatpush1.bf16.msra.mxu0 0
    %3505 = vmatprep.subr.bf16.mxu0 0
    %3506 = vmatpush1.bf16.msra.mxu0 0
    %3507 = vmatprep.subr.bf16.mxu0 0
    %3508 = vmatpush1.bf16.msra.mxu0 0
    %3509 = vmatprep.subr.bf16.mxu0 0
    %3510 = vmatpush1.bf16.msra.mxu0 0
    %3511 = vmatprep.subr.bf16.mxu0 0
    %3512 = vmatpush1.bf16.msra.mxu0 0
    %3513 = vmatprep.subr.bf16.mxu0 0
    %3514 = vmatpush1.bf16.msra.mxu0 0
    %3515 = vmatprep.subr.bf16.mxu0 0
    %3516 = vmatpush1.bf16.msra.mxu0 0
    %3517 = vmatprep.subr.bf16.mxu0 0
    %3518 = vmatpush1.bf16.msra.mxu0 0
    %3519 = vmatprep.subr.bf16.mxu0 0
    %3520 = vmatpush1.bf16.msra.mxu0 0
    %3521 = vmatprep.subr.bf16.mxu0 0
    %3522 = vmatpush1.bf16.msra.mxu0 0
    %3523 = vmatprep.subr.bf16.mxu0 0
    %3524 = vmatpush1.bf16.msra.mxu0 0
    %3525 = vmatprep.mubr.bf16.mxu0 0
    %3526 = vmatmul.mubr.bf16.gmra.mrb[0].mxu0 %v3452
    %v3527 = vpop.f32.mrb[0].mxu0
    %v3528 = vadd.f32 0.0, %v3527
    %v3529 = vpop.f32.mrb[0].mxu0
    %v3530 = vpop.f32.mrb[0].mxu0
    %v3531 = vadd.f32 0.0, %v3530
    %v3532 = vpop.f32.mrb[0].mxu0
    %3533 = vmatprep.mubr.bf16.mxu0 0
    %3534 = vmatmul.mubr.bf16.gmra.mrb[0].mxu0 %v3455
    %v3535 = vpop.f32.mrb[0].mxu0
    %v3536 = vadd.f32 0.0, %v3535
    %v3537 = vpop.f32.mrb[0].mxu0
    %v3538 = vpop.f32.mrb[0].mxu0
    %v3539 = vadd.f32 0.0, %v3538
    %v3540 = vpop.f32.mrb[0].mxu0
    %3541 = vmatprep.mubr.bf16.mxu0 0
    %3542 = vmatmul.mubr.bf16.gmra.mrb[0].mxu0 %v3458
    %v3543 = vpop.f32.mrb[0].mxu0
    %v3544 = vadd.f32 0.0, %v3543
    %v3545 = vpop.f32.mrb[0].mxu0
    %v3546 = vpop.f32.mrb[0].mxu0
    %v3547 = vadd.f32 0.0, %v3546
    %v3548 = vpop.f32.mrb[0].mxu0
    %3549 = vmatprep.mubr.bf16.mxu0 0
    %3550 = vmatmul.mubr.bf16.gmra.mrb[0].mxu0 %v3461
    %v3551 = vpop.f32.mrb[0].mxu0
    %v3552 = vadd.f32 0.0, %v3551
    %v3553 = vpop.f32.mrb[0].mxu0
    %v3554 = vpop.f32.mrb[0].mxu0
    %v3555 = vadd.f32 0.0, %v3554
    %v3556 = vpop.f32.mrb[0].mxu0
    %3557 = vmatprep.mubr.bf16.mxu0 0
    %3558 = vmatmul.mubr.bf16.gmra.mrb[0].mxu0 %v3464
    %v3559 = vpop.f32.mrb[0].mxu0
    %v3560 = vadd.f32 0.0, %v3559
    %v3561 = vpop.f32.mrb[0].mxu0
    %v3562 = vpop.f32.mrb[0].mxu0
    %v3563 = vadd.f32 0.0, %v3562
    %v3564 = vpop.f32.mrb[0].mxu0
    %3565 = vmatprep.mubr.bf16.mxu0 0
    %3566 = vmatmul.mubr.bf16.gmra.mrb[0].mxu0 %v3467
    %v3567 = vpop.f32.mrb[0].mxu0
    %v3568 = vadd.f32 0.0, %v3567
    %v3569 = vpop.f32.mrb[0].mxu0
    %v3570 = vpop.f32.mrb[0].mxu0
    %v3571 = vadd.f32 0.0, %v3570
    %v3572 = vpop.f32.mrb[0].mxu0
    %3573 = vmatprep.mubr.bf16.mxu0 0
    %3574 = vmatmul.mubr.bf16.gmra.mrb[0].mxu0 %v3470
    %v3575 = vpop.f32.mrb[0].mxu0
    %v3576 = vadd.f32 0.0, %v3575
    %v3577 = vpop.f32.mrb[0].mxu0
    %v3578 = vpop.f32.mrb[0].mxu0
    %v3579 = vadd.f32 0.0, %v3578
    %v3580 = vpop.f32.mrb[0].mxu0
    %3581 = vmatprep.mubr.bf16.mxu0 0
    %3582 = vmatmul.mubr.bf16.gmra.mrb[0].mxu0 %v3473
    %v3583 = vpop.f32.mrb[0].mxu0
    %v3584 = vadd.f32 0.0, %v3583
    %v3585 = vpop.f32.mrb[0].mxu0
    %v3586 = vpop.f32.mrb[0].mxu0
    %v3587 = vadd.f32 0.0, %v3586
    %v3588 = vpop.f32.mrb[0].mxu0
    %3589 = vmatprep.mubr.bf16.mxu0 0
    %3590 = vmatmul.mubr.bf16.gmra.mrb[0].mxu0 %v3476
    %v3591 = vpop.f32.mrb[0].mxu0
    %v3592 = vadd.f32 0.0, %v3591
    %v3593 = vpop.f32.mrb[0].mxu0
    %v3594 = vpop.f32.mrb[0].mxu0
    %v3595 = vadd.f32 0.0, %v3594
    %v3596 = vpop.f32.mrb[0].mxu0
    %3597 = vmatprep.mubr.bf16.mxu0 0
    %3598 = vmatmul.mubr.bf16.gmra.mrb[0].mxu0 %v3479
    %v3599 = vpop.f32.mrb[0].mxu0
    %v3600 = vadd.f32 0.0, %v3599
    %v3601 = vpop.f32.mrb[0].mxu0
    %v3602 = vpop.f32.mrb[0].mxu0
    %v3603 = vadd.f32 0.0, %v3602
    %v3604 = vpop.f32.mrb[0].mxu0
    %3605 = vmatprep.mubr.bf16.mxu0 0
    %3606 = vmatmul.mubr.bf16.gmra.mrb[0].mxu0 %v3482
    %v3607 = vpop.f32.mrb[0].mxu0
    %v3608 = vadd.f32 0.0, %v3607
    %v3609 = vpop.f32.mrb[0].mxu0
    %v3610 = vpop.f32.mrb[0].mxu0
    %v3611 = vadd.f32 0.0, %v3610
    %v3612 = vpop.f32.mrb[0].mxu0
    %3613 = vmatprep.mubr.bf16.mxu0 0
    %3614 = vmatmul.mubr.bf16.gmra.mrb[0].mxu0 %v3485
    %v3615 = vpop.f32.mrb[0].mxu0
    %v3616 = vadd.f32 0.0, %v3615
    %v3617 = vpop.f32.mrb[0].mxu0
    %v3618 = vpop.f32.mrb[0].mxu0
    %v3619 = vadd.f32 0.0, %v3618
    %v3620 = vpop.f32.mrb[0].mxu0
    %3621 = vmatprep.mubr.bf16.mxu0 0
    %3622 = vmatmul.mubr.bf16.gmra.mrb[0].mxu0 %v3488
    %v3623 = vpop.f32.mrb[0].mxu0
    %v3624 = vadd.f32 0.0, %v3623
    %v3625 = vpop.f32.mrb[0].mxu0
    %v3626 = vpop.f32.mrb[0].mxu0
    %v3627 = vadd.f32 0.0, %v3626
    %v3628 = vpop.f32.mrb[0].mxu0
    %3629 = vmatprep.mubr.bf16.mxu0 0
    %3630 = vmatmul.mubr.bf16.gmra.mrb[0].mxu0 %v3491
    %v3631 = vpop.f32.mrb[0].mxu0
    %v3632 = vadd.f32 0.0, %v3631
    %v3633 = vpop.f32.mrb[0].mxu0
    %v3634 = vpop.f32.mrb[0].mxu0
    %v3635 = vadd.f32 0.0, %v3634
    %v3636 = vpop.f32.mrb[0].mxu0
    %3637 = vdwg.mxu0
    %vm3638 = vcmask 72704
    %3639 = vst.msk [vmem:[#allocation2] sm:$0xff] %vm3638, %v3528
    %3640 = vst.msk [vmem:[#allocation2 + $0x40] sm:$0xff] %vm3638, %v3531
    %3641 = vst.msk [vmem:[#allocation2 + $0x80] sm:$0xff] %vm3638, %v3536
    %3642 = vst.msk [vmem:[#allocation2 + $0xc0] sm:$0xff] %vm3638, %v3539
    %3647 = vrot.lane.b32.xlu0 %v3544, 9
    %v3648 = vpop.permute.xlu0 %3647
    %3649 = vrot.lane.b32.xlu0 %v3547, 9
    %v3650 = vpop.permute.xlu0 %3649
    %3651 = vrot.lane.b32.xlu0 %v3552, 9
    %v3652 = vpop.permute.xlu0 %3651
    %3653 = vrot.lane.b32.xlu0 %v3555, 9
    %v3654 = vpop.permute.xlu0 %3653
    %vm3659 = vcmask 146504
    %3660 = vst.msk [vmem:[#allocation2] sm:$0xff] %vm3659, %v3648
    %3661 = vst.msk [vmem:[#allocation2 + $0x40] sm:$0xff] %vm3659, %v3650
    %3662 = vst.msk [vmem:[#allocation2 + $0x80] sm:$0xff] %vm3659, %v3652
    %3663 = vst.msk [vmem:[#allocation2 + $0xc0] sm:$0xff] %vm3659, %v3654
    %3668 = vrot.lane.b32.xlu0 %v3560, 18
    %v3669 = vpop.permute.xlu0 %3668
    %3670 = vrot.lane.b32.xlu0 %v3563, 18
    %v3671 = vpop.permute.xlu0 %3670
    %3672 = vrot.lane.b32.xlu0 %v3568, 18
    %v3673 = vpop.permute.xlu0 %3672
    %3674 = vrot.lane.b32.xlu0 %v3571, 18
    %v3675 = vpop.permute.xlu0 %3674
    %vm3680 = vcmask 220304
    %3681 = vst.msk [vmem:[#allocation2] sm:$0xff] %vm3680, %v3669
    %3682 = vst.msk [vmem:[#allocation2 + $0x40] sm:$0xff] %vm3680, %v3671
    %3683 = vst.msk [vmem:[#allocation2 + $0x80] sm:$0xff] %vm3680, %v3673
    %3684 = vst.msk [vmem:[#allocation2 + $0xc0] sm:$0xff] %vm3680, %v3675
    %3689 = vrot.lane.b32.xlu0 %v3576, 27
    %v3690 = vpop.permute.xlu0 %3689
    %3691 = vrot.lane.b32.xlu0 %v3579, 27
    %v3692 = vpop.permute.xlu0 %3691
    %3693 = vrot.lane.b32.xlu0 %v3584, 27
    %v3694 = vpop.permute.xlu0 %3693
    %3695 = vrot.lane.b32.xlu0 %v3587, 27
    %v3696 = vpop.permute.xlu0 %3695
    %vm3701 = vcmask 294104
    %3702 = vst.msk [vmem:[#allocation2] sm:$0xff] %vm3701, %v3690
    %3703 = vst.msk [vmem:[#allocation2 + $0x40] sm:$0xff] %vm3701, %v3692
    %3704 = vst.msk [vmem:[#allocation2 + $0x80] sm:$0xff] %vm3701, %v3694
    %3705 = vst.msk [vmem:[#allocation2 + $0xc0] sm:$0xff] %vm3701, %v3696
    %3710 = vrot.lane.b32.xlu0 %v3592, 36
    %v3711 = vpop.permute.xlu0 %3710
    %3712 = vrot.lane.b32.xlu0 %v3595, 36
    %v3713 = vpop.permute.xlu0 %3712
    %3714 = vrot.lane.b32.xlu0 %v3600, 36
    %v3715 = vpop.permute.xlu0 %3714
    %3716 = vrot.lane.b32.xlu0 %v3603, 36
    %v3717 = vpop.permute.xlu0 %3716
    %vm3722 = vcmask 367904
    %3723 = vst.msk [vmem:[#allocation2] sm:$0xff] %vm3722, %v3711
    %3724 = vst.msk [vmem:[#allocation2 + $0x40] sm:$0xff] %vm3722, %v3713
    %3725 = vst.msk [vmem:[#allocation2 + $0x80] sm:$0xff] %vm3722, %v3715
    %3726 = vst.msk [vmem:[#allocation2 + $0xc0] sm:$0xff] %vm3722, %v3717
    %3731 = vrot.lane.b32.xlu0 %v3608, 45
    %v3732 = vpop.permute.xlu0 %3731
    %3733 = vrot.lane.b32.xlu0 %v3611, 45
    %v3734 = vpop.permute.xlu0 %3733
    %3735 = vrot.lane.b32.xlu0 %v3616, 45
    %v3736 = vpop.permute.xlu0 %3735
    %3737 = vrot.lane.b32.xlu0 %v3619, 45
    %v3738 = vpop.permute.xlu0 %3737
    %vm3743 = vcmask 441704
    %3744 = vst.msk [vmem:[#allocation2] sm:$0xff] %vm3743, %v3732
    %3745 = vst.msk [vmem:[#allocation2 + $0x40] sm:$0xff] %vm3743, %v3734
    %3746 = vst.msk [vmem:[#allocation2 + $0x80] sm:$0xff] %vm3743, %v3736
    %3747 = vst.msk [vmem:[#allocation2 + $0xc0] sm:$0xff] %vm3743, %v3738
    %3752 = vrot.lane.b32.xlu0 %v3624, 54
    %v3753 = vpop.permute.xlu0 %3752
    %3754 = vrot.lane.b32.xlu0 %v3627, 54
    %v3755 = vpop.permute.xlu0 %3754
    %3756 = vrot.lane.b32.xlu0 %v3632, 54
    %v3757 = vpop.permute.xlu0 %3756
    %3758 = vrot.lane.b32.xlu0 %v3635, 54
    %v3759 = vpop.permute.xlu0 %3758
    %vm3764 = vcmask 515504
    %3765 = vst.msk [vmem:[#allocation2] sm:$0xff] %vm3764, %v3753
    %3766 = vst.msk [vmem:[#allocation2 + $0x40] sm:$0xff] %vm3764, %v3755
    %3767 = vst.msk [vmem:[#allocation2 + $0x80] sm:$0xff] %vm3764, %v3757
    %3768 = vst.msk [vmem:[#allocation2 + $0xc0] sm:$0xff] %vm3764, %v3759
    %v3769 = vld [vmem:[#allocation2] sm:$0xff]
    %v3770 = vld [vmem:[#allocation2 + $0x40] sm:$0xff]
    %v3771 = vld [vmem:[#allocation2 + $0x80] sm:$0xff]
    %v3772 = vld [vmem:[#allocation2 + $0xc0] sm:$0xff]
    %v3773 = vpack.c.bf16 %v3770, %v3769
    %v3774 = vpack.c.bf16 %v3772, %v3771
    %v3775 = vld [vmem:[#allocation18] sm:$0xf]
    %v3776 = vld [vmem:[#allocation18 + $0x4] sm:$0xf]
    %v3777 = vld [vmem:[#allocation18 + $0x8] sm:$0xf]
    %v3778 = vld [vmem:[#allocation18 + $0xc] sm:$0xf]
    %v3779 = vld [vmem:[#allocation18 + $0x10] sm:$0xf]
    %v3780 = vld [vmem:[#allocation18 + $0x14] sm:$0xf]
    %v3781 = vld [vmem:[#allocation18 + $0x18] sm:$0xf]
    %v3782 = vld [vmem:[#allocation18 + $0x1c] sm:$0xf]
    %v3783 = vld [vmem:[#allocation3] sm:$0xff]
    %v3784 = vld [vmem:[#allocation3 + $0x8] sm:$0xff]
    %v3785 = vld [vmem:[#allocation3 + $0x10] sm:$0xff]
    %v3786 = vld [vmem:[#allocation3 + $0x18] sm:$0xff]
    %3788 = vset.pattern.permute.xlu0 4
    %3789 = vperm.xlu0 %3788, %v3783
    %v3790 = vpop.permute.xlu0 %3789
    %3793 = vset.pattern.permute.xlu0 4
    %3794 = vperm.xlu0 %3793, %v3784
    %v3795 = vpop.permute.xlu0 %3794
    %3798 = vset.pattern.permute.xlu0 4
    %3799 = vperm.xlu0 %3798, %v3785
    %v3800 = vpop.permute.xlu0 %3799
    %3803 = vset.pattern.permute.xlu0 4
    %3804 = vperm.xlu0 %3803, %v3786
    %v3805 = vpop.permute.xlu0 %3804
    %v3815 = vunpack.c.l.b16 %v3775
    %v3816 = vunpack.c.l.b16 %v3776
    %v3817 = vunpack.c.l.b16 %v3777
    %v3818 = vunpack.c.l.b16 %v3778
    %v3819 = vunpack.c.l.b16 %v3779
    %v3820 = vunpack.c.l.b16 %v3780
    %v3821 = vunpack.c.l.b16 %v3781
    %v3822 = vunpack.c.l.b16 %v3782
    %v3823 = vpack.c.b16 %v3816, %v3815
    %v3824 = vpack.c.b16 %v3818, %v3817
    %v3825 = vpack.c.b16 %v3820, %v3819
    %v3826 = vpack.c.b16 %v3822, %v3821
    %vm3830 = vcmask 515072
    %v3832 = vsel %vm3830, %v3773, 0
    %v3835 = vsel %vm3830, %v3774, 0
    %vm3837 = vcmask 1047552
    %v3838 = vsel %vm958, 4294967295, 65535
    %v3839 = vsel %vm3837, %v3838, 0
    %v3841 = vand.u32 %v3826, %v3839
    %3843 = vmatprep.subr.bf16.mxu0 0
    %3844 = vmatpush1.bf16.msra.mxu0 %v3823
    %3845 = vmatprep.subr.bf16.mxu0 0
    %3846 = vmatpush1.bf16.msra.mxu0 %v3824
    %3847 = vmatprep.subr.bf16.mxu0 0
    %3848 = vmatpush1.bf16.msra.mxu0 %v3825
    %3849 = vmatprep.subr.bf16.mxu0 0
    %3850 = vmatpush1.bf16.msra.mxu0 %v3841
    %3851 = vmatprep.subr.bf16.mxu0 0
    %3852 = vmatpush1.bf16.msra.mxu0 0
    %3853 = vmatprep.subr.bf16.mxu0 0
    %3854 = vmatpush1.bf16.msra.mxu0 0
    %3855 = vmatprep.subr.bf16.mxu0 0
    %3856 = vmatpush1.bf16.msra.mxu0 0
    %3857 = vmatprep.subr.bf16.mxu0 0
    %3858 = vmatpush1.bf16.msra.mxu0 0
    %3859 = vmatprep.subr.bf16.mxu0 0
    %3860 = vmatpush1.bf16.msra.mxu0 0
    %3861 = vmatprep.subr.bf16.mxu0 0
    %3862 = vmatpush1.bf16.msra.mxu0 0
    %3863 = vmatprep.subr.bf16.mxu0 0
    %3864 = vmatpush1.bf16.msra.mxu0 0
    %3865 = vmatprep.subr.bf16.mxu0 0
    %3866 = vmatpush1.bf16.msra.mxu0 0
    %3867 = vmatprep.subr.bf16.mxu0 0
    %3868 = vmatpush1.bf16.msra.mxu0 0
    %3869 = vmatprep.subr.bf16.mxu0 0
    %3870 = vmatpush1.bf16.msra.mxu0 0
    %3871 = vmatprep.subr.bf16.mxu0 0
    %3872 = vmatpush1.bf16.msra.mxu0 0
    %3873 = vmatprep.subr.bf16.mxu0 0
    %3874 = vmatpush1.bf16.msra.mxu0 0
    %3875 = vmatprep.mubr.bf16.mxu0 0
    %3876 = vmatmul.mubr.bf16.gmra.mrb[0].mxu0 %v3832
    %v3877 = vpop.f32.mrb[0].mxu0
    %v3878 = vadd.f32 %v3790, %v3877
    %v3879 = vpop.f32.mrb[0].mxu0
    %v3880 = vpop.f32.mrb[0].mxu0
    %v3881 = vadd.f32 %v3795, %v3880
    %v3882 = vpop.f32.mrb[0].mxu0
    %3883 = vmatprep.mubr.bf16.mxu0 0
    %3884 = vmatmul.mubr.bf16.gmra.mrb[0].mxu0 %v3835
    %v3885 = vpop.f32.mrb[0].mxu0
    %v3886 = vadd.f32 %v3800, %v3885
    %v3887 = vpop.f32.mrb[0].mxu0
    %v3888 = vpop.f32.mrb[0].mxu0
    %v3889 = vadd.f32 %v3805, %v3888
    %v3890 = vpop.f32.mrb[0].mxu0
    %3891 = vdwg.mxu0
    %v3892 = vmax.f32 %v3878, 0.0
    %v3893 = vmax.f32 %v3881, 0.0
    %v3894 = vmax.f32 %v3886, 0.0
    %v3895 = vmax.f32 %v3889, 0.0
    %v3896 = vld [vmem:[#allocation20] sm:$0xf]
    %v3897 = vld [vmem:[#allocation20 + $0x4] sm:$0xf]
    %v3898 = vld [vmem:[#allocation20 + $0x8] sm:$0xf]
    %v3899 = vld [vmem:[#allocation20 + $0xc] sm:$0xf]
    %v3900 = vld [vmem:[#allocation20 + $0x10] sm:$0xf]
    %v3901 = vld [vmem:[#allocation20 + $0x14] sm:$0xf]
    %v3902 = vld [vmem:[#allocation20 + $0x18] sm:$0xf]
    %v3903 = vld [vmem:[#allocation20 + $0x1c] sm:$0xf]
    %v3904 = vld [vmem:[#allocation20 + $0x20] sm:$0xf]
    %v3905 = vld [vmem:[#allocation20 + $0x24] sm:$0xf]
    %v3906 = vld [vmem:[#allocation20 + $0x28] sm:$0xf]
    %v3907 = vld [vmem:[#allocation20 + $0x2c] sm:$0xf]
    %v3908 = vld [vmem:[#allocation20 + $0x30] sm:$0xf]
    %v3909 = vld [vmem:[#allocation20 + $0x34] sm:$0xf]
    %v3910 = vpack.c.bf16 %v3893, %v3892
    %v3911 = vpack.c.bf16 %v3895, %v3894
    %v3926 = vunpack.c.l.b16 %v3896
    %v3927 = vunpack.c.l.b16 %v3897
    %v3928 = vunpack.c.l.b16 %v3898
    %v3929 = vunpack.c.l.b16 %v3899
    %v3930 = vunpack.c.l.b16 %v3900
    %v3931 = vunpack.c.l.b16 %v3901
    %v3932 = vunpack.c.l.b16 %v3902
    %v3933 = vunpack.c.l.b16 %v3903
    %v3934 = vunpack.c.l.b16 %v3904
    %v3935 = vunpack.c.l.b16 %v3905
    %v3936 = vunpack.c.l.b16 %v3906
    %v3937 = vunpack.c.l.b16 %v3907
    %v3938 = vunpack.c.l.b16 %v3908
    %v3939 = vunpack.c.l.b16 %v3909
    %v3940 = vpack.c.b16 %v3927, %v3926
    %v3941 = vpack.c.b16 %v3929, %v3928
    %v3942 = vpack.c.b16 %v3931, %v3930
    %v3943 = vpack.c.b16 %v3933, %v3932
    %v3944 = vpack.c.b16 %v3935, %v3934
    %v3945 = vpack.c.b16 %v3937, %v3936
    %v3946 = vpack.c.b16 %v3939, %v3938
    %v3948 = vsel %vm2542, %v3940, 0
    %v3951 = vsel %vm2542, %v3941, 0
    %v3954 = vsel %vm2542, %v3942, 0
    %v3957 = vsel %vm2542, %v3943, 0
    %v3960 = vsel %vm2542, %v3944, 0
    %v3963 = vsel %vm2542, %v3945, 0
    %v3966 = vsel %vm2542, %v3946, 0
    %3968 = vmatprep.subr.bf16.mxu0 0
    %3969 = vmatpush1.bf16.msra.mxu0 %v3910
    %3970 = vmatprep.subr.bf16.mxu0 0
    %3971 = vmatpush1.bf16.msra.mxu0 %v3911
    %3972 = vmatprep.subr.bf16.mxu0 0
    %3973 = vmatpush1.bf16.msra.mxu0 0
    %3974 = vmatprep.subr.bf16.mxu0 0
    %3975 = vmatpush1.bf16.msra.mxu0 0
    %3976 = vmatprep.subr.bf16.mxu0 0
    %3977 = vmatpush1.bf16.msra.mxu0 0
    %3978 = vmatprep.subr.bf16.mxu0 0
    %3979 = vmatpush1.bf16.msra.mxu0 0
    %3980 = vmatprep.subr.bf16.mxu0 0
    %3981 = vmatpush1.bf16.msra.mxu0 0
    %3982 = vmatprep.subr.bf16.mxu0 0
    %3983 = vmatpush1.bf16.msra.mxu0 0
    %3984 = vmatprep.subr.bf16.mxu0 0
    %3985 = vmatpush1.bf16.msra.mxu0 0
    %3986 = vmatprep.subr.bf16.mxu0 0
    %3987 = vmatpush1.bf16.msra.mxu0 0
    %3988 = vmatprep.subr.bf16.mxu0 0
    %3989 = vmatpush1.bf16.msra.mxu0 0
    %3990 = vmatprep.subr.bf16.mxu0 0
    %3991 = vmatpush1.bf16.msra.mxu0 0
    %3992 = vmatprep.subr.bf16.mxu0 0
    %3993 = vmatpush1.bf16.msra.mxu0 0
    %3994 = vmatprep.subr.bf16.mxu0 0
    %3995 = vmatpush1.bf16.msra.mxu0 0
    %3996 = vmatprep.subr.bf16.mxu0 0
    %3997 = vmatpush1.bf16.msra.mxu0 0
    %3998 = vmatprep.subr.bf16.mxu0 0
    %3999 = vmatpush1.bf16.msra.mxu0 0
    %4000 = vmatprep.mubr.bf16.mxu0 0
    %4001 = vmatmul.mubr.bf16.gmra.mrb[0].mxu0 %v3948
    %v4002 = vpop.f32.mrb[0].mxu0
    %v4003 = vadd.f32 0.0, %v4002
    %v4004 = vpop.f32.mrb[0].mxu0
    %v4005 = vpop.f32.mrb[0].mxu0
    %v4006 = vadd.f32 0.0, %v4005
    %v4007 = vpop.f32.mrb[0].mxu0
    %4008 = vmatprep.mubr.bf16.mxu0 0
    %4009 = vmatmul.mubr.bf16.gmra.mrb[0].mxu0 %v3951
    %v4010 = vpop.f32.mrb[0].mxu0
    %v4011 = vadd.f32 0.0, %v4010
    %v4012 = vpop.f32.mrb[0].mxu0
    %v4013 = vpop.f32.mrb[0].mxu0
    %v4014 = vadd.f32 0.0, %v4013
    %v4015 = vpop.f32.mrb[0].mxu0
    %4016 = vmatprep.mubr.bf16.mxu0 0
    %4017 = vmatmul.mubr.bf16.gmra.mrb[0].mxu0 %v3954
    %v4018 = vpop.f32.mrb[0].mxu0
    %v4019 = vadd.f32 0.0, %v4018
    %v4020 = vpop.f32.mrb[0].mxu0
    %v4021 = vpop.f32.mrb[0].mxu0
    %v4022 = vadd.f32 0.0, %v4021
    %v4023 = vpop.f32.mrb[0].mxu0
    %4024 = vmatprep.mubr.bf16.mxu0 0
    %4025 = vmatmul.mubr.bf16.gmra.mrb[0].mxu0 %v3957
    %v4026 = vpop.f32.mrb[0].mxu0
    %v4027 = vadd.f32 0.0, %v4026
    %v4028 = vpop.f32.mrb[0].mxu0
    %v4029 = vpop.f32.mrb[0].mxu0
    %v4030 = vadd.f32 0.0, %v4029
    %v4031 = vpop.f32.mrb[0].mxu0
    %4032 = vmatprep.mubr.bf16.mxu0 0
    %4033 = vmatmul.mubr.bf16.gmra.mrb[0].mxu0 %v3960
    %v4034 = vpop.f32.mrb[0].mxu0
    %v4035 = vadd.f32 0.0, %v4034
    %v4036 = vpop.f32.mrb[0].mxu0
    %v4037 = vpop.f32.mrb[0].mxu0
    %v4038 = vadd.f32 0.0, %v4037
    %v4039 = vpop.f32.mrb[0].mxu0
    %4040 = vmatprep.mubr.bf16.mxu0 0
    %4041 = vmatmul.mubr.bf16.gmra.mrb[0].mxu0 %v3963
    %v4042 = vpop.f32.mrb[0].mxu0
    %v4043 = vadd.f32 0.0, %v4042
    %v4044 = vpop.f32.mrb[0].mxu0
    %v4045 = vpop.f32.mrb[0].mxu0
    %v4046 = vadd.f32 0.0, %v4045
    %v4047 = vpop.f32.mrb[0].mxu0
    %4048 = vmatprep.mubr.bf16.mxu0 0
    %4049 = vmatmul.mubr.bf16.gmra.mrb[0].mxu0 %v3966
    %v4050 = vpop.f32.mrb[0].mxu0
    %v4051 = vadd.f32 0.0, %v4050
    %v4052 = vpop.f32.mrb[0].mxu0
    %v4053 = vpop.f32.mrb[0].mxu0
    %v4054 = vadd.f32 0.0, %v4053
    %v4055 = vpop.f32.mrb[0].mxu0
    %4056 = vdwg.mxu0
    %4057 = vst.msk [vmem:[#allocation2] sm:$0xff] %vm2884, %v4003
    %4058 = vst.msk [vmem:[#allocation2 + $0x40] sm:$0xff] %vm2884, %v4006
    %4061 = vrot.lane.b32.xlu0 %v4011, 17
    %v4062 = vpop.permute.xlu0 %4061
    %4063 = vrot.lane.b32.xlu0 %v4014, 17
    %v4064 = vpop.permute.xlu0 %4063
    %4067 = vst.msk [vmem:[#allocation2] sm:$0xff] %vm2925, %v4062
    %4068 = vst.msk [vmem:[#allocation2 + $0x40] sm:$0xff] %vm2925, %v4064
    %4071 = vrot.lane.b32.xlu0 %v4019, 34
    %v4072 = vpop.permute.xlu0 %4071
    %4073 = vrot.lane.b32.xlu0 %v4022, 34
    %v4074 = vpop.permute.xlu0 %4073
    %4077 = vst.msk [vmem:[#allocation2] sm:$0xff] %vm2966, %v4072
    %4078 = vst.msk [vmem:[#allocation2 + $0x40] sm:$0xff] %vm2966, %v4074
    %4081 = vrot.lane.b32.xlu0 %v4027, 51
    %v4082 = vpop.permute.xlu0 %4081
    %4083 = vrot.lane.b32.xlu0 %v4030, 51
    %v4084 = vpop.permute.xlu0 %4083
    %4087 = vst.msk [vmem:[#allocation2] sm:$0xff] %vm3007, %v4082
    %4088 = vst.msk [vmem:[#allocation2 + $0x40] sm:$0xff] %vm3007, %v4084
    %4091 = vrot.lane.b32.xlu0 %v4035, 68
    %v4092 = vpop.permute.xlu0 %4091
    %4093 = vrot.lane.b32.xlu0 %v4038, 68
    %v4094 = vpop.permute.xlu0 %4093
    %4097 = vst.msk [vmem:[#allocation2] sm:$0xff] %vm3048, %v4092
    %4098 = vst.msk [vmem:[#allocation2 + $0x40] sm:$0xff] %vm3048, %v4094
    %4101 = vrot.lane.b32.xlu0 %v4043, 85
    %v4102 = vpop.permute.xlu0 %4101
    %4103 = vrot.lane.b32.xlu0 %v4046, 85
    %v4104 = vpop.permute.xlu0 %4103
    %4107 = vst.msk [vmem:[#allocation2] sm:$0xff] %vm3089, %v4102
    %4108 = vst.msk [vmem:[#allocation2 + $0x40] sm:$0xff] %vm3089, %v4104
    %4111 = vrot.lane.b32.xlu0 %v4051, 102
    %v4112 = vpop.permute.xlu0 %4111
    %4113 = vrot.lane.b32.xlu0 %v4054, 102
    %v4114 = vpop.permute.xlu0 %4113
    %4117 = vst.msk [vmem:[#allocation2] sm:$0xff] %vm3130, %v4112
    %4118 = vst.msk [vmem:[#allocation2 + $0x40] sm:$0xff] %vm3130, %v4114
    %v4119 = vld [vmem:[#allocation2] sm:$0xff]
    %v4120 = vld [vmem:[#allocation2 + $0x40] sm:$0xff]
    %v4121 = vpack.c.bf16 %v4120, %v4119
    %v4122 = vld [vmem:[#allocation21] sm:$0xf]
    %v4123 = vld [vmem:[#allocation21 + $0x4] sm:$0xf]
    %v4124 = vld [vmem:[#allocation21 + $0x8] sm:$0xf]
    %v4125 = vld [vmem:[#allocation21 + $0xc] sm:$0xf]
    %v4126 = vld [vmem:[#allocation21 + $0x10] sm:$0xf]
    %v4127 = vld [vmem:[#allocation21 + $0x14] sm:$0xf]
    %v4128 = vld [vmem:[#allocation21 + $0x18] sm:$0xf]
    %v4129 = vld [vmem:[#allocation21 + $0x1c] sm:$0xf]
    %v4130 = vld [vmem:[#allocation21 + $0x20] sm:$0xf]
    %v4131 = vld [vmem:[#allocation21 + $0x24] sm:$0xf]
    %v4132 = vld [vmem:[#allocation21 + $0x28] sm:$0xf]
    %v4133 = vld [vmem:[#allocation21 + $0x2c] sm:$0xf]
    %v4134 = vld [vmem:[#allocation21 + $0x30] sm:$0xf]
    %v4135 = vld [vmem:[#allocation21 + $0x34] sm:$0xf]
    %v4136 = vld [vmem:[#allocation21 + $0x38] sm:$0xf]
    %v4137 = vld [vmem:[#allocation3] sm:$0xff]
    %v4138 = vld [vmem:[#allocation3 + $0x8] sm:$0xff]
    %4140 = vset.pattern.permute.xlu0 5
    %4141 = vperm.xlu0 %4140, %v4137
    %v4142 = vpop.permute.xlu0 %4141
    %4145 = vset.pattern.permute.xlu0 5
    %4146 = vperm.xlu0 %4145, %v4138
    %v4147 = vpop.permute.xlu0 %4146
    %v4164 = vunpack.c.l.b16 %v4122
    %v4165 = vunpack.c.l.b16 %v4123
    %v4166 = vunpack.c.l.b16 %v4124
    %v4167 = vunpack.c.l.b16 %v4125
    %v4168 = vunpack.c.l.b16 %v4126
    %v4169 = vunpack.c.l.b16 %v4127
    %v4170 = vunpack.c.l.b16 %v4128
    %v4171 = vunpack.c.l.b16 %v4129
    %v4172 = vunpack.c.l.b16 %v4130
    %v4173 = vunpack.c.l.b16 %v4131
    %v4174 = vunpack.c.l.b16 %v4132
    %v4175 = vunpack.c.l.b16 %v4133
    %v4176 = vunpack.c.l.b16 %v4134
    %v4177 = vunpack.c.l.b16 %v4135
    %v4178 = vunpack.c.l.b16 %v4136
    %v4179 = vpack.c.b16 %v4165, %v4164
    %v4180 = vpack.c.b16 %v4167, %v4166
    %v4181 = vpack.c.b16 %v4169, %v4168
    %v4182 = vpack.c.b16 %v4171, %v4170
    %v4183 = vpack.c.b16 %v4173, %v4172
    %v4184 = vpack.c.b16 %v4175, %v4174
    %v4185 = vpack.c.b16 %v4177, %v4176
    %v4186 = vpack.c.b16 %v4178, %v4178
    %v4195 = vsel %vm3259, %v4121, 0
    %v4198 = vand.u32 %v4186, %v1619
    %4200 = vmatprep.subr.bf16.mxu0 0
    %4201 = vmatpush1.bf16.msra.mxu0 %v4179
    %4202 = vmatprep.subr.bf16.mxu0 0
    %4203 = vmatpush1.bf16.msra.mxu0 %v4180
    %4204 = vmatprep.subr.bf16.mxu0 0
    %4205 = vmatpush1.bf16.msra.mxu0 %v4181
    %4206 = vmatprep.subr.bf16.mxu0 0
    %4207 = vmatpush1.bf16.msra.mxu0 %v4182
    %4208 = vmatprep.subr.bf16.mxu0 0
    %4209 = vmatpush1.bf16.msra.mxu0 %v4183
    %4210 = vmatprep.subr.bf16.mxu0 0
    %4211 = vmatpush1.bf16.msra.mxu0 %v4184
    %4212 = vmatprep.subr.bf16.mxu0 0
    %4213 = vmatpush1.bf16.msra.mxu0 %v4185
    %4214 = vmatprep.subr.bf16.mxu0 0
    %4215 = vmatpush1.bf16.msra.mxu0 %v4198
    %4216 = vmatprep.subr.bf16.mxu0 0
    %4217 = vmatpush1.bf16.msra.mxu0 0
    %4218 = vmatprep.subr.bf16.mxu0 0
    %4219 = vmatpush1.bf16.msra.mxu0 0
    %4220 = vmatprep.subr.bf16.mxu0 0
    %4221 = vmatpush1.bf16.msra.mxu0 0
    %4222 = vmatprep.subr.bf16.mxu0 0
    %4223 = vmatpush1.bf16.msra.mxu0 0
    %4224 = vmatprep.subr.bf16.mxu0 0
    %4225 = vmatpush1.bf16.msra.mxu0 0
    %4226 = vmatprep.subr.bf16.mxu0 0
    %4227 = vmatpush1.bf16.msra.mxu0 0
    %4228 = vmatprep.subr.bf16.mxu0 0
    %4229 = vmatpush1.bf16.msra.mxu0 0
    %4230 = vmatprep.subr.bf16.mxu0 0
    %4231 = vmatpush1.bf16.msra.mxu0 0
    %4232 = vmatprep.mubr.bf16.mxu0 0
    %4233 = vmatmul.mubr.bf16.gmra.mrb[0].mxu0 %v4195
    %v4234 = vpop.f32.mrb[0].mxu0
    %v4235 = vadd.f32 %v4142, %v4234
    %v4236 = vpop.f32.mrb[0].mxu0
    %v4237 = vpop.f32.mrb[0].mxu0
    %v4238 = vadd.f32 %v4147, %v4237
    %v4239 = vpop.f32.mrb[0].mxu0
    %4240 = vdwg.mxu0
    %v4241 = vmax.f32 %v4235, 0.0
    %v4242 = vmax.f32 %v4238, 0.0
    %v4243 = vld [vmem:[#allocation23] sm:$0xf]
    %v4244 = vld [vmem:[#allocation23 + $0x4] sm:$0xf]
    %v4245 = vld [vmem:[#allocation23 + $0x8] sm:$0xf]
    %v4246 = vld [vmem:[#allocation23 + $0xc] sm:$0xf]
    %v4247 = vld [vmem:[#allocation23 + $0x10] sm:$0xf]
    %v4248 = vld [vmem:[#allocation23 + $0x14] sm:$0xf]
    %v4249 = vld [vmem:[#allocation23 + $0x18] sm:$0xf]
    %v4250 = vpack.c.bf16 %v4242, %v4241
    %v4258 = vunpack.c.l.b16 %v4243
    %v4259 = vunpack.c.l.b16 %v4244
    %v4260 = vunpack.c.l.b16 %v4245
    %v4261 = vunpack.c.l.b16 %v4246
    %v4262 = vunpack.c.l.b16 %v4247
    %v4263 = vunpack.c.l.b16 %v4248
    %v4264 = vunpack.c.l.b16 %v4249
    %v4265 = vpack.c.b16 %v4259, %v4258
    %v4266 = vpack.c.b16 %v4261, %v4260
    %v4267 = vpack.c.b16 %v4263, %v4262
    %v4268 = vpack.c.b16 %v4264, %v4264
    %v4270 = vsel %vm1806, %v4265, 0
    %v4273 = vsel %vm1806, %v4266, 0
    %v4276 = vsel %vm1806, %v4267, 0
    %v4279 = vsel %vm1806, %v4268, 0
    %4281 = vmatprep.subr.bf16.mxu0 0
    %4282 = vmatpush1.bf16.msra.mxu0 %v4250
    %4283 = vmatprep.subr.bf16.mxu0 0
    %4284 = vmatpush1.bf16.msra.mxu0 0
    %4285 = vmatprep.subr.bf16.mxu0 0
    %4286 = vmatpush1.bf16.msra.mxu0 0
    %4287 = vmatprep.subr.bf16.mxu0 0
    %4288 = vmatpush1.bf16.msra.mxu0 0
    %4289 = vmatprep.subr.bf16.mxu0 0
    %4290 = vmatpush1.bf16.msra.mxu0 0
    %4291 = vmatprep.subr.bf16.mxu0 0
    %4292 = vmatpush1.bf16.msra.mxu0 0
    %4293 = vmatprep.subr.bf16.mxu0 0
    %4294 = vmatpush1.bf16.msra.mxu0 0
    %4295 = vmatprep.subr.bf16.mxu0 0
    %4296 = vmatpush1.bf16.msra.mxu0 0
    %4297 = vmatprep.subr.bf16.mxu0 0
    %4298 = vmatpush1.bf16.msra.mxu0 0
    %4299 = vmatprep.subr.bf16.mxu0 0
    %4300 = vmatpush1.bf16.msra.mxu0 0
    %4301 = vmatprep.subr.bf16.mxu0 0
    %4302 = vmatpush1.bf16.msra.mxu0 0
    %4303 = vmatprep.subr.bf16.mxu0 0
    %4304 = vmatpush1.bf16.msra.mxu0 0
    %4305 = vmatprep.subr.bf16.mxu0 0
    %4306 = vmatpush1.bf16.msra.mxu0 0
    %4307 = vmatprep.subr.bf16.mxu0 0
    %4308 = vmatpush1.bf16.msra.mxu0 0
    %4309 = vmatprep.subr.bf16.mxu0 0
    %4310 = vmatpush1.bf16.msra.mxu0 0
    %4311 = vmatprep.subr.bf16.mxu0 0
    %4312 = vmatpush1.bf16.msra.mxu0 0
    %4313 = vmatprep.mubr.bf16.mxu0 0
    %4314 = vmatmul.mubr.bf16.gmra.mrb[0].mxu0 %v4270
    %v4315 = vpop.f32.mrb[0].mxu0
    %v4316 = vadd.f32 0.0, %v4315
    %v4317 = vpop.f32.mrb[0].mxu0
    %v4318 = vpop.f32.mrb[0].mxu0
    %v4319 = vadd.f32 0.0, %v4318
    %v4320 = vpop.f32.mrb[0].mxu0
    %4321 = vmatprep.mubr.bf16.mxu0 0
    %4322 = vmatmul.mubr.bf16.gmra.mrb[0].mxu0 %v4273
    %v4323 = vpop.f32.mrb[0].mxu0
    %v4324 = vadd.f32 0.0, %v4323
    %v4325 = vpop.f32.mrb[0].mxu0
    %v4326 = vpop.f32.mrb[0].mxu0
    %v4327 = vadd.f32 0.0, %v4326
    %v4328 = vpop.f32.mrb[0].mxu0
    %4329 = vmatprep.mubr.bf16.mxu0 0
    %4330 = vmatmul.mubr.bf16.gmra.mrb[0].mxu0 %v4276
    %v4331 = vpop.f32.mrb[0].mxu0
    %v4332 = vadd.f32 0.0, %v4331
    %v4333 = vpop.f32.mrb[0].mxu0
    %v4334 = vpop.f32.mrb[0].mxu0
    %v4335 = vadd.f32 0.0, %v4334
    %v4336 = vpop.f32.mrb[0].mxu0
    %4337 = vmatprep.mubr.bf16.mxu0 0
    %4338 = vmatmul.mubr.bf16.gmra.mrb[0].mxu0 %v4279
    %v4339 = vpop.f32.mrb[0].mxu0
    %v4340 = vadd.f32 0.0, %v4339
    %v4341 = vpop.f32.mrb[0].mxu0
    %v4342 = vpop.f32.mrb[0].mxu0
    %v4343 = vpop.f32.mrb[0].mxu0
    %4344 = vdwg.mxu0
    %4345 = vst.msk [vmem:[#allocation2] sm:$0xff] %vm1994, %v4316
    %4347 = vrot.lane.b32.xlu0 %v4319, 33
    %v4348 = vpop.permute.xlu0 %4347
    %4350 = vst.msk [vmem:[#allocation2] sm:$0xff] %vm2015, %v4348
    %4352 = vrot.lane.b32.xlu0 %v4324, 66
    %v4353 = vpop.permute.xlu0 %4352
    %4355 = vst.msk [vmem:[#allocation2] sm:$0xff] %vm2036, %v4353
    %4357 = vrot.lane.b32.xlu0 %v4327, 99
    %v4358 = vpop.permute.xlu0 %4357
    %4360 = vst.msk [vmem:[#allocation2] sm:$0xff] %vm2057, %v4358
    %4361 = vst.msk [vmem:[#allocation2 + $0x8] sm:$0xff] %vm412, %v4358
    %4363 = vrot.lane.b32.xlu0 %v4332, 4
    %v4364 = vpop.permute.xlu0 %4363
    %4366 = vst.msk [vmem:[#allocation2 + $0x8] sm:$0xff] %vm2082, %v4364
    %4368 = vrot.lane.b32.xlu0 %v4335, 37
    %v4369 = vpop.permute.xlu0 %4368
    %4371 = vst.msk [vmem:[#allocation2 + $0x8] sm:$0xff] %vm2103, %v4369
    %4373 = vrot.lane.b32.xlu0 %v4340, 70
    %v4374 = vpop.permute.xlu0 %4373
    %4376 = vst.msk [vmem:[#allocation2 + $0x8] sm:$0xff] %vm2124, %v4374
    %v4377 = vld [vmem:[#allocation2] sm:$0xff]
    %v4378 = vld [vmem:[#allocation2 + $0x8] sm:$0xff]
    %v4379 = vpack.c.bf16 %v4377, %v4377
    %v4380 = vpack.c.bf16 %v4378, %v4378
    %v4381 = vld [vmem:[#allocation24] sm:$0xf]
    %v4382 = vld [vmem:[#allocation24 + $0x4] sm:$0xf]
    %v4383 = vld [vmem:[#allocation24 + $0x8] sm:$0xf]
    %v4384 = vld [vmem:[#allocation24 + $0xc] sm:$0xf]
    %v4385 = vld [vmem:[#allocation24 + $0x10] sm:$0xf]
    %v4386 = vld [vmem:[#allocation24 + $0x14] sm:$0xf]
    %v4387 = vld [vmem:[#allocation24 + $0x18] sm:$0xf]
    %v4388 = vld [vmem:[#allocation24 + $0x1c] sm:$0xf]
    %v4389 = vld [vmem:[#allocation24 + $0x20] sm:$0xf]
    %v4390 = vld [vmem:[#allocation24 + $0x24] sm:$0xf]
    %v4391 = vld [vmem:[#allocation24 + $0x28] sm:$0xf]
    %v4392 = vld [vmem:[#allocation24 + $0x2c] sm:$0xf]
    %v4393 = vld [vmem:[#allocation24 + $0x30] sm:$0xf]
    %v4394 = vld [vmem:[#allocation24 + $0x34] sm:$0xf]
    %v4395 = vld [vmem:[#allocation24 + $0x38] sm:$0xf]
    %v4396 = vld [vmem:[#allocation24 + $0x3c] sm:$0xf]
    %v4397 = vld [vmem:[#allocation24 + $0x40] sm:$0xf]
    %v4398 = vld [vmem:[#allocation24 + $0x44] sm:$0xf]
    %v4399 = vld [vmem:[#allocation24 + $0x48] sm:$0xf]
    %v4400 = vld [vmem:[#allocation24 + $0x4c] sm:$0xf]
    %v4401 = vld [vmem:[#allocation24 + $0x50] sm:$0xf]
    %v4402 = vld [vmem:[#allocation24 + $0x54] sm:$0xf]
    %v4403 = vld [vmem:[#allocation24 + $0x58] sm:$0xf]
    %v4404 = vld [vmem:[#allocation24 + $0x5c] sm:$0xf]
    %v4405 = vld [vmem:[#allocation24 + $0x60] sm:$0xf]
    %v4406 = vld [vmem:[#allocation24 + $0x64] sm:$0xf]
    %v4407 = vld [vmem:[#allocation24 + $0x68] sm:$0xf]
    %v4408 = vld [vmem:[#allocation24 + $0x6c] sm:$0xf]
    %v4409 = vld [vmem:[#allocation24 + $0x70] sm:$0xf]
    %v4410 = vld [vmem:[#allocation3] sm:$0xff]
    %4412 = vset.pattern.permute.xlu0 6
    %4413 = vperm.xlu0 %4412, %v4410
    %v4414 = vpop.permute.xlu0 %4413
    %v4445 = vunpack.c.l.b16 %v4381
    %v4446 = vunpack.c.l.b16 %v4382
    %v4447 = vunpack.c.l.b16 %v4383
    %v4448 = vunpack.c.l.b16 %v4384
    %v4449 = vunpack.c.l.b16 %v4385
    %v4450 = vunpack.c.l.b16 %v4386
    %v4451 = vunpack.c.l.b16 %v4387
    %v4452 = vunpack.c.l.b16 %v4388
    %v4453 = vunpack.c.l.b16 %v4389
    %v4454 = vunpack.c.l.b16 %v4390
    %v4455 = vunpack.c.l.b16 %v4391
    %v4456 = vunpack.c.l.b16 %v4392
    %v4457 = vunpack.c.l.b16 %v4393
    %v4458 = vunpack.c.l.b16 %v4394
    %v4459 = vunpack.c.l.b16 %v4395
    %v4460 = vunpack.c.l.b16 %v4396
    %v4461 = vunpack.c.l.b16 %v4397
    %v4462 = vunpack.c.l.b16 %v4398
    %v4463 = vunpack.c.l.b16 %v4399
    %v4464 = vunpack.c.l.b16 %v4400
    %v4465 = vunpack.c.l.b16 %v4401
    %v4466 = vunpack.c.l.b16 %v4402
    %v4467 = vunpack.c.l.b16 %v4403
    %v4468 = vunpack.c.l.b16 %v4404
    %v4469 = vunpack.c.l.b16 %v4405
    %v4470 = vunpack.c.l.b16 %v4406
    %v4471 = vunpack.c.l.b16 %v4407
    %v4472 = vunpack.c.l.b16 %v4408
    %v4473 = vunpack.c.l.b16 %v4409
    %v4474 = vpack.c.b16 %v4446, %v4445
    %v4475 = vpack.c.b16 %v4448, %v4447
    %v4476 = vpack.c.b16 %v4450, %v4449
    %v4477 = vpack.c.b16 %v4452, %v4451
    %v4478 = vpack.c.b16 %v4454, %v4453
    %v4479 = vpack.c.b16 %v4456, %v4455
    %v4480 = vpack.c.b16 %v4458, %v4457
    %v4481 = vpack.c.b16 %v4460, %v4459
    %v4482 = vpack.c.b16 %v4462, %v4461
    %v4483 = vpack.c.b16 %v4464, %v4463
    %v4484 = vpack.c.b16 %v4466, %v4465
    %v4485 = vpack.c.b16 %v4468, %v4467
    %v4486 = vpack.c.b16 %v4470, %v4469
    %v4487 = vpack.c.b16 %v4472, %v4471
    %v4488 = vpack.c.b16 %v4473, %v4473
    %v4504 = vsel %vm2281, %v4380, 0
    %v4507 = vand.u32 %v4488, %v1619
    %4509 = vmatprep.subr.bf16.mxu0 0
    %4510 = vmatpush1.bf16.msra.mxu0 %v4474
    %4511 = vmatprep.subr.bf16.mxu0 0
    %4512 = vmatpush1.bf16.msra.mxu0 %v4475
    %4513 = vmatprep.subr.bf16.mxu0 0
    %4514 = vmatpush1.bf16.msra.mxu0 %v4476
    %4515 = vmatprep.subr.bf16.mxu0 0
    %4516 = vmatpush1.bf16.msra.mxu0 %v4477
    %4517 = vmatprep.subr.bf16.mxu0 0
    %4518 = vmatpush1.bf16.msra.mxu0 %v4478
    %4519 = vmatprep.subr.bf16.mxu0 0
    %4520 = vmatpush1.bf16.msra.mxu0 %v4479
    %4521 = vmatprep.subr.bf16.mxu0 0
    %4522 = vmatpush1.bf16.msra.mxu0 %v4480
    %4523 = vmatprep.subr.bf16.mxu0 0
    %4524 = vmatpush1.bf16.msra.mxu0 %v4481
    %4525 = vmatprep.subr.bf16.mxu0 0
    %4526 = vmatpush1.bf16.msra.mxu0 %v4482
    %4527 = vmatprep.subr.bf16.mxu0 0
    %4528 = vmatpush1.bf16.msra.mxu0 %v4483
    %4529 = vmatprep.subr.bf16.mxu0 0
    %4530 = vmatpush1.bf16.msra.mxu0 %v4484
    %4531 = vmatprep.subr.bf16.mxu0 0
    %4532 = vmatpush1.bf16.msra.mxu0 %v4485
    %4533 = vmatprep.subr.bf16.mxu0 0
    %4534 = vmatpush1.bf16.msra.mxu0 %v4486
    %4535 = vmatprep.subr.bf16.mxu0 0
    %4536 = vmatpush1.bf16.msra.mxu0 %v4487
    %4537 = vmatprep.subr.bf16.mxu0 0
    %4538 = vmatpush1.bf16.msra.mxu0 %v4507
    %4539 = vmatprep.subr.bf16.mxu0 0
    %4540 = vmatpush1.bf16.msra.mxu0 0
    %4541 = vmatprep.mubr.bf16.mxu0 %v4504
    %4542 = vmatmul.mubr.bf16.gmra.mrb[0].mxu0 %v4379
    %v4543 = vpop.f32.mrb[0].mxu0
    %v4544 = vadd.f32 %v4414, %v4543
    %v4545 = vpop.f32.mrb[0].mxu0
    %v4546 = vpop.f32.mrb[0].mxu0
    %v4547 = vpop.f32.mrb[0].mxu0
    %4548 = vdwg.mxu0
    %v4549 = vmax.f32 %v4544, 0.0
    %v4550 = vld [vmem:[#allocation26] sm:$0xf]
    %v4551 = vld [vmem:[#allocation26 + $0x4] sm:$0xf]
    %v4552 = vld [vmem:[#allocation26 + $0x8] sm:$0xf]
    %v4553 = vld [vmem:[#allocation26 + $0xc] sm:$0xf]
    %v4554 = vld [vmem:[#allocation26 + $0x10] sm:$0xf]
    %v4555 = vld [vmem:[#allocation26 + $0x14] sm:$0xf]
    %v4556 = vld [vmem:[#allocation26 + $0x18] sm:$0xf]
    %v4557 = vpack.c.bf16 %v4549, %v4549
    %v4565 = vunpack.c.l.b16 %v4550
    %v4566 = vunpack.c.l.b16 %v4551
    %v4567 = vunpack.c.l.b16 %v4552
    %v4568 = vunpack.c.l.b16 %v4553
    %v4569 = vunpack.c.l.b16 %v4554
    %v4570 = vunpack.c.l.b16 %v4555
    %v4571 = vunpack.c.l.b16 %v4556
    %v4572 = vpack.c.b16 %v4566, %v4565
    %v4573 = vpack.c.b16 %v4568, %v4567
    %v4574 = vpack.c.b16 %v4570, %v4569
    %v4575 = vpack.c.b16 %v4571, %v4571
    %v4577 = vsel %vm307, %v4572, 0
    %v4580 = vsel %vm307, %v4573, 0
    %v4583 = vsel %vm307, %v4574, 0
    %v4586 = vsel %vm307, %v4575, 0
    %v4589 = vsel %vm320, %v4557, 0
    %4591 = vmatprep.subr.bf16.mxu0 0
    %4592 = vmatpush1.bf16.msra.mxu0 %v4589
    %4593 = vmatprep.subr.bf16.mxu0 0
    %4594 = vmatpush1.bf16.msra.mxu0 0
    %4595 = vmatprep.subr.bf16.mxu0 0
    %4596 = vmatpush1.bf16.msra.mxu0 0
    %4597 = vmatprep.subr.bf16.mxu0 0
    %4598 = vmatpush1.bf16.msra.mxu0 0
    %4599 = vmatprep.subr.bf16.mxu0 0
    %4600 = vmatpush1.bf16.msra.mxu0 0
    %4601 = vmatprep.subr.bf16.mxu0 0
    %4602 = vmatpush1.bf16.msra.mxu0 0
    %4603 = vmatprep.subr.bf16.mxu0 0
    %4604 = vmatpush1.bf16.msra.mxu0 0
    %4605 = vmatprep.subr.bf16.mxu0 0
    %4606 = vmatpush1.bf16.msra.mxu0 0
    %4607 = vmatprep.subr.bf16.mxu0 0
    %4608 = vmatpush1.bf16.msra.mxu0 0
    %4609 = vmatprep.subr.bf16.mxu0 0
    %4610 = vmatpush1.bf16.msra.mxu0 0
    %4611 = vmatprep.subr.bf16.mxu0 0
    %4612 = vmatpush1.bf16.msra.mxu0 0
    %4613 = vmatprep.subr.bf16.mxu0 0
    %4614 = vmatpush1.bf16.msra.mxu0 0
    %4615 = vmatprep.subr.bf16.mxu0 0
    %4616 = vmatpush1.bf16.msra.mxu0 0
    %4617 = vmatprep.subr.bf16.mxu0 0
    %4618 = vmatpush1.bf16.msra.mxu0 0
    %4619 = vmatprep.subr.bf16.mxu0 0
    %4620 = vmatpush1.bf16.msra.mxu0 0
    %4621 = vmatprep.subr.bf16.mxu0 0
    %4622 = vmatpush1.bf16.msra.mxu0 0
    %4623 = vmatprep.mubr.bf16.mxu0 0
    %4624 = vmatmul.mubr.bf16.gmra.mrb[0].mxu0 %v4577
    %v4625 = vpop.f32.mrb[0].mxu0
    %v4626 = vadd.f32 0.0, %v4625
    %v4627 = vpop.f32.mrb[0].mxu0
    %v4628 = vpop.f32.mrb[0].mxu0
    %v4629 = vadd.f32 0.0, %v4628
    %v4630 = vpop.f32.mrb[0].mxu0
    %4631 = vmatprep.mubr.bf16.mxu0 0
    %4632 = vmatmul.mubr.bf16.gmra.mrb[0].mxu0 %v4580
    %v4633 = vpop.f32.mrb[0].mxu0
    %v4634 = vadd.f32 0.0, %v4633
    %v4635 = vpop.f32.mrb[0].mxu0
    %v4636 = vpop.f32.mrb[0].mxu0
    %v4637 = vadd.f32 0.0, %v4636
    %v4638 = vpop.f32.mrb[0].mxu0
    %4639 = vmatprep.mubr.bf16.mxu0 0
    %4640 = vmatmul.mubr.bf16.gmra.mrb[0].mxu0 %v4583
    %v4641 = vpop.f32.mrb[0].mxu0
    %v4642 = vadd.f32 0.0, %v4641
    %v4643 = vpop.f32.mrb[0].mxu0
    %v4644 = vpop.f32.mrb[0].mxu0
    %v4645 = vadd.f32 0.0, %v4644
    %v4646 = vpop.f32.mrb[0].mxu0
    %4647 = vmatprep.mubr.bf16.mxu0 0
    %4648 = vmatmul.mubr.bf16.gmra.mrb[0].mxu0 %v4586
    %v4649 = vpop.f32.mrb[0].mxu0
    %v4650 = vadd.f32 0.0, %v4649
    %v4651 = vpop.f32.mrb[0].mxu0
    %v4652 = vpop.f32.mrb[0].mxu0
    %v4653 = vpop.f32.mrb[0].mxu0
    %4654 = vdwg.mxu0
    %4655 = vst.msk [vmem:[#allocation2] sm:$0xff] %vm1286, %v4626
    %4657 = vrot.lane.b32.xlu0 %v4629, 65
    %v4658 = vpop.permute.xlu0 %4657
    %4660 = vst.msk [vmem:[#allocation2] sm:$0xff] %vm1297, %v4658
    %4661 = vst.msk [vmem:[#allocation2 + $0x8] sm:$0xff] %vm399, %v4658
    %4663 = vrot.lane.b32.xlu0 %v4634, 2
    %v4664 = vpop.permute.xlu0 %4663
    %4666 = vst.msk [vmem:[#allocation2 + $0x8] sm:$0xff] %vm1310, %v4664
    %4668 = vrot.lane.b32.xlu0 %v4637, 67
    %v4669 = vpop.permute.xlu0 %4668
    %4671 = vst.msk [vmem:[#allocation2 + $0x8] sm:$0xff] %vm1321, %v4669
    %4672 = vst.msk [vmem:[#allocation2 + $0x10] sm:$0xff] %vm412, %v4669
    %4674 = vrot.lane.b32.xlu0 %v4642, 4
    %v4675 = vpop.permute.xlu0 %4674
    %4677 = vst.msk [vmem:[#allocation2 + $0x10] sm:$0xff] %vm1334, %v4675
    %4679 = vrot.lane.b32.xlu0 %v4645, 69
    %v4680 = vpop.permute.xlu0 %4679
    %4682 = vst.msk [vmem:[#allocation2 + $0x10] sm:$0xff] %vm1345, %v4680
    %4683 = vst.msk [vmem:[#allocation2 + $0x18] sm:$0xff] %vm425, %v4680
    %4685 = vrot.lane.b32.xlu0 %v4650, 6
    %v4686 = vpop.permute.xlu0 %4685
    %4688 = vst.msk [vmem:[#allocation2 + $0x18] sm:$0xff] %vm1358, %v4686
    %v4689 = vld [vmem:[#allocation2] sm:$0xff]
    %v4690 = vld [vmem:[#allocation2 + $0x8] sm:$0xff]
    %v4691 = vld [vmem:[#allocation2 + $0x10] sm:$0xff]
    %v4692 = vld [vmem:[#allocation2 + $0x18] sm:$0xff]
    %v4693 = vpack.c.bf16 %v4689, %v4689
    %v4694 = vpack.c.bf16 %v4690, %v4690
    %v4695 = vpack.c.bf16 %v4691, %v4691
    %v4696 = vpack.c.bf16 %v4692, %v4692
    %v4697 = vld [vmem:[#allocation27] sm:$0xff]
    %v4698 = vld [vmem:[#allocation27 + $0x8] sm:$0xff]
    %v4699 = vld [vmem:[#allocation27 + $0x10] sm:$0xff]
    %v4700 = vld [vmem:[#allocation27 + $0x18] sm:$0xff]
    %v4701 = vld [vmem:[#allocation27 + $0x20] sm:$0xff]
    %v4702 = vld [vmem:[#allocation27 + $0x28] sm:$0xff]
    %v4703 = vld [vmem:[#allocation27 + $0x30] sm:$0xff]
    %v4704 = vld [vmem:[#allocation27 + $0x38] sm:$0xff]
    %v4705 = vld [vmem:[#allocation27 + $0x40] sm:$0xff]
    %v4706 = vld [vmem:[#allocation27 + $0x48] sm:$0xff]
    %v4707 = vld [vmem:[#allocation27 + $0x50] sm:$0xff]
    %v4708 = vld [vmem:[#allocation27 + $0x58] sm:$0xff]
    %v4709 = vld [vmem:[#allocation27 + $0x60] sm:$0xff]
    %v4710 = vld [vmem:[#allocation27 + $0x68] sm:$0xff]
    %v4711 = vld [vmem:[#allocation27 + $0x70] sm:$0xff]
    %v4712 = vld [vmem:[#allocation27 + $0x78] sm:$0xff]
    %v4713 = vld [vmem:[#allocation27 + $0x80] sm:$0xff]
    %v4714 = vld [vmem:[#allocation27 + $0x88] sm:$0xff]
    %v4715 = vld [vmem:[#allocation27 + $0x90] sm:$0xff]
    %v4716 = vld [vmem:[#allocation27 + $0x98] sm:$0xff]
    %v4717 = vld [vmem:[#allocation27 + $0xa0] sm:$0xff]
    %v4718 = vld [vmem:[#allocation27 + $0xa8] sm:$0xff]
    %v4719 = vld [vmem:[#allocation27 + $0xb0] sm:$0xff]
    %v4720 = vld [vmem:[#allocation27 + $0xb8] sm:$0xff]
    %v4721 = vld [vmem:[#allocation27 + $0xc0] sm:$0xff]
    %v4722 = vld [vmem:[#allocation27 + $0xc8] sm:$0xff]
    %v4723 = vld [vmem:[#allocation27 + $0xd0] sm:$0xff]
    %v4724 = vld [vmem:[#allocation27 + $0xd8] sm:$0xff]
    %v4725 = vld [vmem:[#allocation27 + $0xe0] sm:$0xff]
    %v4726 = vld [vmem:[#allocation27 + $0xe8] sm:$0xff]
    %v4727 = vld [vmem:[#allocation27 + $0xf0] sm:$0xff]
    %v4728 = vld [vmem:[#allocation27 + $0xf8] sm:$0xff]
    %v4729 = vld [vmem:[#allocation27 + $0x100] sm:$0xff]
    %v4730 = vld [vmem:[#allocation27 + $0x108] sm:$0xff]
    %v4731 = vld [vmem:[#allocation27 + $0x110] sm:$0xff]
    %v4732 = vld [vmem:[#allocation27 + $0x118] sm:$0xff]
    %v4733 = vld [vmem:[#allocation27 + $0x120] sm:$0xff]
    %v4734 = vld [vmem:[#allocation27 + $0x128] sm:$0xff]
    %v4735 = vld [vmem:[#allocation27 + $0x130] sm:$0xff]
    %v4736 = vld [vmem:[#allocation27 + $0x138] sm:$0xff]
    %v4737 = vld [vmem:[#allocation27 + $0x140] sm:$0xff]
    %v4738 = vld [vmem:[#allocation27 + $0x148] sm:$0xff]
    %v4739 = vld [vmem:[#allocation27 + $0x150] sm:$0xff]
    %v4740 = vld [vmem:[#allocation27 + $0x158] sm:$0xff]
    %v4741 = vld [vmem:[#allocation27 + $0x160] sm:$0xff]
    %v4742 = vld [vmem:[#allocation27 + $0x168] sm:$0xff]
    %v4743 = vld [vmem:[#allocation27 + $0x170] sm:$0xff]
    %v4744 = vld [vmem:[#allocation27 + $0x178] sm:$0xff]
    %v4745 = vld [vmem:[#allocation27 + $0x180] sm:$0xff]
    %v4746 = vld [vmem:[#allocation27 + $0x188] sm:$0xff]
    %v4747 = vld [vmem:[#allocation27 + $0x190] sm:$0xff]
    %v4748 = vld [vmem:[#allocation27 + $0x198] sm:$0xff]
    %v4749 = vld [vmem:[#allocation27 + $0x1a0] sm:$0xff]
    %v4750 = vld [vmem:[#allocation27 + $0x1a8] sm:$0xff]
    %v4751 = vld [vmem:[#allocation27 + $0x1b0] sm:$0xff]
    %v4752 = vld [vmem:[#allocation27 + $0x1b8] sm:$0xff]
    %v4753 = vld [vmem:[#allocation27 + $0x1c0] sm:$0xff]
    %v4754 = vld [vmem:[#allocation3] sm:$0xff]
    %4756 = vset.pattern.permute.xlu0 7
    %4757 = vperm.xlu0 %4756, %v4754
    %v4758 = vpop.permute.xlu0 %4757
    %v4817 = vunpack.c.l.b16 %v4697
    %v4818 = vunpack.c.h.b16 %v4697
    %v4819 = vunpack.c.l.b16 %v4698
    %v4820 = vunpack.c.h.b16 %v4698
    %v4821 = vunpack.c.l.b16 %v4699
    %v4822 = vunpack.c.h.b16 %v4699
    %v4823 = vunpack.c.l.b16 %v4700
    %v4824 = vunpack.c.h.b16 %v4700
    %v4825 = vunpack.c.l.b16 %v4701
    %v4826 = vunpack.c.h.b16 %v4701
    %v4827 = vunpack.c.l.b16 %v4702
    %v4828 = vunpack.c.h.b16 %v4702
    %v4829 = vunpack.c.l.b16 %v4703
    %v4830 = vunpack.c.h.b16 %v4703
    %v4831 = vunpack.c.l.b16 %v4704
    %v4832 = vunpack.c.h.b16 %v4704
    %v4833 = vunpack.c.l.b16 %v4705
    %v4834 = vunpack.c.h.b16 %v4705
    %v4835 = vunpack.c.l.b16 %v4706
    %v4836 = vunpack.c.h.b16 %v4706
    %v4837 = vunpack.c.l.b16 %v4707
    %v4838 = vunpack.c.h.b16 %v4707
    %v4839 = vunpack.c.l.b16 %v4708
    %v4840 = vunpack.c.h.b16 %v4708
    %v4841 = vunpack.c.l.b16 %v4709
    %v4842 = vunpack.c.h.b16 %v4709
    %v4843 = vunpack.c.l.b16 %v4710
    %v4844 = vunpack.c.h.b16 %v4710
    %v4845 = vunpack.c.l.b16 %v4711
    %v4846 = vunpack.c.h.b16 %v4711
    %v4847 = vunpack.c.l.b16 %v4712
    %v4848 = vunpack.c.h.b16 %v4712
    %v4849 = vunpack.c.l.b16 %v4713
    %v4850 = vunpack.c.h.b16 %v4713
    %v4851 = vunpack.c.l.b16 %v4714
    %v4852 = vunpack.c.h.b16 %v4714
    %v4853 = vunpack.c.l.b16 %v4715
    %v4854 = vunpack.c.h.b16 %v4715
    %v4855 = vunpack.c.l.b16 %v4716
    %v4856 = vunpack.c.h.b16 %v4716
    %v4857 = vunpack.c.l.b16 %v4717
    %v4858 = vunpack.c.h.b16 %v4717
    %v4859 = vunpack.c.l.b16 %v4718
    %v4860 = vunpack.c.h.b16 %v4718
    %v4861 = vunpack.c.l.b16 %v4719
    %v4862 = vunpack.c.h.b16 %v4719
    %v4863 = vunpack.c.l.b16 %v4720
    %v4864 = vunpack.c.h.b16 %v4720
    %v4865 = vunpack.c.l.b16 %v4721
    %v4866 = vunpack.c.h.b16 %v4721
    %v4867 = vunpack.c.l.b16 %v4722
    %v4868 = vunpack.c.h.b16 %v4722
    %v4869 = vunpack.c.l.b16 %v4723
    %v4870 = vunpack.c.h.b16 %v4723
    %v4871 = vunpack.c.l.b16 %v4724
    %v4872 = vunpack.c.h.b16 %v4724
    %v4873 = vunpack.c.l.b16 %v4725
    %v4874 = vunpack.c.h.b16 %v4725
    %v4875 = vunpack.c.l.b16 %v4726
    %v4876 = vunpack.c.h.b16 %v4726
    %v4877 = vunpack.c.l.b16 %v4727
    %v4878 = vunpack.c.h.b16 %v4727
    %v4879 = vunpack.c.l.b16 %v4728
    %v4880 = vunpack.c.h.b16 %v4728
    %v4881 = vunpack.c.l.b16 %v4729
    %v4882 = vunpack.c.h.b16 %v4729
    %v4883 = vunpack.c.l.b16 %v4730
    %v4884 = vunpack.c.h.b16 %v4730
    %v4885 = vunpack.c.l.b16 %v4731
    %v4886 = vunpack.c.h.b16 %v4731
    %v4887 = vunpack.c.l.b16 %v4732
    %v4888 = vunpack.c.h.b16 %v4732
    %v4889 = vunpack.c.l.b16 %v4733
    %v4890 = vunpack.c.h.b16 %v4733
    %v4891 = vunpack.c.l.b16 %v4734
    %v4892 = vunpack.c.h.b16 %v4734
    %v4893 = vunpack.c.l.b16 %v4735
    %v4894 = vunpack.c.h.b16 %v4735
    %v4895 = vunpack.c.l.b16 %v4736
    %v4896 = vunpack.c.h.b16 %v4736
    %v4897 = vunpack.c.l.b16 %v4737
    %v4898 = vunpack.c.h.b16 %v4737
    %v4899 = vunpack.c.l.b16 %v4738
    %v4900 = vunpack.c.h.b16 %v4738
    %v4901 = vunpack.c.l.b16 %v4739
    %v4902 = vunpack.c.h.b16 %v4739
    %v4903 = vunpack.c.l.b16 %v4740
    %v4904 = vunpack.c.h.b16 %v4740
    %v4905 = vunpack.c.l.b16 %v4741
    %v4906 = vunpack.c.h.b16 %v4741
    %v4907 = vunpack.c.l.b16 %v4742
    %v4908 = vunpack.c.h.b16 %v4742
    %v4909 = vunpack.c.l.b16 %v4743
    %v4910 = vunpack.c.h.b16 %v4743
    %v4911 = vunpack.c.l.b16 %v4744
    %v4912 = vunpack.c.h.b16 %v4744
    %v4913 = vunpack.c.l.b16 %v4745
    %v4914 = vunpack.c.h.b16 %v4745
    %v4915 = vunpack.c.l.b16 %v4746
    %v4916 = vunpack.c.h.b16 %v4746
    %v4917 = vunpack.c.l.b16 %v4747
    %v4918 = vunpack.c.h.b16 %v4747
    %v4919 = vunpack.c.l.b16 %v4748
    %v4920 = vunpack.c.h.b16 %v4748
    %v4921 = vunpack.c.l.b16 %v4749
    %v4922 = vunpack.c.h.b16 %v4749
    %v4923 = vunpack.c.l.b16 %v4750
    %v4924 = vunpack.c.h.b16 %v4750
    %v4925 = vunpack.c.l.b16 %v4751
    %v4926 = vunpack.c.h.b16 %v4751
    %v4927 = vunpack.c.l.b16 %v4752
    %v4928 = vunpack.c.h.b16 %v4752
    %v4929 = vunpack.c.l.b16 %v4753
    %v4930 = vunpack.c.h.b16 %v4753
    %v4931 = vpack.c.b16 %v4819, %v4817
    %v4932 = vpack.c.b16 %v4820, %v4818
    %v4933 = vpack.c.b16 %v4823, %v4821
    %v4934 = vpack.c.b16 %v4824, %v4822
    %v4935 = vpack.c.b16 %v4827, %v4825
    %v4936 = vpack.c.b16 %v4828, %v4826
    %v4937 = vpack.c.b16 %v4831, %v4829
    %v4938 = vpack.c.b16 %v4832, %v4830
    %v4939 = vpack.c.b16 %v4835, %v4833
    %v4940 = vpack.c.b16 %v4836, %v4834
    %v4941 = vpack.c.b16 %v4839, %v4837
    %v4942 = vpack.c.b16 %v4840, %v4838
    %v4943 = vpack.c.b16 %v4843, %v4841
    %v4944 = vpack.c.b16 %v4844, %v4842
    %v4945 = vpack.c.b16 %v4847, %v4845
    %v4946 = vpack.c.b16 %v4848, %v4846
    %v4947 = vpack.c.b16 %v4851, %v4849
    %v4948 = vpack.c.b16 %v4852, %v4850
    %v4949 = vpack.c.b16 %v4855, %v4853
    %v4950 = vpack.c.b16 %v4856, %v4854
    %v4951 = vpack.c.b16 %v4859, %v4857
    %v4952 = vpack.c.b16 %v4860, %v4858
    %v4953 = vpack.c.b16 %v4863, %v4861
    %v4954 = vpack.c.b16 %v4864, %v4862
    %v4955 = vpack.c.b16 %v4867, %v4865
    %v4956 = vpack.c.b16 %v4868, %v4866
    %v4957 = vpack.c.b16 %v4871, %v4869
    %v4958 = vpack.c.b16 %v4872, %v4870
    %v4959 = vpack.c.b16 %v4875, %v4873
    %v4960 = vpack.c.b16 %v4876, %v4874
    %v4961 = vpack.c.b16 %v4879, %v4877
    %v4962 = vpack.c.b16 %v4880, %v4878
    %v4963 = vpack.c.b16 %v4883, %v4881
    %v4964 = vpack.c.b16 %v4884, %v4882
    %v4965 = vpack.c.b16 %v4887, %v4885
    %v4966 = vpack.c.b16 %v4888, %v4886
    %v4967 = vpack.c.b16 %v4891, %v4889
    %v4968 = vpack.c.b16 %v4892, %v4890
    %v4969 = vpack.c.b16 %v4895, %v4893
    %v4970 = vpack.c.b16 %v4896, %v4894
    %v4971 = vpack.c.b16 %v4899, %v4897
    %v4972 = vpack.c.b16 %v4900, %v4898
    %v4973 = vpack.c.b16 %v4903, %v4901
    %v4974 = vpack.c.b16 %v4904, %v4902
    %v4975 = vpack.c.b16 %v4907, %v4905
    %v4976 = vpack.c.b16 %v4908, %v4906
    %v4977 = vpack.c.b16 %v4911, %v4909
    %v4978 = vpack.c.b16 %v4912, %v4910
    %v4979 = vpack.c.b16 %v4915, %v4913
    %v4980 = vpack.c.b16 %v4916, %v4914
    %v4981 = vpack.c.b16 %v4919, %v4917
    %v4982 = vpack.c.b16 %v4920, %v4918
    %v4983 = vpack.c.b16 %v4923, %v4921
    %v4984 = vpack.c.b16 %v4924, %v4922
    %v4985 = vpack.c.b16 %v4927, %v4925
    %v4986 = vpack.c.b16 %v4928, %v4926
    %v4987 = vpack.c.b16 %v4929, %v4929
    %v4988 = vpack.c.b16 %v4930, %v4930
    %v5046 = vsel %vm1613, %v4696, 0
    %v5049 = vand.u32 %v4987, %v1619
    %v5052 = vand.u32 %v4988, %v1619
    %5054 = vmatprep.subr.bf16.mxu0 %v4932
    %5055 = vmatpush1.bf16.msra.mxu0 %v4931
    %5056 = vmatprep.subr.bf16.mxu0 %v4934
    %5057 = vmatpush1.bf16.msra.mxu0 %v4933
    %5058 = vmatprep.subr.bf16.mxu0 %v4936
    %5059 = vmatpush1.bf16.msra.mxu0 %v4935
    %5060 = vmatprep.subr.bf16.mxu0 %v4938
    %5061 = vmatpush1.bf16.msra.mxu0 %v4937
    %5062 = vmatprep.subr.bf16.mxu0 %v4940
    %5063 = vmatpush1.bf16.msra.mxu0 %v4939
    %5064 = vmatprep.subr.bf16.mxu0 %v4942
    %5065 = vmatpush1.bf16.msra.mxu0 %v4941
    %5066 = vmatprep.subr.bf16.mxu0 %v4944
    %5067 = vmatpush1.bf16.msra.mxu0 %v4943
    %5068 = vmatprep.subr.bf16.mxu0 %v4946
    %5069 = vmatpush1.bf16.msra.mxu0 %v4945
    %5070 = vmatprep.subr.bf16.mxu0 %v4948
    %5071 = vmatpush1.bf16.msra.mxu0 %v4947
    %5072 = vmatprep.subr.bf16.mxu0 %v4950
    %5073 = vmatpush1.bf16.msra.mxu0 %v4949
    %5074 = vmatprep.subr.bf16.mxu0 %v4952
    %5075 = vmatpush1.bf16.msra.mxu0 %v4951
    %5076 = vmatprep.subr.bf16.mxu0 %v4954
    %5077 = vmatpush1.bf16.msra.mxu0 %v4953
    %5078 = vmatprep.subr.bf16.mxu0 %v4956
    %5079 = vmatpush1.bf16.msra.mxu0 %v4955
    %5080 = vmatprep.subr.bf16.mxu0 %v4958
    %5081 = vmatpush1.bf16.msra.mxu0 %v4957
    %5082 = vmatprep.subr.bf16.mxu0 %v4960
    %5083 = vmatpush1.bf16.msra.mxu0 %v4959
    %5084 = vmatprep.subr.bf16.mxu0 %v4962
    %5085 = vmatpush1.bf16.msra.mxu0 %v4961
    %5086 = vmatprep.mubr.bf16.mxu0 %v4694
    %5087 = vmatmul.mubr.bf16.gmra.mrb[0].mxu0 %v4693
    %v5088 = vpop.f32.mrb[0].mxu0
    %v5089 = vadd.f32 %v4758, %v5088
    %v5090 = vpop.f32.mrb[0].mxu0
    %v5091 = vadd.f32 %v4758, %v5090
    %v5092 = vpop.f32.mrb[0].mxu0
    %v5093 = vpop.f32.mrb[0].mxu0
    %5094 = vdwg.mxu0
    %5095 = vmatprep.subr.bf16.mxu0 %v4964
    %5096 = vmatpush1.bf16.msra.mxu0 %v4963
    %5097 = vmatprep.subr.bf16.mxu0 %v4966
    %5098 = vmatpush1.bf16.msra.mxu0 %v4965
    %5099 = vmatprep.subr.bf16.mxu0 %v4968
    %5100 = vmatpush1.bf16.msra.mxu0 %v4967
    %5101 = vmatprep.subr.bf16.mxu0 %v4970
    %5102 = vmatpush1.bf16.msra.mxu0 %v4969
    %5103 = vmatprep.subr.bf16.mxu0 %v4972
    %5104 = vmatpush1.bf16.msra.mxu0 %v4971
    %5105 = vmatprep.subr.bf16.mxu0 %v4974
    %5106 = vmatpush1.bf16.msra.mxu0 %v4973
    %5107 = vmatprep.subr.bf16.mxu0 %v4976
    %5108 = vmatpush1.bf16.msra.mxu0 %v4975
    %5109 = vmatprep.subr.bf16.mxu0 %v4978
    %5110 = vmatpush1.bf16.msra.mxu0 %v4977
    %5111 = vmatprep.subr.bf16.mxu0 %v4980
    %5112 = vmatpush1.bf16.msra.mxu0 %v4979
    %5113 = vmatprep.subr.bf16.mxu0 %v4982
    %5114 = vmatpush1.bf16.msra.mxu0 %v4981
    %5115 = vmatprep.subr.bf16.mxu0 %v4984
    %5116 = vmatpush1.bf16.msra.mxu0 %v4983
    %5117 = vmatprep.subr.bf16.mxu0 %v4986
    %5118 = vmatpush1.bf16.msra.mxu0 %v4985
    %5119 = vmatprep.subr.bf16.mxu0 %v5052
    %5120 = vmatpush1.bf16.msra.mxu0 %v5049
    %5121 = vmatprep.subr.bf16.mxu0 0
    %5122 = vmatpush1.bf16.msra.mxu0 0
    %5123 = vmatprep.subr.bf16.mxu0 0
    %5124 = vmatpush1.bf16.msra.mxu0 0
    %5125 = vmatprep.subr.bf16.mxu0 0
    %5126 = vmatpush1.bf16.msra.mxu0 0
    %5127 = vmatprep.mubr.bf16.mxu0 %v5046
    %5128 = vmatmul.mubr.bf16.gmra.mrb[0].mxu0 %v4695
    %v5129 = vpop.f32.mrb[0].mxu0
    %v5130 = vadd.f32 %v5089, %v5129
    %v5131 = vpop.f32.mrb[0].mxu0
    %v5132 = vadd.f32 %v5091, %v5131
    %v5133 = vpop.f32.mrb[0].mxu0
    %v5134 = vpop.f32.mrb[0].mxu0
    %5135 = vdwg.mxu0
    %v5138 = vcombine.low %v5130, %v5132
    %v5140 = vunpack.c.l.s4 1966171168
    %v5141 = vunpack.c.0.s8 %v5140
    %v5142 = vlaneseq
    %v5143 = vshrl.u32 %v5142, 7
    %v5144 = vsub.s32 %v5141, %v5143
    %v5145 = vrot.slane %v5138, %v5144
    %v5147 = vunpack.c.l.s4 1966171168
    %v5148 = vunpack.c.0.s8 %v5147
    %v5149 = vlaneseq
    %v5150 = vshrl.u32 %v5149, 7
    %v5151 = vsub.s32 %v5148, %v5150
    %v5152 = vrot.slane %v5145, %v5151
    %v5154 = vlaneseq
    %vm5155 = vcmp.ge.s32.totalorder %v5154, 0
    %vm5156 = vcmp.lt.s32.totalorder %v5154, 130
    %vm5157 = vmand %vm5155, %vm5156
    %5158 = vst.msk [vmem:[#allocation29] sm:$0x3] %vm5157, %v5152
    %s5159 = scalar_lea.vmem %s0, 16
    %v5160 = vld [vmem:[%s5159] sm:$0xff]
    %v5161 = vld [vmem:[%s5159 + $0x8] sm:$0xff]
    %v5162 = vld [vmem:[#allocation6] sm:$0xf]
    %v5163 = vld [vmem:[#allocation6 + $0x4] sm:$0xf]
    %v5164 = vld [vmem:[#allocation6 + $0x8] sm:$0xf]
    %v5165 = vld [vmem:[#allocation6 + $0xc] sm:$0xf]
    %v5166 = vld [vmem:[#allocation6 + $0x10] sm:$0xf]
    %v5167 = vld [vmem:[#allocation6 + $0x14] sm:$0xf]
    %v5168 = vld [vmem:[#allocation6 + $0x18] sm:$0xf]
    %v5169 = vpack.c.bf16 %v5160, %v5160
    %v5170 = vpack.c.bf16 %v5161, %v5161
    %v5178 = vunpack.c.l.b16 %v5162
    %v5179 = vunpack.c.l.b16 %v5163
    %v5180 = vunpack.c.l.b16 %v5164
    %v5181 = vunpack.c.l.b16 %v5165
    %v5182 = vunpack.c.l.b16 %v5166
    %v5183 = vunpack.c.l.b16 %v5167
    %v5184 = vunpack.c.l.b16 %v5168
    %v5185 = vpack.c.b16 %v5179, %v5178
    %v5186 = vpack.c.b16 %v5181, %v5180
    %v5187 = vpack.c.b16 %v5183, %v5182
    %v5188 = vpack.c.b16 %v5184, %v5184
    %v5190 = vsel %vm307, %v5185, 0
    %v5193 = vsel %vm307, %v5186, 0
    %v5196 = vsel %vm307, %v5187, 0
    %v5199 = vsel %vm307, %v5188, 0
    %v5202 = vsel %vm320, %v5169, 0
    %v5205 = vsel %vm320, %v5170, 0
    %5207 = vmatprep.subr.bf16.mxu0 %v5205
    %5208 = vmatpush1.bf16.msra.mxu0 %v5202
    %5209 = vmatprep.subr.bf16.mxu0 0
    %5210 = vmatpush1.bf16.msra.mxu0 0
    %5211 = vmatprep.subr.bf16.mxu0 0
    %5212 = vmatpush1.bf16.msra.mxu0 0
    %5213 = vmatprep.subr.bf16.mxu0 0
    %5214 = vmatpush1.bf16.msra.mxu0 0
    %5215 = vmatprep.subr.bf16.mxu0 0
    %5216 = vmatpush1.bf16.msra.mxu0 0
    %5217 = vmatprep.subr.bf16.mxu0 0
    %5218 = vmatpush1.bf16.msra.mxu0 0
    %5219 = vmatprep.subr.bf16.mxu0 0
    %5220 = vmatpush1.bf16.msra.mxu0 0
    %5221 = vmatprep.subr.bf16.mxu0 0
    %5222 = vmatpush1.bf16.msra.mxu0 0
    %5223 = vmatprep.subr.bf16.mxu0 0
    %5224 = vmatpush1.bf16.msra.mxu0 0
    %5225 = vmatprep.subr.bf16.mxu0 0
    %5226 = vmatpush1.bf16.msra.mxu0 0
    %5227 = vmatprep.subr.bf16.mxu0 0
    %5228 = vmatpush1.bf16.msra.mxu0 0
    %5229 = vmatprep.subr.bf16.mxu0 0
    %5230 = vmatpush1.bf16.msra.mxu0 0
    %5231 = vmatprep.subr.bf16.mxu0 0
    %5232 = vmatpush1.bf16.msra.mxu0 0
    %5233 = vmatprep.subr.bf16.mxu0 0
    %5234 = vmatpush1.bf16.msra.mxu0 0
    %5235 = vmatprep.subr.bf16.mxu0 0
    %5236 = vmatpush1.bf16.msra.mxu0 0
    %5237 = vmatprep.subr.bf16.mxu0 0
    %5238 = vmatpush1.bf16.msra.mxu0 0
    %5239 = vmatprep.mubr.bf16.mxu0 0
    %5240 = vmatmul.mubr.bf16.gmra.mrb[0].mxu0 %v5190
    %v5241 = vpop.f32.mrb[0].mxu0
    %v5242 = vadd.f32 0.0, %v5241
    %v5243 = vpop.f32.mrb[0].mxu0
    %v5244 = vadd.f32 0.0, %v5243
    %v5245 = vpop.f32.mrb[0].mxu0
    %v5246 = vadd.f32 0.0, %v5245
    %v5247 = vpop.f32.mrb[0].mxu0
    %v5248 = vadd.f32 0.0, %v5247
    %5249 = vmatprep.mubr.bf16.mxu0 0
    %5250 = vmatmul.mubr.bf16.gmra.mrb[0].mxu0 %v5193
    %v5251 = vpop.f32.mrb[0].mxu0
    %v5252 = vadd.f32 0.0, %v5251
    %v5253 = vpop.f32.mrb[0].mxu0
    %v5254 = vadd.f32 0.0, %v5253
    %v5255 = vpop.f32.mrb[0].mxu0
    %v5256 = vadd.f32 0.0, %v5255
    %v5257 = vpop.f32.mrb[0].mxu0
    %v5258 = vadd.f32 0.0, %v5257
    %5259 = vmatprep.mubr.bf16.mxu0 0
    %5260 = vmatmul.mubr.bf16.gmra.mrb[0].mxu0 %v5196
    %v5261 = vpop.f32.mrb[0].mxu0
    %v5262 = vadd.f32 0.0, %v5261
    %v5263 = vpop.f32.mrb[0].mxu0
    %v5264 = vadd.f32 0.0, %v5263
    %v5265 = vpop.f32.mrb[0].mxu0
    %v5266 = vadd.f32 0.0, %v5265
    %v5267 = vpop.f32.mrb[0].mxu0
    %v5268 = vadd.f32 0.0, %v5267
    %5269 = vmatprep.mubr.bf16.mxu0 0
    %5270 = vmatmul.mubr.bf16.gmra.mrb[0].mxu0 %v5199
    %v5271 = vpop.f32.mrb[0].mxu0
    %v5272 = vadd.f32 0.0, %v5271
    %v5273 = vpop.f32.mrb[0].mxu0
    %v5274 = vadd.f32 0.0, %v5273
    %v5275 = vpop.f32.mrb[0].mxu0
    %v5276 = vpop.f32.mrb[0].mxu0
    %5277 = vdwg.mxu0
    %5278 = vst [vmem:[#allocation2] sm:$0xff] %v5242
    %5279 = vst.msk [vmem:[#allocation2 + $0x8] sm:$0xff] %vm399, %v5244
    %5282 = vrot.lane.b32.xlu0 %v5246, 2
    %v5283 = vpop.permute.xlu0 %5282
    %5284 = vrot.lane.b32.xlu0 %v5248, 2
    %v5285 = vpop.permute.xlu0 %5284
    %v5286 = vsel %vm399, %v5283, %v5285
    %5289 = vst.msk [vmem:[#allocation2 + $0x8] sm:$0xff] %vm410, %v5283
    %5290 = vst.msk [vmem:[#allocation2 + $0x10] sm:$0xff] %vm412, %v5286
    %5293 = vrot.lane.b32.xlu0 %v5252, 4
    %v5294 = vpop.permute.xlu0 %5293
    %5295 = vrot.lane.b32.xlu0 %v5254, 4
    %v5296 = vpop.permute.xlu0 %5295
    %v5297 = vsel %vm412, %v5294, %v5296
    %5300 = vst.msk [vmem:[#allocation2 + $0x10] sm:$0xff] %vm423, %v5294
    %5301 = vst.msk [vmem:[#allocation2 + $0x18] sm:$0xff] %vm425, %v5297
    %5304 = vrot.lane.b32.xlu0 %v5256, 6
    %v5305 = vpop.permute.xlu0 %5304
    %5306 = vrot.lane.b32.xlu0 %v5258, 6
    %v5307 = vpop.permute.xlu0 %5306
    %v5308 = vsel %vm425, %v5305, %v5307
    %5311 = vst.msk [vmem:[#allocation2 + $0x18] sm:$0xff] %vm436, %v5305
    %5312 = vst.msk [vmem:[#allocation2 + $0x20] sm:$0xff] %vm307, %v5308
    %5315 = vrot.lane.b32.xlu0 %v5262, 8
    %v5316 = vpop.permute.xlu0 %5315
    %5317 = vrot.lane.b32.xlu0 %v5264, 8
    %v5318 = vpop.permute.xlu0 %5317
    %v5319 = vsel %vm307, %v5316, %v5318
    %5322 = vst.msk [vmem:[#allocation2 + $0x20] sm:$0xff] %vm448, %v5316
    %5323 = vst.msk [vmem:[#allocation2 + $0x28] sm:$0xff] %vm450, %v5319
    %5326 = vrot.lane.b32.xlu0 %v5266, 10
    %v5327 = vpop.permute.xlu0 %5326
    %5328 = vrot.lane.b32.xlu0 %v5268, 10
    %v5329 = vpop.permute.xlu0 %5328
    %v5330 = vsel %vm450, %v5327, %v5329
    %5333 = vst.msk [vmem:[#allocation2 + $0x28] sm:$0xff] %vm461, %v5327
    %5334 = vst.msk [vmem:[#allocation2 + $0x30] sm:$0xff] %vm463, %v5330
    %5337 = vrot.lane.b32.xlu0 %v5272, 12
    %v5338 = vpop.permute.xlu0 %5337
    %5339 = vrot.lane.b32.xlu0 %v5274, 12
    %v5340 = vpop.permute.xlu0 %5339
    %v5341 = vsel %vm463, %v5338, %v5340
    %5344 = vst.msk [vmem:[#allocation2 + $0x30] sm:$0xff] %vm474, %v5338
    %5345 = vst.msk [vmem:[#allocation2 + $0x38] sm:$0xff] %vm476, %v5341
    %v5346 = vld [vmem:[#allocation2] sm:$0xff]
    %v5347 = vld [vmem:[#allocation2 + $0x8] sm:$0xff]
    %v5348 = vld [vmem:[#allocation2 + $0x10] sm:$0xff]
    %v5349 = vld [vmem:[#allocation2 + $0x18] sm:$0xff]
    %v5350 = vld [vmem:[#allocation2 + $0x20] sm:$0xff]
    %v5351 = vld [vmem:[#allocation2 + $0x28] sm:$0xff]
    %v5352 = vld [vmem:[#allocation2 + $0x30] sm:$0xff]
    %v5353 = vld [vmem:[#allocation2 + $0x38] sm:$0xff]
    %v5354 = vpack.c.bf16 %v5346, %v5346
    %v5355 = vpack.c.bf16 %v5347, %v5347
    %v5356 = vpack.c.bf16 %v5348, %v5348
    %v5357 = vpack.c.bf16 %v5349, %v5349
    %v5358 = vpack.c.bf16 %v5350, %v5350
    %v5359 = vpack.c.bf16 %v5351, %v5351
    %v5360 = vpack.c.bf16 %v5352, %v5352
    %v5361 = vpack.c.bf16 %v5353, %v5353
    %v5362 = vld [vmem:[#allocation8] sm:$0xf]
    %v5363 = vld [vmem:[#allocation8 + $0x4] sm:$0xf]
    %v5364 = vld [vmem:[#allocation8 + $0x8] sm:$0xf]
    %v5365 = vld [vmem:[#allocation8 + $0xc] sm:$0xf]
    %v5366 = vld [vmem:[#allocation8 + $0x10] sm:$0xf]
    %v5367 = vld [vmem:[#allocation8 + $0x14] sm:$0xf]
    %v5368 = vld [vmem:[#allocation8 + $0x18] sm:$0xf]
    %v5369 = vld [vmem:[#allocation8 + $0x1c] sm:$0xf]
    %v5370 = vld [vmem:[#allocation8 + $0x20] sm:$0xf]
    %v5371 = vld [vmem:[#allocation8 + $0x24] sm:$0xf]
    %v5372 = vld [vmem:[#allocation8 + $0x28] sm:$0xf]
    %v5373 = vld [vmem:[#allocation8 + $0x2c] sm:$0xf]
    %v5374 = vld [vmem:[#allocation8 + $0x30] sm:$0xf]
    %v5375 = vld [vmem:[#allocation8 + $0x34] sm:$0xf]
    %v5376 = vld [vmem:[#allocation8 + $0x38] sm:$0xf]
    %v5377 = vld [vmem:[#allocation8 + $0x3c] sm:$0xf]
    %v5378 = vld [vmem:[#allocation8 + $0x40] sm:$0xf]
    %v5379 = vld [vmem:[#allocation8 + $0x44] sm:$0xf]
    %v5380 = vld [vmem:[#allocation8 + $0x48] sm:$0xf]
    %v5381 = vld [vmem:[#allocation8 + $0x4c] sm:$0xf]
    %v5382 = vld [vmem:[#allocation8 + $0x50] sm:$0xf]
    %v5383 = vld [vmem:[#allocation8 + $0x54] sm:$0xf]
    %v5384 = vld [vmem:[#allocation8 + $0x58] sm:$0xf]
    %v5385 = vld [vmem:[#allocation8 + $0x5c] sm:$0xf]
    %v5386 = vld [vmem:[#allocation8 + $0x60] sm:$0xf]
    %v5387 = vld [vmem:[#allocation8 + $0x64] sm:$0xf]
    %v5388 = vld [vmem:[#allocation8 + $0x68] sm:$0xf]
    %v5389 = vld [vmem:[#allocation8 + $0x6c] sm:$0xf]
    %v5390 = vld [vmem:[#allocation8 + $0x70] sm:$0xf]
    %v5391 = vld [vmem:[#allocation8 + $0x74] sm:$0xf]
    %v5392 = vld [vmem:[#allocation8 + $0x78] sm:$0xf]
    %v5393 = vld [vmem:[#allocation8 + $0x7c] sm:$0xf]
    %v5394 = vld [vmem:[#allocation8 + $0x80] sm:$0xf]
    %v5395 = vld [vmem:[#allocation8 + $0x84] sm:$0xf]
    %v5396 = vld [vmem:[#allocation8 + $0x88] sm:$0xf]
    %v5397 = vld [vmem:[#allocation8 + $0x8c] sm:$0xf]
    %v5398 = vld [vmem:[#allocation8 + $0x90] sm:$0xf]
    %v5399 = vld [vmem:[#allocation8 + $0x94] sm:$0xf]
    %v5400 = vld [vmem:[#allocation8 + $0x98] sm:$0xf]
    %v5401 = vld [vmem:[#allocation8 + $0x9c] sm:$0xf]
    %v5402 = vld [vmem:[#allocation8 + $0xa0] sm:$0xf]
    %v5403 = vld [vmem:[#allocation8 + $0xa4] sm:$0xf]
    %v5404 = vld [vmem:[#allocation8 + $0xa8] sm:$0xf]
    %v5405 = vld [vmem:[#allocation8 + $0xac] sm:$0xf]
    %v5406 = vld [vmem:[#allocation8 + $0xb0] sm:$0xf]
    %v5407 = vld [vmem:[#allocation8 + $0xb4] sm:$0xf]
    %v5408 = vld [vmem:[#allocation8 + $0xb8] sm:$0xf]
    %v5409 = vld [vmem:[#allocation8 + $0xbc] sm:$0xf]
    %v5410 = vld [vmem:[#allocation8 + $0xc0] sm:$0xf]
    %v5411 = vld [vmem:[#allocation8 + $0xc4] sm:$0xf]
    %v5412 = vld [vmem:[#allocation8 + $0xc8] sm:$0xf]
    %v5413 = vld [vmem:[#allocation8 + $0xcc] sm:$0xf]
    %v5414 = vld [vmem:[#allocation8 + $0xd0] sm:$0xf]
    %v5415 = vld [vmem:[#allocation8 + $0xd4] sm:$0xf]
    %v5416 = vld [vmem:[#allocation8 + $0xd8] sm:$0xf]
    %v5417 = vld [vmem:[#allocation8 + $0xdc] sm:$0xf]
    %v5418 = vld [vmem:[#allocation8 + $0xe0] sm:$0xf]
    %v5419 = vld [vmem:[#allocation8 + $0xe4] sm:$0xf]
    %v5420 = vld [vmem:[#allocation8 + $0xe8] sm:$0xf]
    %v5421 = vld [vmem:[#allocation8 + $0xec] sm:$0xf]
    %v5422 = vld [vmem:[#allocation8 + $0xf0] sm:$0xf]
    %v5423 = vld [vmem:[#allocation8 + $0xf4] sm:$0xf]
    %v5424 = vld [vmem:[#allocation8 + $0xf8] sm:$0xf]
    %v5425 = vld [vmem:[#allocation8 + $0xfc] sm:$0xf]
    %v5426 = vld [vmem:[#allocation8 + $0x100] sm:$0xf]
    %v5427 = vld [vmem:[#allocation8 + $0x104] sm:$0xf]
    %v5428 = vld [vmem:[#allocation8 + $0x108] sm:$0xf]
    %v5429 = vld [vmem:[#allocation8 + $0x10c] sm:$0xf]
    %v5430 = vld [vmem:[#allocation8 + $0x110] sm:$0xf]
    %v5431 = vld [vmem:[#allocation8 + $0x114] sm:$0xf]
    %v5432 = vld [vmem:[#allocation8 + $0x118] sm:$0xf]
    %v5433 = vld [vmem:[#allocation8 + $0x11c] sm:$0xf]
    %v5434 = vld [vmem:[#allocation8 + $0x120] sm:$0xf]
    %v5435 = vld [vmem:[#allocation8 + $0x124] sm:$0xf]
    %v5436 = vld [vmem:[#allocation8 + $0x128] sm:$0xf]
    %v5437 = vld [vmem:[#allocation8 + $0x12c] sm:$0xf]
    %v5438 = vld [vmem:[#allocation8 + $0x130] sm:$0xf]
    %v5439 = vld [vmem:[#allocation8 + $0x134] sm:$0xf]
    %v5440 = vld [vmem:[#allocation8 + $0x138] sm:$0xf]
    %v5441 = vld [vmem:[#allocation8 + $0x13c] sm:$0xf]
    %v5442 = vld [vmem:[#allocation8 + $0x140] sm:$0xf]
    %v5443 = vld [vmem:[#allocation8 + $0x144] sm:$0xf]
    %v5444 = vld [vmem:[#allocation8 + $0x148] sm:$0xf]
    %v5445 = vld [vmem:[#allocation8 + $0x14c] sm:$0xf]
    %v5446 = vld [vmem:[#allocation8 + $0x150] sm:$0xf]
    %v5447 = vld [vmem:[#allocation8 + $0x154] sm:$0xf]
    %v5448 = vld [vmem:[#allocation8 + $0x158] sm:$0xf]
    %v5449 = vld [vmem:[#allocation8 + $0x15c] sm:$0xf]
    %v5450 = vld [vmem:[#allocation8 + $0x160] sm:$0xf]
    %v5451 = vld [vmem:[#allocation8 + $0x164] sm:$0xf]
    %v5452 = vld [vmem:[#allocation8 + $0x168] sm:$0xf]
    %v5453 = vld [vmem:[#allocation8 + $0x16c] sm:$0xf]
    %v5454 = vld [vmem:[#allocation8 + $0x170] sm:$0xf]
    %v5455 = vld [vmem:[#allocation8 + $0x174] sm:$0xf]
    %v5456 = vld [vmem:[#allocation8 + $0x178] sm:$0xf]
    %v5457 = vld [vmem:[#allocation8 + $0x17c] sm:$0xf]
    %v5458 = vld [vmem:[#allocation8 + $0x180] sm:$0xf]
    %v5459 = vld [vmem:[#allocation8 + $0x184] sm:$0xf]
    %v5460 = vld [vmem:[#allocation8 + $0x188] sm:$0xf]
    %v5461 = vld [vmem:[#allocation8 + $0x18c] sm:$0xf]
    %v5462 = vld [vmem:[#allocation8 + $0x190] sm:$0xf]
    %v5463 = vld [vmem:[#allocation8 + $0x194] sm:$0xf]
    %v5464 = vld [vmem:[#allocation8 + $0x198] sm:$0xf]
    %v5465 = vld [vmem:[#allocation8 + $0x19c] sm:$0xf]
    %v5466 = vld [vmem:[#allocation8 + $0x1a0] sm:$0xf]
    %v5467 = vld [vmem:[#allocation8 + $0x1a4] sm:$0xf]
    %v5468 = vld [vmem:[#allocation8 + $0x1a8] sm:$0xf]
    %v5469 = vld [vmem:[#allocation8 + $0x1ac] sm:$0xf]
    %v5470 = vld [vmem:[#allocation8 + $0x1b0] sm:$0xf]
    %v5471 = vld [vmem:[#allocation8 + $0x1b4] sm:$0xf]
    %v5472 = vld [vmem:[#allocation8 + $0x1b8] sm:$0xf]
    %v5473 = vld [vmem:[#allocation8 + $0x1bc] sm:$0xf]
    %v5474 = vld [vmem:[#allocation8 + $0x1c0] sm:$0xf]
    %v5475 = vld [vmem:[#allocation8 + $0x1c4] sm:$0x7]
    %v5476 = vld [vmem:[#allocation3] sm:$0xff]
    %5478 = vset.pattern.permute.xlu0 0
    %5479 = vperm.xlu0 %5478, %v5476
    %v5480 = vpop.permute.xlu0 %5479
    %v5596 = vunpack.c.l.b16 %v5362
    %v5597 = vunpack.c.l.b16 %v5363
    %v5598 = vunpack.c.l.b16 %v5364
    %v5599 = vunpack.c.l.b16 %v5365
    %v5600 = vunpack.c.l.b16 %v5366
    %v5601 = vunpack.c.l.b16 %v5367
    %v5602 = vunpack.c.l.b16 %v5368
    %v5603 = vunpack.c.l.b16 %v5369
    %v5604 = vunpack.c.l.b16 %v5370
    %v5605 = vunpack.c.l.b16 %v5371
    %v5606 = vunpack.c.l.b16 %v5372
    %v5607 = vunpack.c.l.b16 %v5373
    %v5608 = vunpack.c.l.b16 %v5374
    %v5609 = vunpack.c.l.b16 %v5375
    %v5610 = vunpack.c.l.b16 %v5376
    %v5611 = vunpack.c.l.b16 %v5377
    %v5612 = vunpack.c.l.b16 %v5378
    %v5613 = vunpack.c.l.b16 %v5379
    %v5614 = vunpack.c.l.b16 %v5380
    %v5615 = vunpack.c.l.b16 %v5381
    %v5616 = vunpack.c.l.b16 %v5382
    %v5617 = vunpack.c.l.b16 %v5383
    %v5618 = vunpack.c.l.b16 %v5384
    %v5619 = vunpack.c.l.b16 %v5385
    %v5620 = vunpack.c.l.b16 %v5386
    %v5621 = vunpack.c.l.b16 %v5387
    %v5622 = vunpack.c.l.b16 %v5388
    %v5623 = vunpack.c.l.b16 %v5389
    %v5624 = vunpack.c.l.b16 %v5390
    %v5625 = vunpack.c.l.b16 %v5391
    %v5626 = vunpack.c.l.b16 %v5392
    %v5627 = vunpack.c.l.b16 %v5393
    %v5628 = vunpack.c.l.b16 %v5394
    %v5629 = vunpack.c.l.b16 %v5395
    %v5630 = vunpack.c.l.b16 %v5396
    %v5631 = vunpack.c.l.b16 %v5397
    %v5632 = vunpack.c.l.b16 %v5398
    %v5633 = vunpack.c.l.b16 %v5399
    %v5634 = vunpack.c.l.b16 %v5400
    %v5635 = vunpack.c.l.b16 %v5401
    %v5636 = vunpack.c.l.b16 %v5402
    %v5637 = vunpack.c.l.b16 %v5403
    %v5638 = vunpack.c.l.b16 %v5404
    %v5639 = vunpack.c.l.b16 %v5405
    %v5640 = vunpack.c.l.b16 %v5406
    %v5641 = vunpack.c.l.b16 %v5407
    %v5642 = vunpack.c.l.b16 %v5408
    %v5643 = vunpack.c.l.b16 %v5409
    %v5644 = vunpack.c.l.b16 %v5410
    %v5645 = vunpack.c.l.b16 %v5411
    %v5646 = vunpack.c.l.b16 %v5412
    %v5647 = vunpack.c.l.b16 %v5413
    %v5648 = vunpack.c.l.b16 %v5414
    %v5649 = vunpack.c.l.b16 %v5415
    %v5650 = vunpack.c.l.b16 %v5416
    %v5651 = vunpack.c.l.b16 %v5417
    %v5652 = vunpack.c.l.b16 %v5418
    %v5653 = vunpack.c.l.b16 %v5419
    %v5654 = vunpack.c.l.b16 %v5420
    %v5655 = vunpack.c.l.b16 %v5421
    %v5656 = vunpack.c.l.b16 %v5422
    %v5657 = vunpack.c.l.b16 %v5423
    %v5658 = vunpack.c.l.b16 %v5424
    %v5659 = vunpack.c.l.b16 %v5425
    %v5660 = vunpack.c.l.b16 %v5426
    %v5661 = vunpack.c.l.b16 %v5427
    %v5662 = vunpack.c.l.b16 %v5428
    %v5663 = vunpack.c.l.b16 %v5429
    %v5664 = vunpack.c.l.b16 %v5430
    %v5665 = vunpack.c.l.b16 %v5431
    %v5666 = vunpack.c.l.b16 %v5432
    %v5667 = vunpack.c.l.b16 %v5433
    %v5668 = vunpack.c.l.b16 %v5434
    %v5669 = vunpack.c.l.b16 %v5435
    %v5670 = vunpack.c.l.b16 %v5436
    %v5671 = vunpack.c.l.b16 %v5437
    %v5672 = vunpack.c.l.b16 %v5438
    %v5673 = vunpack.c.l.b16 %v5439
    %v5674 = vunpack.c.l.b16 %v5440
    %v5675 = vunpack.c.l.b16 %v5441
    %v5676 = vunpack.c.l.b16 %v5442
    %v5677 = vunpack.c.l.b16 %v5443
    %v5678 = vunpack.c.l.b16 %v5444
    %v5679 = vunpack.c.l.b16 %v5445
    %v5680 = vunpack.c.l.b16 %v5446
    %v5681 = vunpack.c.l.b16 %v5447
    %v5682 = vunpack.c.l.b16 %v5448
    %v5683 = vunpack.c.l.b16 %v5449
    %v5684 = vunpack.c.l.b16 %v5450
    %v5685 = vunpack.c.l.b16 %v5451
    %v5686 = vunpack.c.l.b16 %v5452
    %v5687 = vunpack.c.l.b16 %v5453
    %v5688 = vunpack.c.l.b16 %v5454
    %v5689 = vunpack.c.l.b16 %v5455
    %v5690 = vunpack.c.l.b16 %v5456
    %v5691 = vunpack.c.l.b16 %v5457
    %v5692 = vunpack.c.l.b16 %v5458
    %v5693 = vunpack.c.l.b16 %v5459
    %v5694 = vunpack.c.l.b16 %v5460
    %v5695 = vunpack.c.l.b16 %v5461
    %v5696 = vunpack.c.l.b16 %v5462
    %v5697 = vunpack.c.l.b16 %v5463
    %v5698 = vunpack.c.l.b16 %v5464
    %v5699 = vunpack.c.l.b16 %v5465
    %v5700 = vunpack.c.l.b16 %v5466
    %v5701 = vunpack.c.l.b16 %v5467
    %v5702 = vunpack.c.l.b16 %v5468
    %v5703 = vunpack.c.l.b16 %v5469
    %v5704 = vunpack.c.l.b16 %v5470
    %v5705 = vunpack.c.l.b16 %v5471
    %v5706 = vunpack.c.l.b16 %v5472
    %v5707 = vunpack.c.l.b16 %v5473
    %v5708 = vunpack.c.l.b16 %v5474
    %v5709 = vunpack.c.l.b16 %v5475
    %v5710 = vpack.c.b16 %v5597, %v5596
    %v5711 = vpack.c.b16 %v5599, %v5598
    %v5712 = vpack.c.b16 %v5601, %v5600
    %v5713 = vpack.c.b16 %v5603, %v5602
    %v5714 = vpack.c.b16 %v5605, %v5604
    %v5715 = vpack.c.b16 %v5607, %v5606
    %v5716 = vpack.c.b16 %v5609, %v5608
    %v5717 = vpack.c.b16 %v5611, %v5610
    %v5718 = vpack.c.b16 %v5613, %v5612
    %v5719 = vpack.c.b16 %v5615, %v5614
    %v5720 = vpack.c.b16 %v5617, %v5616
    %v5721 = vpack.c.b16 %v5619, %v5618
    %v5722 = vpack.c.b16 %v5621, %v5620
    %v5723 = vpack.c.b16 %v5623, %v5622
    %v5724 = vpack.c.b16 %v5625, %v5624
    %v5725 = vpack.c.b16 %v5627, %v5626
    %v5726 = vpack.c.b16 %v5629, %v5628
    %v5727 = vpack.c.b16 %v5631, %v5630
    %v5728 = vpack.c.b16 %v5633, %v5632
    %v5729 = vpack.c.b16 %v5635, %v5634
    %v5730 = vpack.c.b16 %v5637, %v5636
    %v5731 = vpack.c.b16 %v5639, %v5638
    %v5732 = vpack.c.b16 %v5641, %v5640
    %v5733 = vpack.c.b16 %v5643, %v5642
    %v5734 = vpack.c.b16 %v5645, %v5644
    %v5735 = vpack.c.b16 %v5647, %v5646
    %v5736 = vpack.c.b16 %v5649, %v5648
    %v5737 = vpack.c.b16 %v5651, %v5650
    %v5738 = vpack.c.b16 %v5653, %v5652
    %v5739 = vpack.c.b16 %v5655, %v5654
    %v5740 = vpack.c.b16 %v5657, %v5656
    %v5741 = vpack.c.b16 %v5659, %v5658
    %v5742 = vpack.c.b16 %v5661, %v5660
    %v5743 = vpack.c.b16 %v5663, %v5662
    %v5744 = vpack.c.b16 %v5665, %v5664
    %v5745 = vpack.c.b16 %v5667, %v5666
    %v5746 = vpack.c.b16 %v5669, %v5668
    %v5747 = vpack.c.b16 %v5671, %v5670
    %v5748 = vpack.c.b16 %v5673, %v5672
    %v5749 = vpack.c.b16 %v5675, %v5674
    %v5750 = vpack.c.b16 %v5677, %v5676
    %v5751 = vpack.c.b16 %v5679, %v5678
    %v5752 = vpack.c.b16 %v5681, %v5680
    %v5753 = vpack.c.b16 %v5683, %v5682
    %v5754 = vpack.c.b16 %v5685, %v5684
    %v5755 = vpack.c.b16 %v5687, %v5686
    %v5756 = vpack.c.b16 %v5689, %v5688
    %v5757 = vpack.c.b16 %v5691, %v5690
    %v5758 = vpack.c.b16 %v5693, %v5692
    %v5759 = vpack.c.b16 %v5695, %v5694
    %v5760 = vpack.c.b16 %v5697, %v5696
    %v5761 = vpack.c.b16 %v5699, %v5698
    %v5762 = vpack.c.b16 %v5701, %v5700
    %v5763 = vpack.c.b16 %v5703, %v5702
    %v5764 = vpack.c.b16 %v5705, %v5704
    %v5765 = vpack.c.b16 %v5707, %v5706
    %v5766 = vpack.c.b16 %v5709, %v5708
    %v5824 = vsel %vm476, %v5361, 0
    %v5827 = vsel %vm958, %v5766, 0
    %5829 = vmatprep.subr.bf16.mxu0 0
    %5830 = vmatpush1.bf16.msra.mxu0 %v5710
    %5831 = vmatprep.subr.bf16.mxu0 0
    %5832 = vmatpush1.bf16.msra.mxu0 %v5711
    %5833 = vmatprep.subr.bf16.mxu0 0
    %5834 = vmatpush1.bf16.msra.mxu0 %v5712
    %5835 = vmatprep.subr.bf16.mxu0 0
    %5836 = vmatpush1.bf16.msra.mxu0 %v5713
    %5837 = vmatprep.subr.bf16.mxu0 0
    %5838 = vmatpush1.bf16.msra.mxu0 %v5714
    %5839 = vmatprep.subr.bf16.mxu0 0
    %5840 = vmatpush1.bf16.msra.mxu0 %v5715
    %5841 = vmatprep.subr.bf16.mxu0 0
    %5842 = vmatpush1.bf16.msra.mxu0 %v5716
    %5843 = vmatprep.subr.bf16.mxu0 0
    %5844 = vmatpush1.bf16.msra.mxu0 %v5717
    %5845 = vmatprep.subr.bf16.mxu0 0
    %5846 = vmatpush1.bf16.msra.mxu0 %v5718
    %5847 = vmatprep.subr.bf16.mxu0 0
    %5848 = vmatpush1.bf16.msra.mxu0 %v5719
    %5849 = vmatprep.subr.bf16.mxu0 0
    %5850 = vmatpush1.bf16.msra.mxu0 %v5720
    %5851 = vmatprep.subr.bf16.mxu0 0
    %5852 = vmatpush1.bf16.msra.mxu0 %v5721
    %5853 = vmatprep.subr.bf16.mxu0 0
    %5854 = vmatpush1.bf16.msra.mxu0 %v5722
    %5855 = vmatprep.subr.bf16.mxu0 0
    %5856 = vmatpush1.bf16.msra.mxu0 %v5723
    %5857 = vmatprep.subr.bf16.mxu0 0
    %5858 = vmatpush1.bf16.msra.mxu0 %v5724
    %5859 = vmatprep.subr.bf16.mxu0 0
    %5860 = vmatpush1.bf16.msra.mxu0 %v5725
    %5861 = vmatprep.mubr.bf16.mxu0 %v5355
    %5862 = vmatmul.mubr.bf16.gmra.mrb[0].mxu0 %v5354
    %v5863 = vpop.f32.mrb[0].mxu0
    %v5864 = vadd.f32 %v5480, %v5863
    %v5865 = vpop.f32.mrb[0].mxu0
    %v5866 = vpop.f32.mrb[0].mxu0
    %v5867 = vpop.f32.mrb[0].mxu0
    %5868 = vdwg.mxu0
    %5869 = vmatprep.subr.bf16.mxu0 0
    %5870 = vmatpush1.bf16.msra.mxu0 %v5726
    %5871 = vmatprep.subr.bf16.mxu0 0
    %5872 = vmatpush1.bf16.msra.mxu0 %v5727
    %5873 = vmatprep.subr.bf16.mxu0 0
    %5874 = vmatpush1.bf16.msra.mxu0 %v5728
    %5875 = vmatprep.subr.bf16.mxu0 0
    %5876 = vmatpush1.bf16.msra.mxu0 %v5729
    %5877 = vmatprep.subr.bf16.mxu0 0
    %5878 = vmatpush1.bf16.msra.mxu0 %v5730
    %5879 = vmatprep.subr.bf16.mxu0 0
    %5880 = vmatpush1.bf16.msra.mxu0 %v5731
    %5881 = vmatprep.subr.bf16.mxu0 0
    %5882 = vmatpush1.bf16.msra.mxu0 %v5732
    %5883 = vmatprep.subr.bf16.mxu0 0
    %5884 = vmatpush1.bf16.msra.mxu0 %v5733
    %5885 = vmatprep.subr.bf16.mxu0 0
    %5886 = vmatpush1.bf16.msra.mxu0 %v5734
    %5887 = vmatprep.subr.bf16.mxu0 0
    %5888 = vmatpush1.bf16.msra.mxu0 %v5735
    %5889 = vmatprep.subr.bf16.mxu0 0
    %5890 = vmatpush1.bf16.msra.mxu0 %v5736
    %5891 = vmatprep.subr.bf16.mxu0 0
    %5892 = vmatpush1.bf16.msra.mxu0 %v5737
    %5893 = vmatprep.subr.bf16.mxu0 0
    %5894 = vmatpush1.bf16.msra.mxu0 %v5738
    %5895 = vmatprep.subr.bf16.mxu0 0
    %5896 = vmatpush1.bf16.msra.mxu0 %v5739
    %5897 = vmatprep.subr.bf16.mxu0 0
    %5898 = vmatpush1.bf16.msra.mxu0 %v5740
    %5899 = vmatprep.subr.bf16.mxu0 0
    %5900 = vmatpush1.bf16.msra.mxu0 %v5741
    %5901 = vmatprep.mubr.bf16.mxu0 %v5357
    %5902 = vmatmul.mubr.bf16.gmra.mrb[0].mxu0 %v5356
    %v5903 = vpop.f32.mrb[0].mxu0
    %v5904 = vadd.f32 %v5864, %v5903
    %v5905 = vpop.f32.mrb[0].mxu0
    %v5906 = vpop.f32.mrb[0].mxu0
    %v5907 = vpop.f32.mrb[0].mxu0
    %5908 = vdwg.mxu0
    %5909 = vmatprep.subr.bf16.mxu0 0
    %5910 = vmatpush1.bf16.msra.mxu0 %v5742
    %5911 = vmatprep.subr.bf16.mxu0 0
    %5912 = vmatpush1.bf16.msra.mxu0 %v5743
    %5913 = vmatprep.subr.bf16.mxu0 0
    %5914 = vmatpush1.bf16.msra.mxu0 %v5744
    %5915 = vmatprep.subr.bf16.mxu0 0
    %5916 = vmatpush1.bf16.msra.mxu0 %v5745
    %5917 = vmatprep.subr.bf16.mxu0 0
    %5918 = vmatpush1.bf16.msra.mxu0 %v5746
    %5919 = vmatprep.subr.bf16.mxu0 0
    %5920 = vmatpush1.bf16.msra.mxu0 %v5747
    %5921 = vmatprep.subr.bf16.mxu0 0
    %5922 = vmatpush1.bf16.msra.mxu0 %v5748
    %5923 = vmatprep.subr.bf16.mxu0 0
    %5924 = vmatpush1.bf16.msra.mxu0 %v5749
    %5925 = vmatprep.subr.bf16.mxu0 0
    %5926 = vmatpush1.bf16.msra.mxu0 %v5750
    %5927 = vmatprep.subr.bf16.mxu0 0
    %5928 = vmatpush1.bf16.msra.mxu0 %v5751
    %5929 = vmatprep.subr.bf16.mxu0 0
    %5930 = vmatpush1.bf16.msra.mxu0 %v5752
    %5931 = vmatprep.subr.bf16.mxu0 0
    %5932 = vmatpush1.bf16.msra.mxu0 %v5753
    %5933 = vmatprep.subr.bf16.mxu0 0
    %5934 = vmatpush1.bf16.msra.mxu0 %v5754
    %5935 = vmatprep.subr.bf16.mxu0 0
    %5936 = vmatpush1.bf16.msra.mxu0 %v5755
    %5937 = vmatprep.subr.bf16.mxu0 0
    %5938 = vmatpush1.bf16.msra.mxu0 %v5756
    %5939 = vmatprep.subr.bf16.mxu0 0
    %5940 = vmatpush1.bf16.msra.mxu0 %v5757
    %5941 = vmatprep.mubr.bf16.mxu0 %v5359
    %5942 = vmatmul.mubr.bf16.gmra.mrb[0].mxu0 %v5358
    %v5943 = vpop.f32.mrb[0].mxu0
    %v5944 = vadd.f32 %v5904, %v5943
    %v5945 = vpop.f32.mrb[0].mxu0
    %v5946 = vpop.f32.mrb[0].mxu0
    %v5947 = vpop.f32.mrb[0].mxu0
    %5948 = vdwg.mxu0
    %5949 = vmatprep.subr.bf16.mxu0 0
    %5950 = vmatpush1.bf16.msra.mxu0 %v5758
    %5951 = vmatprep.subr.bf16.mxu0 0
    %5952 = vmatpush1.bf16.msra.mxu0 %v5759
    %5953 = vmatprep.subr.bf16.mxu0 0
    %5954 = vmatpush1.bf16.msra.mxu0 %v5760
    %5955 = vmatprep.subr.bf16.mxu0 0
    %5956 = vmatpush1.bf16.msra.mxu0 %v5761
    %5957 = vmatprep.subr.bf16.mxu0 0
    %5958 = vmatpush1.bf16.msra.mxu0 %v5762
    %5959 = vmatprep.subr.bf16.mxu0 0
    %5960 = vmatpush1.bf16.msra.mxu0 %v5763
    %5961 = vmatprep.subr.bf16.mxu0 0
    %5962 = vmatpush1.bf16.msra.mxu0 %v5764
    %5963 = vmatprep.subr.bf16.mxu0 0
    %5964 = vmatpush1.bf16.msra.mxu0 %v5765
    %5965 = vmatprep.subr.bf16.mxu0 0
    %5966 = vmatpush1.bf16.msra.mxu0 %v5827
    %5967 = vmatprep.subr.bf16.mxu0 0
    %5968 = vmatpush1.bf16.msra.mxu0 0
    %5969 = vmatprep.subr.bf16.mxu0 0
    %5970 = vmatpush1.bf16.msra.mxu0 0
    %5971 = vmatprep.subr.bf16.mxu0 0
    %5972 = vmatpush1.bf16.msra.mxu0 0
    %5973 = vmatprep.subr.bf16.mxu0 0
    %5974 = vmatpush1.bf16.msra.mxu0 0
    %5975 = vmatprep.subr.bf16.mxu0 0
    %5976 = vmatpush1.bf16.msra.mxu0 0
    %5977 = vmatprep.subr.bf16.mxu0 0
    %5978 = vmatpush1.bf16.msra.mxu0 0
    %5979 = vmatprep.subr.bf16.mxu0 0
    %5980 = vmatpush1.bf16.msra.mxu0 0
    %5981 = vmatprep.mubr.bf16.mxu0 %v5824
    %5982 = vmatmul.mubr.bf16.gmra.mrb[0].mxu0 %v5360
    %v5983 = vpop.f32.mrb[0].mxu0
    %v5984 = vadd.f32 %v5944, %v5983
    %v5985 = vpop.f32.mrb[0].mxu0
    %v5986 = vpop.f32.mrb[0].mxu0
    %v5987 = vpop.f32.mrb[0].mxu0
    %5988 = vdwg.mxu0
    %v5989 = vmax.f32 %v5984, 0.0
    %v5990 = vld [vmem:[#allocation9] sm:$0xf]
    %v5991 = vld [vmem:[#allocation9 + $0x4] sm:$0xf]
    %v5992 = vld [vmem:[#allocation9 + $0x8] sm:$0xf]
    %v5993 = vld [vmem:[#allocation9 + $0xc] sm:$0xf]
    %v5994 = vld [vmem:[#allocation9 + $0x10] sm:$0xf]
    %v5995 = vld [vmem:[#allocation9 + $0x14] sm:$0xf]
    %v5996 = vld [vmem:[#allocation9 + $0x18] sm:$0xf]
    %v5997 = vld [vmem:[#allocation9 + $0x1c] sm:$0xf]
    %v5998 = vld [vmem:[#allocation9 + $0x20] sm:$0xf]
    %v5999 = vld [vmem:[#allocation9 + $0x24] sm:$0xf]
    %v6000 = vld [vmem:[#allocation9 + $0x28] sm:$0xf]
    %v6001 = vld [vmem:[#allocation9 + $0x2c] sm:$0xf]
    %v6002 = vld [vmem:[#allocation9 + $0x30] sm:$0xf]
    %v6003 = vld [vmem:[#allocation9 + $0x34] sm:$0xf]
    %v6004 = vpack.c.bf16 %v5989, %v5989
    %v6019 = vunpack.c.l.b16 %v5990
    %v6020 = vunpack.c.l.b16 %v5991
    %v6021 = vunpack.c.l.b16 %v5992
    %v6022 = vunpack.c.l.b16 %v5993
    %v6023 = vunpack.c.l.b16 %v5994
    %v6024 = vunpack.c.l.b16 %v5995
    %v6025 = vunpack.c.l.b16 %v5996
    %v6026 = vunpack.c.l.b16 %v5997
    %v6027 = vunpack.c.l.b16 %v5998
    %v6028 = vunpack.c.l.b16 %v5999
    %v6029 = vunpack.c.l.b16 %v6000
    %v6030 = vunpack.c.l.b16 %v6001
    %v6031 = vunpack.c.l.b16 %v6002
    %v6032 = vunpack.c.l.b16 %v6003
    %v6033 = vpack.c.b16 %v6020, %v6019
    %v6034 = vpack.c.b16 %v6022, %v6021
    %v6035 = vpack.c.b16 %v6024, %v6023
    %v6036 = vpack.c.b16 %v6026, %v6025
    %v6037 = vpack.c.b16 %v6028, %v6027
    %v6038 = vpack.c.b16 %v6030, %v6029
    %v6039 = vpack.c.b16 %v6032, %v6031
    %v6041 = vsel %vm307, %v6033, 0
    %v6044 = vsel %vm307, %v6034, 0
    %v6047 = vsel %vm307, %v6035, 0
    %v6050 = vsel %vm307, %v6036, 0
    %v6053 = vsel %vm307, %v6037, 0
    %v6056 = vsel %vm307, %v6038, 0
    %v6059 = vsel %vm307, %v6039, 0
    %v6062 = vsel %vm320, %v6004, 0
    %6064 = vmatprep.subr.bf16.mxu0 0
    %6065 = vmatpush1.bf16.msra.mxu0 %v6062
    %6066 = vmatprep.subr.bf16.mxu0 0
    %6067 = vmatpush1.bf16.msra.mxu0 0
    %6068 = vmatprep.subr.bf16.mxu0 0
    %6069 = vmatpush1.bf16.msra.mxu0 0
    %6070 = vmatprep.subr.bf16.mxu0 0
    %6071 = vmatpush1.bf16.msra.mxu0 0
    %6072 = vmatprep.subr.bf16.mxu0 0
    %6073 = vmatpush1.bf16.msra.mxu0 0
    %6074 = vmatprep.subr.bf16.mxu0 0
    %6075 = vmatpush1.bf16.msra.mxu0 0
    %6076 = vmatprep.subr.bf16.mxu0 0
    %6077 = vmatpush1.bf16.msra.mxu0 0
    %6078 = vmatprep.subr.bf16.mxu0 0
    %6079 = vmatpush1.bf16.msra.mxu0 0
    %6080 = vmatprep.subr.bf16.mxu0 0
    %6081 = vmatpush1.bf16.msra.mxu0 0
    %6082 = vmatprep.subr.bf16.mxu0 0
    %6083 = vmatpush1.bf16.msra.mxu0 0
    %6084 = vmatprep.subr.bf16.mxu0 0
    %6085 = vmatpush1.bf16.msra.mxu0 0
    %6086 = vmatprep.subr.bf16.mxu0 0
    %6087 = vmatpush1.bf16.msra.mxu0 0
    %6088 = vmatprep.subr.bf16.mxu0 0
    %6089 = vmatpush1.bf16.msra.mxu0 0
    %6090 = vmatprep.subr.bf16.mxu0 0
    %6091 = vmatpush1.bf16.msra.mxu0 0
    %6092 = vmatprep.subr.bf16.mxu0 0
    %6093 = vmatpush1.bf16.msra.mxu0 0
    %6094 = vmatprep.subr.bf16.mxu0 0
    %6095 = vmatpush1.bf16.msra.mxu0 0
    %6096 = vmatprep.mubr.bf16.mxu0 0
    %6097 = vmatmul.mubr.bf16.gmra.mrb[0].mxu0 %v6041
    %v6098 = vpop.f32.mrb[0].mxu0
    %v6099 = vadd.f32 0.0, %v6098
    %v6100 = vpop.f32.mrb[0].mxu0
    %v6101 = vpop.f32.mrb[0].mxu0
    %v6102 = vadd.f32 0.0, %v6101
    %v6103 = vpop.f32.mrb[0].mxu0
    %6104 = vmatprep.mubr.bf16.mxu0 0
    %6105 = vmatmul.mubr.bf16.gmra.mrb[0].mxu0 %v6044
    %v6106 = vpop.f32.mrb[0].mxu0
    %v6107 = vadd.f32 0.0, %v6106
    %v6108 = vpop.f32.mrb[0].mxu0
    %v6109 = vpop.f32.mrb[0].mxu0
    %v6110 = vadd.f32 0.0, %v6109
    %v6111 = vpop.f32.mrb[0].mxu0
    %6112 = vmatprep.mubr.bf16.mxu0 0
    %6113 = vmatmul.mubr.bf16.gmra.mrb[0].mxu0 %v6047
    %v6114 = vpop.f32.mrb[0].mxu0
    %v6115 = vadd.f32 0.0, %v6114
    %v6116 = vpop.f32.mrb[0].mxu0
    %v6117 = vpop.f32.mrb[0].mxu0
    %v6118 = vadd.f32 0.0, %v6117
    %v6119 = vpop.f32.mrb[0].mxu0
    %6120 = vmatprep.mubr.bf16.mxu0 0
    %6121 = vmatmul.mubr.bf16.gmra.mrb[0].mxu0 %v6050
    %v6122 = vpop.f32.mrb[0].mxu0
    %v6123 = vadd.f32 0.0, %v6122
    %v6124 = vpop.f32.mrb[0].mxu0
    %v6125 = vpop.f32.mrb[0].mxu0
    %v6126 = vadd.f32 0.0, %v6125
    %v6127 = vpop.f32.mrb[0].mxu0
    %6128 = vmatprep.mubr.bf16.mxu0 0
    %6129 = vmatmul.mubr.bf16.gmra.mrb[0].mxu0 %v6053
    %v6130 = vpop.f32.mrb[0].mxu0
    %v6131 = vadd.f32 0.0, %v6130
    %v6132 = vpop.f32.mrb[0].mxu0
    %v6133 = vpop.f32.mrb[0].mxu0
    %v6134 = vadd.f32 0.0, %v6133
    %v6135 = vpop.f32.mrb[0].mxu0
    %6136 = vmatprep.mubr.bf16.mxu0 0
    %6137 = vmatmul.mubr.bf16.gmra.mrb[0].mxu0 %v6056
    %v6138 = vpop.f32.mrb[0].mxu0
    %v6139 = vadd.f32 0.0, %v6138
    %v6140 = vpop.f32.mrb[0].mxu0
    %v6141 = vpop.f32.mrb[0].mxu0
    %v6142 = vadd.f32 0.0, %v6141
    %v6143 = vpop.f32.mrb[0].mxu0
    %6144 = vmatprep.mubr.bf16.mxu0 0
    %6145 = vmatmul.mubr.bf16.gmra.mrb[0].mxu0 %v6059
    %v6146 = vpop.f32.mrb[0].mxu0
    %v6147 = vadd.f32 0.0, %v6146
    %v6148 = vpop.f32.mrb[0].mxu0
    %v6149 = vpop.f32.mrb[0].mxu0
    %v6150 = vadd.f32 0.0, %v6149
    %v6151 = vpop.f32.mrb[0].mxu0
    %6152 = vdwg.mxu0
    %6153 = vst.msk [vmem:[#allocation2] sm:$0xff] %vm1286, %v6099
    %6154 = vst.msk [vmem:[#allocation2 + $0x40] sm:$0xff] %vm1286, %v6102
    %6157 = vrot.lane.b32.xlu0 %v6107, 65
    %v6158 = vpop.permute.xlu0 %6157
    %6159 = vrot.lane.b32.xlu0 %v6110, 65
    %v6160 = vpop.permute.xlu0 %6159
    %6163 = vst.msk [vmem:[#allocation2] sm:$0xff] %vm1297, %v6158
    %6164 = vst.msk [vmem:[#allocation2 + $0x8] sm:$0xff] %vm399, %v6158
    %6165 = vst.msk [vmem:[#allocation2 + $0x40] sm:$0xff] %vm1297, %v6160
    %6166 = vst.msk [vmem:[#allocation2 + $0x48] sm:$0xff] %vm399, %v6160
    %6169 = vrot.lane.b32.xlu0 %v6115, 2
    %v6170 = vpop.permute.xlu0 %6169
    %6171 = vrot.lane.b32.xlu0 %v6118, 2
    %v6172 = vpop.permute.xlu0 %6171
    %6175 = vst.msk [vmem:[#allocation2 + $0x8] sm:$0xff] %vm1310, %v6170
    %6176 = vst.msk [vmem:[#allocation2 + $0x48] sm:$0xff] %vm1310, %v6172
    %6179 = vrot.lane.b32.xlu0 %v6123, 67
    %v6180 = vpop.permute.xlu0 %6179
    %6181 = vrot.lane.b32.xlu0 %v6126, 67
    %v6182 = vpop.permute.xlu0 %6181
    %6185 = vst.msk [vmem:[#allocation2 + $0x8] sm:$0xff] %vm1321, %v6180
    %6186 = vst.msk [vmem:[#allocation2 + $0x10] sm:$0xff] %vm412, %v6180
    %6187 = vst.msk [vmem:[#allocation2 + $0x48] sm:$0xff] %vm1321, %v6182
    %6188 = vst.msk [vmem:[#allocation2 + $0x50] sm:$0xff] %vm412, %v6182
    %6191 = vrot.lane.b32.xlu0 %v6131, 4
    %v6192 = vpop.permute.xlu0 %6191
    %6193 = vrot.lane.b32.xlu0 %v6134, 4
    %v6194 = vpop.permute.xlu0 %6193
    %6197 = vst.msk [vmem:[#allocation2 + $0x10] sm:$0xff] %vm1334, %v6192
    %6198 = vst.msk [vmem:[#allocation2 + $0x50] sm:$0xff] %vm1334, %v6194
    %6201 = vrot.lane.b32.xlu0 %v6139, 69
    %v6202 = vpop.permute.xlu0 %6201
    %6203 = vrot.lane.b32.xlu0 %v6142, 69
    %v6204 = vpop.permute.xlu0 %6203
    %6207 = vst.msk [vmem:[#allocation2 + $0x10] sm:$0xff] %vm1345, %v6202
    %6208 = vst.msk [vmem:[#allocation2 + $0x18] sm:$0xff] %vm425, %v6202
    %6209 = vst.msk [vmem:[#allocation2 + $0x50] sm:$0xff] %vm1345, %v6204
    %6210 = vst.msk [vmem:[#allocation2 + $0x58] sm:$0xff] %vm425, %v6204
    %6213 = vrot.lane.b32.xlu0 %v6147, 6
    %v6214 = vpop.permute.xlu0 %6213
    %6215 = vrot.lane.b32.xlu0 %v6150, 6
    %v6216 = vpop.permute.xlu0 %6215
    %6219 = vst.msk [vmem:[#allocation2 + $0x18] sm:$0xff] %vm1358, %v6214
    %6220 = vst.msk [vmem:[#allocation2 + $0x58] sm:$0xff] %vm1358, %v6216
    %v6221 = vld [vmem:[#allocation2] sm:$0xff]
    %v6222 = vld [vmem:[#allocation2 + $0x8] sm:$0xff]
    %v6223 = vld [vmem:[#allocation2 + $0x10] sm:$0xff]
    %v6224 = vld [vmem:[#allocation2 + $0x18] sm:$0xff]
    %v6225 = vld [vmem:[#allocation2 + $0x40] sm:$0xff]
    %v6226 = vld [vmem:[#allocation2 + $0x48] sm:$0xff]
    %v6227 = vld [vmem:[#allocation2 + $0x50] sm:$0xff]
    %v6228 = vld [vmem:[#allocation2 + $0x58] sm:$0xff]
    %v6229 = vpack.c.bf16 %v6225, %v6221
    %v6230 = vpack.c.bf16 %v6226, %v6222
    %v6231 = vpack.c.bf16 %v6227, %v6223
    %v6232 = vpack.c.bf16 %v6228, %v6224
    %v6233 = vld [vmem:[#allocation11] sm:$0xf]
    %v6234 = vld [vmem:[#allocation11 + $0x4] sm:$0xf]
    %v6235 = vld [vmem:[#allocation11 + $0x8] sm:$0xf]
    %v6236 = vld [vmem:[#allocation11 + $0xc] sm:$0xf]
    %v6237 = vld [vmem:[#allocation11 + $0x10] sm:$0xf]
    %v6238 = vld [vmem:[#allocation11 + $0x14] sm:$0xf]
    %v6239 = vld [vmem:[#allocation11 + $0x18] sm:$0xf]
    %v6240 = vld [vmem:[#allocation11 + $0x1c] sm:$0xf]
    %v6241 = vld [vmem:[#allocation11 + $0x20] sm:$0xf]
    %v6242 = vld [vmem:[#allocation11 + $0x24] sm:$0xf]
    %v6243 = vld [vmem:[#allocation11 + $0x28] sm:$0xf]
    %v6244 = vld [vmem:[#allocation11 + $0x2c] sm:$0xf]
    %v6245 = vld [vmem:[#allocation11 + $0x30] sm:$0xf]
    %v6246 = vld [vmem:[#allocation11 + $0x34] sm:$0xf]
    %v6247 = vld [vmem:[#allocation11 + $0x38] sm:$0xf]
    %v6248 = vld [vmem:[#allocation11 + $0x3c] sm:$0xf]
    %v6249 = vld [vmem:[#allocation11 + $0x40] sm:$0xf]
    %v6250 = vld [vmem:[#allocation11 + $0x44] sm:$0xf]
    %v6251 = vld [vmem:[#allocation11 + $0x48] sm:$0xf]
    %v6252 = vld [vmem:[#allocation11 + $0x4c] sm:$0xf]
    %v6253 = vld [vmem:[#allocation11 + $0x50] sm:$0xf]
    %v6254 = vld [vmem:[#allocation11 + $0x54] sm:$0xf]
    %v6255 = vld [vmem:[#allocation11 + $0x58] sm:$0xf]
    %v6256 = vld [vmem:[#allocation11 + $0x5c] sm:$0xf]
    %v6257 = vld [vmem:[#allocation11 + $0x60] sm:$0xf]
    %v6258 = vld [vmem:[#allocation11 + $0x64] sm:$0xf]
    %v6259 = vld [vmem:[#allocation11 + $0x68] sm:$0xf]
    %v6260 = vld [vmem:[#allocation11 + $0x6c] sm:$0xf]
    %v6261 = vld [vmem:[#allocation11 + $0x70] sm:$0xf]
    %v6262 = vld [vmem:[#allocation11 + $0x74] sm:$0xf]
    %v6263 = vld [vmem:[#allocation11 + $0x78] sm:$0xf]
    %v6264 = vld [vmem:[#allocation11 + $0x7c] sm:$0xf]
    %v6265 = vld [vmem:[#allocation11 + $0x80] sm:$0xf]
    %v6266 = vld [vmem:[#allocation11 + $0x84] sm:$0xf]
    %v6267 = vld [vmem:[#allocation11 + $0x88] sm:$0xf]
    %v6268 = vld [vmem:[#allocation11 + $0x8c] sm:$0xf]
    %v6269 = vld [vmem:[#allocation11 + $0x90] sm:$0xf]
    %v6270 = vld [vmem:[#allocation11 + $0x94] sm:$0xf]
    %v6271 = vld [vmem:[#allocation11 + $0x98] sm:$0xf]
    %v6272 = vld [vmem:[#allocation11 + $0x9c] sm:$0xf]
    %v6273 = vld [vmem:[#allocation11 + $0xa0] sm:$0xf]
    %v6274 = vld [vmem:[#allocation11 + $0xa4] sm:$0xf]
    %v6275 = vld [vmem:[#allocation11 + $0xa8] sm:$0xf]
    %v6276 = vld [vmem:[#allocation11 + $0xac] sm:$0xf]
    %v6277 = vld [vmem:[#allocation11 + $0xb0] sm:$0xf]
    %v6278 = vld [vmem:[#allocation11 + $0xb4] sm:$0xf]
    %v6279 = vld [vmem:[#allocation11 + $0xb8] sm:$0xf]
    %v6280 = vld [vmem:[#allocation11 + $0xbc] sm:$0xf]
    %v6281 = vld [vmem:[#allocation11 + $0xc0] sm:$0xf]
    %v6282 = vld [vmem:[#allocation11 + $0xc4] sm:$0xf]
    %v6283 = vld [vmem:[#allocation11 + $0xc8] sm:$0xf]
    %v6284 = vld [vmem:[#allocation11 + $0xcc] sm:$0xf]
    %v6285 = vld [vmem:[#allocation11 + $0xd0] sm:$0xf]
    %v6286 = vld [vmem:[#allocation11 + $0xd4] sm:$0xf]
    %v6287 = vld [vmem:[#allocation11 + $0xd8] sm:$0xf]
    %v6288 = vld [vmem:[#allocation11 + $0xdc] sm:$0xf]
    %v6289 = vld [vmem:[#allocation11 + $0xe0] sm:$0xf]
    %v6290 = vld [vmem:[#allocation3] sm:$0xff]
    %v6291 = vld [vmem:[#allocation3 + $0x8] sm:$0xff]
    %6293 = vset.pattern.permute.xlu0 1
    %6294 = vperm.xlu0 %6293, %v6290
    %v6295 = vpop.permute.xlu0 %6294
    %6298 = vset.pattern.permute.xlu0 1
    %6299 = vperm.xlu0 %6298, %v6291
    %v6300 = vpop.permute.xlu0 %6299
    %v6359 = vunpack.c.l.b16 %v6233
    %v6360 = vunpack.c.l.b16 %v6234
    %v6361 = vunpack.c.l.b16 %v6235
    %v6362 = vunpack.c.l.b16 %v6236
    %v6363 = vunpack.c.l.b16 %v6237
    %v6364 = vunpack.c.l.b16 %v6238
    %v6365 = vunpack.c.l.b16 %v6239
    %v6366 = vunpack.c.l.b16 %v6240
    %v6367 = vunpack.c.l.b16 %v6241
    %v6368 = vunpack.c.l.b16 %v6242
    %v6369 = vunpack.c.l.b16 %v6243
    %v6370 = vunpack.c.l.b16 %v6244
    %v6371 = vunpack.c.l.b16 %v6245
    %v6372 = vunpack.c.l.b16 %v6246
    %v6373 = vunpack.c.l.b16 %v6247
    %v6374 = vunpack.c.l.b16 %v6248
    %v6375 = vunpack.c.l.b16 %v6249
    %v6376 = vunpack.c.l.b16 %v6250
    %v6377 = vunpack.c.l.b16 %v6251
    %v6378 = vunpack.c.l.b16 %v6252
    %v6379 = vunpack.c.l.b16 %v6253
    %v6380 = vunpack.c.l.b16 %v6254
    %v6381 = vunpack.c.l.b16 %v6255
    %v6382 = vunpack.c.l.b16 %v6256
    %v6383 = vunpack.c.l.b16 %v6257
    %v6384 = vunpack.c.l.b16 %v6258
    %v6385 = vunpack.c.l.b16 %v6259
    %v6386 = vunpack.c.l.b16 %v6260
    %v6387 = vunpack.c.l.b16 %v6261
    %v6388 = vunpack.c.l.b16 %v6262
    %v6389 = vunpack.c.l.b16 %v6263
    %v6390 = vunpack.c.l.b16 %v6264
    %v6391 = vunpack.c.l.b16 %v6265
    %v6392 = vunpack.c.l.b16 %v6266
    %v6393 = vunpack.c.l.b16 %v6267
    %v6394 = vunpack.c.l.b16 %v6268
    %v6395 = vunpack.c.l.b16 %v6269
    %v6396 = vunpack.c.l.b16 %v6270
    %v6397 = vunpack.c.l.b16 %v6271
    %v6398 = vunpack.c.l.b16 %v6272
    %v6399 = vunpack.c.l.b16 %v6273
    %v6400 = vunpack.c.l.b16 %v6274
    %v6401 = vunpack.c.l.b16 %v6275
    %v6402 = vunpack.c.l.b16 %v6276
    %v6403 = vunpack.c.l.b16 %v6277
    %v6404 = vunpack.c.l.b16 %v6278
    %v6405 = vunpack.c.l.b16 %v6279
    %v6406 = vunpack.c.l.b16 %v6280
    %v6407 = vunpack.c.l.b16 %v6281
    %v6408 = vunpack.c.l.b16 %v6282
    %v6409 = vunpack.c.l.b16 %v6283
    %v6410 = vunpack.c.l.b16 %v6284
    %v6411 = vunpack.c.l.b16 %v6285
    %v6412 = vunpack.c.l.b16 %v6286
    %v6413 = vunpack.c.l.b16 %v6287
    %v6414 = vunpack.c.l.b16 %v6288
    %v6415 = vunpack.c.l.b16 %v6289
    %v6416 = vpack.c.b16 %v6360, %v6359
    %v6417 = vpack.c.b16 %v6362, %v6361
    %v6418 = vpack.c.b16 %v6364, %v6363
    %v6419 = vpack.c.b16 %v6366, %v6365
    %v6420 = vpack.c.b16 %v6368, %v6367
    %v6421 = vpack.c.b16 %v6370, %v6369
    %v6422 = vpack.c.b16 %v6372, %v6371
    %v6423 = vpack.c.b16 %v6374, %v6373
    %v6424 = vpack.c.b16 %v6376, %v6375
    %v6425 = vpack.c.b16 %v6378, %v6377
    %v6426 = vpack.c.b16 %v6380, %v6379
    %v6427 = vpack.c.b16 %v6382, %v6381
    %v6428 = vpack.c.b16 %v6384, %v6383
    %v6429 = vpack.c.b16 %v6386, %v6385
    %v6430 = vpack.c.b16 %v6388, %v6387
    %v6431 = vpack.c.b16 %v6390, %v6389
    %v6432 = vpack.c.b16 %v6392, %v6391
    %v6433 = vpack.c.b16 %v6394, %v6393
    %v6434 = vpack.c.b16 %v6396, %v6395
    %v6435 = vpack.c.b16 %v6398, %v6397
    %v6436 = vpack.c.b16 %v6400, %v6399
    %v6437 = vpack.c.b16 %v6402, %v6401
    %v6438 = vpack.c.b16 %v6404, %v6403
    %v6439 = vpack.c.b16 %v6406, %v6405
    %v6440 = vpack.c.b16 %v6408, %v6407
    %v6441 = vpack.c.b16 %v6410, %v6409
    %v6442 = vpack.c.b16 %v6412, %v6411
    %v6443 = vpack.c.b16 %v6414, %v6413
    %v6444 = vpack.c.b16 %v6415, %v6415
    %v6474 = vsel %vm1613, %v6232, 0
    %v6477 = vand.u32 %v6444, %v1619
    %6479 = vmatprep.subr.bf16.mxu0 0
    %6480 = vmatpush1.bf16.msra.mxu0 %v6416
    %6481 = vmatprep.subr.bf16.mxu0 0
    %6482 = vmatpush1.bf16.msra.mxu0 %v6417
    %6483 = vmatprep.subr.bf16.mxu0 0
    %6484 = vmatpush1.bf16.msra.mxu0 %v6418
    %6485 = vmatprep.subr.bf16.mxu0 0
    %6486 = vmatpush1.bf16.msra.mxu0 %v6419
    %6487 = vmatprep.subr.bf16.mxu0 0
    %6488 = vmatpush1.bf16.msra.mxu0 %v6420
    %6489 = vmatprep.subr.bf16.mxu0 0
    %6490 = vmatpush1.bf16.msra.mxu0 %v6421
    %6491 = vmatprep.subr.bf16.mxu0 0
    %6492 = vmatpush1.bf16.msra.mxu0 %v6422
    %6493 = vmatprep.subr.bf16.mxu0 0
    %6494 = vmatpush1.bf16.msra.mxu0 %v6423
    %6495 = vmatprep.subr.bf16.mxu0 0
    %6496 = vmatpush1.bf16.msra.mxu0 %v6424
    %6497 = vmatprep.subr.bf16.mxu0 0
    %6498 = vmatpush1.bf16.msra.mxu0 %v6425
    %6499 = vmatprep.subr.bf16.mxu0 0
    %6500 = vmatpush1.bf16.msra.mxu0 %v6426
    %6501 = vmatprep.subr.bf16.mxu0 0
    %6502 = vmatpush1.bf16.msra.mxu0 %v6427
    %6503 = vmatprep.subr.bf16.mxu0 0
    %6504 = vmatpush1.bf16.msra.mxu0 %v6428
    %6505 = vmatprep.subr.bf16.mxu0 0
    %6506 = vmatpush1.bf16.msra.mxu0 %v6429
    %6507 = vmatprep.subr.bf16.mxu0 0
    %6508 = vmatpush1.bf16.msra.mxu0 %v6430
    %6509 = vmatprep.subr.bf16.mxu0 0
    %6510 = vmatpush1.bf16.msra.mxu0 %v6431
    %6511 = vmatprep.mubr.bf16.mxu0 %v6230
    %6512 = vmatmul.mubr.bf16.gmra.mrb[0].mxu0 %v6229
    %v6513 = vpop.f32.mrb[0].mxu0
    %v6514 = vadd.f32 %v6295, %v6513
    %v6515 = vpop.f32.mrb[0].mxu0
    %v6516 = vpop.f32.mrb[0].mxu0
    %v6517 = vadd.f32 %v6300, %v6516
    %v6518 = vpop.f32.mrb[0].mxu0
    %6519 = vdwg.mxu0
    %6520 = vmatprep.subr.bf16.mxu0 0
    %6521 = vmatpush1.bf16.msra.mxu0 %v6432
    %6522 = vmatprep.subr.bf16.mxu0 0
    %6523 = vmatpush1.bf16.msra.mxu0 %v6433
    %6524 = vmatprep.subr.bf16.mxu0 0
    %6525 = vmatpush1.bf16.msra.mxu0 %v6434
    %6526 = vmatprep.subr.bf16.mxu0 0
    %6527 = vmatpush1.bf16.msra.mxu0 %v6435
    %6528 = vmatprep.subr.bf16.mxu0 0
    %6529 = vmatpush1.bf16.msra.mxu0 %v6436
    %6530 = vmatprep.subr.bf16.mxu0 0
    %6531 = vmatpush1.bf16.msra.mxu0 %v6437
    %6532 = vmatprep.subr.bf16.mxu0 0
    %6533 = vmatpush1.bf16.msra.mxu0 %v6438
    %6534 = vmatprep.subr.bf16.mxu0 0
    %6535 = vmatpush1.bf16.msra.mxu0 %v6439
    %6536 = vmatprep.subr.bf16.mxu0 0
    %6537 = vmatpush1.bf16.msra.mxu0 %v6440
    %6538 = vmatprep.subr.bf16.mxu0 0
    %6539 = vmatpush1.bf16.msra.mxu0 %v6441
    %6540 = vmatprep.subr.bf16.mxu0 0
    %6541 = vmatpush1.bf16.msra.mxu0 %v6442
    %6542 = vmatprep.subr.bf16.mxu0 0
    %6543 = vmatpush1.bf16.msra.mxu0 %v6443
    %6544 = vmatprep.subr.bf16.mxu0 0
    %6545 = vmatpush1.bf16.msra.mxu0 %v6477
    %6546 = vmatprep.subr.bf16.mxu0 0
    %6547 = vmatpush1.bf16.msra.mxu0 0
    %6548 = vmatprep.subr.bf16.mxu0 0
    %6549 = vmatpush1.bf16.msra.mxu0 0
    %6550 = vmatprep.subr.bf16.mxu0 0
    %6551 = vmatpush1.bf16.msra.mxu0 0
    %6552 = vmatprep.mubr.bf16.mxu0 %v6474
    %6553 = vmatmul.mubr.bf16.gmra.mrb[0].mxu0 %v6231
    %v6554 = vpop.f32.mrb[0].mxu0
    %v6555 = vadd.f32 %v6514, %v6554
    %v6556 = vpop.f32.mrb[0].mxu0
    %v6557 = vpop.f32.mrb[0].mxu0
    %v6558 = vadd.f32 %v6517, %v6557
    %v6559 = vpop.f32.mrb[0].mxu0
    %6560 = vdwg.mxu0
    %v6561 = vmax.f32 %v6555, 0.0
    %v6562 = vmax.f32 %v6558, 0.0
    %v6563 = vld [vmem:[#allocation12] sm:$0xf]
    %v6564 = vld [vmem:[#allocation12 + $0x4] sm:$0xf]
    %v6565 = vld [vmem:[#allocation12 + $0x8] sm:$0xf]
    %v6566 = vld [vmem:[#allocation12 + $0xc] sm:$0xf]
    %v6567 = vld [vmem:[#allocation12 + $0x10] sm:$0xf]
    %v6568 = vld [vmem:[#allocation12 + $0x14] sm:$0xf]
    %v6569 = vld [vmem:[#allocation12 + $0x18] sm:$0xf]
    %v6570 = vld [vmem:[#allocation12 + $0x1c] sm:$0xf]
    %v6571 = vld [vmem:[#allocation12 + $0x20] sm:$0xf]
    %v6572 = vld [vmem:[#allocation12 + $0x24] sm:$0xf]
    %v6573 = vld [vmem:[#allocation12 + $0x28] sm:$0xf]
    %v6574 = vld [vmem:[#allocation12 + $0x2c] sm:$0xf]
    %v6575 = vld [vmem:[#allocation12 + $0x30] sm:$0xf]
    %v6576 = vld [vmem:[#allocation12 + $0x34] sm:$0xf]
    %v6577 = vld [vmem:[#allocation12 + $0x38] sm:$0xf]
    %v6578 = vld [vmem:[#allocation12 + $0x3c] sm:$0xf]
    %v6579 = vld [vmem:[#allocation12 + $0x40] sm:$0xf]
    %v6580 = vld [vmem:[#allocation12 + $0x44] sm:$0xf]
    %v6581 = vld [vmem:[#allocation12 + $0x48] sm:$0xf]
    %v6582 = vld [vmem:[#allocation12 + $0x4c] sm:$0xf]
    %v6583 = vld [vmem:[#allocation12 + $0x50] sm:$0xf]
    %v6584 = vld [vmem:[#allocation12 + $0x54] sm:$0xf]
    %v6585 = vld [vmem:[#allocation12 + $0x58] sm:$0xf]
    %v6586 = vld [vmem:[#allocation12 + $0x5c] sm:$0xf]
    %v6587 = vld [vmem:[#allocation12 + $0x60] sm:$0xf]
    %v6588 = vld [vmem:[#allocation12 + $0x64] sm:$0xf]
    %v6589 = vld [vmem:[#allocation12 + $0x68] sm:$0xf]
    %v6590 = vld [vmem:[#allocation12 + $0x6c] sm:$0xf]
    %v6591 = vpack.c.bf16 %v6562, %v6561
    %v6620 = vunpack.c.l.b16 %v6563
    %v6621 = vunpack.c.l.b16 %v6564
    %v6622 = vunpack.c.l.b16 %v6565
    %v6623 = vunpack.c.l.b16 %v6566
    %v6624 = vunpack.c.l.b16 %v6567
    %v6625 = vunpack.c.l.b16 %v6568
    %v6626 = vunpack.c.l.b16 %v6569
    %v6627 = vunpack.c.l.b16 %v6570
    %v6628 = vunpack.c.l.b16 %v6571
    %v6629 = vunpack.c.l.b16 %v6572
    %v6630 = vunpack.c.l.b16 %v6573
    %v6631 = vunpack.c.l.b16 %v6574
    %v6632 = vunpack.c.l.b16 %v6575
    %v6633 = vunpack.c.l.b16 %v6576
    %v6634 = vunpack.c.l.b16 %v6577
    %v6635 = vunpack.c.l.b16 %v6578
    %v6636 = vunpack.c.l.b16 %v6579
    %v6637 = vunpack.c.l.b16 %v6580
    %v6638 = vunpack.c.l.b16 %v6581
    %v6639 = vunpack.c.l.b16 %v6582
    %v6640 = vunpack.c.l.b16 %v6583
    %v6641 = vunpack.c.l.b16 %v6584
    %v6642 = vunpack.c.l.b16 %v6585
    %v6643 = vunpack.c.l.b16 %v6586
    %v6644 = vunpack.c.l.b16 %v6587
    %v6645 = vunpack.c.l.b16 %v6588
    %v6646 = vunpack.c.l.b16 %v6589
    %v6647 = vunpack.c.l.b16 %v6590
    %v6648 = vpack.c.b16 %v6621, %v6620
    %v6649 = vpack.c.b16 %v6623, %v6622
    %v6650 = vpack.c.b16 %v6625, %v6624
    %v6651 = vpack.c.b16 %v6627, %v6626
    %v6652 = vpack.c.b16 %v6629, %v6628
    %v6653 = vpack.c.b16 %v6631, %v6630
    %v6654 = vpack.c.b16 %v6633, %v6632
    %v6655 = vpack.c.b16 %v6635, %v6634
    %v6656 = vpack.c.b16 %v6637, %v6636
    %v6657 = vpack.c.b16 %v6639, %v6638
    %v6658 = vpack.c.b16 %v6641, %v6640
    %v6659 = vpack.c.b16 %v6643, %v6642
    %v6660 = vpack.c.b16 %v6645, %v6644
    %v6661 = vpack.c.b16 %v6647, %v6646
    %v6663 = vsel %vm1806, %v6648, 0
    %v6666 = vsel %vm1806, %v6649, 0
    %v6669 = vsel %vm1806, %v6650, 0
    %v6672 = vsel %vm1806, %v6651, 0
    %v6675 = vsel %vm1806, %v6652, 0
    %v6678 = vsel %vm1806, %v6653, 0
    %v6681 = vsel %vm1806, %v6654, 0
    %v6684 = vsel %vm1806, %v6655, 0
    %v6687 = vsel %vm1806, %v6656, 0
    %v6690 = vsel %vm1806, %v6657, 0
    %v6693 = vsel %vm1806, %v6658, 0
    %v6696 = vsel %vm1806, %v6659, 0
    %v6699 = vsel %vm1806, %v6660, 0
    %v6702 = vsel %vm1806, %v6661, 0
    %6704 = vmatprep.subr.bf16.mxu0 0
    %6705 = vmatpush1.bf16.msra.mxu0 %v6591
    %6706 = vmatprep.subr.bf16.mxu0 0
    %6707 = vmatpush1.bf16.msra.mxu0 0
    %6708 = vmatprep.subr.bf16.mxu0 0
    %6709 = vmatpush1.bf16.msra.mxu0 0
    %6710 = vmatprep.subr.bf16.mxu0 0
    %6711 = vmatpush1.bf16.msra.mxu0 0
    %6712 = vmatprep.subr.bf16.mxu0 0
    %6713 = vmatpush1.bf16.msra.mxu0 0
    %6714 = vmatprep.subr.bf16.mxu0 0
    %6715 = vmatpush1.bf16.msra.mxu0 0
    %6716 = vmatprep.subr.bf16.mxu0 0
    %6717 = vmatpush1.bf16.msra.mxu0 0
    %6718 = vmatprep.subr.bf16.mxu0 0
    %6719 = vmatpush1.bf16.msra.mxu0 0
    %6720 = vmatprep.subr.bf16.mxu0 0
    %6721 = vmatpush1.bf16.msra.mxu0 0
    %6722 = vmatprep.subr.bf16.mxu0 0
    %6723 = vmatpush1.bf16.msra.mxu0 0
    %6724 = vmatprep.subr.bf16.mxu0 0
    %6725 = vmatpush1.bf16.msra.mxu0 0
    %6726 = vmatprep.subr.bf16.mxu0 0
    %6727 = vmatpush1.bf16.msra.mxu0 0
    %6728 = vmatprep.subr.bf16.mxu0 0
    %6729 = vmatpush1.bf16.msra.mxu0 0
    %6730 = vmatprep.subr.bf16.mxu0 0
    %6731 = vmatpush1.bf16.msra.mxu0 0
    %6732 = vmatprep.subr.bf16.mxu0 0
    %6733 = vmatpush1.bf16.msra.mxu0 0
    %6734 = vmatprep.subr.bf16.mxu0 0
    %6735 = vmatpush1.bf16.msra.mxu0 0
    %6736 = vmatprep.mubr.bf16.mxu0 0
    %6737 = vmatmul.mubr.bf16.gmra.mrb[0].mxu0 %v6663
    %v6738 = vpop.f32.mrb[0].mxu0
    %v6739 = vadd.f32 0.0, %v6738
    %v6740 = vpop.f32.mrb[0].mxu0
    %v6741 = vpop.f32.mrb[0].mxu0
    %v6742 = vadd.f32 0.0, %v6741
    %v6743 = vpop.f32.mrb[0].mxu0
    %6744 = vmatprep.mubr.bf16.mxu0 0
    %6745 = vmatmul.mubr.bf16.gmra.mrb[0].mxu0 %v6666
    %v6746 = vpop.f32.mrb[0].mxu0
    %v6747 = vadd.f32 0.0, %v6746
    %v6748 = vpop.f32.mrb[0].mxu0
    %v6749 = vpop.f32.mrb[0].mxu0
    %v6750 = vadd.f32 0.0, %v6749
    %v6751 = vpop.f32.mrb[0].mxu0
    %6752 = vmatprep.mubr.bf16.mxu0 0
    %6753 = vmatmul.mubr.bf16.gmra.mrb[0].mxu0 %v6669
    %v6754 = vpop.f32.mrb[0].mxu0
    %v6755 = vadd.f32 0.0, %v6754
    %v6756 = vpop.f32.mrb[0].mxu0
    %v6757 = vpop.f32.mrb[0].mxu0
    %v6758 = vadd.f32 0.0, %v6757
    %v6759 = vpop.f32.mrb[0].mxu0
    %6760 = vmatprep.mubr.bf16.mxu0 0
    %6761 = vmatmul.mubr.bf16.gmra.mrb[0].mxu0 %v6672
    %v6762 = vpop.f32.mrb[0].mxu0
    %v6763 = vadd.f32 0.0, %v6762
    %v6764 = vpop.f32.mrb[0].mxu0
    %v6765 = vpop.f32.mrb[0].mxu0
    %v6766 = vadd.f32 0.0, %v6765
    %v6767 = vpop.f32.mrb[0].mxu0
    %6768 = vmatprep.mubr.bf16.mxu0 0
    %6769 = vmatmul.mubr.bf16.gmra.mrb[0].mxu0 %v6675
    %v6770 = vpop.f32.mrb[0].mxu0
    %v6771 = vadd.f32 0.0, %v6770
    %v6772 = vpop.f32.mrb[0].mxu0
    %v6773 = vpop.f32.mrb[0].mxu0
    %v6774 = vadd.f32 0.0, %v6773
    %v6775 = vpop.f32.mrb[0].mxu0
    %6776 = vmatprep.mubr.bf16.mxu0 0
    %6777 = vmatmul.mubr.bf16.gmra.mrb[0].mxu0 %v6678
    %v6778 = vpop.f32.mrb[0].mxu0
    %v6779 = vadd.f32 0.0, %v6778
    %v6780 = vpop.f32.mrb[0].mxu0
    %v6781 = vpop.f32.mrb[0].mxu0
    %v6782 = vadd.f32 0.0, %v6781
    %v6783 = vpop.f32.mrb[0].mxu0
    %6784 = vmatprep.mubr.bf16.mxu0 0
    %6785 = vmatmul.mubr.bf16.gmra.mrb[0].mxu0 %v6681
    %v6786 = vpop.f32.mrb[0].mxu0
    %v6787 = vadd.f32 0.0, %v6786
    %v6788 = vpop.f32.mrb[0].mxu0
    %v6789 = vpop.f32.mrb[0].mxu0
    %v6790 = vadd.f32 0.0, %v6789
    %v6791 = vpop.f32.mrb[0].mxu0
    %6792 = vmatprep.mubr.bf16.mxu0 0
    %6793 = vmatmul.mubr.bf16.gmra.mrb[0].mxu0 %v6684
    %v6794 = vpop.f32.mrb[0].mxu0
    %v6795 = vadd.f32 0.0, %v6794
    %v6796 = vpop.f32.mrb[0].mxu0
    %v6797 = vpop.f32.mrb[0].mxu0
    %v6798 = vadd.f32 0.0, %v6797
    %v6799 = vpop.f32.mrb[0].mxu0
    %6800 = vmatprep.mubr.bf16.mxu0 0
    %6801 = vmatmul.mubr.bf16.gmra.mrb[0].mxu0 %v6687
    %v6802 = vpop.f32.mrb[0].mxu0
    %v6803 = vadd.f32 0.0, %v6802
    %v6804 = vpop.f32.mrb[0].mxu0
    %v6805 = vpop.f32.mrb[0].mxu0
    %v6806 = vadd.f32 0.0, %v6805
    %v6807 = vpop.f32.mrb[0].mxu0
    %6808 = vmatprep.mubr.bf16.mxu0 0
    %6809 = vmatmul.mubr.bf16.gmra.mrb[0].mxu0 %v6690
    %v6810 = vpop.f32.mrb[0].mxu0
    %v6811 = vadd.f32 0.0, %v6810
    %v6812 = vpop.f32.mrb[0].mxu0
    %v6813 = vpop.f32.mrb[0].mxu0
    %v6814 = vadd.f32 0.0, %v6813
    %v6815 = vpop.f32.mrb[0].mxu0
    %6816 = vmatprep.mubr.bf16.mxu0 0
    %6817 = vmatmul.mubr.bf16.gmra.mrb[0].mxu0 %v6693
    %v6818 = vpop.f32.mrb[0].mxu0
    %v6819 = vadd.f32 0.0, %v6818
    %v6820 = vpop.f32.mrb[0].mxu0
    %v6821 = vpop.f32.mrb[0].mxu0
    %v6822 = vadd.f32 0.0, %v6821
    %v6823 = vpop.f32.mrb[0].mxu0
    %6824 = vmatprep.mubr.bf16.mxu0 0
    %6825 = vmatmul.mubr.bf16.gmra.mrb[0].mxu0 %v6696
    %v6826 = vpop.f32.mrb[0].mxu0
    %v6827 = vadd.f32 0.0, %v6826
    %v6828 = vpop.f32.mrb[0].mxu0
    %v6829 = vpop.f32.mrb[0].mxu0
    %v6830 = vadd.f32 0.0, %v6829
    %v6831 = vpop.f32.mrb[0].mxu0
    %6832 = vmatprep.mubr.bf16.mxu0 0
    %6833 = vmatmul.mubr.bf16.gmra.mrb[0].mxu0 %v6699
    %v6834 = vpop.f32.mrb[0].mxu0
    %v6835 = vadd.f32 0.0, %v6834
    %v6836 = vpop.f32.mrb[0].mxu0
    %v6837 = vpop.f32.mrb[0].mxu0
    %v6838 = vadd.f32 0.0, %v6837
    %v6839 = vpop.f32.mrb[0].mxu0
    %6840 = vmatprep.mubr.bf16.mxu0 0
    %6841 = vmatmul.mubr.bf16.gmra.mrb[0].mxu0 %v6702
    %v6842 = vpop.f32.mrb[0].mxu0
    %v6843 = vadd.f32 0.0, %v6842
    %v6844 = vpop.f32.mrb[0].mxu0
    %v6845 = vpop.f32.mrb[0].mxu0
    %v6846 = vadd.f32 0.0, %v6845
    %v6847 = vpop.f32.mrb[0].mxu0
    %6848 = vdwg.mxu0
    %6849 = vst.msk [vmem:[#allocation2] sm:$0xff] %vm1994, %v6739
    %6850 = vst.msk [vmem:[#allocation2 + $0x40] sm:$0xff] %vm1994, %v6742
    %6851 = vst.msk [vmem:[#allocation2 + $0x80] sm:$0xff] %vm1994, %v6747
    %6852 = vst.msk [vmem:[#allocation2 + $0xc0] sm:$0xff] %vm1994, %v6750
    %6857 = vrot.lane.b32.xlu0 %v6755, 33
    %v6858 = vpop.permute.xlu0 %6857
    %6859 = vrot.lane.b32.xlu0 %v6758, 33
    %v6860 = vpop.permute.xlu0 %6859
    %6861 = vrot.lane.b32.xlu0 %v6763, 33
    %v6862 = vpop.permute.xlu0 %6861
    %6863 = vrot.lane.b32.xlu0 %v6766, 33
    %v6864 = vpop.permute.xlu0 %6863
    %6869 = vst.msk [vmem:[#allocation2] sm:$0xff] %vm2015, %v6858
    %6870 = vst.msk [vmem:[#allocation2 + $0x40] sm:$0xff] %vm2015, %v6860
    %6871 = vst.msk [vmem:[#allocation2 + $0x80] sm:$0xff] %vm2015, %v6862
    %6872 = vst.msk [vmem:[#allocation2 + $0xc0] sm:$0xff] %vm2015, %v6864
    %6877 = vrot.lane.b32.xlu0 %v6771, 66
    %v6878 = vpop.permute.xlu0 %6877
    %6879 = vrot.lane.b32.xlu0 %v6774, 66
    %v6880 = vpop.permute.xlu0 %6879
    %6881 = vrot.lane.b32.xlu0 %v6779, 66
    %v6882 = vpop.permute.xlu0 %6881
    %6883 = vrot.lane.b32.xlu0 %v6782, 66
    %v6884 = vpop.permute.xlu0 %6883
    %6889 = vst.msk [vmem:[#allocation2] sm:$0xff] %vm2036, %v6878
    %6890 = vst.msk [vmem:[#allocation2 + $0x40] sm:$0xff] %vm2036, %v6880
    %6891 = vst.msk [vmem:[#allocation2 + $0x80] sm:$0xff] %vm2036, %v6882
    %6892 = vst.msk [vmem:[#allocation2 + $0xc0] sm:$0xff] %vm2036, %v6884
    %6897 = vrot.lane.b32.xlu0 %v6787, 99
    %v6898 = vpop.permute.xlu0 %6897
    %6899 = vrot.lane.b32.xlu0 %v6790, 99
    %v6900 = vpop.permute.xlu0 %6899
    %6901 = vrot.lane.b32.xlu0 %v6795, 99
    %v6902 = vpop.permute.xlu0 %6901
    %6903 = vrot.lane.b32.xlu0 %v6798, 99
    %v6904 = vpop.permute.xlu0 %6903
    %6909 = vst.msk [vmem:[#allocation2] sm:$0xff] %vm2057, %v6898
    %6910 = vst.msk [vmem:[#allocation2 + $0x8] sm:$0xff] %vm412, %v6898
    %6911 = vst.msk [vmem:[#allocation2 + $0x40] sm:$0xff] %vm2057, %v6900
    %6912 = vst.msk [vmem:[#allocation2 + $0x48] sm:$0xff] %vm412, %v6900
    %6913 = vst.msk [vmem:[#allocation2 + $0x80] sm:$0xff] %vm2057, %v6902
    %6914 = vst.msk [vmem:[#allocation2 + $0x88] sm:$0xff] %vm412, %v6902
    %6915 = vst.msk [vmem:[#allocation2 + $0xc0] sm:$0xff] %vm2057, %v6904
    %6916 = vst.msk [vmem:[#allocation2 + $0xc8] sm:$0xff] %vm412, %v6904
    %6921 = vrot.lane.b32.xlu0 %v6803, 4
    %v6922 = vpop.permute.xlu0 %6921
    %6923 = vrot.lane.b32.xlu0 %v6806, 4
    %v6924 = vpop.permute.xlu0 %6923
    %6925 = vrot.lane.b32.xlu0 %v6811, 4
    %v6926 = vpop.permute.xlu0 %6925
    %6927 = vrot.lane.b32.xlu0 %v6814, 4
    %v6928 = vpop.permute.xlu0 %6927
    %6933 = vst.msk [vmem:[#allocation2 + $0x8] sm:$0xff] %vm2082, %v6922
    %6934 = vst.msk [vmem:[#allocation2 + $0x48] sm:$0xff] %vm2082, %v6924
    %6935 = vst.msk [vmem:[#allocation2 + $0x88] sm:$0xff] %vm2082, %v6926
    %6936 = vst.msk [vmem:[#allocation2 + $0xc8] sm:$0xff] %vm2082, %v6928
    %6941 = vrot.lane.b32.xlu0 %v6819, 37
    %v6942 = vpop.permute.xlu0 %6941
    %6943 = vrot.lane.b32.xlu0 %v6822, 37
    %v6944 = vpop.permute.xlu0 %6943
    %6945 = vrot.lane.b32.xlu0 %v6827, 37
    %v6946 = vpop.permute.xlu0 %6945
    %6947 = vrot.lane.b32.xlu0 %v6830, 37
    %v6948 = vpop.permute.xlu0 %6947
    %6953 = vst.msk [vmem:[#allocation2 + $0x8] sm:$0xff] %vm2103, %v6942
    %6954 = vst.msk [vmem:[#allocation2 + $0x48] sm:$0xff] %vm2103, %v6944
    %6955 = vst.msk [vmem:[#allocation2 + $0x88] sm:$0xff] %vm2103, %v6946
    %6956 = vst.msk [vmem:[#allocation2 + $0xc8] sm:$0xff] %vm2103, %v6948
    %6961 = vrot.lane.b32.xlu0 %v6835, 70
    %v6962 = vpop.permute.xlu0 %6961
    %6963 = vrot.lane.b32.xlu0 %v6838, 70
    %v6964 = vpop.permute.xlu0 %6963
    %6965 = vrot.lane.b32.xlu0 %v6843, 70
    %v6966 = vpop.permute.xlu0 %6965
    %6967 = vrot.lane.b32.xlu0 %v6846, 70
    %v6968 = vpop.permute.xlu0 %6967
    %6973 = vst.msk [vmem:[#allocation2 + $0x8] sm:$0xff] %vm2124, %v6962
    %6974 = vst.msk [vmem:[#allocation2 + $0x48] sm:$0xff] %vm2124, %v6964
    %6975 = vst.msk [vmem:[#allocation2 + $0x88] sm:$0xff] %vm2124, %v6966
    %6976 = vst.msk [vmem:[#allocation2 + $0xc8] sm:$0xff] %vm2124, %v6968
    %v6977 = vld [vmem:[#allocation2] sm:$0xff]
    %v6978 = vld [vmem:[#allocation2 + $0x8] sm:$0xff]
    %v6979 = vld [vmem:[#allocation2 + $0x40] sm:$0xff]
    %v6980 = vld [vmem:[#allocation2 + $0x48] sm:$0xff]
    %v6981 = vld [vmem:[#allocation2 + $0x80] sm:$0xff]
    %v6982 = vld [vmem:[#allocation2 + $0x88] sm:$0xff]
    %v6983 = vld [vmem:[#allocation2 + $0xc0] sm:$0xff]
    %v6984 = vld [vmem:[#allocation2 + $0xc8] sm:$0xff]
    %v6985 = vpack.c.bf16 %v6979, %v6977
    %v6986 = vpack.c.bf16 %v6980, %v6978
    %v6987 = vpack.c.bf16 %v6983, %v6981
    %v6988 = vpack.c.bf16 %v6984, %v6982
    %v6989 = vld [vmem:[#allocation14] sm:$0xf]
    %v6990 = vld [vmem:[#allocation14 + $0x4] sm:$0xf]
    %v6991 = vld [vmem:[#allocation14 + $0x8] sm:$0xf]
    %v6992 = vld [vmem:[#allocation14 + $0xc] sm:$0xf]
    %v6993 = vld [vmem:[#allocation14 + $0x10] sm:$0xf]
    %v6994 = vld [vmem:[#allocation14 + $0x14] sm:$0xf]
    %v6995 = vld [vmem:[#allocation14 + $0x18] sm:$0xf]
    %v6996 = vld [vmem:[#allocation14 + $0x1c] sm:$0xf]
    %v6997 = vld [vmem:[#allocation14 + $0x20] sm:$0xf]
    %v6998 = vld [vmem:[#allocation14 + $0x24] sm:$0xf]
    %v6999 = vld [vmem:[#allocation14 + $0x28] sm:$0xf]
    %v7000 = vld [vmem:[#allocation14 + $0x2c] sm:$0xf]
    %v7001 = vld [vmem:[#allocation14 + $0x30] sm:$0xf]
    %v7002 = vld [vmem:[#allocation14 + $0x34] sm:$0xf]
    %v7003 = vld [vmem:[#allocation14 + $0x38] sm:$0xf]
    %v7004 = vld [vmem:[#allocation14 + $0x3c] sm:$0xf]
    %v7005 = vld [vmem:[#allocation14 + $0x40] sm:$0xf]
    %v7006 = vld [vmem:[#allocation14 + $0x44] sm:$0xf]
    %v7007 = vld [vmem:[#allocation14 + $0x48] sm:$0xf]
    %v7008 = vld [vmem:[#allocation14 + $0x4c] sm:$0xf]
    %v7009 = vld [vmem:[#allocation14 + $0x50] sm:$0xf]
    %v7010 = vld [vmem:[#allocation14 + $0x54] sm:$0xf]
    %v7011 = vld [vmem:[#allocation14 + $0x58] sm:$0xf]
    %v7012 = vld [vmem:[#allocation14 + $0x5c] sm:$0xf]
    %v7013 = vld [vmem:[#allocation14 + $0x60] sm:$0xf]
    %v7014 = vld [vmem:[#allocation14 + $0x64] sm:$0xf]
    %v7015 = vld [vmem:[#allocation14 + $0x68] sm:$0xf]
    %v7016 = vld [vmem:[#allocation14 + $0x6c] sm:$0xf]
    %v7017 = vld [vmem:[#allocation14 + $0x70] sm:$0xf]
    %v7018 = vld [vmem:[#allocation3] sm:$0xff]
    %v7019 = vld [vmem:[#allocation3 + $0x8] sm:$0xff]
    %v7020 = vld [vmem:[#allocation3 + $0x10] sm:$0xff]
    %v7021 = vld [vmem:[#allocation3 + $0x18] sm:$0xff]
    %7023 = vset.pattern.permute.xlu0 2
    %7024 = vperm.xlu0 %7023, %v7018
    %v7025 = vpop.permute.xlu0 %7024
    %7028 = vset.pattern.permute.xlu0 2
    %7029 = vperm.xlu0 %7028, %v7019
    %v7030 = vpop.permute.xlu0 %7029
    %7033 = vset.pattern.permute.xlu0 2
    %7034 = vperm.xlu0 %7033, %v7020
    %v7035 = vpop.permute.xlu0 %7034
    %7038 = vset.pattern.permute.xlu0 2
    %7039 = vperm.xlu0 %7038, %v7021
    %v7040 = vpop.permute.xlu0 %7039
    %v7071 = vunpack.c.l.b16 %v6989
    %v7072 = vunpack.c.l.b16 %v6990
    %v7073 = vunpack.c.l.b16 %v6991
    %v7074 = vunpack.c.l.b16 %v6992
    %v7075 = vunpack.c.l.b16 %v6993
    %v7076 = vunpack.c.l.b16 %v6994
    %v7077 = vunpack.c.l.b16 %v6995
    %v7078 = vunpack.c.l.b16 %v6996
    %v7079 = vunpack.c.l.b16 %v6997
    %v7080 = vunpack.c.l.b16 %v6998
    %v7081 = vunpack.c.l.b16 %v6999
    %v7082 = vunpack.c.l.b16 %v7000
    %v7083 = vunpack.c.l.b16 %v7001
    %v7084 = vunpack.c.l.b16 %v7002
    %v7085 = vunpack.c.l.b16 %v7003
    %v7086 = vunpack.c.l.b16 %v7004
    %v7087 = vunpack.c.l.b16 %v7005
    %v7088 = vunpack.c.l.b16 %v7006
    %v7089 = vunpack.c.l.b16 %v7007
    %v7090 = vunpack.c.l.b16 %v7008
    %v7091 = vunpack.c.l.b16 %v7009
    %v7092 = vunpack.c.l.b16 %v7010
    %v7093 = vunpack.c.l.b16 %v7011
    %v7094 = vunpack.c.l.b16 %v7012
    %v7095 = vunpack.c.l.b16 %v7013
    %v7096 = vunpack.c.l.b16 %v7014
    %v7097 = vunpack.c.l.b16 %v7015
    %v7098 = vunpack.c.l.b16 %v7016
    %v7099 = vunpack.c.l.b16 %v7017
    %v7100 = vpack.c.b16 %v7072, %v7071
    %v7101 = vpack.c.b16 %v7074, %v7073
    %v7102 = vpack.c.b16 %v7076, %v7075
    %v7103 = vpack.c.b16 %v7078, %v7077
    %v7104 = vpack.c.b16 %v7080, %v7079
    %v7105 = vpack.c.b16 %v7082, %v7081
    %v7106 = vpack.c.b16 %v7084, %v7083
    %v7107 = vpack.c.b16 %v7086, %v7085
    %v7108 = vpack.c.b16 %v7088, %v7087
    %v7109 = vpack.c.b16 %v7090, %v7089
    %v7110 = vpack.c.b16 %v7092, %v7091
    %v7111 = vpack.c.b16 %v7094, %v7093
    %v7112 = vpack.c.b16 %v7096, %v7095
    %v7113 = vpack.c.b16 %v7098, %v7097
    %v7114 = vpack.c.b16 %v7099, %v7099
    %v7130 = vsel %vm2281, %v6986, 0
    %v7133 = vsel %vm2281, %v6988, 0
    %v7136 = vand.u32 %v7114, %v1619
    %7138 = vmatprep.subr.bf16.mxu0 0
    %7139 = vmatpush1.bf16.msra.mxu0 %v7100
    %7140 = vmatprep.subr.bf16.mxu0 0
    %7141 = vmatpush1.bf16.msra.mxu0 %v7101
    %7142 = vmatprep.subr.bf16.mxu0 0
    %7143 = vmatpush1.bf16.msra.mxu0 %v7102
    %7144 = vmatprep.subr.bf16.mxu0 0
    %7145 = vmatpush1.bf16.msra.mxu0 %v7103
    %7146 = vmatprep.subr.bf16.mxu0 0
    %7147 = vmatpush1.bf16.msra.mxu0 %v7104
    %7148 = vmatprep.subr.bf16.mxu0 0
    %7149 = vmatpush1.bf16.msra.mxu0 %v7105
    %7150 = vmatprep.subr.bf16.mxu0 0
    %7151 = vmatpush1.bf16.msra.mxu0 %v7106
    %7152 = vmatprep.subr.bf16.mxu0 0
    %7153 = vmatpush1.bf16.msra.mxu0 %v7107
    %7154 = vmatprep.subr.bf16.mxu0 0
    %7155 = vmatpush1.bf16.msra.mxu0 %v7108
    %7156 = vmatprep.subr.bf16.mxu0 0
    %7157 = vmatpush1.bf16.msra.mxu0 %v7109
    %7158 = vmatprep.subr.bf16.mxu0 0
    %7159 = vmatpush1.bf16.msra.mxu0 %v7110
    %7160 = vmatprep.subr.bf16.mxu0 0
    %7161 = vmatpush1.bf16.msra.mxu0 %v7111
    %7162 = vmatprep.subr.bf16.mxu0 0
    %7163 = vmatpush1.bf16.msra.mxu0 %v7112
    %7164 = vmatprep.subr.bf16.mxu0 0
    %7165 = vmatpush1.bf16.msra.mxu0 %v7113
    %7166 = vmatprep.subr.bf16.mxu0 0
    %7167 = vmatpush1.bf16.msra.mxu0 %v7136
    %7168 = vmatprep.subr.bf16.mxu0 0
    %7169 = vmatpush1.bf16.msra.mxu0 0
    %7170 = vmatprep.mubr.bf16.mxu0 %v7130
    %7171 = vmatmul.mubr.bf16.gmra.mrb[0].mxu0 %v6985
    %v7172 = vpop.f32.mrb[0].mxu0
    %v7173 = vadd.f32 %v7025, %v7172
    %v7174 = vpop.f32.mrb[0].mxu0
    %v7175 = vpop.f32.mrb[0].mxu0
    %v7176 = vadd.f32 %v7030, %v7175
    %v7177 = vpop.f32.mrb[0].mxu0
    %7178 = vmatprep.mubr.bf16.mxu0 %v7133
    %7179 = vmatmul.mubr.bf16.gmra.mrb[0].mxu0 %v6987
    %v7180 = vpop.f32.mrb[0].mxu0
    %v7181 = vadd.f32 %v7035, %v7180
    %v7182 = vpop.f32.mrb[0].mxu0
    %v7183 = vpop.f32.mrb[0].mxu0
    %v7184 = vadd.f32 %v7040, %v7183
    %v7185 = vpop.f32.mrb[0].mxu0
    %7186 = vdwg.mxu0
    %v7187 = vmax.f32 %v7173, 0.0
    %v7188 = vmax.f32 %v7176, 0.0
    %v7189 = vmax.f32 %v7181, 0.0
    %v7190 = vmax.f32 %v7184, 0.0
    %v7191 = vld [vmem:[#allocation15] sm:$0xf]
    %v7192 = vld [vmem:[#allocation15 + $0x4] sm:$0xf]
    %v7193 = vld [vmem:[#allocation15 + $0x8] sm:$0xf]
    %v7194 = vld [vmem:[#allocation15 + $0xc] sm:$0xf]
    %v7195 = vld [vmem:[#allocation15 + $0x10] sm:$0xf]
    %v7196 = vld [vmem:[#allocation15 + $0x14] sm:$0xf]
    %v7197 = vld [vmem:[#allocation15 + $0x18] sm:$0xf]
    %v7198 = vld [vmem:[#allocation15 + $0x1c] sm:$0xf]
    %v7199 = vld [vmem:[#allocation15 + $0x20] sm:$0xf]
    %v7200 = vld [vmem:[#allocation15 + $0x24] sm:$0xf]
    %v7201 = vld [vmem:[#allocation15 + $0x28] sm:$0xf]
    %v7202 = vld [vmem:[#allocation15 + $0x2c] sm:$0xf]
    %v7203 = vld [vmem:[#allocation15 + $0x30] sm:$0xf]
    %v7204 = vld [vmem:[#allocation15 + $0x34] sm:$0xf]
    %v7205 = vld [vmem:[#allocation15 + $0x38] sm:$0xf]
    %v7206 = vld [vmem:[#allocation15 + $0x3c] sm:$0xf]
    %v7207 = vld [vmem:[#allocation15 + $0x40] sm:$0xf]
    %v7208 = vld [vmem:[#allocation15 + $0x44] sm:$0xf]
    %v7209 = vld [vmem:[#allocation15 + $0x48] sm:$0xf]
    %v7210 = vld [vmem:[#allocation15 + $0x4c] sm:$0xf]
    %v7211 = vld [vmem:[#allocation15 + $0x50] sm:$0xf]
    %v7212 = vld [vmem:[#allocation15 + $0x54] sm:$0xf]
    %v7213 = vld [vmem:[#allocation15 + $0x58] sm:$0xf]
    %v7214 = vld [vmem:[#allocation15 + $0x5c] sm:$0xf]
    %v7215 = vld [vmem:[#allocation15 + $0x60] sm:$0xf]
    %v7216 = vld [vmem:[#allocation15 + $0x64] sm:$0xf]
    %v7217 = vld [vmem:[#allocation15 + $0x68] sm:$0xf]
    %v7218 = vld [vmem:[#allocation15 + $0x6c] sm:$0xf]
    %v7219 = vld [vmem:[#allocation15 + $0x70] sm:$0xf]
    %v7220 = vld [vmem:[#allocation15 + $0x74] sm:$0xf]
    %v7221 = vld [vmem:[#allocation15 + $0x78] sm:$0xf]
    %v7222 = vld [vmem:[#allocation15 + $0x7c] sm:$0xf]
    %v7223 = vld [vmem:[#allocation15 + $0x80] sm:$0xf]
    %v7224 = vld [vmem:[#allocation15 + $0x84] sm:$0xf]
    %v7225 = vld [vmem:[#allocation15 + $0x88] sm:$0xf]
    %v7226 = vld [vmem:[#allocation15 + $0x8c] sm:$0xf]
    %v7227 = vld [vmem:[#allocation15 + $0x90] sm:$0xf]
    %v7228 = vld [vmem:[#allocation15 + $0x94] sm:$0xf]
    %v7229 = vld [vmem:[#allocation15 + $0x98] sm:$0xf]
    %v7230 = vld [vmem:[#allocation15 + $0x9c] sm:$0xf]
    %v7231 = vld [vmem:[#allocation15 + $0xa0] sm:$0xf]
    %v7232 = vld [vmem:[#allocation15 + $0xa4] sm:$0xf]
    %v7233 = vld [vmem:[#allocation15 + $0xa8] sm:$0xf]
    %v7234 = vld [vmem:[#allocation15 + $0xac] sm:$0xf]
    %v7235 = vld [vmem:[#allocation15 + $0xb0] sm:$0xf]
    %v7236 = vld [vmem:[#allocation15 + $0xb4] sm:$0xf]
    %v7237 = vld [vmem:[#allocation15 + $0xb8] sm:$0xf]
    %v7238 = vld [vmem:[#allocation15 + $0xbc] sm:$0xf]
    %v7239 = vld [vmem:[#allocation15 + $0xc0] sm:$0xf]
    %v7240 = vld [vmem:[#allocation15 + $0xc4] sm:$0xf]
    %v7241 = vld [vmem:[#allocation15 + $0xc8] sm:$0xf]
    %v7242 = vld [vmem:[#allocation15 + $0xcc] sm:$0xf]
    %v7243 = vld [vmem:[#allocation15 + $0xd0] sm:$0xf]
    %v7244 = vld [vmem:[#allocation15 + $0xd4] sm:$0xf]
    %v7245 = vld [vmem:[#allocation15 + $0xd8] sm:$0xf]
    %v7246 = vld [vmem:[#allocation15 + $0xdc] sm:$0xf]
    %v7247 = vpack.c.bf16 %v7188, %v7187
    %v7248 = vpack.c.bf16 %v7190, %v7189
    %v7305 = vunpack.c.l.b16 %v7191
    %v7306 = vunpack.c.l.b16 %v7192
    %v7307 = vunpack.c.l.b16 %v7193
    %v7308 = vunpack.c.l.b16 %v7194
    %v7309 = vunpack.c.l.b16 %v7195
    %v7310 = vunpack.c.l.b16 %v7196
    %v7311 = vunpack.c.l.b16 %v7197
    %v7312 = vunpack.c.l.b16 %v7198
    %v7313 = vunpack.c.l.b16 %v7199
    %v7314 = vunpack.c.l.b16 %v7200
    %v7315 = vunpack.c.l.b16 %v7201
    %v7316 = vunpack.c.l.b16 %v7202
    %v7317 = vunpack.c.l.b16 %v7203
    %v7318 = vunpack.c.l.b16 %v7204
    %v7319 = vunpack.c.l.b16 %v7205
    %v7320 = vunpack.c.l.b16 %v7206
    %v7321 = vunpack.c.l.b16 %v7207
    %v7322 = vunpack.c.l.b16 %v7208
    %v7323 = vunpack.c.l.b16 %v7209
    %v7324 = vunpack.c.l.b16 %v7210
    %v7325 = vunpack.c.l.b16 %v7211
    %v7326 = vunpack.c.l.b16 %v7212
    %v7327 = vunpack.c.l.b16 %v7213
    %v7328 = vunpack.c.l.b16 %v7214
    %v7329 = vunpack.c.l.b16 %v7215
    %v7330 = vunpack.c.l.b16 %v7216
    %v7331 = vunpack.c.l.b16 %v7217
    %v7332 = vunpack.c.l.b16 %v7218
    %v7333 = vunpack.c.l.b16 %v7219
    %v7334 = vunpack.c.l.b16 %v7220
    %v7335 = vunpack.c.l.b16 %v7221
    %v7336 = vunpack.c.l.b16 %v7222
    %v7337 = vunpack.c.l.b16 %v7223
    %v7338 = vunpack.c.l.b16 %v7224
    %v7339 = vunpack.c.l.b16 %v7225
    %v7340 = vunpack.c.l.b16 %v7226
    %v7341 = vunpack.c.l.b16 %v7227
    %v7342 = vunpack.c.l.b16 %v7228
    %v7343 = vunpack.c.l.b16 %v7229
    %v7344 = vunpack.c.l.b16 %v7230
    %v7345 = vunpack.c.l.b16 %v7231
    %v7346 = vunpack.c.l.b16 %v7232
    %v7347 = vunpack.c.l.b16 %v7233
    %v7348 = vunpack.c.l.b16 %v7234
    %v7349 = vunpack.c.l.b16 %v7235
    %v7350 = vunpack.c.l.b16 %v7236
    %v7351 = vunpack.c.l.b16 %v7237
    %v7352 = vunpack.c.l.b16 %v7238
    %v7353 = vunpack.c.l.b16 %v7239
    %v7354 = vunpack.c.l.b16 %v7240
    %v7355 = vunpack.c.l.b16 %v7241
    %v7356 = vunpack.c.l.b16 %v7242
    %v7357 = vunpack.c.l.b16 %v7243
    %v7358 = vunpack.c.l.b16 %v7244
    %v7359 = vunpack.c.l.b16 %v7245
    %v7360 = vunpack.c.l.b16 %v7246
    %v7361 = vpack.c.b16 %v7306, %v7305
    %v7362 = vpack.c.b16 %v7308, %v7307
    %v7363 = vpack.c.b16 %v7310, %v7309
    %v7364 = vpack.c.b16 %v7312, %v7311
    %v7365 = vpack.c.b16 %v7314, %v7313
    %v7366 = vpack.c.b16 %v7316, %v7315
    %v7367 = vpack.c.b16 %v7318, %v7317
    %v7368 = vpack.c.b16 %v7320, %v7319
    %v7369 = vpack.c.b16 %v7322, %v7321
    %v7370 = vpack.c.b16 %v7324, %v7323
    %v7371 = vpack.c.b16 %v7326, %v7325
    %v7372 = vpack.c.b16 %v7328, %v7327
    %v7373 = vpack.c.b16 %v7330, %v7329
    %v7374 = vpack.c.b16 %v7332, %v7331
    %v7375 = vpack.c.b16 %v7334, %v7333
    %v7376 = vpack.c.b16 %v7336, %v7335
    %v7377 = vpack.c.b16 %v7338, %v7337
    %v7378 = vpack.c.b16 %v7340, %v7339
    %v7379 = vpack.c.b16 %v7342, %v7341
    %v7380 = vpack.c.b16 %v7344, %v7343
    %v7381 = vpack.c.b16 %v7346, %v7345
    %v7382 = vpack.c.b16 %v7348, %v7347
    %v7383 = vpack.c.b16 %v7350, %v7349
    %v7384 = vpack.c.b16 %v7352, %v7351
    %v7385 = vpack.c.b16 %v7354, %v7353
    %v7386 = vpack.c.b16 %v7356, %v7355
    %v7387 = vpack.c.b16 %v7358, %v7357
    %v7388 = vpack.c.b16 %v7360, %v7359
    %v7390 = vsel %vm2542, %v7361, 0
    %v7393 = vsel %vm2542, %v7362, 0
    %v7396 = vsel %vm2542, %v7363, 0
    %v7399 = vsel %vm2542, %v7364, 0
    %v7402 = vsel %vm2542, %v7365, 0
    %v7405 = vsel %vm2542, %v7366, 0
    %v7408 = vsel %vm2542, %v7367, 0
    %v7411 = vsel %vm2542, %v7368, 0
    %v7414 = vsel %vm2542, %v7369, 0
    %v7417 = vsel %vm2542, %v7370, 0
    %v7420 = vsel %vm2542, %v7371, 0
    %v7423 = vsel %vm2542, %v7372, 0
    %v7426 = vsel %vm2542, %v7373, 0
    %v7429 = vsel %vm2542, %v7374, 0
    %v7432 = vsel %vm2542, %v7375, 0
    %v7435 = vsel %vm2542, %v7376, 0
    %v7438 = vsel %vm2542, %v7377, 0
    %v7441 = vsel %vm2542, %v7378, 0
    %v7444 = vsel %vm2542, %v7379, 0
    %v7447 = vsel %vm2542, %v7380, 0
    %v7450 = vsel %vm2542, %v7381, 0
    %v7453 = vsel %vm2542, %v7382, 0
    %v7456 = vsel %vm2542, %v7383, 0
    %v7459 = vsel %vm2542, %v7384, 0
    %v7462 = vsel %vm2542, %v7385, 0
    %v7465 = vsel %vm2542, %v7386, 0
    %v7468 = vsel %vm2542, %v7387, 0
    %v7471 = vsel %vm2542, %v7388, 0
    %7473 = vmatprep.subr.bf16.mxu0 0
    %7474 = vmatpush1.bf16.msra.mxu0 %v7247
    %7475 = vmatprep.subr.bf16.mxu0 0
    %7476 = vmatpush1.bf16.msra.mxu0 %v7248
    %7477 = vmatprep.subr.bf16.mxu0 0
    %7478 = vmatpush1.bf16.msra.mxu0 0
    %7479 = vmatprep.subr.bf16.mxu0 0
    %7480 = vmatpush1.bf16.msra.mxu0 0
    %7481 = vmatprep.subr.bf16.mxu0 0
    %7482 = vmatpush1.bf16.msra.mxu0 0
    %7483 = vmatprep.subr.bf16.mxu0 0
    %7484 = vmatpush1.bf16.msra.mxu0 0
    %7485 = vmatprep.subr.bf16.mxu0 0
    %7486 = vmatpush1.bf16.msra.mxu0 0
    %7487 = vmatprep.subr.bf16.mxu0 0
    %7488 = vmatpush1.bf16.msra.mxu0 0
    %7489 = vmatprep.subr.bf16.mxu0 0
    %7490 = vmatpush1.bf16.msra.mxu0 0
    %7491 = vmatprep.subr.bf16.mxu0 0
    %7492 = vmatpush1.bf16.msra.mxu0 0
    %7493 = vmatprep.subr.bf16.mxu0 0
    %7494 = vmatpush1.bf16.msra.mxu0 0
    %7495 = vmatprep.subr.bf16.mxu0 0
    %7496 = vmatpush1.bf16.msra.mxu0 0
    %7497 = vmatprep.subr.bf16.mxu0 0
    %7498 = vmatpush1.bf16.msra.mxu0 0
    %7499 = vmatprep.subr.bf16.mxu0 0
    %7500 = vmatpush1.bf16.msra.mxu0 0
    %7501 = vmatprep.subr.bf16.mxu0 0
    %7502 = vmatpush1.bf16.msra.mxu0 0
    %7503 = vmatprep.subr.bf16.mxu0 0
    %7504 = vmatpush1.bf16.msra.mxu0 0
    %7505 = vmatprep.mubr.bf16.mxu0 0
    %7506 = vmatmul.mubr.bf16.gmra.mrb[0].mxu0 %v7390
    %v7507 = vpop.f32.mrb[0].mxu0
    %v7508 = vadd.f32 0.0, %v7507
    %v7509 = vpop.f32.mrb[0].mxu0
    %v7510 = vpop.f32.mrb[0].mxu0
    %v7511 = vadd.f32 0.0, %v7510
    %v7512 = vpop.f32.mrb[0].mxu0
    %7513 = vmatprep.mubr.bf16.mxu0 0
    %7514 = vmatmul.mubr.bf16.gmra.mrb[0].mxu0 %v7393
    %v7515 = vpop.f32.mrb[0].mxu0
    %v7516 = vadd.f32 0.0, %v7515
    %v7517 = vpop.f32.mrb[0].mxu0
    %v7518 = vpop.f32.mrb[0].mxu0
    %v7519 = vadd.f32 0.0, %v7518
    %v7520 = vpop.f32.mrb[0].mxu0
    %7521 = vmatprep.mubr.bf16.mxu0 0
    %7522 = vmatmul.mubr.bf16.gmra.mrb[0].mxu0 %v7396
    %v7523 = vpop.f32.mrb[0].mxu0
    %v7524 = vadd.f32 0.0, %v7523
    %v7525 = vpop.f32.mrb[0].mxu0
    %v7526 = vpop.f32.mrb[0].mxu0
    %v7527 = vadd.f32 0.0, %v7526
    %v7528 = vpop.f32.mrb[0].mxu0
    %7529 = vmatprep.mubr.bf16.mxu0 0
    %7530 = vmatmul.mubr.bf16.gmra.mrb[0].mxu0 %v7399
    %v7531 = vpop.f32.mrb[0].mxu0
    %v7532 = vadd.f32 0.0, %v7531
    %v7533 = vpop.f32.mrb[0].mxu0
    %v7534 = vpop.f32.mrb[0].mxu0
    %v7535 = vadd.f32 0.0, %v7534
    %v7536 = vpop.f32.mrb[0].mxu0
    %7537 = vmatprep.mubr.bf16.mxu0 0
    %7538 = vmatmul.mubr.bf16.gmra.mrb[0].mxu0 %v7402
    %v7539 = vpop.f32.mrb[0].mxu0
    %v7540 = vadd.f32 0.0, %v7539
    %v7541 = vpop.f32.mrb[0].mxu0
    %v7542 = vpop.f32.mrb[0].mxu0
    %v7543 = vadd.f32 0.0, %v7542
    %v7544 = vpop.f32.mrb[0].mxu0
    %7545 = vmatprep.mubr.bf16.mxu0 0
    %7546 = vmatmul.mubr.bf16.gmra.mrb[0].mxu0 %v7405
    %v7547 = vpop.f32.mrb[0].mxu0
    %v7548 = vadd.f32 0.0, %v7547
    %v7549 = vpop.f32.mrb[0].mxu0
    %v7550 = vpop.f32.mrb[0].mxu0
    %v7551 = vadd.f32 0.0, %v7550
    %v7552 = vpop.f32.mrb[0].mxu0
    %7553 = vmatprep.mubr.bf16.mxu0 0
    %7554 = vmatmul.mubr.bf16.gmra.mrb[0].mxu0 %v7408
    %v7555 = vpop.f32.mrb[0].mxu0
    %v7556 = vadd.f32 0.0, %v7555
    %v7557 = vpop.f32.mrb[0].mxu0
    %v7558 = vpop.f32.mrb[0].mxu0
    %v7559 = vadd.f32 0.0, %v7558
    %v7560 = vpop.f32.mrb[0].mxu0
    %7561 = vmatprep.mubr.bf16.mxu0 0
    %7562 = vmatmul.mubr.bf16.gmra.mrb[0].mxu0 %v7411
    %v7563 = vpop.f32.mrb[0].mxu0
    %v7564 = vadd.f32 0.0, %v7563
    %v7565 = vpop.f32.mrb[0].mxu0
    %v7566 = vpop.f32.mrb[0].mxu0
    %v7567 = vadd.f32 0.0, %v7566
    %v7568 = vpop.f32.mrb[0].mxu0
    %7569 = vmatprep.mubr.bf16.mxu0 0
    %7570 = vmatmul.mubr.bf16.gmra.mrb[0].mxu0 %v7414
    %v7571 = vpop.f32.mrb[0].mxu0
    %v7572 = vadd.f32 0.0, %v7571
    %v7573 = vpop.f32.mrb[0].mxu0
    %v7574 = vpop.f32.mrb[0].mxu0
    %v7575 = vadd.f32 0.0, %v7574
    %v7576 = vpop.f32.mrb[0].mxu0
    %7577 = vmatprep.mubr.bf16.mxu0 0
    %7578 = vmatmul.mubr.bf16.gmra.mrb[0].mxu0 %v7417
    %v7579 = vpop.f32.mrb[0].mxu0
    %v7580 = vadd.f32 0.0, %v7579
    %v7581 = vpop.f32.mrb[0].mxu0
    %v7582 = vpop.f32.mrb[0].mxu0
    %v7583 = vadd.f32 0.0, %v7582
    %v7584 = vpop.f32.mrb[0].mxu0
    %7585 = vmatprep.mubr.bf16.mxu0 0
    %7586 = vmatmul.mubr.bf16.gmra.mrb[0].mxu0 %v7420
    %v7587 = vpop.f32.mrb[0].mxu0
    %v7588 = vadd.f32 0.0, %v7587
    %v7589 = vpop.f32.mrb[0].mxu0
    %v7590 = vpop.f32.mrb[0].mxu0
    %v7591 = vadd.f32 0.0, %v7590
    %v7592 = vpop.f32.mrb[0].mxu0
    %7593 = vmatprep.mubr.bf16.mxu0 0
    %7594 = vmatmul.mubr.bf16.gmra.mrb[0].mxu0 %v7423
    %v7595 = vpop.f32.mrb[0].mxu0
    %v7596 = vadd.f32 0.0, %v7595
    %v7597 = vpop.f32.mrb[0].mxu0
    %v7598 = vpop.f32.mrb[0].mxu0
    %v7599 = vadd.f32 0.0, %v7598
    %v7600 = vpop.f32.mrb[0].mxu0
    %7601 = vmatprep.mubr.bf16.mxu0 0
    %7602 = vmatmul.mubr.bf16.gmra.mrb[0].mxu0 %v7426
    %v7603 = vpop.f32.mrb[0].mxu0
    %v7604 = vadd.f32 0.0, %v7603
    %v7605 = vpop.f32.mrb[0].mxu0
    %v7606 = vpop.f32.mrb[0].mxu0
    %v7607 = vadd.f32 0.0, %v7606
    %v7608 = vpop.f32.mrb[0].mxu0
    %7609 = vmatprep.mubr.bf16.mxu0 0
    %7610 = vmatmul.mubr.bf16.gmra.mrb[0].mxu0 %v7429
    %v7611 = vpop.f32.mrb[0].mxu0
    %v7612 = vadd.f32 0.0, %v7611
    %v7613 = vpop.f32.mrb[0].mxu0
    %v7614 = vpop.f32.mrb[0].mxu0
    %v7615 = vadd.f32 0.0, %v7614
    %v7616 = vpop.f32.mrb[0].mxu0
    %7617 = vmatprep.mubr.bf16.mxu0 0
    %7618 = vmatmul.mubr.bf16.gmra.mrb[0].mxu0 %v7432
    %v7619 = vpop.f32.mrb[0].mxu0
    %v7620 = vadd.f32 0.0, %v7619
    %v7621 = vpop.f32.mrb[0].mxu0
    %v7622 = vpop.f32.mrb[0].mxu0
    %v7623 = vadd.f32 0.0, %v7622
    %v7624 = vpop.f32.mrb[0].mxu0
    %7625 = vmatprep.mubr.bf16.mxu0 0
    %7626 = vmatmul.mubr.bf16.gmra.mrb[0].mxu0 %v7435
    %v7627 = vpop.f32.mrb[0].mxu0
    %v7628 = vadd.f32 0.0, %v7627
    %v7629 = vpop.f32.mrb[0].mxu0
    %v7630 = vpop.f32.mrb[0].mxu0
    %v7631 = vadd.f32 0.0, %v7630
    %v7632 = vpop.f32.mrb[0].mxu0
    %7633 = vmatprep.mubr.bf16.mxu0 0
    %7634 = vmatmul.mubr.bf16.gmra.mrb[0].mxu0 %v7438
    %v7635 = vpop.f32.mrb[0].mxu0
    %v7636 = vadd.f32 0.0, %v7635
    %v7637 = vpop.f32.mrb[0].mxu0
    %v7638 = vpop.f32.mrb[0].mxu0
    %v7639 = vadd.f32 0.0, %v7638
    %v7640 = vpop.f32.mrb[0].mxu0
    %7641 = vmatprep.mubr.bf16.mxu0 0
    %7642 = vmatmul.mubr.bf16.gmra.mrb[0].mxu0 %v7441
    %v7643 = vpop.f32.mrb[0].mxu0
    %v7644 = vadd.f32 0.0, %v7643
    %v7645 = vpop.f32.mrb[0].mxu0
    %v7646 = vpop.f32.mrb[0].mxu0
    %v7647 = vadd.f32 0.0, %v7646
    %v7648 = vpop.f32.mrb[0].mxu0
    %7649 = vmatprep.mubr.bf16.mxu0 0
    %7650 = vmatmul.mubr.bf16.gmra.mrb[0].mxu0 %v7444
    %v7651 = vpop.f32.mrb[0].mxu0
    %v7652 = vadd.f32 0.0, %v7651
    %v7653 = vpop.f32.mrb[0].mxu0
    %v7654 = vpop.f32.mrb[0].mxu0
    %v7655 = vadd.f32 0.0, %v7654
    %v7656 = vpop.f32.mrb[0].mxu0
    %7657 = vmatprep.mubr.bf16.mxu0 0
    %7658 = vmatmul.mubr.bf16.gmra.mrb[0].mxu0 %v7447
    %v7659 = vpop.f32.mrb[0].mxu0
    %v7660 = vadd.f32 0.0, %v7659
    %v7661 = vpop.f32.mrb[0].mxu0
    %v7662 = vpop.f32.mrb[0].mxu0
    %v7663 = vadd.f32 0.0, %v7662
    %v7664 = vpop.f32.mrb[0].mxu0
    %7665 = vmatprep.mubr.bf16.mxu0 0
    %7666 = vmatmul.mubr.bf16.gmra.mrb[0].mxu0 %v7450
    %v7667 = vpop.f32.mrb[0].mxu0
    %v7668 = vadd.f32 0.0, %v7667
    %v7669 = vpop.f32.mrb[0].mxu0
    %v7670 = vpop.f32.mrb[0].mxu0
    %v7671 = vadd.f32 0.0, %v7670
    %v7672 = vpop.f32.mrb[0].mxu0
    %7673 = vmatprep.mubr.bf16.mxu0 0
    %7674 = vmatmul.mubr.bf16.gmra.mrb[0].mxu0 %v7453
    %v7675 = vpop.f32.mrb[0].mxu0
    %v7676 = vadd.f32 0.0, %v7675
    %v7677 = vpop.f32.mrb[0].mxu0
    %v7678 = vpop.f32.mrb[0].mxu0
    %v7679 = vadd.f32 0.0, %v7678
    %v7680 = vpop.f32.mrb[0].mxu0
    %7681 = vmatprep.mubr.bf16.mxu0 0
    %7682 = vmatmul.mubr.bf16.gmra.mrb[0].mxu0 %v7456
    %v7683 = vpop.f32.mrb[0].mxu0
    %v7684 = vadd.f32 0.0, %v7683
    %v7685 = vpop.f32.mrb[0].mxu0
    %v7686 = vpop.f32.mrb[0].mxu0
    %v7687 = vadd.f32 0.0, %v7686
    %v7688 = vpop.f32.mrb[0].mxu0
    %7689 = vmatprep.mubr.bf16.mxu0 0
    %7690 = vmatmul.mubr.bf16.gmra.mrb[0].mxu0 %v7459
    %v7691 = vpop.f32.mrb[0].mxu0
    %v7692 = vadd.f32 0.0, %v7691
    %v7693 = vpop.f32.mrb[0].mxu0
    %v7694 = vpop.f32.mrb[0].mxu0
    %v7695 = vadd.f32 0.0, %v7694
    %v7696 = vpop.f32.mrb[0].mxu0
    %7697 = vmatprep.mubr.bf16.mxu0 0
    %7698 = vmatmul.mubr.bf16.gmra.mrb[0].mxu0 %v7462
    %v7699 = vpop.f32.mrb[0].mxu0
    %v7700 = vadd.f32 0.0, %v7699
    %v7701 = vpop.f32.mrb[0].mxu0
    %v7702 = vpop.f32.mrb[0].mxu0
    %v7703 = vadd.f32 0.0, %v7702
    %v7704 = vpop.f32.mrb[0].mxu0
    %7705 = vmatprep.mubr.bf16.mxu0 0
    %7706 = vmatmul.mubr.bf16.gmra.mrb[0].mxu0 %v7465
    %v7707 = vpop.f32.mrb[0].mxu0
    %v7708 = vadd.f32 0.0, %v7707
    %v7709 = vpop.f32.mrb[0].mxu0
    %v7710 = vpop.f32.mrb[0].mxu0
    %v7711 = vadd.f32 0.0, %v7710
    %v7712 = vpop.f32.mrb[0].mxu0
    %7713 = vmatprep.mubr.bf16.mxu0 0
    %7714 = vmatmul.mubr.bf16.gmra.mrb[0].mxu0 %v7468
    %v7715 = vpop.f32.mrb[0].mxu0
    %v7716 = vadd.f32 0.0, %v7715
    %v7717 = vpop.f32.mrb[0].mxu0
    %v7718 = vpop.f32.mrb[0].mxu0
    %v7719 = vadd.f32 0.0, %v7718
    %v7720 = vpop.f32.mrb[0].mxu0
    %7721 = vmatprep.mubr.bf16.mxu0 0
    %7722 = vmatmul.mubr.bf16.gmra.mrb[0].mxu0 %v7471
    %v7723 = vpop.f32.mrb[0].mxu0
    %v7724 = vadd.f32 0.0, %v7723
    %v7725 = vpop.f32.mrb[0].mxu0
    %v7726 = vpop.f32.mrb[0].mxu0
    %v7727 = vadd.f32 0.0, %v7726
    %v7728 = vpop.f32.mrb[0].mxu0
    %7729 = vdwg.mxu0
    %7730 = vst.msk [vmem:[#allocation2] sm:$0xff] %vm2884, %v7508
    %7731 = vst.msk [vmem:[#allocation2 + $0x40] sm:$0xff] %vm2884, %v7511
    %7732 = vst.msk [vmem:[#allocation2 + $0x80] sm:$0xff] %vm2884, %v7516
    %7733 = vst.msk [vmem:[#allocation2 + $0xc0] sm:$0xff] %vm2884, %v7519
    %7734 = vst.msk [vmem:[#allocation2 + $0x100] sm:$0xff] %vm2884, %v7524
    %7735 = vst.msk [vmem:[#allocation2 + $0x140] sm:$0xff] %vm2884, %v7527
    %7736 = vst.msk [vmem:[#allocation2 + $0x180] sm:$0xff] %vm2884, %v7532
    %7737 = vst.msk [vmem:[#allocation2 + $0x1c0] sm:$0xff] %vm2884, %v7535
    %7746 = vrot.lane.b32.xlu0 %v7540, 17
    %v7747 = vpop.permute.xlu0 %7746
    %7748 = vrot.lane.b32.xlu0 %v7543, 17
    %v7749 = vpop.permute.xlu0 %7748
    %7750 = vrot.lane.b32.xlu0 %v7548, 17
    %v7751 = vpop.permute.xlu0 %7750
    %7752 = vrot.lane.b32.xlu0 %v7551, 17
    %v7753 = vpop.permute.xlu0 %7752
    %7754 = vrot.lane.b32.xlu0 %v7556, 17
    %v7755 = vpop.permute.xlu0 %7754
    %7756 = vrot.lane.b32.xlu0 %v7559, 17
    %v7757 = vpop.permute.xlu0 %7756
    %7758 = vrot.lane.b32.xlu0 %v7564, 17
    %v7759 = vpop.permute.xlu0 %7758
    %7760 = vrot.lane.b32.xlu0 %v7567, 17
    %v7761 = vpop.permute.xlu0 %7760
    %7770 = vst.msk [vmem:[#allocation2] sm:$0xff] %vm2925, %v7747
    %7771 = vst.msk [vmem:[#allocation2 + $0x40] sm:$0xff] %vm2925, %v7749
    %7772 = vst.msk [vmem:[#allocation2 + $0x80] sm:$0xff] %vm2925, %v7751
    %7773 = vst.msk [vmem:[#allocation2 + $0xc0] sm:$0xff] %vm2925, %v7753
    %7774 = vst.msk [vmem:[#allocation2 + $0x100] sm:$0xff] %vm2925, %v7755
    %7775 = vst.msk [vmem:[#allocation2 + $0x140] sm:$0xff] %vm2925, %v7757
    %7776 = vst.msk [vmem:[#allocation2 + $0x180] sm:$0xff] %vm2925, %v7759
    %7777 = vst.msk [vmem:[#allocation2 + $0x1c0] sm:$0xff] %vm2925, %v7761
    %7786 = vrot.lane.b32.xlu0 %v7572, 34
    %v7787 = vpop.permute.xlu0 %7786
    %7788 = vrot.lane.b32.xlu0 %v7575, 34
    %v7789 = vpop.permute.xlu0 %7788
    %7790 = vrot.lane.b32.xlu0 %v7580, 34
    %v7791 = vpop.permute.xlu0 %7790
    %7792 = vrot.lane.b32.xlu0 %v7583, 34
    %v7793 = vpop.permute.xlu0 %7792
    %7794 = vrot.lane.b32.xlu0 %v7588, 34
    %v7795 = vpop.permute.xlu0 %7794
    %7796 = vrot.lane.b32.xlu0 %v7591, 34
    %v7797 = vpop.permute.xlu0 %7796
    %7798 = vrot.lane.b32.xlu0 %v7596, 34
    %v7799 = vpop.permute.xlu0 %7798
    %7800 = vrot.lane.b32.xlu0 %v7599, 34
    %v7801 = vpop.permute.xlu0 %7800
    %7810 = vst.msk [vmem:[#allocation2] sm:$0xff] %vm2966, %v7787
    %7811 = vst.msk [vmem:[#allocation2 + $0x40] sm:$0xff] %vm2966, %v7789
    %7812 = vst.msk [vmem:[#allocation2 + $0x80] sm:$0xff] %vm2966, %v7791
    %7813 = vst.msk [vmem:[#allocation2 + $0xc0] sm:$0xff] %vm2966, %v7793
    %7814 = vst.msk [vmem:[#allocation2 + $0x100] sm:$0xff] %vm2966, %v7795
    %7815 = vst.msk [vmem:[#allocation2 + $0x140] sm:$0xff] %vm2966, %v7797
    %7816 = vst.msk [vmem:[#allocation2 + $0x180] sm:$0xff] %vm2966, %v7799
    %7817 = vst.msk [vmem:[#allocation2 + $0x1c0] sm:$0xff] %vm2966, %v7801
    %7826 = vrot.lane.b32.xlu0 %v7604, 51
    %v7827 = vpop.permute.xlu0 %7826
    %7828 = vrot.lane.b32.xlu0 %v7607, 51
    %v7829 = vpop.permute.xlu0 %7828
    %7830 = vrot.lane.b32.xlu0 %v7612, 51
    %v7831 = vpop.permute.xlu0 %7830
    %7832 = vrot.lane.b32.xlu0 %v7615, 51
    %v7833 = vpop.permute.xlu0 %7832
    %7834 = vrot.lane.b32.xlu0 %v7620, 51
    %v7835 = vpop.permute.xlu0 %7834
    %7836 = vrot.lane.b32.xlu0 %v7623, 51
    %v7837 = vpop.permute.xlu0 %7836
    %7838 = vrot.lane.b32.xlu0 %v7628, 51
    %v7839 = vpop.permute.xlu0 %7838
    %7840 = vrot.lane.b32.xlu0 %v7631, 51
    %v7841 = vpop.permute.xlu0 %7840
    %7850 = vst.msk [vmem:[#allocation2] sm:$0xff] %vm3007, %v7827
    %7851 = vst.msk [vmem:[#allocation2 + $0x40] sm:$0xff] %vm3007, %v7829
    %7852 = vst.msk [vmem:[#allocation2 + $0x80] sm:$0xff] %vm3007, %v7831
    %7853 = vst.msk [vmem:[#allocation2 + $0xc0] sm:$0xff] %vm3007, %v7833
    %7854 = vst.msk [vmem:[#allocation2 + $0x100] sm:$0xff] %vm3007, %v7835
    %7855 = vst.msk [vmem:[#allocation2 + $0x140] sm:$0xff] %vm3007, %v7837
    %7856 = vst.msk [vmem:[#allocation2 + $0x180] sm:$0xff] %vm3007, %v7839
    %7857 = vst.msk [vmem:[#allocation2 + $0x1c0] sm:$0xff] %vm3007, %v7841
    %7866 = vrot.lane.b32.xlu0 %v7636, 68
    %v7867 = vpop.permute.xlu0 %7866
    %7868 = vrot.lane.b32.xlu0 %v7639, 68
    %v7869 = vpop.permute.xlu0 %7868
    %7870 = vrot.lane.b32.xlu0 %v7644, 68
    %v7871 = vpop.permute.xlu0 %7870
    %7872 = vrot.lane.b32.xlu0 %v7647, 68
    %v7873 = vpop.permute.xlu0 %7872
    %7874 = vrot.lane.b32.xlu0 %v7652, 68
    %v7875 = vpop.permute.xlu0 %7874
    %7876 = vrot.lane.b32.xlu0 %v7655, 68
    %v7877 = vpop.permute.xlu0 %7876
    %7878 = vrot.lane.b32.xlu0 %v7660, 68
    %v7879 = vpop.permute.xlu0 %7878
    %7880 = vrot.lane.b32.xlu0 %v7663, 68
    %v7881 = vpop.permute.xlu0 %7880
    %7890 = vst.msk [vmem:[#allocation2] sm:$0xff] %vm3048, %v7867
    %7891 = vst.msk [vmem:[#allocation2 + $0x40] sm:$0xff] %vm3048, %v7869
    %7892 = vst.msk [vmem:[#allocation2 + $0x80] sm:$0xff] %vm3048, %v7871
    %7893 = vst.msk [vmem:[#allocation2 + $0xc0] sm:$0xff] %vm3048, %v7873
    %7894 = vst.msk [vmem:[#allocation2 + $0x100] sm:$0xff] %vm3048, %v7875
    %7895 = vst.msk [vmem:[#allocation2 + $0x140] sm:$0xff] %vm3048, %v7877
    %7896 = vst.msk [vmem:[#allocation2 + $0x180] sm:$0xff] %vm3048, %v7879
    %7897 = vst.msk [vmem:[#allocation2 + $0x1c0] sm:$0xff] %vm3048, %v7881
    %7906 = vrot.lane.b32.xlu0 %v7668, 85
    %v7907 = vpop.permute.xlu0 %7906
    %7908 = vrot.lane.b32.xlu0 %v7671, 85
    %v7909 = vpop.permute.xlu0 %7908
    %7910 = vrot.lane.b32.xlu0 %v7676, 85
    %v7911 = vpop.permute.xlu0 %7910
    %7912 = vrot.lane.b32.xlu0 %v7679, 85
    %v7913 = vpop.permute.xlu0 %7912
    %7914 = vrot.lane.b32.xlu0 %v7684, 85
    %v7915 = vpop.permute.xlu0 %7914
    %7916 = vrot.lane.b32.xlu0 %v7687, 85
    %v7917 = vpop.permute.xlu0 %7916
    %7918 = vrot.lane.b32.xlu0 %v7692, 85
    %v7919 = vpop.permute.xlu0 %7918
    %7920 = vrot.lane.b32.xlu0 %v7695, 85
    %v7921 = vpop.permute.xlu0 %7920
    %7930 = vst.msk [vmem:[#allocation2] sm:$0xff] %vm3089, %v7907
    %7931 = vst.msk [vmem:[#allocation2 + $0x40] sm:$0xff] %vm3089, %v7909
    %7932 = vst.msk [vmem:[#allocation2 + $0x80] sm:$0xff] %vm3089, %v7911
    %7933 = vst.msk [vmem:[#allocation2 + $0xc0] sm:$0xff] %vm3089, %v7913
    %7934 = vst.msk [vmem:[#allocation2 + $0x100] sm:$0xff] %vm3089, %v7915
    %7935 = vst.msk [vmem:[#allocation2 + $0x140] sm:$0xff] %vm3089, %v7917
    %7936 = vst.msk [vmem:[#allocation2 + $0x180] sm:$0xff] %vm3089, %v7919
    %7937 = vst.msk [vmem:[#allocation2 + $0x1c0] sm:$0xff] %vm3089, %v7921
    %7946 = vrot.lane.b32.xlu0 %v7700, 102
    %v7947 = vpop.permute.xlu0 %7946
    %7948 = vrot.lane.b32.xlu0 %v7703, 102
    %v7949 = vpop.permute.xlu0 %7948
    %7950 = vrot.lane.b32.xlu0 %v7708, 102
    %v7951 = vpop.permute.xlu0 %7950
    %7952 = vrot.lane.b32.xlu0 %v7711, 102
    %v7953 = vpop.permute.xlu0 %7952
    %7954 = vrot.lane.b32.xlu0 %v7716, 102
    %v7955 = vpop.permute.xlu0 %7954
    %7956 = vrot.lane.b32.xlu0 %v7719, 102
    %v7957 = vpop.permute.xlu0 %7956
    %7958 = vrot.lane.b32.xlu0 %v7724, 102
    %v7959 = vpop.permute.xlu0 %7958
    %7960 = vrot.lane.b32.xlu0 %v7727, 102
    %v7961 = vpop.permute.xlu0 %7960
    %7970 = vst.msk [vmem:[#allocation2] sm:$0xff] %vm3130, %v7947
    %7971 = vst.msk [vmem:[#allocation2 + $0x40] sm:$0xff] %vm3130, %v7949
    %7972 = vst.msk [vmem:[#allocation2 + $0x80] sm:$0xff] %vm3130, %v7951
    %7973 = vst.msk [vmem:[#allocation2 + $0xc0] sm:$0xff] %vm3130, %v7953
    %7974 = vst.msk [vmem:[#allocation2 + $0x100] sm:$0xff] %vm3130, %v7955
    %7975 = vst.msk [vmem:[#allocation2 + $0x140] sm:$0xff] %vm3130, %v7957
    %7976 = vst.msk [vmem:[#allocation2 + $0x180] sm:$0xff] %vm3130, %v7959
    %7977 = vst.msk [vmem:[#allocation2 + $0x1c0] sm:$0xff] %vm3130, %v7961
    %v7978 = vld [vmem:[#allocation2] sm:$0xff]
    %v7979 = vld [vmem:[#allocation2 + $0x40] sm:$0xff]
    %v7980 = vld [vmem:[#allocation2 + $0x80] sm:$0xff]
    %v7981 = vld [vmem:[#allocation2 + $0xc0] sm:$0xff]
    %v7982 = vld [vmem:[#allocation2 + $0x100] sm:$0xff]
    %v7983 = vld [vmem:[#allocation2 + $0x140] sm:$0xff]
    %v7984 = vld [vmem:[#allocation2 + $0x180] sm:$0xff]
    %v7985 = vld [vmem:[#allocation2 + $0x1c0] sm:$0xff]
    %v7986 = vpack.c.bf16 %v7979, %v7978
    %v7987 = vpack.c.bf16 %v7981, %v7980
    %v7988 = vpack.c.bf16 %v7983, %v7982
    %v7989 = vpack.c.bf16 %v7985, %v7984
    %v7990 = vld [vmem:[#allocation17] sm:$0xf]
    %v7991 = vld [vmem:[#allocation17 + $0x4] sm:$0xf]
    %v7992 = vld [vmem:[#allocation17 + $0x8] sm:$0xf]
    %v7993 = vld [vmem:[#allocation17 + $0xc] sm:$0xf]
    %v7994 = vld [vmem:[#allocation17 + $0x10] sm:$0xf]
    %v7995 = vld [vmem:[#allocation17 + $0x14] sm:$0xf]
    %v7996 = vld [vmem:[#allocation17 + $0x18] sm:$0xf]
    %v7997 = vld [vmem:[#allocation17 + $0x1c] sm:$0xf]
    %v7998 = vld [vmem:[#allocation17 + $0x20] sm:$0xf]
    %v7999 = vld [vmem:[#allocation17 + $0x24] sm:$0xf]
    %v8000 = vld [vmem:[#allocation17 + $0x28] sm:$0xf]
    %v8001 = vld [vmem:[#allocation17 + $0x2c] sm:$0xf]
    %v8002 = vld [vmem:[#allocation17 + $0x30] sm:$0xf]
    %v8003 = vld [vmem:[#allocation17 + $0x34] sm:$0xf]
    %v8004 = vld [vmem:[#allocation17 + $0x38] sm:$0xf]
    %v8005 = vld [vmem:[#allocation3] sm:$0xff]
    %v8006 = vld [vmem:[#allocation3 + $0x8] sm:$0xff]
    %v8007 = vld [vmem:[#allocation3 + $0x10] sm:$0xff]
    %v8008 = vld [vmem:[#allocation3 + $0x18] sm:$0xff]
    %v8009 = vld [vmem:[#allocation3 + $0x20] sm:$0xff]
    %v8010 = vld [vmem:[#allocation3 + $0x28] sm:$0xff]
    %v8011 = vld [vmem:[#allocation3 + $0x30] sm:$0xff]
    %v8012 = vld [vmem:[#allocation3 + $0x38] sm:$0xff]
    %8014 = vset.pattern.permute.xlu0 3
    %8015 = vperm.xlu0 %8014, %v8005
    %v8016 = vpop.permute.xlu0 %8015
    %8019 = vset.pattern.permute.xlu0 3
    %8020 = vperm.xlu0 %8019, %v8006
    %v8021 = vpop.permute.xlu0 %8020
    %8024 = vset.pattern.permute.xlu0 3
    %8025 = vperm.xlu0 %8024, %v8007
    %v8026 = vpop.permute.xlu0 %8025
    %8029 = vset.pattern.permute.xlu0 3
    %8030 = vperm.xlu0 %8029, %v8008
    %v8031 = vpop.permute.xlu0 %8030
    %8034 = vset.pattern.permute.xlu0 3
    %8035 = vperm.xlu0 %8034, %v8009
    %v8036 = vpop.permute.xlu0 %8035
    %8039 = vset.pattern.permute.xlu0 3
    %8040 = vperm.xlu0 %8039, %v8010
    %v8041 = vpop.permute.xlu0 %8040
    %8044 = vset.pattern.permute.xlu0 3
    %8045 = vperm.xlu0 %8044, %v8011
    %v8046 = vpop.permute.xlu0 %8045
    %8049 = vset.pattern.permute.xlu0 3
    %8050 = vperm.xlu0 %8049, %v8012
    %v8051 = vpop.permute.xlu0 %8050
    %v8068 = vunpack.c.l.b16 %v7990
    %v8069 = vunpack.c.l.b16 %v7991
    %v8070 = vunpack.c.l.b16 %v7992
    %v8071 = vunpack.c.l.b16 %v7993
    %v8072 = vunpack.c.l.b16 %v7994
    %v8073 = vunpack.c.l.b16 %v7995
    %v8074 = vunpack.c.l.b16 %v7996
    %v8075 = vunpack.c.l.b16 %v7997
    %v8076 = vunpack.c.l.b16 %v7998
    %v8077 = vunpack.c.l.b16 %v7999
    %v8078 = vunpack.c.l.b16 %v8000
    %v8079 = vunpack.c.l.b16 %v8001
    %v8080 = vunpack.c.l.b16 %v8002
    %v8081 = vunpack.c.l.b16 %v8003
    %v8082 = vunpack.c.l.b16 %v8004
    %v8083 = vpack.c.b16 %v8069, %v8068
    %v8084 = vpack.c.b16 %v8071, %v8070
    %v8085 = vpack.c.b16 %v8073, %v8072
    %v8086 = vpack.c.b16 %v8075, %v8074
    %v8087 = vpack.c.b16 %v8077, %v8076
    %v8088 = vpack.c.b16 %v8079, %v8078
    %v8089 = vpack.c.b16 %v8081, %v8080
    %v8090 = vpack.c.b16 %v8082, %v8082
    %v8099 = vsel %vm3259, %v7986, 0
    %v8102 = vsel %vm3259, %v7987, 0
    %v8105 = vsel %vm3259, %v7988, 0
    %v8108 = vsel %vm3259, %v7989, 0
    %v8111 = vand.u32 %v8090, %v1619
    %8113 = vmatprep.subr.bf16.mxu0 0
    %8114 = vmatpush1.bf16.msra.mxu0 %v8083
    %8115 = vmatprep.subr.bf16.mxu0 0
    %8116 = vmatpush1.bf16.msra.mxu0 %v8084
    %8117 = vmatprep.subr.bf16.mxu0 0
    %8118 = vmatpush1.bf16.msra.mxu0 %v8085
    %8119 = vmatprep.subr.bf16.mxu0 0
    %8120 = vmatpush1.bf16.msra.mxu0 %v8086
    %8121 = vmatprep.subr.bf16.mxu0 0
    %8122 = vmatpush1.bf16.msra.mxu0 %v8087
    %8123 = vmatprep.subr.bf16.mxu0 0
    %8124 = vmatpush1.bf16.msra.mxu0 %v8088
    %8125 = vmatprep.subr.bf16.mxu0 0
    %8126 = vmatpush1.bf16.msra.mxu0 %v8089
    %8127 = vmatprep.subr.bf16.mxu0 0
    %8128 = vmatpush1.bf16.msra.mxu0 %v8111
    %8129 = vmatprep.subr.bf16.mxu0 0
    %8130 = vmatpush1.bf16.msra.mxu0 0
    %8131 = vmatprep.subr.bf16.mxu0 0
    %8132 = vmatpush1.bf16.msra.mxu0 0
    %8133 = vmatprep.subr.bf16.mxu0 0
    %8134 = vmatpush1.bf16.msra.mxu0 0
    %8135 = vmatprep.subr.bf16.mxu0 0
    %8136 = vmatpush1.bf16.msra.mxu0 0
    %8137 = vmatprep.subr.bf16.mxu0 0
    %8138 = vmatpush1.bf16.msra.mxu0 0
    %8139 = vmatprep.subr.bf16.mxu0 0
    %8140 = vmatpush1.bf16.msra.mxu0 0
    %8141 = vmatprep.subr.bf16.mxu0 0
    %8142 = vmatpush1.bf16.msra.mxu0 0
    %8143 = vmatprep.subr.bf16.mxu0 0
    %8144 = vmatpush1.bf16.msra.mxu0 0
    %8145 = vmatprep.mubr.bf16.mxu0 0
    %8146 = vmatmul.mubr.bf16.gmra.mrb[0].mxu0 %v8099
    %v8147 = vpop.f32.mrb[0].mxu0
    %v8148 = vadd.f32 %v8016, %v8147
    %v8149 = vpop.f32.mrb[0].mxu0
    %v8150 = vpop.f32.mrb[0].mxu0
    %v8151 = vadd.f32 %v8021, %v8150
    %v8152 = vpop.f32.mrb[0].mxu0
    %8153 = vmatprep.mubr.bf16.mxu0 0
    %8154 = vmatmul.mubr.bf16.gmra.mrb[0].mxu0 %v8102
    %v8155 = vpop.f32.mrb[0].mxu0
    %v8156 = vadd.f32 %v8026, %v8155
    %v8157 = vpop.f32.mrb[0].mxu0
    %v8158 = vpop.f32.mrb[0].mxu0
    %v8159 = vadd.f32 %v8031, %v8158
    %v8160 = vpop.f32.mrb[0].mxu0
    %8161 = vmatprep.mubr.bf16.mxu0 0
    %8162 = vmatmul.mubr.bf16.gmra.mrb[0].mxu0 %v8105
    %v8163 = vpop.f32.mrb[0].mxu0
    %v8164 = vadd.f32 %v8036, %v8163
    %v8165 = vpop.f32.mrb[0].mxu0
    %v8166 = vpop.f32.mrb[0].mxu0
    %v8167 = vadd.f32 %v8041, %v8166
    %v8168 = vpop.f32.mrb[0].mxu0
    %8169 = vmatprep.mubr.bf16.mxu0 0
    %8170 = vmatmul.mubr.bf16.gmra.mrb[0].mxu0 %v8108
    %v8171 = vpop.f32.mrb[0].mxu0
    %v8172 = vadd.f32 %v8046, %v8171
    %v8173 = vpop.f32.mrb[0].mxu0
    %v8174 = vpop.f32.mrb[0].mxu0
    %v8175 = vadd.f32 %v8051, %v8174
    %v8176 = vpop.f32.mrb[0].mxu0
    %8177 = vdwg.mxu0
    %v8178 = vmax.f32 %v8148, 0.0
    %v8179 = vmax.f32 %v8151, 0.0
    %v8180 = vmax.f32 %v8156, 0.0
    %v8181 = vmax.f32 %v8159, 0.0
    %v8182 = vmax.f32 %v8164, 0.0
    %v8183 = vmax.f32 %v8167, 0.0
    %v8184 = vmax.f32 %v8172, 0.0
    %v8185 = vmax.f32 %v8175, 0.0
    %v8186 = vld [vmem:[%s10] sm:$0xf]
    %v8187 = vld [vmem:[%s10 + $0x4] sm:$0xf]
    %v8188 = vld [vmem:[%s10 + $0x8] sm:$0xf]
    %v8189 = vld [vmem:[%s10 + $0xc] sm:$0xf]
    %v8190 = vld [vmem:[%s10 + $0x10] sm:$0xf]
    %v8191 = vld [vmem:[%s10 + $0x14] sm:$0xf]
    %v8192 = vld [vmem:[%s10 + $0x18] sm:$0xf]
    %v8193 = vld [vmem:[%s10 + $0x1c] sm:$0xf]
    %v8194 = vld [vmem:[%s10 + $0x20] sm:$0xf]
    %v8195 = vld [vmem:[%s10 + $0x24] sm:$0xf]
    %v8196 = vld [vmem:[%s10 + $0x28] sm:$0xf]
    %v8197 = vld [vmem:[%s10 + $0x2c] sm:$0xf]
    %v8198 = vld [vmem:[%s10 + $0x30] sm:$0xf]
    %v8199 = vld [vmem:[%s10 + $0x34] sm:$0xf]
    %v8200 = vld [vmem:[%s10 + $0x38] sm:$0xf]
    %v8201 = vld [vmem:[%s10 + $0x3c] sm:$0xf]
    %v8202 = vld [vmem:[%s10 + $0x40] sm:$0xf]
    %v8203 = vld [vmem:[%s10 + $0x44] sm:$0xf]
    %v8204 = vld [vmem:[%s10 + $0x48] sm:$0xf]
    %v8205 = vld [vmem:[%s10 + $0x4c] sm:$0xf]
    %v8206 = vld [vmem:[%s10 + $0x50] sm:$0xf]
    %v8207 = vld [vmem:[%s10 + $0x54] sm:$0xf]
    %v8208 = vld [vmem:[%s10 + $0x58] sm:$0xf]
    %v8209 = vld [vmem:[%s10 + $0x5c] sm:$0xf]
    %v8210 = vld [vmem:[%s10 + $0x60] sm:$0xf]
    %v8211 = vld [vmem:[%s10 + $0x64] sm:$0xf]
    %v8212 = vld [vmem:[%s10 + $0x68] sm:$0xf]
    %v8213 = vld [vmem:[%s10 + $0x6c] sm:$0xf]
    %v8214 = vpack.c.bf16 %v8179, %v8178
    %v8215 = vpack.c.bf16 %v8181, %v8180
    %v8216 = vpack.c.bf16 %v8183, %v8182
    %v8217 = vpack.c.bf16 %v8185, %v8184
    %v8246 = vunpack.c.l.b16 %v8186
    %v8247 = vunpack.c.l.b16 %v8187
    %v8248 = vunpack.c.l.b16 %v8188
    %v8249 = vunpack.c.l.b16 %v8189
    %v8250 = vunpack.c.l.b16 %v8190
    %v8251 = vunpack.c.l.b16 %v8191
    %v8252 = vunpack.c.l.b16 %v8192
    %v8253 = vunpack.c.l.b16 %v8193
    %v8254 = vunpack.c.l.b16 %v8194
    %v8255 = vunpack.c.l.b16 %v8195
    %v8256 = vunpack.c.l.b16 %v8196
    %v8257 = vunpack.c.l.b16 %v8197
    %v8258 = vunpack.c.l.b16 %v8198
    %v8259 = vunpack.c.l.b16 %v8199
    %v8260 = vunpack.c.l.b16 %v8200
    %v8261 = vunpack.c.l.b16 %v8201
    %v8262 = vunpack.c.l.b16 %v8202
    %v8263 = vunpack.c.l.b16 %v8203
    %v8264 = vunpack.c.l.b16 %v8204
    %v8265 = vunpack.c.l.b16 %v8205
    %v8266 = vunpack.c.l.b16 %v8206
    %v8267 = vunpack.c.l.b16 %v8207
    %v8268 = vunpack.c.l.b16 %v8208
    %v8269 = vunpack.c.l.b16 %v8209
    %v8270 = vunpack.c.l.b16 %v8210
    %v8271 = vunpack.c.l.b16 %v8211
    %v8272 = vunpack.c.l.b16 %v8212
    %v8273 = vunpack.c.l.b16 %v8213
    %v8274 = vpack.c.b16 %v8247, %v8246
    %v8275 = vpack.c.b16 %v8249, %v8248
    %v8276 = vpack.c.b16 %v8251, %v8250
    %v8277 = vpack.c.b16 %v8253, %v8252
    %v8278 = vpack.c.b16 %v8255, %v8254
    %v8279 = vpack.c.b16 %v8257, %v8256
    %v8280 = vpack.c.b16 %v8259, %v8258
    %v8281 = vpack.c.b16 %v8261, %v8260
    %v8282 = vpack.c.b16 %v8263, %v8262
    %v8283 = vpack.c.b16 %v8265, %v8264
    %v8284 = vpack.c.b16 %v8267, %v8266
    %v8285 = vpack.c.b16 %v8269, %v8268
    %v8286 = vpack.c.b16 %v8271, %v8270
    %v8287 = vpack.c.b16 %v8273, %v8272
    %v8289 = vsel %vm3450, %v8274, 0
    %v8292 = vsel %vm3450, %v8275, 0
    %v8295 = vsel %vm3450, %v8276, 0
    %v8298 = vsel %vm3450, %v8277, 0
    %v8301 = vsel %vm3450, %v8278, 0
    %v8304 = vsel %vm3450, %v8279, 0
    %v8307 = vsel %vm3450, %v8280, 0
    %v8310 = vsel %vm3450, %v8281, 0
    %v8313 = vsel %vm3450, %v8282, 0
    %v8316 = vsel %vm3450, %v8283, 0
    %v8319 = vsel %vm3450, %v8284, 0
    %v8322 = vsel %vm3450, %v8285, 0
    %v8325 = vsel %vm3450, %v8286, 0
    %v8328 = vsel %vm3450, %v8287, 0
    %8330 = vmatprep.subr.bf16.mxu0 0
    %8331 = vmatpush1.bf16.msra.mxu0 %v8214
    %8332 = vmatprep.subr.bf16.mxu0 0
    %8333 = vmatpush1.bf16.msra.mxu0 %v8215
    %8334 = vmatprep.subr.bf16.mxu0 0
    %8335 = vmatpush1.bf16.msra.mxu0 %v8216
    %8336 = vmatprep.subr.bf16.mxu0 0
    %8337 = vmatpush1.bf16.msra.mxu0 %v8217
    %8338 = vmatprep.subr.bf16.mxu0 0
    %8339 = vmatpush1.bf16.msra.mxu0 0
    %8340 = vmatprep.subr.bf16.mxu0 0
    %8341 = vmatpush1.bf16.msra.mxu0 0
    %8342 = vmatprep.subr.bf16.mxu0 0
    %8343 = vmatpush1.bf16.msra.mxu0 0
    %8344 = vmatprep.subr.bf16.mxu0 0
    %8345 = vmatpush1.bf16.msra.mxu0 0
    %8346 = vmatprep.subr.bf16.mxu0 0
    %8347 = vmatpush1.bf16.msra.mxu0 0
    %8348 = vmatprep.subr.bf16.mxu0 0
    %8349 = vmatpush1.bf16.msra.mxu0 0
    %8350 = vmatprep.subr.bf16.mxu0 0
    %8351 = vmatpush1.bf16.msra.mxu0 0
    %8352 = vmatprep.subr.bf16.mxu0 0
    %8353 = vmatpush1.bf16.msra.mxu0 0
    %8354 = vmatprep.subr.bf16.mxu0 0
    %8355 = vmatpush1.bf16.msra.mxu0 0
    %8356 = vmatprep.subr.bf16.mxu0 0
    %8357 = vmatpush1.bf16.msra.mxu0 0
    %8358 = vmatprep.subr.bf16.mxu0 0
    %8359 = vmatpush1.bf16.msra.mxu0 0
    %8360 = vmatprep.subr.bf16.mxu0 0
    %8361 = vmatpush1.bf16.msra.mxu0 0
    %8362 = vmatprep.mubr.bf16.mxu0 0
    %8363 = vmatmul.mubr.bf16.gmra.mrb[0].mxu0 %v8289
    %v8364 = vpop.f32.mrb[0].mxu0
    %v8365 = vadd.f32 0.0, %v8364
    %v8366 = vpop.f32.mrb[0].mxu0
    %v8367 = vpop.f32.mrb[0].mxu0
    %v8368 = vadd.f32 0.0, %v8367
    %v8369 = vpop.f32.mrb[0].mxu0
    %8370 = vmatprep.mubr.bf16.mxu0 0
    %8371 = vmatmul.mubr.bf16.gmra.mrb[0].mxu0 %v8292
    %v8372 = vpop.f32.mrb[0].mxu0
    %v8373 = vadd.f32 0.0, %v8372
    %v8374 = vpop.f32.mrb[0].mxu0
    %v8375 = vpop.f32.mrb[0].mxu0
    %v8376 = vadd.f32 0.0, %v8375
    %v8377 = vpop.f32.mrb[0].mxu0
    %8378 = vmatprep.mubr.bf16.mxu0 0
    %8379 = vmatmul.mubr.bf16.gmra.mrb[0].mxu0 %v8295
    %v8380 = vpop.f32.mrb[0].mxu0
    %v8381 = vadd.f32 0.0, %v8380
    %v8382 = vpop.f32.mrb[0].mxu0
    %v8383 = vpop.f32.mrb[0].mxu0
    %v8384 = vadd.f32 0.0, %v8383
    %v8385 = vpop.f32.mrb[0].mxu0
    %8386 = vmatprep.mubr.bf16.mxu0 0
    %8387 = vmatmul.mubr.bf16.gmra.mrb[0].mxu0 %v8298
    %v8388 = vpop.f32.mrb[0].mxu0
    %v8389 = vadd.f32 0.0, %v8388
    %v8390 = vpop.f32.mrb[0].mxu0
    %v8391 = vpop.f32.mrb[0].mxu0
    %v8392 = vadd.f32 0.0, %v8391
    %v8393 = vpop.f32.mrb[0].mxu0
    %8394 = vmatprep.mubr.bf16.mxu0 0
    %8395 = vmatmul.mubr.bf16.gmra.mrb[0].mxu0 %v8301
    %v8396 = vpop.f32.mrb[0].mxu0
    %v8397 = vadd.f32 0.0, %v8396
    %v8398 = vpop.f32.mrb[0].mxu0
    %v8399 = vpop.f32.mrb[0].mxu0
    %v8400 = vadd.f32 0.0, %v8399
    %v8401 = vpop.f32.mrb[0].mxu0
    %8402 = vmatprep.mubr.bf16.mxu0 0
    %8403 = vmatmul.mubr.bf16.gmra.mrb[0].mxu0 %v8304
    %v8404 = vpop.f32.mrb[0].mxu0
    %v8405 = vadd.f32 0.0, %v8404
    %v8406 = vpop.f32.mrb[0].mxu0
    %v8407 = vpop.f32.mrb[0].mxu0
    %v8408 = vadd.f32 0.0, %v8407
    %v8409 = vpop.f32.mrb[0].mxu0
    %8410 = vmatprep.mubr.bf16.mxu0 0
    %8411 = vmatmul.mubr.bf16.gmra.mrb[0].mxu0 %v8307
    %v8412 = vpop.f32.mrb[0].mxu0
    %v8413 = vadd.f32 0.0, %v8412
    %v8414 = vpop.f32.mrb[0].mxu0
    %v8415 = vpop.f32.mrb[0].mxu0
    %v8416 = vadd.f32 0.0, %v8415
    %v8417 = vpop.f32.mrb[0].mxu0
    %8418 = vmatprep.mubr.bf16.mxu0 0
    %8419 = vmatmul.mubr.bf16.gmra.mrb[0].mxu0 %v8310
    %v8420 = vpop.f32.mrb[0].mxu0
    %v8421 = vadd.f32 0.0, %v8420
    %v8422 = vpop.f32.mrb[0].mxu0
    %v8423 = vpop.f32.mrb[0].mxu0
    %v8424 = vadd.f32 0.0, %v8423
    %v8425 = vpop.f32.mrb[0].mxu0
    %8426 = vmatprep.mubr.bf16.mxu0 0
    %8427 = vmatmul.mubr.bf16.gmra.mrb[0].mxu0 %v8313
    %v8428 = vpop.f32.mrb[0].mxu0
    %v8429 = vadd.f32 0.0, %v8428
    %v8430 = vpop.f32.mrb[0].mxu0
    %v8431 = vpop.f32.mrb[0].mxu0
    %v8432 = vadd.f32 0.0, %v8431
    %v8433 = vpop.f32.mrb[0].mxu0
    %8434 = vmatprep.mubr.bf16.mxu0 0
    %8435 = vmatmul.mubr.bf16.gmra.mrb[0].mxu0 %v8316
    %v8436 = vpop.f32.mrb[0].mxu0
    %v8437 = vadd.f32 0.0, %v8436
    %v8438 = vpop.f32.mrb[0].mxu0
    %v8439 = vpop.f32.mrb[0].mxu0
    %v8440 = vadd.f32 0.0, %v8439
    %v8441 = vpop.f32.mrb[0].mxu0
    %8442 = vmatprep.mubr.bf16.mxu0 0
    %8443 = vmatmul.mubr.bf16.gmra.mrb[0].mxu0 %v8319
    %v8444 = vpop.f32.mrb[0].mxu0
    %v8445 = vadd.f32 0.0, %v8444
    %v8446 = vpop.f32.mrb[0].mxu0
    %v8447 = vpop.f32.mrb[0].mxu0
    %v8448 = vadd.f32 0.0, %v8447
    %v8449 = vpop.f32.mrb[0].mxu0
    %8450 = vmatprep.mubr.bf16.mxu0 0
    %8451 = vmatmul.mubr.bf16.gmra.mrb[0].mxu0 %v8322
    %v8452 = vpop.f32.mrb[0].mxu0
    %v8453 = vadd.f32 0.0, %v8452
    %v8454 = vpop.f32.mrb[0].mxu0
    %v8455 = vpop.f32.mrb[0].mxu0
    %v8456 = vadd.f32 0.0, %v8455
    %v8457 = vpop.f32.mrb[0].mxu0
    %8458 = vmatprep.mubr.bf16.mxu0 0
    %8459 = vmatmul.mubr.bf16.gmra.mrb[0].mxu0 %v8325
    %v8460 = vpop.f32.mrb[0].mxu0
    %v8461 = vadd.f32 0.0, %v8460
    %v8462 = vpop.f32.mrb[0].mxu0
    %v8463 = vpop.f32.mrb[0].mxu0
    %v8464 = vadd.f32 0.0, %v8463
    %v8465 = vpop.f32.mrb[0].mxu0
    %8466 = vmatprep.mubr.bf16.mxu0 0
    %8467 = vmatmul.mubr.bf16.gmra.mrb[0].mxu0 %v8328
    %v8468 = vpop.f32.mrb[0].mxu0
    %v8469 = vadd.f32 0.0, %v8468
    %v8470 = vpop.f32.mrb[0].mxu0
    %v8471 = vpop.f32.mrb[0].mxu0
    %v8472 = vadd.f32 0.0, %v8471
    %v8473 = vpop.f32.mrb[0].mxu0
    %8474 = vdwg.mxu0
    %8475 = vst.msk [vmem:[#allocation2] sm:$0xff] %vm3638, %v8365
    %8476 = vst.msk [vmem:[#allocation2 + $0x40] sm:$0xff] %vm3638, %v8368
    %8477 = vst.msk [vmem:[#allocation2 + $0x80] sm:$0xff] %vm3638, %v8373
    %8478 = vst.msk [vmem:[#allocation2 + $0xc0] sm:$0xff] %vm3638, %v8376
    %8483 = vrot.lane.b32.xlu0 %v8381, 9
    %v8484 = vpop.permute.xlu0 %8483
    %8485 = vrot.lane.b32.xlu0 %v8384, 9
    %v8486 = vpop.permute.xlu0 %8485
    %8487 = vrot.lane.b32.xlu0 %v8389, 9
    %v8488 = vpop.permute.xlu0 %8487
    %8489 = vrot.lane.b32.xlu0 %v8392, 9
    %v8490 = vpop.permute.xlu0 %8489
    %8495 = vst.msk [vmem:[#allocation2] sm:$0xff] %vm3659, %v8484
    %8496 = vst.msk [vmem:[#allocation2 + $0x40] sm:$0xff] %vm3659, %v8486
    %8497 = vst.msk [vmem:[#allocation2 + $0x80] sm:$0xff] %vm3659, %v8488
    %8498 = vst.msk [vmem:[#allocation2 + $0xc0] sm:$0xff] %vm3659, %v8490
    %8503 = vrot.lane.b32.xlu0 %v8397, 18
    %v8504 = vpop.permute.xlu0 %8503
    %8505 = vrot.lane.b32.xlu0 %v8400, 18
    %v8506 = vpop.permute.xlu0 %8505
    %8507 = vrot.lane.b32.xlu0 %v8405, 18
    %v8508 = vpop.permute.xlu0 %8507
    %8509 = vrot.lane.b32.xlu0 %v8408, 18
    %v8510 = vpop.permute.xlu0 %8509
    %8515 = vst.msk [vmem:[#allocation2] sm:$0xff] %vm3680, %v8504
    %8516 = vst.msk [vmem:[#allocation2 + $0x40] sm:$0xff] %vm3680, %v8506
    %8517 = vst.msk [vmem:[#allocation2 + $0x80] sm:$0xff] %vm3680, %v8508
    %8518 = vst.msk [vmem:[#allocation2 + $0xc0] sm:$0xff] %vm3680, %v8510
    %8523 = vrot.lane.b32.xlu0 %v8413, 27
    %v8524 = vpop.permute.xlu0 %8523
    %8525 = vrot.lane.b32.xlu0 %v8416, 27
    %v8526 = vpop.permute.xlu0 %8525
    %8527 = vrot.lane.b32.xlu0 %v8421, 27
    %v8528 = vpop.permute.xlu0 %8527
    %8529 = vrot.lane.b32.xlu0 %v8424, 27
    %v8530 = vpop.permute.xlu0 %8529
    %8535 = vst.msk [vmem:[#allocation2] sm:$0xff] %vm3701, %v8524
    %8536 = vst.msk [vmem:[#allocation2 + $0x40] sm:$0xff] %vm3701, %v8526
    %8537 = vst.msk [vmem:[#allocation2 + $0x80] sm:$0xff] %vm3701, %v8528
    %8538 = vst.msk [vmem:[#allocation2 + $0xc0] sm:$0xff] %vm3701, %v8530
    %8543 = vrot.lane.b32.xlu0 %v8429, 36
    %v8544 = vpop.permute.xlu0 %8543
    %8545 = vrot.lane.b32.xlu0 %v8432, 36
    %v8546 = vpop.permute.xlu0 %8545
    %8547 = vrot.lane.b32.xlu0 %v8437, 36
    %v8548 = vpop.permute.xlu0 %8547
    %8549 = vrot.lane.b32.xlu0 %v8440, 36
    %v8550 = vpop.permute.xlu0 %8549
    %8555 = vst.msk [vmem:[#allocation2] sm:$0xff] %vm3722, %v8544
    %8556 = vst.msk [vmem:[#allocation2 + $0x40] sm:$0xff] %vm3722, %v8546
    %8557 = vst.msk [vmem:[#allocation2 + $0x80] sm:$0xff] %vm3722, %v8548
    %8558 = vst.msk [vmem:[#allocation2 + $0xc0] sm:$0xff] %vm3722, %v8550
    %8563 = vrot.lane.b32.xlu0 %v8445, 45
    %v8564 = vpop.permute.xlu0 %8563
    %8565 = vrot.lane.b32.xlu0 %v8448, 45
    %v8566 = vpop.permute.xlu0 %8565
    %8567 = vrot.lane.b32.xlu0 %v8453, 45
    %v8568 = vpop.permute.xlu0 %8567
    %8569 = vrot.lane.b32.xlu0 %v8456, 45
    %v8570 = vpop.permute.xlu0 %8569
    %8575 = vst.msk [vmem:[#allocation2] sm:$0xff] %vm3743, %v8564
    %8576 = vst.msk [vmem:[#allocation2 + $0x40] sm:$0xff] %vm3743, %v8566
    %8577 = vst.msk [vmem:[#allocation2 + $0x80] sm:$0xff] %vm3743, %v8568
    %8578 = vst.msk [vmem:[#allocation2 + $0xc0] sm:$0xff] %vm3743, %v8570
    %8583 = vrot.lane.b32.xlu0 %v8461, 54
    %v8584 = vpop.permute.xlu0 %8583
    %8585 = vrot.lane.b32.xlu0 %v8464, 54
    %v8586 = vpop.permute.xlu0 %8585
    %8587 = vrot.lane.b32.xlu0 %v8469, 54
    %v8588 = vpop.permute.xlu0 %8587
    %8589 = vrot.lane.b32.xlu0 %v8472, 54
    %v8590 = vpop.permute.xlu0 %8589
    %8595 = vst.msk [vmem:[#allocation2] sm:$0xff] %vm3764, %v8584
    %8596 = vst.msk [vmem:[#allocation2 + $0x40] sm:$0xff] %vm3764, %v8586
    %8597 = vst.msk [vmem:[#allocation2 + $0x80] sm:$0xff] %vm3764, %v8588
    %8598 = vst.msk [vmem:[#allocation2 + $0xc0] sm:$0xff] %vm3764, %v8590
    %v8599 = vld [vmem:[#allocation2] sm:$0xff]
    %v8600 = vld [vmem:[#allocation2 + $0x40] sm:$0xff]
    %v8601 = vld [vmem:[#allocation2 + $0x80] sm:$0xff]
    %v8602 = vld [vmem:[#allocation2 + $0xc0] sm:$0xff]
    %v8603 = vpack.c.bf16 %v8600, %v8599
    %v8604 = vpack.c.bf16 %v8602, %v8601
    %v8605 = vld [vmem:[#allocation18] sm:$0xf]
    %v8606 = vld [vmem:[#allocation18 + $0x4] sm:$0xf]
    %v8607 = vld [vmem:[#allocation18 + $0x8] sm:$0xf]
    %v8608 = vld [vmem:[#allocation18 + $0xc] sm:$0xf]
    %v8609 = vld [vmem:[#allocation18 + $0x10] sm:$0xf]
    %v8610 = vld [vmem:[#allocation18 + $0x14] sm:$0xf]
    %v8611 = vld [vmem:[#allocation18 + $0x18] sm:$0xf]
    %v8612 = vld [vmem:[#allocation18 + $0x1c] sm:$0xf]
    %v8613 = vld [vmem:[#allocation3] sm:$0xff]
    %v8614 = vld [vmem:[#allocation3 + $0x8] sm:$0xff]
    %v8615 = vld [vmem:[#allocation3 + $0x10] sm:$0xff]
    %v8616 = vld [vmem:[#allocation3 + $0x18] sm:$0xff]
    %8618 = vset.pattern.permute.xlu0 4
    %8619 = vperm.xlu0 %8618, %v8613
    %v8620 = vpop.permute.xlu0 %8619
    %8623 = vset.pattern.permute.xlu0 4
    %8624 = vperm.xlu0 %8623, %v8614
    %v8625 = vpop.permute.xlu0 %8624
    %8628 = vset.pattern.permute.xlu0 4
    %8629 = vperm.xlu0 %8628, %v8615
    %v8630 = vpop.permute.xlu0 %8629
    %8633 = vset.pattern.permute.xlu0 4
    %8634 = vperm.xlu0 %8633, %v8616
    %v8635 = vpop.permute.xlu0 %8634
    %v8645 = vunpack.c.l.b16 %v8605
    %v8646 = vunpack.c.l.b16 %v8606
    %v8647 = vunpack.c.l.b16 %v8607
    %v8648 = vunpack.c.l.b16 %v8608
    %v8649 = vunpack.c.l.b16 %v8609
    %v8650 = vunpack.c.l.b16 %v8610
    %v8651 = vunpack.c.l.b16 %v8611
    %v8652 = vunpack.c.l.b16 %v8612
    %v8653 = vpack.c.b16 %v8646, %v8645
    %v8654 = vpack.c.b16 %v8648, %v8647
    %v8655 = vpack.c.b16 %v8650, %v8649
    %v8656 = vpack.c.b16 %v8652, %v8651
    %v8661 = vsel %vm3830, %v8603, 0
    %v8664 = vsel %vm3830, %v8604, 0
    %v8667 = vand.u32 %v8656, %v3839
    %8669 = vmatprep.subr.bf16.mxu0 0
    %8670 = vmatpush1.bf16.msra.mxu0 %v8653
    %8671 = vmatprep.subr.bf16.mxu0 0
    %8672 = vmatpush1.bf16.msra.mxu0 %v8654
    %8673 = vmatprep.subr.bf16.mxu0 0
    %8674 = vmatpush1.bf16.msra.mxu0 %v8655
    %8675 = vmatprep.subr.bf16.mxu0 0
    %8676 = vmatpush1.bf16.msra.mxu0 %v8667
    %8677 = vmatprep.subr.bf16.mxu0 0
    %8678 = vmatpush1.bf16.msra.mxu0 0
    %8679 = vmatprep.subr.bf16.mxu0 0
    %8680 = vmatpush1.bf16.msra.mxu0 0
    %8681 = vmatprep.subr.bf16.mxu0 0
    %8682 = vmatpush1.bf16.msra.mxu0 0
    %8683 = vmatprep.subr.bf16.mxu0 0
    %8684 = vmatpush1.bf16.msra.mxu0 0
    %8685 = vmatprep.subr.bf16.mxu0 0
    %8686 = vmatpush1.bf16.msra.mxu0 0
    %8687 = vmatprep.subr.bf16.mxu0 0
    %8688 = vmatpush1.bf16.msra.mxu0 0
    %8689 = vmatprep.subr.bf16.mxu0 0
    %8690 = vmatpush1.bf16.msra.mxu0 0
    %8691 = vmatprep.subr.bf16.mxu0 0
    %8692 = vmatpush1.bf16.msra.mxu0 0
    %8693 = vmatprep.subr.bf16.mxu0 0
    %8694 = vmatpush1.bf16.msra.mxu0 0
    %8695 = vmatprep.subr.bf16.mxu0 0
    %8696 = vmatpush1.bf16.msra.mxu0 0
    %8697 = vmatprep.subr.bf16.mxu0 0
    %8698 = vmatpush1.bf16.msra.mxu0 0
    %8699 = vmatprep.subr.bf16.mxu0 0
    %8700 = vmatpush1.bf16.msra.mxu0 0
    %8701 = vmatprep.mubr.bf16.mxu0 0
    %8702 = vmatmul.mubr.bf16.gmra.mrb[0].mxu0 %v8661
    %v8703 = vpop.f32.mrb[0].mxu0
    %v8704 = vadd.f32 %v8620, %v8703
    %v8705 = vpop.f32.mrb[0].mxu0
    %v8706 = vpop.f32.mrb[0].mxu0
    %v8707 = vadd.f32 %v8625, %v8706
    %v8708 = vpop.f32.mrb[0].mxu0
    %8709 = vmatprep.mubr.bf16.mxu0 0
    %8710 = vmatmul.mubr.bf16.gmra.mrb[0].mxu0 %v8664
    %v8711 = vpop.f32.mrb[0].mxu0
    %v8712 = vadd.f32 %v8630, %v8711
    %v8713 = vpop.f32.mrb[0].mxu0
    %v8714 = vpop.f32.mrb[0].mxu0
    %v8715 = vadd.f32 %v8635, %v8714
    %v8716 = vpop.f32.mrb[0].mxu0
    %8717 = vdwg.mxu0
    %v8718 = vmax.f32 %v8704, 0.0
    %v8719 = vmax.f32 %v8707, 0.0
    %v8720 = vmax.f32 %v8712, 0.0
    %v8721 = vmax.f32 %v8715, 0.0
    %v8722 = vld [vmem:[#allocation20] sm:$0xf]
    %v8723 = vld [vmem:[#allocation20 + $0x4] sm:$0xf]
    %v8724 = vld [vmem:[#allocation20 + $0x8] sm:$0xf]
    %v8725 = vld [vmem:[#allocation20 + $0xc] sm:$0xf]
    %v8726 = vld [vmem:[#allocation20 + $0x10] sm:$0xf]
    %v8727 = vld [vmem:[#allocation20 + $0x14] sm:$0xf]
    %v8728 = vld [vmem:[#allocation20 + $0x18] sm:$0xf]
    %v8729 = vld [vmem:[#allocation20 + $0x1c] sm:$0xf]
    %v8730 = vld [vmem:[#allocation20 + $0x20] sm:$0xf]
    %v8731 = vld [vmem:[#allocation20 + $0x24] sm:$0xf]
    %v8732 = vld [vmem:[#allocation20 + $0x28] sm:$0xf]
    %v8733 = vld [vmem:[#allocation20 + $0x2c] sm:$0xf]
    %v8734 = vld [vmem:[#allocation20 + $0x30] sm:$0xf]
    %v8735 = vld [vmem:[#allocation20 + $0x34] sm:$0xf]
    %v8736 = vpack.c.bf16 %v8719, %v8718
    %v8737 = vpack.c.bf16 %v8721, %v8720
    %v8752 = vunpack.c.l.b16 %v8722
    %v8753 = vunpack.c.l.b16 %v8723
    %v8754 = vunpack.c.l.b16 %v8724
    %v8755 = vunpack.c.l.b16 %v8725
    %v8756 = vunpack.c.l.b16 %v8726
    %v8757 = vunpack.c.l.b16 %v8727
    %v8758 = vunpack.c.l.b16 %v8728
    %v8759 = vunpack.c.l.b16 %v8729
    %v8760 = vunpack.c.l.b16 %v8730
    %v8761 = vunpack.c.l.b16 %v8731
    %v8762 = vunpack.c.l.b16 %v8732
    %v8763 = vunpack.c.l.b16 %v8733
    %v8764 = vunpack.c.l.b16 %v8734
    %v8765 = vunpack.c.l.b16 %v8735
    %v8766 = vpack.c.b16 %v8753, %v8752
    %v8767 = vpack.c.b16 %v8755, %v8754
    %v8768 = vpack.c.b16 %v8757, %v8756
    %v8769 = vpack.c.b16 %v8759, %v8758
    %v8770 = vpack.c.b16 %v8761, %v8760
    %v8771 = vpack.c.b16 %v8763, %v8762
    %v8772 = vpack.c.b16 %v8765, %v8764
    %v8774 = vsel %vm2542, %v8766, 0
    %v8777 = vsel %vm2542, %v8767, 0
    %v8780 = vsel %vm2542, %v8768, 0
    %v8783 = vsel %vm2542, %v8769, 0
    %v8786 = vsel %vm2542, %v8770, 0
    %v8789 = vsel %vm2542, %v8771, 0
    %v8792 = vsel %vm2542, %v8772, 0
    %8794 = vmatprep.subr.bf16.mxu0 0
    %8795 = vmatpush1.bf16.msra.mxu0 %v8736
    %8796 = vmatprep.subr.bf16.mxu0 0
    %8797 = vmatpush1.bf16.msra.mxu0 %v8737
    %8798 = vmatprep.subr.bf16.mxu0 0
    %8799 = vmatpush1.bf16.msra.mxu0 0
    %8800 = vmatprep.subr.bf16.mxu0 0
    %8801 = vmatpush1.bf16.msra.mxu0 0
    %8802 = vmatprep.subr.bf16.mxu0 0
    %8803 = vmatpush1.bf16.msra.mxu0 0
    %8804 = vmatprep.subr.bf16.mxu0 0
    %8805 = vmatpush1.bf16.msra.mxu0 0
    %8806 = vmatprep.subr.bf16.mxu0 0
    %8807 = vmatpush1.bf16.msra.mxu0 0
    %8808 = vmatprep.subr.bf16.mxu0 0
    %8809 = vmatpush1.bf16.msra.mxu0 0
    %8810 = vmatprep.subr.bf16.mxu0 0
    %8811 = vmatpush1.bf16.msra.mxu0 0
    %8812 = vmatprep.subr.bf16.mxu0 0
    %8813 = vmatpush1.bf16.msra.mxu0 0
    %8814 = vmatprep.subr.bf16.mxu0 0
    %8815 = vmatpush1.bf16.msra.mxu0 0
    %8816 = vmatprep.subr.bf16.mxu0 0
    %8817 = vmatpush1.bf16.msra.mxu0 0
    %8818 = vmatprep.subr.bf16.mxu0 0
    %8819 = vmatpush1.bf16.msra.mxu0 0
    %8820 = vmatprep.subr.bf16.mxu0 0
    %8821 = vmatpush1.bf16.msra.mxu0 0
    %8822 = vmatprep.subr.bf16.mxu0 0
    %8823 = vmatpush1.bf16.msra.mxu0 0
    %8824 = vmatprep.subr.bf16.mxu0 0
    %8825 = vmatpush1.bf16.msra.mxu0 0
    %8826 = vmatprep.mubr.bf16.mxu0 0
    %8827 = vmatmul.mubr.bf16.gmra.mrb[0].mxu0 %v8774
    %v8828 = vpop.f32.mrb[0].mxu0
    %v8829 = vadd.f32 0.0, %v8828
    %v8830 = vpop.f32.mrb[0].mxu0
    %v8831 = vpop.f32.mrb[0].mxu0
    %v8832 = vadd.f32 0.0, %v8831
    %v8833 = vpop.f32.mrb[0].mxu0
    %8834 = vmatprep.mubr.bf16.mxu0 0
    %8835 = vmatmul.mubr.bf16.gmra.mrb[0].mxu0 %v8777
    %v8836 = vpop.f32.mrb[0].mxu0
    %v8837 = vadd.f32 0.0, %v8836
    %v8838 = vpop.f32.mrb[0].mxu0
    %v8839 = vpop.f32.mrb[0].mxu0
    %v8840 = vadd.f32 0.0, %v8839
    %v8841 = vpop.f32.mrb[0].mxu0
    %8842 = vmatprep.mubr.bf16.mxu0 0
    %8843 = vmatmul.mubr.bf16.gmra.mrb[0].mxu0 %v8780
    %v8844 = vpop.f32.mrb[0].mxu0
    %v8845 = vadd.f32 0.0, %v8844
    %v8846 = vpop.f32.mrb[0].mxu0
    %v8847 = vpop.f32.mrb[0].mxu0
    %v8848 = vadd.f32 0.0, %v8847
    %v8849 = vpop.f32.mrb[0].mxu0
    %8850 = vmatprep.mubr.bf16.mxu0 0
    %8851 = vmatmul.mubr.bf16.gmra.mrb[0].mxu0 %v8783
    %v8852 = vpop.f32.mrb[0].mxu0
    %v8853 = vadd.f32 0.0, %v8852
    %v8854 = vpop.f32.mrb[0].mxu0
    %v8855 = vpop.f32.mrb[0].mxu0
    %v8856 = vadd.f32 0.0, %v8855
    %v8857 = vpop.f32.mrb[0].mxu0
    %8858 = vmatprep.mubr.bf16.mxu0 0
    %8859 = vmatmul.mubr.bf16.gmra.mrb[0].mxu0 %v8786
    %v8860 = vpop.f32.mrb[0].mxu0
    %v8861 = vadd.f32 0.0, %v8860
    %v8862 = vpop.f32.mrb[0].mxu0
    %v8863 = vpop.f32.mrb[0].mxu0
    %v8864 = vadd.f32 0.0, %v8863
    %v8865 = vpop.f32.mrb[0].mxu0
    %8866 = vmatprep.mubr.bf16.mxu0 0
    %8867 = vmatmul.mubr.bf16.gmra.mrb[0].mxu0 %v8789
    %v8868 = vpop.f32.mrb[0].mxu0
    %v8869 = vadd.f32 0.0, %v8868
    %v8870 = vpop.f32.mrb[0].mxu0
    %v8871 = vpop.f32.mrb[0].mxu0
    %v8872 = vadd.f32 0.0, %v8871
    %v8873 = vpop.f32.mrb[0].mxu0
    %8874 = vmatprep.mubr.bf16.mxu0 0
    %8875 = vmatmul.mubr.bf16.gmra.mrb[0].mxu0 %v8792
    %v8876 = vpop.f32.mrb[0].mxu0
    %v8877 = vadd.f32 0.0, %v8876
    %v8878 = vpop.f32.mrb[0].mxu0
    %v8879 = vpop.f32.mrb[0].mxu0
    %v8880 = vadd.f32 0.0, %v8879
    %v8881 = vpop.f32.mrb[0].mxu0
    %8882 = vdwg.mxu0
    %8883 = vst.msk [vmem:[#allocation2] sm:$0xff] %vm2884, %v8829
    %8884 = vst.msk [vmem:[#allocation2 + $0x40] sm:$0xff] %vm2884, %v8832
    %8887 = vrot.lane.b32.xlu0 %v8837, 17
    %v8888 = vpop.permute.xlu0 %8887
    %8889 = vrot.lane.b32.xlu0 %v8840, 17
    %v8890 = vpop.permute.xlu0 %8889
    %8893 = vst.msk [vmem:[#allocation2] sm:$0xff] %vm2925, %v8888
    %8894 = vst.msk [vmem:[#allocation2 + $0x40] sm:$0xff] %vm2925, %v8890
    %8897 = vrot.lane.b32.xlu0 %v8845, 34
    %v8898 = vpop.permute.xlu0 %8897
    %8899 = vrot.lane.b32.xlu0 %v8848, 34
    %v8900 = vpop.permute.xlu0 %8899
    %8903 = vst.msk [vmem:[#allocation2] sm:$0xff] %vm2966, %v8898
    %8904 = vst.msk [vmem:[#allocation2 + $0x40] sm:$0xff] %vm2966, %v8900
    %8907 = vrot.lane.b32.xlu0 %v8853, 51
    %v8908 = vpop.permute.xlu0 %8907
    %8909 = vrot.lane.b32.xlu0 %v8856, 51
    %v8910 = vpop.permute.xlu0 %8909
    %8913 = vst.msk [vmem:[#allocation2] sm:$0xff] %vm3007, %v8908
    %8914 = vst.msk [vmem:[#allocation2 + $0x40] sm:$0xff] %vm3007, %v8910
    %8917 = vrot.lane.b32.xlu0 %v8861, 68
    %v8918 = vpop.permute.xlu0 %8917
    %8919 = vrot.lane.b32.xlu0 %v8864, 68
    %v8920 = vpop.permute.xlu0 %8919
    %8923 = vst.msk [vmem:[#allocation2] sm:$0xff] %vm3048, %v8918
    %8924 = vst.msk [vmem:[#allocation2 + $0x40] sm:$0xff] %vm3048, %v8920
    %8927 = vrot.lane.b32.xlu0 %v8869, 85
    %v8928 = vpop.permute.xlu0 %8927
    %8929 = vrot.lane.b32.xlu0 %v8872, 85
    %v8930 = vpop.permute.xlu0 %8929
    %8933 = vst.msk [vmem:[#allocation2] sm:$0xff] %vm3089, %v8928
    %8934 = vst.msk [vmem:[#allocation2 + $0x40] sm:$0xff] %vm3089, %v8930
    %8937 = vrot.lane.b32.xlu0 %v8877, 102
    %v8938 = vpop.permute.xlu0 %8937
    %8939 = vrot.lane.b32.xlu0 %v8880, 102
    %v8940 = vpop.permute.xlu0 %8939
    %8943 = vst.msk [vmem:[#allocation2] sm:$0xff] %vm3130, %v8938
    %8944 = vst.msk [vmem:[#allocation2 + $0x40] sm:$0xff] %vm3130, %v8940
    %v8945 = vld [vmem:[#allocation2] sm:$0xff]
    %v8946 = vld [vmem:[#allocation2 + $0x40] sm:$0xff]
    %v8947 = vpack.c.bf16 %v8946, %v8945
    %v8948 = vld [vmem:[#allocation21] sm:$0xf]
    %v8949 = vld [vmem:[#allocation21 + $0x4] sm:$0xf]
    %v8950 = vld [vmem:[#allocation21 + $0x8] sm:$0xf]
    %v8951 = vld [vmem:[#allocation21 + $0xc] sm:$0xf]
    %v8952 = vld [vmem:[#allocation21 + $0x10] sm:$0xf]
    %v8953 = vld [vmem:[#allocation21 + $0x14] sm:$0xf]
    %v8954 = vld [vmem:[#allocation21 + $0x18] sm:$0xf]
    %v8955 = vld [vmem:[#allocation21 + $0x1c] sm:$0xf]
    %v8956 = vld [vmem:[#allocation21 + $0x20] sm:$0xf]
    %v8957 = vld [vmem:[#allocation21 + $0x24] sm:$0xf]
    %v8958 = vld [vmem:[#allocation21 + $0x28] sm:$0xf]
    %v8959 = vld [vmem:[#allocation21 + $0x2c] sm:$0xf]
    %v8960 = vld [vmem:[#allocation21 + $0x30] sm:$0xf]
    %v8961 = vld [vmem:[#allocation21 + $0x34] sm:$0xf]
    %v8962 = vld [vmem:[#allocation21 + $0x38] sm:$0xf]
    %v8963 = vld [vmem:[#allocation3] sm:$0xff]
    %v8964 = vld [vmem:[#allocation3 + $0x8] sm:$0xff]
    %8966 = vset.pattern.permute.xlu0 5
    %8967 = vperm.xlu0 %8966, %v8963
    %v8968 = vpop.permute.xlu0 %8967
    %8971 = vset.pattern.permute.xlu0 5
    %8972 = vperm.xlu0 %8971, %v8964
    %v8973 = vpop.permute.xlu0 %8972
    %v8990 = vunpack.c.l.b16 %v8948
    %v8991 = vunpack.c.l.b16 %v8949
    %v8992 = vunpack.c.l.b16 %v8950
    %v8993 = vunpack.c.l.b16 %v8951
    %v8994 = vunpack.c.l.b16 %v8952
    %v8995 = vunpack.c.l.b16 %v8953
    %v8996 = vunpack.c.l.b16 %v8954
    %v8997 = vunpack.c.l.b16 %v8955
    %v8998 = vunpack.c.l.b16 %v8956
    %v8999 = vunpack.c.l.b16 %v8957
    %v9000 = vunpack.c.l.b16 %v8958
    %v9001 = vunpack.c.l.b16 %v8959
    %v9002 = vunpack.c.l.b16 %v8960
    %v9003 = vunpack.c.l.b16 %v8961
    %v9004 = vunpack.c.l.b16 %v8962
    %v9005 = vpack.c.b16 %v8991, %v8990
    %v9006 = vpack.c.b16 %v8993, %v8992
    %v9007 = vpack.c.b16 %v8995, %v8994
    %v9008 = vpack.c.b16 %v8997, %v8996
    %v9009 = vpack.c.b16 %v8999, %v8998
    %v9010 = vpack.c.b16 %v9001, %v9000
    %v9011 = vpack.c.b16 %v9003, %v9002
    %v9012 = vpack.c.b16 %v9004, %v9004
    %v9021 = vsel %vm3259, %v8947, 0
    %v9024 = vand.u32 %v9012, %v1619
    %9026 = vmatprep.subr.bf16.mxu0 0
    %9027 = vmatpush1.bf16.msra.mxu0 %v9005
    %9028 = vmatprep.subr.bf16.mxu0 0
    %9029 = vmatpush1.bf16.msra.mxu0 %v9006
    %9030 = vmatprep.subr.bf16.mxu0 0
    %9031 = vmatpush1.bf16.msra.mxu0 %v9007
    %9032 = vmatprep.subr.bf16.mxu0 0
    %9033 = vmatpush1.bf16.msra.mxu0 %v9008
    %9034 = vmatprep.subr.bf16.mxu0 0
    %9035 = vmatpush1.bf16.msra.mxu0 %v9009
    %9036 = vmatprep.subr.bf16.mxu0 0
    %9037 = vmatpush1.bf16.msra.mxu0 %v9010
    %9038 = vmatprep.subr.bf16.mxu0 0
    %9039 = vmatpush1.bf16.msra.mxu0 %v9011
    %9040 = vmatprep.subr.bf16.mxu0 0
    %9041 = vmatpush1.bf16.msra.mxu0 %v9024
    %9042 = vmatprep.subr.bf16.mxu0 0
    %9043 = vmatpush1.bf16.msra.mxu0 0
    %9044 = vmatprep.subr.bf16.mxu0 0
    %9045 = vmatpush1.bf16.msra.mxu0 0
    %9046 = vmatprep.subr.bf16.mxu0 0
    %9047 = vmatpush1.bf16.msra.mxu0 0
    %9048 = vmatprep.subr.bf16.mxu0 0
    %9049 = vmatpush1.bf16.msra.mxu0 0
    %9050 = vmatprep.subr.bf16.mxu0 0
    %9051 = vmatpush1.bf16.msra.mxu0 0
    %9052 = vmatprep.subr.bf16.mxu0 0
    %9053 = vmatpush1.bf16.msra.mxu0 0
    %9054 = vmatprep.subr.bf16.mxu0 0
    %9055 = vmatpush1.bf16.msra.mxu0 0
    %9056 = vmatprep.subr.bf16.mxu0 0
    %9057 = vmatpush1.bf16.msra.mxu0 0
    %9058 = vmatprep.mubr.bf16.mxu0 0
    %9059 = vmatmul.mubr.bf16.gmra.mrb[0].mxu0 %v9021
    %v9060 = vpop.f32.mrb[0].mxu0
    %v9061 = vadd.f32 %v8968, %v9060
    %v9062 = vpop.f32.mrb[0].mxu0
    %v9063 = vpop.f32.mrb[0].mxu0
    %v9064 = vadd.f32 %v8973, %v9063
    %v9065 = vpop.f32.mrb[0].mxu0
    %9066 = vdwg.mxu0
    %v9067 = vmax.f32 %v9061, 0.0
    %v9068 = vmax.f32 %v9064, 0.0
    %v9069 = vld [vmem:[#allocation23] sm:$0xf]
    %v9070 = vld [vmem:[#allocation23 + $0x4] sm:$0xf]
    %v9071 = vld [vmem:[#allocation23 + $0x8] sm:$0xf]
    %v9072 = vld [vmem:[#allocation23 + $0xc] sm:$0xf]
    %v9073 = vld [vmem:[#allocation23 + $0x10] sm:$0xf]
    %v9074 = vld [vmem:[#allocation23 + $0x14] sm:$0xf]
    %v9075 = vld [vmem:[#allocation23 + $0x18] sm:$0xf]
    %v9076 = vpack.c.bf16 %v9068, %v9067
    %v9084 = vunpack.c.l.b16 %v9069
    %v9085 = vunpack.c.l.b16 %v9070
    %v9086 = vunpack.c.l.b16 %v9071
    %v9087 = vunpack.c.l.b16 %v9072
    %v9088 = vunpack.c.l.b16 %v9073
    %v9089 = vunpack.c.l.b16 %v9074
    %v9090 = vunpack.c.l.b16 %v9075
    %v9091 = vpack.c.b16 %v9085, %v9084
    %v9092 = vpack.c.b16 %v9087, %v9086
    %v9093 = vpack.c.b16 %v9089, %v9088
    %v9094 = vpack.c.b16 %v9090, %v9090
    %v9096 = vsel %vm1806, %v9091, 0
    %v9099 = vsel %vm1806, %v9092, 0
    %v9102 = vsel %vm1806, %v9093, 0
    %v9105 = vsel %vm1806, %v9094, 0
    %9107 = vmatprep.subr.bf16.mxu0 0
    %9108 = vmatpush1.bf16.msra.mxu0 %v9076
    %9109 = vmatprep.subr.bf16.mxu0 0
    %9110 = vmatpush1.bf16.msra.mxu0 0
    %9111 = vmatprep.subr.bf16.mxu0 0
    %9112 = vmatpush1.bf16.msra.mxu0 0
    %9113 = vmatprep.subr.bf16.mxu0 0
    %9114 = vmatpush1.bf16.msra.mxu0 0
    %9115 = vmatprep.subr.bf16.mxu0 0
    %9116 = vmatpush1.bf16.msra.mxu0 0
    %9117 = vmatprep.subr.bf16.mxu0 0
    %9118 = vmatpush1.bf16.msra.mxu0 0
    %9119 = vmatprep.subr.bf16.mxu0 0
    %9120 = vmatpush1.bf16.msra.mxu0 0
    %9121 = vmatprep.subr.bf16.mxu0 0
    %9122 = vmatpush1.bf16.msra.mxu0 0
    %9123 = vmatprep.subr.bf16.mxu0 0
    %9124 = vmatpush1.bf16.msra.mxu0 0
    %9125 = vmatprep.subr.bf16.mxu0 0
    %9126 = vmatpush1.bf16.msra.mxu0 0
    %9127 = vmatprep.subr.bf16.mxu0 0
    %9128 = vmatpush1.bf16.msra.mxu0 0
    %9129 = vmatprep.subr.bf16.mxu0 0
    %9130 = vmatpush1.bf16.msra.mxu0 0
    %9131 = vmatprep.subr.bf16.mxu0 0
    %9132 = vmatpush1.bf16.msra.mxu0 0
    %9133 = vmatprep.subr.bf16.mxu0 0
    %9134 = vmatpush1.bf16.msra.mxu0 0
    %9135 = vmatprep.subr.bf16.mxu0 0
    %9136 = vmatpush1.bf16.msra.mxu0 0
    %9137 = vmatprep.subr.bf16.mxu0 0
    %9138 = vmatpush1.bf16.msra.mxu0 0
    %9139 = vmatprep.mubr.bf16.mxu0 0
    %9140 = vmatmul.mubr.bf16.gmra.mrb[0].mxu0 %v9096
    %v9141 = vpop.f32.mrb[0].mxu0
    %v9142 = vadd.f32 0.0, %v9141
    %v9143 = vpop.f32.mrb[0].mxu0
    %v9144 = vpop.f32.mrb[0].mxu0
    %v9145 = vadd.f32 0.0, %v9144
    %v9146 = vpop.f32.mrb[0].mxu0
    %9147 = vmatprep.mubr.bf16.mxu0 0
    %9148 = vmatmul.mubr.bf16.gmra.mrb[0].mxu0 %v9099
    %v9149 = vpop.f32.mrb[0].mxu0
    %v9150 = vadd.f32 0.0, %v9149
    %v9151 = vpop.f32.mrb[0].mxu0
    %v9152 = vpop.f32.mrb[0].mxu0
    %v9153 = vadd.f32 0.0, %v9152
    %v9154 = vpop.f32.mrb[0].mxu0
    %9155 = vmatprep.mubr.bf16.mxu0 0
    %9156 = vmatmul.mubr.bf16.gmra.mrb[0].mxu0 %v9102
    %v9157 = vpop.f32.mrb[0].mxu0
    %v9158 = vadd.f32 0.0, %v9157
    %v9159 = vpop.f32.mrb[0].mxu0
    %v9160 = vpop.f32.mrb[0].mxu0
    %v9161 = vadd.f32 0.0, %v9160
    %v9162 = vpop.f32.mrb[0].mxu0
    %9163 = vmatprep.mubr.bf16.mxu0 0
    %9164 = vmatmul.mubr.bf16.gmra.mrb[0].mxu0 %v9105
    %v9165 = vpop.f32.mrb[0].mxu0
    %v9166 = vadd.f32 0.0, %v9165
    %v9167 = vpop.f32.mrb[0].mxu0
    %v9168 = vpop.f32.mrb[0].mxu0
    %v9169 = vpop.f32.mrb[0].mxu0
    %9170 = vdwg.mxu0
    %9171 = vst.msk [vmem:[#allocation2] sm:$0xff] %vm1994, %v9142
    %9173 = vrot.lane.b32.xlu0 %v9145, 33
    %v9174 = vpop.permute.xlu0 %9173
    %9176 = vst.msk [vmem:[#allocation2] sm:$0xff] %vm2015, %v9174
    %9178 = vrot.lane.b32.xlu0 %v9150, 66
    %v9179 = vpop.permute.xlu0 %9178
    %9181 = vst.msk [vmem:[#allocation2] sm:$0xff] %vm2036, %v9179
    %9183 = vrot.lane.b32.xlu0 %v9153, 99
    %v9184 = vpop.permute.xlu0 %9183
    %9186 = vst.msk [vmem:[#allocation2] sm:$0xff] %vm2057, %v9184
    %9187 = vst.msk [vmem:[#allocation2 + $0x8] sm:$0xff] %vm412, %v9184
    %9189 = vrot.lane.b32.xlu0 %v9158, 4
    %v9190 = vpop.permute.xlu0 %9189
    %9192 = vst.msk [vmem:[#allocation2 + $0x8] sm:$0xff] %vm2082, %v9190
    %9194 = vrot.lane.b32.xlu0 %v9161, 37
    %v9195 = vpop.permute.xlu0 %9194
    %9197 = vst.msk [vmem:[#allocation2 + $0x8] sm:$0xff] %vm2103, %v9195
    %9199 = vrot.lane.b32.xlu0 %v9166, 70
    %v9200 = vpop.permute.xlu0 %9199
    %9202 = vst.msk [vmem:[#allocation2 + $0x8] sm:$0xff] %vm2124, %v9200
    %v9203 = vld [vmem:[#allocation2] sm:$0xff]
    %v9204 = vld [vmem:[#allocation2 + $0x8] sm:$0xff]
    %v9205 = vpack.c.bf16 %v9203, %v9203
    %v9206 = vpack.c.bf16 %v9204, %v9204
    %v9207 = vld [vmem:[#allocation24] sm:$0xf]
    %v9208 = vld [vmem:[#allocation24 + $0x4] sm:$0xf]
    %v9209 = vld [vmem:[#allocation24 + $0x8] sm:$0xf]
    %v9210 = vld [vmem:[#allocation24 + $0xc] sm:$0xf]
    %v9211 = vld [vmem:[#allocation24 + $0x10] sm:$0xf]
    %v9212 = vld [vmem:[#allocation24 + $0x14] sm:$0xf]
    %v9213 = vld [vmem:[#allocation24 + $0x18] sm:$0xf]
    %v9214 = vld [vmem:[#allocation24 + $0x1c] sm:$0xf]
    %v9215 = vld [vmem:[#allocation24 + $0x20] sm:$0xf]
    %v9216 = vld [vmem:[#allocation24 + $0x24] sm:$0xf]
    %v9217 = vld [vmem:[#allocation24 + $0x28] sm:$0xf]
    %v9218 = vld [vmem:[#allocation24 + $0x2c] sm:$0xf]
    %v9219 = vld [vmem:[#allocation24 + $0x30] sm:$0xf]
    %v9220 = vld [vmem:[#allocation24 + $0x34] sm:$0xf]
    %v9221 = vld [vmem:[#allocation24 + $0x38] sm:$0xf]
    %v9222 = vld [vmem:[#allocation24 + $0x3c] sm:$0xf]
    %v9223 = vld [vmem:[#allocation24 + $0x40] sm:$0xf]
    %v9224 = vld [vmem:[#allocation24 + $0x44] sm:$0xf]
    %v9225 = vld [vmem:[#allocation24 + $0x48] sm:$0xf]
    %v9226 = vld [vmem:[#allocation24 + $0x4c] sm:$0xf]
    %v9227 = vld [vmem:[#allocation24 + $0x50] sm:$0xf]
    %v9228 = vld [vmem:[#allocation24 + $0x54] sm:$0xf]
    %v9229 = vld [vmem:[#allocation24 + $0x58] sm:$0xf]
    %v9230 = vld [vmem:[#allocation24 + $0x5c] sm:$0xf]
    %v9231 = vld [vmem:[#allocation24 + $0x60] sm:$0xf]
    %v9232 = vld [vmem:[#allocation24 + $0x64] sm:$0xf]
    %v9233 = vld [vmem:[#allocation24 + $0x68] sm:$0xf]
    %v9234 = vld [vmem:[#allocation24 + $0x6c] sm:$0xf]
    %v9235 = vld [vmem:[#allocation24 + $0x70] sm:$0xf]
    %v9236 = vld [vmem:[#allocation3] sm:$0xff]
    %9238 = vset.pattern.permute.xlu0 6
    %9239 = vperm.xlu0 %9238, %v9236
    %v9240 = vpop.permute.xlu0 %9239
    %v9271 = vunpack.c.l.b16 %v9207
    %v9272 = vunpack.c.l.b16 %v9208
    %v9273 = vunpack.c.l.b16 %v9209
    %v9274 = vunpack.c.l.b16 %v9210
    %v9275 = vunpack.c.l.b16 %v9211
    %v9276 = vunpack.c.l.b16 %v9212
    %v9277 = vunpack.c.l.b16 %v9213
    %v9278 = vunpack.c.l.b16 %v9214
    %v9279 = vunpack.c.l.b16 %v9215
    %v9280 = vunpack.c.l.b16 %v9216
    %v9281 = vunpack.c.l.b16 %v9217
    %v9282 = vunpack.c.l.b16 %v9218
    %v9283 = vunpack.c.l.b16 %v9219
    %v9284 = vunpack.c.l.b16 %v9220
    %v9285 = vunpack.c.l.b16 %v9221
    %v9286 = vunpack.c.l.b16 %v9222
    %v9287 = vunpack.c.l.b16 %v9223
    %v9288 = vunpack.c.l.b16 %v9224
    %v9289 = vunpack.c.l.b16 %v9225
    %v9290 = vunpack.c.l.b16 %v9226
    %v9291 = vunpack.c.l.b16 %v9227
    %v9292 = vunpack.c.l.b16 %v9228
    %v9293 = vunpack.c.l.b16 %v9229
    %v9294 = vunpack.c.l.b16 %v9230
    %v9295 = vunpack.c.l.b16 %v9231
    %v9296 = vunpack.c.l.b16 %v9232
    %v9297 = vunpack.c.l.b16 %v9233
    %v9298 = vunpack.c.l.b16 %v9234
    %v9299 = vunpack.c.l.b16 %v9235
    %v9300 = vpack.c.b16 %v9272, %v9271
    %v9301 = vpack.c.b16 %v9274, %v9273
    %v9302 = vpack.c.b16 %v9276, %v9275
    %v9303 = vpack.c.b16 %v9278, %v9277
    %v9304 = vpack.c.b16 %v9280, %v9279
    %v9305 = vpack.c.b16 %v9282, %v9281
    %v9306 = vpack.c.b16 %v9284, %v9283
    %v9307 = vpack.c.b16 %v9286, %v9285
    %v9308 = vpack.c.b16 %v9288, %v9287
    %v9309 = vpack.c.b16 %v9290, %v9289
    %v9310 = vpack.c.b16 %v9292, %v9291
    %v9311 = vpack.c.b16 %v9294, %v9293
    %v9312 = vpack.c.b16 %v9296, %v9295
    %v9313 = vpack.c.b16 %v9298, %v9297
    %v9314 = vpack.c.b16 %v9299, %v9299
    %v9330 = vsel %vm2281, %v9206, 0
    %v9333 = vand.u32 %v9314, %v1619
    %9335 = vmatprep.subr.bf16.mxu0 0
    %9336 = vmatpush1.bf16.msra.mxu0 %v9300
    %9337 = vmatprep.subr.bf16.mxu0 0
    %9338 = vmatpush1.bf16.msra.mxu0 %v9301
    %9339 = vmatprep.subr.bf16.mxu0 0
    %9340 = vmatpush1.bf16.msra.mxu0 %v9302
    %9341 = vmatprep.subr.bf16.mxu0 0
    %9342 = vmatpush1.bf16.msra.mxu0 %v9303
    %9343 = vmatprep.subr.bf16.mxu0 0
    %9344 = vmatpush1.bf16.msra.mxu0 %v9304
    %9345 = vmatprep.subr.bf16.mxu0 0
    %9346 = vmatpush1.bf16.msra.mxu0 %v9305
    %9347 = vmatprep.subr.bf16.mxu0 0
    %9348 = vmatpush1.bf16.msra.mxu0 %v9306
    %9349 = vmatprep.subr.bf16.mxu0 0
    %9350 = vmatpush1.bf16.msra.mxu0 %v9307
    %9351 = vmatprep.subr.bf16.mxu0 0
    %9352 = vmatpush1.bf16.msra.mxu0 %v9308
    %9353 = vmatprep.subr.bf16.mxu0 0
    %9354 = vmatpush1.bf16.msra.mxu0 %v9309
    %9355 = vmatprep.subr.bf16.mxu0 0
    %9356 = vmatpush1.bf16.msra.mxu0 %v9310
    %9357 = vmatprep.subr.bf16.mxu0 0
    %9358 = vmatpush1.bf16.msra.mxu0 %v9311
    %9359 = vmatprep.subr.bf16.mxu0 0
    %9360 = vmatpush1.bf16.msra.mxu0 %v9312
    %9361 = vmatprep.subr.bf16.mxu0 0
    %9362 = vmatpush1.bf16.msra.mxu0 %v9313
    %9363 = vmatprep.subr.bf16.mxu0 0
    %9364 = vmatpush1.bf16.msra.mxu0 %v9333
    %9365 = vmatprep.subr.bf16.mxu0 0
    %9366 = vmatpush1.bf16.msra.mxu0 0
    %9367 = vmatprep.mubr.bf16.mxu0 %v9330
    %9368 = vmatmul.mubr.bf16.gmra.mrb[0].mxu0 %v9205
    %v9369 = vpop.f32.mrb[0].mxu0
    %v9370 = vadd.f32 %v9240, %v9369
    %v9371 = vpop.f32.mrb[0].mxu0
    %v9372 = vpop.f32.mrb[0].mxu0
    %v9373 = vpop.f32.mrb[0].mxu0
    %9374 = vdwg.mxu0
    %v9375 = vmax.f32 %v9370, 0.0
    %v9376 = vld [vmem:[#allocation26] sm:$0xf]
    %v9377 = vld [vmem:[#allocation26 + $0x4] sm:$0xf]
    %v9378 = vld [vmem:[#allocation26 + $0x8] sm:$0xf]
    %v9379 = vld [vmem:[#allocation26 + $0xc] sm:$0xf]
    %v9380 = vld [vmem:[#allocation26 + $0x10] sm:$0xf]
    %v9381 = vld [vmem:[#allocation26 + $0x14] sm:$0xf]
    %v9382 = vld [vmem:[#allocation26 + $0x18] sm:$0xf]
    %v9383 = vpack.c.bf16 %v9375, %v9375
    %v9391 = vunpack.c.l.b16 %v9376
    %v9392 = vunpack.c.l.b16 %v9377
    %v9393 = vunpack.c.l.b16 %v9378
    %v9394 = vunpack.c.l.b16 %v9379
    %v9395 = vunpack.c.l.b16 %v9380
    %v9396 = vunpack.c.l.b16 %v9381
    %v9397 = vunpack.c.l.b16 %v9382
    %v9398 = vpack.c.b16 %v9392, %v9391
    %v9399 = vpack.c.b16 %v9394, %v9393
    %v9400 = vpack.c.b16 %v9396, %v9395
    %v9401 = vpack.c.b16 %v9397, %v9397
    %v9403 = vsel %vm307, %v9398, 0
    %v9406 = vsel %vm307, %v9399, 0
    %v9409 = vsel %vm307, %v9400, 0
    %v9412 = vsel %vm307, %v9401, 0
    %v9415 = vsel %vm320, %v9383, 0
    %9417 = vmatprep.subr.bf16.mxu0 0
    %9418 = vmatpush1.bf16.msra.mxu0 %v9415
    %9419 = vmatprep.subr.bf16.mxu0 0
    %9420 = vmatpush1.bf16.msra.mxu0 0
    %9421 = vmatprep.subr.bf16.mxu0 0
    %9422 = vmatpush1.bf16.msra.mxu0 0
    %9423 = vmatprep.subr.bf16.mxu0 0
    %9424 = vmatpush1.bf16.msra.mxu0 0
    %9425 = vmatprep.subr.bf16.mxu0 0
    %9426 = vmatpush1.bf16.msra.mxu0 0
    %9427 = vmatprep.subr.bf16.mxu0 0
    %9428 = vmatpush1.bf16.msra.mxu0 0
    %9429 = vmatprep.subr.bf16.mxu0 0
    %9430 = vmatpush1.bf16.msra.mxu0 0
    %9431 = vmatprep.subr.bf16.mxu0 0
    %9432 = vmatpush1.bf16.msra.mxu0 0
    %9433 = vmatprep.subr.bf16.mxu0 0
    %9434 = vmatpush1.bf16.msra.mxu0 0
    %9435 = vmatprep.subr.bf16.mxu0 0
    %9436 = vmatpush1.bf16.msra.mxu0 0
    %9437 = vmatprep.subr.bf16.mxu0 0
    %9438 = vmatpush1.bf16.msra.mxu0 0
    %9439 = vmatprep.subr.bf16.mxu0 0
    %9440 = vmatpush1.bf16.msra.mxu0 0
    %9441 = vmatprep.subr.bf16.mxu0 0
    %9442 = vmatpush1.bf16.msra.mxu0 0
    %9443 = vmatprep.subr.bf16.mxu0 0
    %9444 = vmatpush1.bf16.msra.mxu0 0
    %9445 = vmatprep.subr.bf16.mxu0 0
    %9446 = vmatpush1.bf16.msra.mxu0 0
    %9447 = vmatprep.subr.bf16.mxu0 0
    %9448 = vmatpush1.bf16.msra.mxu0 0
    %9449 = vmatprep.mubr.bf16.mxu0 0
    %9450 = vmatmul.mubr.bf16.gmra.mrb[0].mxu0 %v9403
    %v9451 = vpop.f32.mrb[0].mxu0
    %v9452 = vadd.f32 0.0, %v9451
    %v9453 = vpop.f32.mrb[0].mxu0
    %v9454 = vpop.f32.mrb[0].mxu0
    %v9455 = vadd.f32 0.0, %v9454
    %v9456 = vpop.f32.mrb[0].mxu0
    %9457 = vmatprep.mubr.bf16.mxu0 0
    %9458 = vmatmul.mubr.bf16.gmra.mrb[0].mxu0 %v9406
    %v9459 = vpop.f32.mrb[0].mxu0
    %v9460 = vadd.f32 0.0, %v9459
    %v9461 = vpop.f32.mrb[0].mxu0
    %v9462 = vpop.f32.mrb[0].mxu0
    %v9463 = vadd.f32 0.0, %v9462
    %v9464 = vpop.f32.mrb[0].mxu0
    %9465 = vmatprep.mubr.bf16.mxu0 0
    %9466 = vmatmul.mubr.bf16.gmra.mrb[0].mxu0 %v9409
    %v9467 = vpop.f32.mrb[0].mxu0
    %v9468 = vadd.f32 0.0, %v9467
    %v9469 = vpop.f32.mrb[0].mxu0
    %v9470 = vpop.f32.mrb[0].mxu0
    %v9471 = vadd.f32 0.0, %v9470
    %v9472 = vpop.f32.mrb[0].mxu0
    %9473 = vmatprep.mubr.bf16.mxu0 0
    %9474 = vmatmul.mubr.bf16.gmra.mrb[0].mxu0 %v9412
    %v9475 = vpop.f32.mrb[0].mxu0
    %v9476 = vadd.f32 0.0, %v9475
    %v9477 = vpop.f32.mrb[0].mxu0
    %v9478 = vpop.f32.mrb[0].mxu0
    %v9479 = vpop.f32.mrb[0].mxu0
    %9480 = vdwg.mxu0
    %9481 = vst.msk [vmem:[#allocation2] sm:$0xff] %vm1286, %v9452
    %9483 = vrot.lane.b32.xlu0 %v9455, 65
    %v9484 = vpop.permute.xlu0 %9483
    %9486 = vst.msk [vmem:[#allocation2] sm:$0xff] %vm1297, %v9484
    %9487 = vst.msk [vmem:[#allocation2 + $0x8] sm:$0xff] %vm399, %v9484
    %9489 = vrot.lane.b32.xlu0 %v9460, 2
    %v9490 = vpop.permute.xlu0 %9489
    %9492 = vst.msk [vmem:[#allocation2 + $0x8] sm:$0xff] %vm1310, %v9490
    %9494 = vrot.lane.b32.xlu0 %v9463, 67
    %v9495 = vpop.permute.xlu0 %9494
    %9497 = vst.msk [vmem:[#allocation2 + $0x8] sm:$0xff] %vm1321, %v9495
    %9498 = vst.msk [vmem:[#allocation2 + $0x10] sm:$0xff] %vm412, %v9495
    %9500 = vrot.lane.b32.xlu0 %v9468, 4
    %v9501 = vpop.permute.xlu0 %9500
    %9503 = vst.msk [vmem:[#allocation2 + $0x10] sm:$0xff] %vm1334, %v9501
    %9505 = vrot.lane.b32.xlu0 %v9471, 69
    %v9506 = vpop.permute.xlu0 %9505
    %9508 = vst.msk [vmem:[#allocation2 + $0x10] sm:$0xff] %vm1345, %v9506
    %9509 = vst.msk [vmem:[#allocation2 + $0x18] sm:$0xff] %vm425, %v9506
    %9511 = vrot.lane.b32.xlu0 %v9476, 6
    %v9512 = vpop.permute.xlu0 %9511
    %9514 = vst.msk [vmem:[#allocation2 + $0x18] sm:$0xff] %vm1358, %v9512
    %v9515 = vld [vmem:[#allocation2] sm:$0xff]
    %v9516 = vld [vmem:[#allocation2 + $0x8] sm:$0xff]
    %v9517 = vld [vmem:[#allocation2 + $0x10] sm:$0xff]
    %v9518 = vld [vmem:[#allocation2 + $0x18] sm:$0xff]
    %v9519 = vpack.c.bf16 %v9515, %v9515
    %v9520 = vpack.c.bf16 %v9516, %v9516
    %v9521 = vpack.c.bf16 %v9517, %v9517
    %v9522 = vpack.c.bf16 %v9518, %v9518
    %v9523 = vld [vmem:[#allocation27] sm:$0xff]
    %v9524 = vld [vmem:[#allocation27 + $0x8] sm:$0xff]
    %v9525 = vld [vmem:[#allocation27 + $0x10] sm:$0xff]
    %v9526 = vld [vmem:[#allocation27 + $0x18] sm:$0xff]
    %v9527 = vld [vmem:[#allocation27 + $0x20] sm:$0xff]
    %v9528 = vld [vmem:[#allocation27 + $0x28] sm:$0xff]
    %v9529 = vld [vmem:[#allocation27 + $0x30] sm:$0xff]
    %v9530 = vld [vmem:[#allocation27 + $0x38] sm:$0xff]
    %v9531 = vld [vmem:[#allocation27 + $0x40] sm:$0xff]
    %v9532 = vld [vmem:[#allocation27 + $0x48] sm:$0xff]
    %v9533 = vld [vmem:[#allocation27 + $0x50] sm:$0xff]
    %v9534 = vld [vmem:[#allocation27 + $0x58] sm:$0xff]
    %v9535 = vld [vmem:[#allocation27 + $0x60] sm:$0xff]
    %v9536 = vld [vmem:[#allocation27 + $0x68] sm:$0xff]
    %v9537 = vld [vmem:[#allocation27 + $0x70] sm:$0xff]
    %v9538 = vld [vmem:[#allocation27 + $0x78] sm:$0xff]
    %v9539 = vld [vmem:[#allocation27 + $0x80] sm:$0xff]
    %v9540 = vld [vmem:[#allocation27 + $0x88] sm:$0xff]
    %v9541 = vld [vmem:[#allocation27 + $0x90] sm:$0xff]
    %v9542 = vld [vmem:[#allocation27 + $0x98] sm:$0xff]
    %v9543 = vld [vmem:[#allocation27 + $0xa0] sm:$0xff]
    %v9544 = vld [vmem:[#allocation27 + $0xa8] sm:$0xff]
    %v9545 = vld [vmem:[#allocation27 + $0xb0] sm:$0xff]
    %v9546 = vld [vmem:[#allocation27 + $0xb8] sm:$0xff]
    %v9547 = vld [vmem:[#allocation27 + $0xc0] sm:$0xff]
    %v9548 = vld [vmem:[#allocation27 + $0xc8] sm:$0xff]
    %v9549 = vld [vmem:[#allocation27 + $0xd0] sm:$0xff]
    %v9550 = vld [vmem:[#allocation27 + $0xd8] sm:$0xff]
    %v9551 = vld [vmem:[#allocation27 + $0xe0] sm:$0xff]
    %v9552 = vld [vmem:[#allocation27 + $0xe8] sm:$0xff]
    %v9553 = vld [vmem:[#allocation27 + $0xf0] sm:$0xff]
    %v9554 = vld [vmem:[#allocation27 + $0xf8] sm:$0xff]
    %v9555 = vld [vmem:[#allocation27 + $0x100] sm:$0xff]
    %v9556 = vld [vmem:[#allocation27 + $0x108] sm:$0xff]
    %v9557 = vld [vmem:[#allocation27 + $0x110] sm:$0xff]
    %v9558 = vld [vmem:[#allocation27 + $0x118] sm:$0xff]
    %v9559 = vld [vmem:[#allocation27 + $0x120] sm:$0xff]
    %v9560 = vld [vmem:[#allocation27 + $0x128] sm:$0xff]
    %v9561 = vld [vmem:[#allocation27 + $0x130] sm:$0xff]
    %v9562 = vld [vmem:[#allocation27 + $0x138] sm:$0xff]
    %v9563 = vld [vmem:[#allocation27 + $0x140] sm:$0xff]
    %v9564 = vld [vmem:[#allocation27 + $0x148] sm:$0xff]
    %v9565 = vld [vmem:[#allocation27 + $0x150] sm:$0xff]
    %v9566 = vld [vmem:[#allocation27 + $0x158] sm:$0xff]
    %v9567 = vld [vmem:[#allocation27 + $0x160] sm:$0xff]
    %v9568 = vld [vmem:[#allocation27 + $0x168] sm:$0xff]
    %v9569 = vld [vmem:[#allocation27 + $0x170] sm:$0xff]
    %v9570 = vld [vmem:[#allocation27 + $0x178] sm:$0xff]
    %v9571 = vld [vmem:[#allocation27 + $0x180] sm:$0xff]
    %v9572 = vld [vmem:[#allocation27 + $0x188] sm:$0xff]
    %v9573 = vld [vmem:[#allocation27 + $0x190] sm:$0xff]
    %v9574 = vld [vmem:[#allocation27 + $0x198] sm:$0xff]
    %v9575 = vld [vmem:[#allocation27 + $0x1a0] sm:$0xff]
    %v9576 = vld [vmem:[#allocation27 + $0x1a8] sm:$0xff]
    %v9577 = vld [vmem:[#allocation27 + $0x1b0] sm:$0xff]
    %v9578 = vld [vmem:[#allocation27 + $0x1b8] sm:$0xff]
    %v9579 = vld [vmem:[#allocation27 + $0x1c0] sm:$0xff]
    %v9580 = vld [vmem:[#allocation3] sm:$0xff]
    %9582 = vset.pattern.permute.xlu0 7
    %9583 = vperm.xlu0 %9582, %v9580
    %v9584 = vpop.permute.xlu0 %9583
    %v9643 = vunpack.c.l.b16 %v9523
    %v9644 = vunpack.c.h.b16 %v9523
    %v9645 = vunpack.c.l.b16 %v9524
    %v9646 = vunpack.c.h.b16 %v9524
    %v9647 = vunpack.c.l.b16 %v9525
    %v9648 = vunpack.c.h.b16 %v9525
    %v9649 = vunpack.c.l.b16 %v9526
    %v9650 = vunpack.c.h.b16 %v9526
    %v9651 = vunpack.c.l.b16 %v9527
    %v9652 = vunpack.c.h.b16 %v9527
    %v9653 = vunpack.c.l.b16 %v9528
    %v9654 = vunpack.c.h.b16 %v9528
    %v9655 = vunpack.c.l.b16 %v9529
    %v9656 = vunpack.c.h.b16 %v9529
    %v9657 = vunpack.c.l.b16 %v9530
    %v9658 = vunpack.c.h.b16 %v9530
    %v9659 = vunpack.c.l.b16 %v9531
    %v9660 = vunpack.c.h.b16 %v9531
    %v9661 = vunpack.c.l.b16 %v9532
    %v9662 = vunpack.c.h.b16 %v9532
    %v9663 = vunpack.c.l.b16 %v9533
    %v9664 = vunpack.c.h.b16 %v9533
    %v9665 = vunpack.c.l.b16 %v9534
    %v9666 = vunpack.c.h.b16 %v9534
    %v9667 = vunpack.c.l.b16 %v9535
    %v9668 = vunpack.c.h.b16 %v9535
    %v9669 = vunpack.c.l.b16 %v9536
    %v9670 = vunpack.c.h.b16 %v9536
    %v9671 = vunpack.c.l.b16 %v9537
    %v9672 = vunpack.c.h.b16 %v9537
    %v9673 = vunpack.c.l.b16 %v9538
    %v9674 = vunpack.c.h.b16 %v9538
    %v9675 = vunpack.c.l.b16 %v9539
    %v9676 = vunpack.c.h.b16 %v9539
    %v9677 = vunpack.c.l.b16 %v9540
    %v9678 = vunpack.c.h.b16 %v9540
    %v9679 = vunpack.c.l.b16 %v9541
    %v9680 = vunpack.c.h.b16 %v9541
    %v9681 = vunpack.c.l.b16 %v9542
    %v9682 = vunpack.c.h.b16 %v9542
    %v9683 = vunpack.c.l.b16 %v9543
    %v9684 = vunpack.c.h.b16 %v9543
    %v9685 = vunpack.c.l.b16 %v9544
    %v9686 = vunpack.c.h.b16 %v9544
    %v9687 = vunpack.c.l.b16 %v9545
    %v9688 = vunpack.c.h.b16 %v9545
    %v9689 = vunpack.c.l.b16 %v9546
    %v9690 = vunpack.c.h.b16 %v9546
    %v9691 = vunpack.c.l.b16 %v9547
    %v9692 = vunpack.c.h.b16 %v9547
    %v9693 = vunpack.c.l.b16 %v9548
    %v9694 = vunpack.c.h.b16 %v9548
    %v9695 = vunpack.c.l.b16 %v9549
    %v9696 = vunpack.c.h.b16 %v9549
    %v9697 = vunpack.c.l.b16 %v9550
    %v9698 = vunpack.c.h.b16 %v9550
    %v9699 = vunpack.c.l.b16 %v9551
    %v9700 = vunpack.c.h.b16 %v9551
    %v9701 = vunpack.c.l.b16 %v9552
    %v9702 = vunpack.c.h.b16 %v9552
    %v9703 = vunpack.c.l.b16 %v9553
    %v9704 = vunpack.c.h.b16 %v9553
    %v9705 = vunpack.c.l.b16 %v9554
    %v9706 = vunpack.c.h.b16 %v9554
    %v9707 = vunpack.c.l.b16 %v9555
    %v9708 = vunpack.c.h.b16 %v9555
    %v9709 = vunpack.c.l.b16 %v9556
    %v9710 = vunpack.c.h.b16 %v9556
    %v9711 = vunpack.c.l.b16 %v9557
    %v9712 = vunpack.c.h.b16 %v9557
    %v9713 = vunpack.c.l.b16 %v9558
    %v9714 = vunpack.c.h.b16 %v9558
    %v9715 = vunpack.c.l.b16 %v9559
    %v9716 = vunpack.c.h.b16 %v9559
    %v9717 = vunpack.c.l.b16 %v9560
    %v9718 = vunpack.c.h.b16 %v9560
    %v9719 = vunpack.c.l.b16 %v9561
    %v9720 = vunpack.c.h.b16 %v9561
    %v9721 = vunpack.c.l.b16 %v9562
    %v9722 = vunpack.c.h.b16 %v9562
    %v9723 = vunpack.c.l.b16 %v9563
    %v9724 = vunpack.c.h.b16 %v9563
    %v9725 = vunpack.c.l.b16 %v9564
    %v9726 = vunpack.c.h.b16 %v9564
    %v9727 = vunpack.c.l.b16 %v9565
    %v9728 = vunpack.c.h.b16 %v9565
    %v9729 = vunpack.c.l.b16 %v9566
    %v9730 = vunpack.c.h.b16 %v9566
    %v9731 = vunpack.c.l.b16 %v9567
    %v9732 = vunpack.c.h.b16 %v9567
    %v9733 = vunpack.c.l.b16 %v9568
    %v9734 = vunpack.c.h.b16 %v9568
    %v9735 = vunpack.c.l.b16 %v9569
    %v9736 = vunpack.c.h.b16 %v9569
    %v9737 = vunpack.c.l.b16 %v9570
    %v9738 = vunpack.c.h.b16 %v9570
    %v9739 = vunpack.c.l.b16 %v9571
    %v9740 = vunpack.c.h.b16 %v9571
    %v9741 = vunpack.c.l.b16 %v9572
    %v9742 = vunpack.c.h.b16 %v9572
    %v9743 = vunpack.c.l.b16 %v9573
    %v9744 = vunpack.c.h.b16 %v9573
    %v9745 = vunpack.c.l.b16 %v9574
    %v9746 = vunpack.c.h.b16 %v9574
    %v9747 = vunpack.c.l.b16 %v9575
    %v9748 = vunpack.c.h.b16 %v9575
    %v9749 = vunpack.c.l.b16 %v9576
    %v9750 = vunpack.c.h.b16 %v9576
    %v9751 = vunpack.c.l.b16 %v9577
    %v9752 = vunpack.c.h.b16 %v9577
    %v9753 = vunpack.c.l.b16 %v9578
    %v9754 = vunpack.c.h.b16 %v9578
    %v9755 = vunpack.c.l.b16 %v9579
    %v9756 = vunpack.c.h.b16 %v9579
    %v9757 = vpack.c.b16 %v9645, %v9643
    %v9758 = vpack.c.b16 %v9646, %v9644
    %v9759 = vpack.c.b16 %v9649, %v9647
    %v9760 = vpack.c.b16 %v9650, %v9648
    %v9761 = vpack.c.b16 %v9653, %v9651
    %v9762 = vpack.c.b16 %v9654, %v9652
    %v9763 = vpack.c.b16 %v9657, %v9655
    %v9764 = vpack.c.b16 %v9658, %v9656
    %v9765 = vpack.c.b16 %v9661, %v9659
    %v9766 = vpack.c.b16 %v9662, %v9660
    %v9767 = vpack.c.b16 %v9665, %v9663
    %v9768 = vpack.c.b16 %v9666, %v9664
    %v9769 = vpack.c.b16 %v9669, %v9667
    %v9770 = vpack.c.b16 %v9670, %v9668
    %v9771 = vpack.c.b16 %v9673, %v9671
    %v9772 = vpack.c.b16 %v9674, %v9672
    %v9773 = vpack.c.b16 %v9677, %v9675
    %v9774 = vpack.c.b16 %v9678, %v9676
    %v9775 = vpack.c.b16 %v9681, %v9679
    %v9776 = vpack.c.b16 %v9682, %v9680
    %v9777 = vpack.c.b16 %v9685, %v9683
    %v9778 = vpack.c.b16 %v9686, %v9684
    %v9779 = vpack.c.b16 %v9689, %v9687
    %v9780 = vpack.c.b16 %v9690, %v9688
    %v9781 = vpack.c.b16 %v9693, %v9691
    %v9782 = vpack.c.b16 %v9694, %v9692
    %v9783 = vpack.c.b16 %v9697, %v9695
    %v9784 = vpack.c.b16 %v9698, %v9696
    %v9785 = vpack.c.b16 %v9701, %v9699
    %v9786 = vpack.c.b16 %v9702, %v9700
    %v9787 = vpack.c.b16 %v9705, %v9703
    %v9788 = vpack.c.b16 %v9706, %v9704
    %v9789 = vpack.c.b16 %v9709, %v9707
    %v9790 = vpack.c.b16 %v9710, %v9708
    %v9791 = vpack.c.b16 %v9713, %v9711
    %v9792 = vpack.c.b16 %v9714, %v9712
    %v9793 = vpack.c.b16 %v9717, %v9715
    %v9794 = vpack.c.b16 %v9718, %v9716
    %v9795 = vpack.c.b16 %v9721, %v9719
    %v9796 = vpack.c.b16 %v9722, %v9720
    %v9797 = vpack.c.b16 %v9725, %v9723
    %v9798 = vpack.c.b16 %v9726, %v9724
    %v9799 = vpack.c.b16 %v9729, %v9727
    %v9800 = vpack.c.b16 %v9730, %v9728
    %v9801 = vpack.c.b16 %v9733, %v9731
    %v9802 = vpack.c.b16 %v9734, %v9732
    %v9803 = vpack.c.b16 %v9737, %v9735
    %v9804 = vpack.c.b16 %v9738, %v9736
    %v9805 = vpack.c.b16 %v9741, %v9739
    %v9806 = vpack.c.b16 %v9742, %v9740
    %v9807 = vpack.c.b16 %v9745, %v9743
    %v9808 = vpack.c.b16 %v9746, %v9744
    %v9809 = vpack.c.b16 %v9749, %v9747
    %v9810 = vpack.c.b16 %v9750, %v9748
    %v9811 = vpack.c.b16 %v9753, %v9751
    %v9812 = vpack.c.b16 %v9754, %v9752
    %v9813 = vpack.c.b16 %v9755, %v9755
    %v9814 = vpack.c.b16 %v9756, %v9756
    %v9872 = vsel %vm1613, %v9522, 0
    %v9875 = vand.u32 %v9813, %v1619
    %v9878 = vand.u32 %v9814, %v1619
    %9880 = vmatprep.subr.bf16.mxu0 %v9758
    %9881 = vmatpush1.bf16.msra.mxu0 %v9757
    %9882 = vmatprep.subr.bf16.mxu0 %v9760
    %9883 = vmatpush1.bf16.msra.mxu0 %v9759
    %9884 = vmatprep.subr.bf16.mxu0 %v9762
    %9885 = vmatpush1.bf16.msra.mxu0 %v9761
    %9886 = vmatprep.subr.bf16.mxu0 %v9764
    %9887 = vmatpush1.bf16.msra.mxu0 %v9763
    %9888 = vmatprep.subr.bf16.mxu0 %v9766
    %9889 = vmatpush1.bf16.msra.mxu0 %v9765
    %9890 = vmatprep.subr.bf16.mxu0 %v9768
    %9891 = vmatpush1.bf16.msra.mxu0 %v9767
    %9892 = vmatprep.subr.bf16.mxu0 %v9770
    %9893 = vmatpush1.bf16.msra.mxu0 %v9769
    %9894 = vmatprep.subr.bf16.mxu0 %v9772
    %9895 = vmatpush1.bf16.msra.mxu0 %v9771
    %9896 = vmatprep.subr.bf16.mxu0 %v9774
    %9897 = vmatpush1.bf16.msra.mxu0 %v9773
    %9898 = vmatprep.subr.bf16.mxu0 %v9776
    %9899 = vmatpush1.bf16.msra.mxu0 %v9775
    %9900 = vmatprep.subr.bf16.mxu0 %v9778
    %9901 = vmatpush1.bf16.msra.mxu0 %v9777
    %9902 = vmatprep.subr.bf16.mxu0 %v9780
    %9903 = vmatpush1.bf16.msra.mxu0 %v9779
    %9904 = vmatprep.subr.bf16.mxu0 %v9782
    %9905 = vmatpush1.bf16.msra.mxu0 %v9781
    %9906 = vmatprep.subr.bf16.mxu0 %v9784
    %9907 = vmatpush1.bf16.msra.mxu0 %v9783
    %9908 = vmatprep.subr.bf16.mxu0 %v9786
    %9909 = vmatpush1.bf16.msra.mxu0 %v9785
    %9910 = vmatprep.subr.bf16.mxu0 %v9788
    %9911 = vmatpush1.bf16.msra.mxu0 %v9787
    %9912 = vmatprep.mubr.bf16.mxu0 %v9520
    %9913 = vmatmul.mubr.bf16.gmra.mrb[0].mxu0 %v9519
    %v9914 = vpop.f32.mrb[0].mxu0
    %v9915 = vadd.f32 %v9584, %v9914
    %v9916 = vpop.f32.mrb[0].mxu0
    %v9917 = vadd.f32 %v9584, %v9916
    %v9918 = vpop.f32.mrb[0].mxu0
    %v9919 = vpop.f32.mrb[0].mxu0
    %9920 = vdwg.mxu0
    %9921 = vmatprep.subr.bf16.mxu0 %v9790
    %9922 = vmatpush1.bf16.msra.mxu0 %v9789
    %9923 = vmatprep.subr.bf16.mxu0 %v9792
    %9924 = vmatpush1.bf16.msra.mxu0 %v9791
    %9925 = vmatprep.subr.bf16.mxu0 %v9794
    %9926 = vmatpush1.bf16.msra.mxu0 %v9793
    %9927 = vmatprep.subr.bf16.mxu0 %v9796
    %9928 = vmatpush1.bf16.msra.mxu0 %v9795
    %9929 = vmatprep.subr.bf16.mxu0 %v9798
    %9930 = vmatpush1.bf16.msra.mxu0 %v9797
    %9931 = vmatprep.subr.bf16.mxu0 %v9800
    %9932 = vmatpush1.bf16.msra.mxu0 %v9799
    %9933 = vmatprep.subr.bf16.mxu0 %v9802
    %9934 = vmatpush1.bf16.msra.mxu0 %v9801
    %9935 = vmatprep.subr.bf16.mxu0 %v9804
    %9936 = vmatpush1.bf16.msra.mxu0 %v9803
    %9937 = vmatprep.subr.bf16.mxu0 %v9806
    %9938 = vmatpush1.bf16.msra.mxu0 %v9805
    %9939 = vmatprep.subr.bf16.mxu0 %v9808
    %9940 = vmatpush1.bf16.msra.mxu0 %v9807
    %9941 = vmatprep.subr.bf16.mxu0 %v9810
    %9942 = vmatpush1.bf16.msra.mxu0 %v9809
    %9943 = vmatprep.subr.bf16.mxu0 %v9812
    %9944 = vmatpush1.bf16.msra.mxu0 %v9811
    %9945 = vmatprep.subr.bf16.mxu0 %v9878
    %9946 = vmatpush1.bf16.msra.mxu0 %v9875
    %9947 = vmatprep.subr.bf16.mxu0 0
    %9948 = vmatpush1.bf16.msra.mxu0 0
    %9949 = vmatprep.subr.bf16.mxu0 0
    %9950 = vmatpush1.bf16.msra.mxu0 0
    %9951 = vmatprep.subr.bf16.mxu0 0
    %9952 = vmatpush1.bf16.msra.mxu0 0
    %9953 = vmatprep.mubr.bf16.mxu0 %v9872
    %9954 = vmatmul.mubr.bf16.gmra.mrb[0].mxu0 %v9521
    %v9955 = vpop.f32.mrb[0].mxu0
    %v9956 = vadd.f32 %v9915, %v9955
    %v9957 = vpop.f32.mrb[0].mxu0
    %v9958 = vadd.f32 %v9917, %v9957
    %v9959 = vpop.f32.mrb[0].mxu0
    %v9960 = vpop.f32.mrb[0].mxu0
    %9961 = vdwg.mxu0
    %v9964 = vcombine.low %v9956, %v9958
    %v9966 = vunpack.c.l.s4 1966171168
    %v9967 = vunpack.c.0.s8 %v9966
    %v9968 = vlaneseq
    %v9969 = vshrl.u32 %v9968, 7
    %v9970 = vsub.s32 %v9967, %v9969
    %v9971 = vrot.slane %v9964, %v9970
    %v9973 = vunpack.c.l.s4 1966171168
    %v9974 = vunpack.c.0.s8 %v9973
    %v9975 = vlaneseq
    %v9976 = vshrl.u32 %v9975, 7
    %v9977 = vsub.s32 %v9974, %v9976
    %v9978 = vrot.slane %v9971, %v9977
    %s9980 = scalar_lea.vmem [#allocation29], 2
    %9981 = vst.msk [vmem:[%s9980] sm:$0x3] %vm5157, %v9978
    // Predicated region
    $region138: #{forward.1} parent=1 // pred_check
      _
    $region139: #{forward.1} parent=1 // pred_check_branch
      %9983 = sbr.rel (0) target = $region141
    $region140: #{forward.1} parent=1 // pred_region
      %s9985 = ssub.s32 64, 64
      %9986 = vsyncadd [#allocation5], %s9985
      %s9987 = sshll.u32 [#allocation29], 4
      %s9988 = int_to_ptr.vmem [resolvable:$true] %s9987
      %9993 = dma.vmem_to_hbm [thread:$0]  %s9988, 64, %s18, [#allocation5], 32, 32, 2
    $region141: #{forward.1} parent=1 // pred_fallthru
      _
    // Predicated region
    $region142: #{forward.1} parent=1 // pred_check
      _
    $region143: #{forward.1} parent=1 // pred_check_branch
      %9995 = sbr.rel (0) target = $region145
    $region144: #{forward.1} parent=1 // pred_region
      %9996 = dma.done [#allocation5], 64
    $region145: #{forward.1} parent=1 // pred_fallthru
      _
    %9997 = vsyncpa [#allocation4], 1
    %9998 = vsyncpa [#allocation7], 1
    %9999 = vsyncpa [#allocation10], 1
    %10000 = vsyncpa [#allocation13], 1
    %10001 = vsyncpa [#allocation16], 1
    %10002 = vsyncpa [#allocation19], 1
    %10003 = vsyncpa [#allocation22], 1
    %10004 = vsyncpa [#allocation25], 1
    %10005 = vsyncpa [#allocation28], 1
    %10006 = vsyncpa [#allocation5], 1

</llo_original>
